<compile_context>
chip_gen: v7x
topology: tpu7x:2x2x1
jax: 0.10.0
libtpu: 0.0.40
codegen_flags: <defaults>
</compile_context>

<pallas_src>
import functools

import numpy as np
import jax
import jax.numpy as jnp
from jax.experimental import pallas as pl
from jax.experimental.pallas import tpu as pltpu  # noqa: F401  (TPU backend)

NGF = 8


def _round_up(n, m):
    return ((n + m - 1) // m) * m


# =============================================================================
# Pallas kernel 1: fused conv matmul
#   out = post_act( norm( pre_act(A) @ W + bias ) )
# Full-array blocks (no grid): every layer of this net fits in VMEM, so one
# invocation per conv removes all intermediate HBM round trips for the epilogue.
# =============================================================================
def _fused_conv_kernel(*refs, pre_act, norm, post_act, groups, inv_count):
    if norm == 'bnm':
        a_ref, w_ref, b_ref, m_ref, fold_ref, o_ref = refs
    else:
        a_ref, w_ref, b_ref, o_ref = refs
    eps = 1e-5

    a = a_ref[...]                                   # bf16 (M, K)
    if pre_act == 'lrelu':
        a = jnp.where(a >= 0, a, a * 0.2)            # LeakyReLU(0.2) fused on the input side
    elif pre_act == 'relu':
        a = jnp.maximum(a, 0)

    out = jnp.dot(a, w_ref[...], preferred_element_type=jnp.float32)   # bf16 x bf16 -> f32 MXU
    out = out + b_ref[...]                           # (1, Np) bias, f32 epilogue

    if norm == 'bn':            # BatchNorm (training): per-column stats over all rows
        mean = jnp.mean(out, axis=0, keepdims=True)
        var = jnp.mean(out * out, axis=0, keepdims=True) - mean * mean
        out = (out - mean) * jax.lax.rsqrt(var + eps)
    elif norm == 'bnm':         # BatchNorm for sub-pixel conv-transpose: masked + phase-folded stats
        mask = m_ref[...]
        om = out * mask
        s1 = jnp.sum(om, axis=0, keepdims=True)              # (1, Np)
        s2 = jnp.sum(om * out, axis=0, keepdims=True)
        mean = jnp.dot(s1, fold_ref[...], preferred_element_type=jnp.float32) * inv_count
        ex2 = jnp.dot(s2, fold_ref[...], preferred_element_type=jnp.float32) * inv_count
        var = ex2 - mean * mean
        out = (out - mean) * jax.lax.rsqrt(var + eps)
    elif norm == 'in':          # InstanceNorm (affine=False): per-sample row groups
        nb, hw = groups
        parts = []
        for g in range(nb):     # nb == batch (2), static unroll; hw is a multiple of 8
            o = out[g * hw:(g + 1) * hw, :]
            m = jnp.mean(o, axis=0, keepdims=True)
            v = jnp.mean(o * o, axis=0, keepdims=True) - m * m
            parts.append((o - m) * jax.lax.rsqrt(v + eps))
        out = jnp.concatenate(parts, axis=0)

    if post_act == 'tanh':
        out = jnp.tanh(out)

    o_ref[...] = out


def fused_matmul(a, w, bias, *, pre_act='none', norm='none', post_act='none',
                 groups=None, mask=None, fold=None, count=None):
    M = a.shape[0]
    n_pad = w.shape[1]
    kern = functools.partial(
        _fused_conv_kernel, pre_act=pre_act, norm=norm, post_act=post_act,
        groups=groups, inv_count=(1.0 / count) if count else None)
    args = (a, w, bias)
    if norm == 'bnm':
        args = args + (mask, fold)
    return pl.pallas_call(
        kern,
        out_shape=jax.ShapeDtypeStruct((M, n_pad), jnp.float32),
    )(*args)


# =============================================================================
# Pallas kernel 2: InnerShiftTriple core (whole batch in one launch).
# Cosine similarity between masked "former" and non-masked "latter" features,
# first-index argmax, paste, and the F_c * F_shift fuse -- all fused.
# =============================================================================
def _shift_fuse_kernel(f_ref, l_ref, bmask_ref, o_ref):
    f = f_ref[...]                                    # (B*nm, C) f32
    l = l_ref[...]                                    # (B*nn, C) f32
    fh = f * jax.lax.rsqrt(jnp.maximum(jnp.sum(f * f, axis=1, keepdims=True), 1e-12))
    lh = l * jax.lax.rsqrt(jnp.maximum(jnp.sum(l * l, axis=1, keepdims=True), 1e-12))
    cos = jnp.dot(fh, lh.T, preferred_element_type=jnp.float32)      # (B*nm, B*nn)
    cosm = jnp.where(bmask_ref[...] > 0.5, cos, -1e30)               # restrict to same batch
    col_j = jax.lax.broadcasted_iota(jnp.int32, cosm.shape, 1)
    maxv = jnp.max(cosm, axis=1, keepdims=True)
    idx = jnp.min(jnp.where(cosm >= maxv, col_j, cosm.shape[1]),
                  axis=1, keepdims=True)                             # first index of the max
    onehot = (col_j == idx).astype(jnp.float32)
    shifted = jnp.dot(onehot, l, preferred_element_type=jnp.float32)  # paste latter features
    o_ref[...] = shifted * f                          # F_fuse = F_c * F_shift at masked pos.


# =============================================================================
# im2col + layer wrappers (JAX glue around the fused kernels)
# =============================================================================
def _im2col(x, k, stride, pad):
    B, C, H, W = x.shape
    xp = jnp.pad(x, ((0, 0), (0, 0), (pad, pad), (pad, pad)))
    Ho = (H + 2 * pad - k) // stride + 1
    Wo = (W + 2 * pad - k) // stride + 1
    cols = []
    for i in range(k):
        for j in range(k):
            cols.append(xp[:, :, i:i + stride * Ho:stride, j:j + stride * Wo:stride])
    patches = jnp.stack(cols, axis=2)                          # (B, C, k*k, Ho, Wo)
    A = patches.transpose(0, 3, 4, 1, 2).reshape(B * Ho * Wo, C * k * k)
    return A, Ho, Wo


def conv_block(x, lw, cout, *, k=4, stride=2, pad=1, pre='none', norm='none', post='none'):
    B = x.shape[0]
    A, Ho, Wo = _im2col(x, k, stride, pad)
    out = fused_matmul(A.astype(jnp.bfloat16), lw['w'], lw['b'],
                       pre_act=pre, norm=norm, post_act=post,
                       groups=(B, Ho * Wo) if norm == 'in' else None)
    return out[:, :cout].reshape(B, Ho, Wo, cout).transpose(0, 3, 1, 2)


def _convt_bn_mask_fold(B, H, W, cout, n_pad):
    """Static (trace-time) mask of valid (window, phase) entries and a phase-fold
    matrix so in-kernel BN stats equal BN over the interleaved conv-transpose output."""
    Ho, Wo = H + 1, W + 1
    tr = np.arange(Ho)[:, None, None]
    tc = np.arange(Wo)[None, :, None]
    pr = np.array([0, 0, 1, 1])[None, None, :]
    ps = np.array([0, 1, 0, 1])[None, None, :]
    valid = ((tr >= pr) & (tr < pr + H) & (tc >= ps) & (tc < ps + W)).astype(np.float32)
    mask = np.zeros((B * Ho * Wo, n_pad), np.float32)
    mask[:, :4 * cout] = np.broadcast_to(
        valid[None, :, :, :, None], (B, Ho, Wo, 4, cout)).reshape(B * Ho * Wo, 4 * cout)
    ch = np.arange(n_pad) % cout
    real = np.arange(n_pad) < 4 * cout
    fold = ((ch[:, None] == ch[None, :]) & real[:, None] & real[None, :]).astype(np.float32)
    count = float(B * 4 * H * W)
    return jnp.asarray(mask), jnp.asarray(fold), count


def convt_block(x, lw, cout, *, pre='none', norm='none', post='none'):
    """ConvTranspose2d(k=4, s=2, p=1) via sub-pixel decomposition: one k=2/stride-1
    fused matmul producing all 4 output phases, then interleave."""
    B, _, H, W = x.shape
    A, Ho, Wo = _im2col(x, 2, 1, 1)                   # Ho = H+1, Wo = W+1 (phase windows)
    n_pad = lw['w'].shape[1]
    kw = dict(pre_act=pre, post_act=post)
    if norm == 'bn':
        mask, fold, count = _convt_bn_mask_fold(B, H, W, cout, n_pad)
        kw.update(norm='bnm', mask=mask, fold=fold, count=count)
    else:
        kw.update(norm=norm)
    out = fused_matmul(A.astype(jnp.bfloat16), lw['w'], lw['b'], **kw)
    out = out[:, :4 * cout].reshape(B, Ho, Wo, 4, cout)
    phases = [out[:, r:r + H, s:s + W, 2 * r + s, :] for r in (0, 1) for s in (0, 1)]
    y = jnp.stack(phases, axis=-1).reshape(B, H, W, cout, 2, 2)
    return y.transpose(0, 3, 1, 4, 2, 5).reshape(B, cout, 2 * H, 2 * W)


# =============================================================================
# InnerResShiftTriple forward (shift + res_net)
# TODO(synk): util.cal_feat_mask / cal_flag_given_mask_thred are MagicMocks in the
# original test file; a deterministic flag (center 2x2 masked at the 4x4 shift
# resolution, shift_sz=1, stride=1) is used instead.
# =============================================================================
_MASK_HW = 4
_FLAG_2D = np.zeros((_MASK_HW, _MASK_HW), np.int32)
_FLAG_2D[1:3, 1:3] = 1
_FLAG = _FLAG_2D.reshape(-1)
_MASK_IDX = np.where(_FLAG == 1)[0]
_NONMASK_IDX = np.where(_FLAG == 0)[0]
_NM = len(_MASK_IDX)
_NN = len(_NONMASK_IDX)


def inner_res_shift(x, p):
    B, C, H, W = x.shape
    half = C // 2
    former = x[:, :half]
    latter = x[:, half:]

    f_flat = former.reshape(B, half, H * W).transpose(0, 2, 1)        # (B, HW, half)
    l_flat = latter.reshape(B, half, H * W).transpose(0, 2, 1)
    former_m = f_flat[:, _MASK_IDX, :].reshape(B * _NM, half)
    latter_nm = l_flat[:, _NONMASK_IDX, :].reshape(B * _NN, half)
    bmask = np.kron(np.eye(B, dtype=np.float32), np.ones((_NM, _NN), np.float32))

    fused_m = pl.pallas_call(
        _shift_fuse_kernel,
        out_shape=jax.ShapeDtypeStruct((B * _NM, half), jnp.float32),
    )(former_m.astype(jnp.float32), latter_nm.astype(jnp.float32), bmask)

    fuse_flat = jnp.zeros((B, H * W, half), jnp.float32)
    fuse_flat = fuse_flat.at[:, _MASK_IDX, :].set(fused_m.reshape(B, _NM, half))
    F_fuse = fuse_flat.transpose(0, 2, 1).reshape(B, half, H, W)

    F_com = jnp.concatenate([former, F_fuse], axis=1)                 # (B, C, H, W)
    r1 = conv_block(F_com, p['res1'], half, k=3, stride=1, pad=1, pre='none', norm='in')
    r2 = conv_block(r1, p['res2'], half, k=3, stride=1, pad=1, pre='relu', norm='in')
    return jnp.concatenate([former + r2, latter], axis=1)


# =============================================================================
# Full forward (num_downs=5).  Activations are fused into the NEXT conv kernel
# (they act on that conv's input); norms/tanh are fused into the producing kernel.
# =============================================================================
def model_forward(p, x):
    # ---- down path --------------------------------------------------------
    x4 = conv_block(x,  p['b5_d'], NGF,     pre='none',  norm='none')   # (B,  8, 16, 16)
    x3 = conv_block(x4, p['b4_d'], NGF * 2, pre='lrelu', norm='bn')     # (B, 16,  8,  8)
    x2 = conv_block(x3, p['b3_d'], NGF * 4, pre='lrelu', norm='bn')     # (B, 32,  4,  4)
    x1 = conv_block(x2, p['b2_d'], NGF * 8, pre='lrelu', norm='bn')     # (B, 64,  2,  2)
    d1 = conv_block(x1, p['b1_d'], NGF * 8, pre='lrelu', norm='none')   # (B, 64,  1,  1)
    # ---- innermost up ------------------------------------------------------
    y1 = convt_block(d1, p['b1_u'], NGF * 8, pre='relu', norm='bn')     # (B, 64,  2,  2)
    s1 = jnp.concatenate([y1, x1], axis=1)                              # (B,128,  2,  2)
    y2 = convt_block(s1, p['b2_u'], NGF * 4, pre='relu', norm='bn')     # (B, 32,  4,  4)
    s2 = jnp.concatenate([y2, x2], axis=1)                              # (B, 64,  4,  4)
    # ---- ResUnet shift block ----------------------------------------------
    sh_in = jnp.maximum(s2, 0.0)       # uprelu (multi-consumer, kept in plain JAX)
    # InnerCos: identity in forward.
    sh = inner_res_shift(sh_in, p)                                      # (B, 64,  4,  4)
    y3 = convt_block(sh, p['b3_u'], NGF * 2, pre='none', norm='bn')     # (B, 16,  8,  8)
    s3 = jnp.concatenate([y3, x3], axis=1)                              # (B, 32,  8,  8)
    y4 = convt_block(s3, p['b4_u'], NGF,     pre='relu', norm='bn')     # (B,  8, 16, 16)
    s4 = jnp.concatenate([y4, x4], axis=1)                              # (B, 16, 16, 16)
    # ---- outermost up ------------------------------------------------------
    out = convt_block(s4, p['b5_u'], 3, pre='relu', norm='none', post='tanh')
    return out                                                          # (B, 3, 32, 32)


# =============================================================================
# Parameter init + one-time preprocessing (reshape / pad-to-128 / bf16 cast),
# hoisted out of the jitted hot path.
# =============================================================================
def _prep_conv(w, b):
    cout, cin, k, _ = w.shape
    n_pad = max(128, _round_up(cout, 128))
    Wm = jnp.transpose(w.reshape(cout, cin * k * k))                   # (K, cout)
    Wm = jnp.pad(Wm, ((0, 0), (0, n_pad - cout)))
    bias = jnp.pad(b[None, :], ((0, 0), (0, n_pad - cout)))
    return {'w': Wm.astype(jnp.bfloat16), 'b': bias.astype(jnp.float32)}


def _prep_convt(w, b):
    cin, cout, k, _ = w.shape                                          # PyTorch (Cin, Cout, 4, 4)
    n_pad = max(128, _round_up(4 * cout, 128))
    blocks = []
    for r in (0, 1):
        for s in (0, 1):
            sub = w[:, :, 3 - r::-2, 3 - s::-2]                        # (Cin, Cout, 2, 2) taps
            blocks.append(jnp.transpose(sub, (1, 0, 2, 3)).reshape(cout, cin * 4))
    Wm = jnp.transpose(jnp.concatenate(blocks, axis=0))                # (Cin*4, 4*Cout)
    Wm = jnp.pad(Wm, ((0, 0), (0, n_pad - 4 * cout)))
    bias = jnp.pad(jnp.tile(b, 4)[None, :], ((0, 0), (0, n_pad - 4 * cout)))
    return {'w': Wm.astype(jnp.bfloat16), 'b': bias.astype(jnp.float32)}


def make_params(key, ngf=NGF, input_nc=3, output_nc=3):
    keys = iter(jax.random.split(key, 32))

    def w(shape):
        fan_in = float(np.prod(shape[1:]))
        return jax.random.normal(next(keys), shape, jnp.float32) / np.sqrt(fan_in)

    def b(n):
        return jnp.zeros((n,), jnp.float32)

    raw = {
        'b5_d': (w((ngf, input_nc, 4, 4)), b(ngf)),
        'b4_d': (w((ngf * 2, ngf, 4, 4)), b(ngf * 2)),
        'b3_d': (w((ngf * 4, ngf * 2, 4, 4)), b(ngf * 4)),
        'b2_d': (w((ngf * 8, ngf * 4, 4, 4)), b(ngf * 8)),
        'b1_d': (w((ngf * 8, ngf * 8, 4, 4)), b(ngf * 8)),
        'b1_u': (w((ngf * 8, ngf * 8, 4, 4)), b(ngf * 8)),       # ConvT: (Cin, Cout, 4, 4)
        'b2_u': (w((ngf * 16, ngf * 4, 4, 4)), b(ngf * 4)),
        'b3_u': (w((ngf * 8, ngf * 2, 4, 4)), b(ngf * 2)),
        'b4_u': (w((ngf * 4, ngf, 4, 4)), b(ngf)),
        'b5_u': (w((ngf * 2, output_nc, 4, 4)), b(output_nc)),
        'res1': (w((ngf * 4, ngf * 8, 3, 3)), b(ngf * 4)),
        'res2': (w((ngf * 4, ngf * 4, 3, 3)), b(ngf * 4)),
    }
    p = {}
    for name in ('b5_d', 'b4_d', 'b3_d', 'b2_d', 'b1_d', 'res1', 'res2'):
        p[name] = _prep_conv(*raw[name])
    for name in ('b1_u', 'b2_u', 'b3_u', 'b4_u', 'b5_u'):
        p[name] = _prep_convt(*raw[name])
    return p


if __name__ == "__main__":
    key = jax.random.PRNGKey(0)
    pkey, xkey = jax.random.split(key)
    params = make_params(pkey)
    x = jax.random.normal(xkey, (2, 3, 32, 32), jnp.float32)

    fwd = jax.jit(model_forward)
    out = jax.block_until_ready(fwd(params, x))
    assert out.shape == (2, 3, 32, 32) and out.dtype == jnp.float32
    assert bool(jnp.all(jnp.isfinite(out)))
    print("KERNEL_OK")
</pallas_src>

<mosaic_0001>
module attributes {stable_mosaic.version = 11 : i64} {
  func.func @_fused_conv_kernel(%arg0: memref<512x48xbf16, #tpu.memory_space<vmem>>, %arg1: memref<48x128xbf16, #tpu.memory_space<vmem>>, %arg2: memref<1x128xf32, #tpu.memory_space<vmem>>, %arg3: memref<512x128xf32, #tpu.memory_space<vmem>>) attributes {dimension_semantics = [], scalar_prefetch = 0 : i64, scratch_operands = 0 : i64, tpu.core_type = #tpu.core_type<tc>} {
    %c0 = arith.constant 0 : index
    %c0_0 = arith.constant 0 : index
    %0 = vector.load %arg0[%c0, %c0_0] : memref<512x48xbf16, #tpu.memory_space<vmem>>, vector<512x48xbf16>
    %c0_1 = arith.constant 0 : index
    %c0_2 = arith.constant 0 : index
    %1 = vector.load %arg1[%c0_1, %c0_2] : memref<48x128xbf16, #tpu.memory_space<vmem>>, vector<48x128xbf16>
    %cst = arith.constant dense<0.000000e+00> : vector<512x128xf32>
    %2 = tpu.matmul %0, %1, %cst {dimension_numbers = #tpu.dot_dimension_numbers<[1], [0], [0], [1], [0, 0, 1, 1], [], []>} : vector<512x48xbf16>, vector<48x128xbf16>, vector<512x128xf32> -> vector<512x128xf32>
    %c0_3 = arith.constant 0 : index
    %c0_4 = arith.constant 0 : index
    %3 = vector.load %arg2[%c0_3, %c0_4] : memref<1x128xf32, #tpu.memory_space<vmem>>, vector<1x128xf32>
    %4 = vector.broadcast %3 : vector<1x128xf32> to vector<512x128xf32>
    %5 = arith.addf %2, %4 : vector<512x128xf32>
    %c0_5 = arith.constant 0 : index
    %c0_6 = arith.constant 0 : index
    %6 = vector.load %arg3[%c0_5, %c0_6] : memref<512x128xf32, #tpu.memory_space<vmem>>, vector<512x128xf32>
    tpu.vector_store %arg3[%c0_5, %c0_6], %5 {strides = array<i32>} : memref<512x128xf32, #tpu.memory_space<vmem>>, vector<512x128xf32>,
    return
  }
}

module attributes {stable_mosaic.version = 11 : i64} {
  func.func @_fused_conv_kernel(%arg0: memref<128x128xbf16, #tpu.memory_space<vmem>>, %arg1: memref<128x128xbf16, #tpu.memory_space<vmem>>, %arg2: memref<1x128xf32, #tpu.memory_space<vmem>>, %arg3: memref<128x128xf32, #tpu.memory_space<vmem>>) attributes {dimension_semantics = [], scalar_prefetch = 0 : i64, scratch_operands = 0 : i64, tpu.core_type = #tpu.core_type<tc>} {
    %c0 = arith.constant 0 : index
    %c0_0 = arith.constant 0 : index
    %0 = vector.load %arg0[%c0, %c0_0] : memref<128x128xbf16, #tpu.memory_space<vmem>>, vector<128x128xbf16>
    %cst = arith.constant 0.000000e+00 : bf16
    %1 = vector.broadcast %cst : bf16 to vector<128x128xbf16>
    %2 = arith.cmpf oge, %0, %1 : vector<128x128xbf16>
    %cst_1 = arith.constant 2.001950e-01 : bf16
    %3 = vector.broadcast %cst_1 : bf16 to vector<128x128xbf16>
    %4 = arith.mulf %0, %3 : vector<128x128xbf16>
    %5 = arith.select %2, %0, %4 : vector<128x128xi1>, vector<128x128xbf16>
    %c0_2 = arith.constant 0 : index
    %c0_3 = arith.constant 0 : index
    %6 = vector.load %arg1[%c0_2, %c0_3] : memref<128x128xbf16, #tpu.memory_space<vmem>>, vector<128x128xbf16>
    %cst_4 = arith.constant dense<0.000000e+00> : vector<128x128xf32>
    %7 = tpu.matmul %5, %6, %cst_4 {dimension_numbers = #tpu.dot_dimension_numbers<[1], [0], [0], [1], [0, 0, 1, 1], [], []>} : vector<128x128xbf16>, vector<128x128xbf16>, vector<128x128xf32> -> vector<128x128xf32>
    %c0_5 = arith.constant 0 : index
    %c0_6 = arith.constant 0 : index
    %8 = vector.load %arg2[%c0_5, %c0_6] : memref<1x128xf32, #tpu.memory_space<vmem>>, vector<1x128xf32>
    %9 = vector.broadcast %8 : vector<1x128xf32> to vector<128x128xf32>
    %10 = arith.addf %7, %9 : vector<128x128xf32>
    %cst_7 = arith.constant dense<0.000000e+00> : vector<128xf32>
    %11 = vector.multi_reduction <add>, %10, %cst_7 [0] : vector<128x128xf32> to vector<128xf32>
    %12 = vector.shape_cast %11 : vector<128xf32> to vector<1x128xf32>
    %cst_8 = arith.constant 1.280000e+02 : f32
    %13 = vector.broadcast %cst_8 : f32 to vector<1x128xf32>
    %14 = arith.divf %12, %13 : vector<1x128xf32>
    %15 = arith.mulf %10, %10 : vector<128x128xf32>
    %cst_9 = arith.constant dense<0.000000e+00> : vector<128xf32>
    %16 = vector.multi_reduction <add>, %15, %cst_9 [0] : vector<128x128xf32> to vector<128xf32>
    %17 = vector.shape_cast %16 : vector<128xf32> to vector<1x128xf32>
    %cst_10 = arith.constant 1.280000e+02 : f32
    %18 = vector.broadcast %cst_10 : f32 to vector<1x128xf32>
    %19 = arith.divf %17, %18 : vector<1x128xf32>
    %20 = arith.mulf %14, %14 : vector<1x128xf32>
    %21 = arith.subf %19, %20 : vector<1x128xf32>
    %22 = vector.broadcast %14 : vector<1x128xf32> to vector<128x128xf32>
    %23 = arith.subf %10, %22 : vector<128x128xf32>
    %cst_11 = arith.constant 9.99999974E-6 : f32
    %24 = vector.broadcast %cst_11 : f32 to vector<1x128xf32>
    %25 = arith.addf %21, %24 : vector<1x128xf32>
    %26 = math.rsqrt %25 : vector<1x128xf32>
    %27 = vector.broadcast %26 : vector<1x128xf32> to vector<128x128xf32>
    %28 = arith.mulf %23, %27 : vector<128x128xf32>
    %c0_12 = arith.constant 0 : index
    %c0_13 = arith.constant 0 : index
    %29 = vector.load %arg3[%c0_12, %c0_13] : memref<128x128xf32, #tpu.memory_space<vmem>>, vector<128x128xf32>
    tpu.vector_store %arg3[%c0_12, %c0_13], %28 {strides = array<i32>} : memref<128x128xf32, #tpu.memory_space<vmem>>, vector<128x128xf32>,
    return
  }
}

module attributes {stable_mosaic.version = 11 : i64} {
  func.func @_fused_conv_kernel(%arg0: memref<32x256xbf16, #tpu.memory_space<vmem>>, %arg1: memref<256x128xbf16, #tpu.memory_space<vmem>>, %arg2: memref<1x128xf32, #tpu.memory_space<vmem>>, %arg3: memref<32x128xf32, #tpu.memory_space<vmem>>) attributes {dimension_semantics = [], scalar_prefetch = 0 : i64, scratch_operands = 0 : i64, tpu.core_type = #tpu.core_type<tc>} {
    %c0 = arith.constant 0 : index
    %c0_0 = arith.constant 0 : index
    %0 = vector.load %arg0[%c0, %c0_0] : memref<32x256xbf16, #tpu.memory_space<vmem>>, vector<32x256xbf16>
    %cst = arith.constant 0.000000e+00 : bf16
    %1 = vector.broadcast %cst : bf16 to vector<32x256xbf16>
    %2 = arith.cmpf oge, %0, %1 : vector<32x256xbf16>
    %cst_1 = arith.constant 2.001950e-01 : bf16
    %3 = vector.broadcast %cst_1 : bf16 to vector<32x256xbf16>
    %4 = arith.mulf %0, %3 : vector<32x256xbf16>
    %5 = arith.select %2, %0, %4 : vector<32x256xi1>, vector<32x256xbf16>
    %c0_2 = arith.constant 0 : index
    %c0_3 = arith.constant 0 : index
    %6 = vector.load %arg1[%c0_2, %c0_3] : memref<256x128xbf16, #tpu.memory_space<vmem>>, vector<256x128xbf16>
    %cst_4 = arith.constant dense<0.000000e+00> : vector<32x128xf32>
    %7 = tpu.matmul %5, %6, %cst_4 {dimension_numbers = #tpu.dot_dimension_numbers<[1], [0], [0], [1], [0, 0, 1, 1], [], []>} : vector<32x256xbf16>, vector<256x128xbf16>, vector<32x128xf32> -> vector<32x128xf32>
    %c0_5 = arith.constant 0 : index
    %c0_6 = arith.constant 0 : index
    %8 = vector.load %arg2[%c0_5, %c0_6] : memref<1x128xf32, #tpu.memory_space<vmem>>, vector<1x128xf32>
    %9 = vector.broadcast %8 : vector<1x128xf32> to vector<32x128xf32>
    %10 = arith.addf %7, %9 : vector<32x128xf32>
    %cst_7 = arith.constant dense<0.000000e+00> : vector<128xf32>
    %11 = vector.multi_reduction <add>, %10, %cst_7 [0] : vector<32x128xf32> to vector<128xf32>
    %12 = vector.shape_cast %11 : vector<128xf32> to vector<1x128xf32>
    %cst_8 = arith.constant 3.200000e+01 : f32
    %13 = vector.broadcast %cst_8 : f32 to vector<1x128xf32>
    %14 = arith.divf %12, %13 : vector<1x128xf32>
    %15 = arith.mulf %10, %10 : vector<32x128xf32>
    %cst_9 = arith.constant dense<0.000000e+00> : vector<128xf32>
    %16 = vector.multi_reduction <add>, %15, %cst_9 [0] : vector<32x128xf32> to vector<128xf32>
    %17 = vector.shape_cast %16 : vector<128xf32> to vector<1x128xf32>
    %cst_10 = arith.constant 3.200000e+01 : f32
    %18 = vector.broadcast %cst_10 : f32 to vector<1x128xf32>
    %19 = arith.divf %17, %18 : vector<1x128xf32>
    %20 = arith.mulf %14, %14 : vector<1x128xf32>
    %21 = arith.subf %19, %20 : vector<1x128xf32>
    %22 = vector.broadcast %14 : vector<1x128xf32> to vector<32x128xf32>
    %23 = arith.subf %10, %22 : vector<32x128xf32>
    %cst_11 = arith.constant 9.99999974E-6 : f32
    %24 = vector.broadcast %cst_11 : f32 to vector<1x128xf32>
    %25 = arith.addf %21, %24 : vector<1x128xf32>
    %26 = math.rsqrt %25 : vector<1x128xf32>
    %27 = vector.broadcast %26 : vector<1x128xf32> to vector<32x128xf32>
    %28 = arith.mulf %23, %27 : vector<32x128xf32>
    %c0_12 = arith.constant 0 : index
    %c0_13 = arith.constant 0 : index
    %29 = vector.load %arg3[%c0_12, %c0_13] : memref<32x128xf32, #tpu.memory_space<vmem>>, vector<32x128xf32>
    tpu.vector_store %arg3[%c0_12, %c0_13], %28 {strides = array<i32>} : memref<32x128xf32, #tpu.memory_space<vmem>>, vector<32x128xf32>,
    return
  }
}

module attributes {stable_mosaic.version = 11 : i64} {
  func.func @_fused_conv_kernel(%arg0: memref<8x512xbf16, #tpu.memory_space<vmem>>, %arg1: memref<512x128xbf16, #tpu.memory_space<vmem>>, %arg2: memref<1x128xf32, #tpu.memory_space<vmem>>, %arg3: memref<8x128xf32, #tpu.memory_space<vmem>>) attributes {dimension_semantics = [], scalar_prefetch = 0 : i64, scratch_operands = 0 : i64, tpu.core_type = #tpu.core_type<tc>} {
    %c0 = arith.constant 0 : index
    %c0_0 = arith.constant 0 : index
    %0 = vector.load %arg0[%c0, %c0_0] : memref<8x512xbf16, #tpu.memory_space<vmem>>, vector<8x512xbf16>
    %cst = arith.constant 0.000000e+00 : bf16
    %1 = vector.broadcast %cst : bf16 to vector<8x512xbf16>
    %2 = arith.cmpf oge, %0, %1 : vector<8x512xbf16>
    %cst_1 = arith.constant 2.001950e-01 : bf16
    %3 = vector.broadcast %cst_1 : bf16 to vector<8x512xbf16>
    %4 = arith.mulf %0, %3 : vector<8x512xbf16>
    %5 = arith.select %2, %0, %4 : vector<8x512xi1>, vector<8x512xbf16>
    %c0_2 = arith.constant 0 : index
    %c0_3 = arith.constant 0 : index
    %6 = vector.load %arg1[%c0_2, %c0_3] : memref<512x128xbf16, #tpu.memory_space<vmem>>, vector<512x128xbf16>
    %cst_4 = arith.constant dense<0.000000e+00> : vector<8x128xf32>
    %7 = tpu.matmul %5, %6, %cst_4 {dimension_numbers = #tpu.dot_dimension_numbers<[1], [0], [0], [1], [0, 0, 1, 1], [], []>} : vector<8x512xbf16>, vector<512x128xbf16>, vector<8x128xf32> -> vector<8x128xf32>
    %c0_5 = arith.constant 0 : index
    %c0_6 = arith.constant 0 : index
    %8 = vector.load %arg2[%c0_5, %c0_6] : memref<1x128xf32, #tpu.memory_space<vmem>>, vector<1x128xf32>
    %9 = vector.broadcast %8 : vector<1x128xf32> to vector<8x128xf32>
    %10 = arith.addf %7, %9 : vector<8x128xf32>
    %cst_7 = arith.constant dense<0.000000e+00> : vector<128xf32>
    %11 = vector.multi_reduction <add>, %10, %cst_7 [0] : vector<8x128xf32> to vector<128xf32>
    %12 = vector.shape_cast %11 : vector<128xf32> to vector<1x128xf32>
    %cst_8 = arith.constant 8.000000e+00 : f32
    %13 = vector.broadcast %cst_8 : f32 to vector<1x128xf32>
    %14 = arith.divf %12, %13 : vector<1x128xf32>
    %15 = arith.mulf %10, %10 : vector<8x128xf32>
    %cst_9 = arith.constant dense<0.000000e+00> : vector<128xf32>
    %16 = vector.multi_reduction <add>, %15, %cst_9 [0] : vector<8x128xf32> to vector<128xf32>
    %17 = vector.shape_cast %16 : vector<128xf32> to vector<1x128xf32>
    %cst_10 = arith.constant 8.000000e+00 : f32
    %18 = vector.broadcast %cst_10 : f32 to vector<1x128xf32>
    %19 = arith.divf %17, %18 : vector<1x128xf32>
    %20 = arith.mulf %14, %14 : vector<1x128xf32>
    %21 = arith.subf %19, %20 : vector<1x128xf32>
    %22 = vector.broadcast %14 : vector<1x128xf32> to vector<8x128xf32>
    %23 = arith.subf %10, %22 : vector<8x128xf32>
    %cst_11 = arith.constant 9.99999974E-6 : f32
    %24 = vector.broadcast %cst_11 : f32 to vector<1x128xf32>
    %25 = arith.addf %21, %24 : vector<1x128xf32>
    %26 = math.rsqrt %25 : vector<1x128xf32>
    %27 = vector.broadcast %26 : vector<1x128xf32> to vector<8x128xf32>
    %28 = arith.mulf %23, %27 : vector<8x128xf32>
    %c0_12 = arith.constant 0 : index
    %c0_13 = arith.constant 0 : index
    %29 = vector.load %arg3[%c0_12, %c0_13] : memref<8x128xf32, #tpu.memory_space<vmem>>, vector<8x128xf32>
    tpu.vector_store %arg3[%c0_12, %c0_13], %28 {strides = array<i32>} : memref<8x128xf32, #tpu.memory_space<vmem>>, vector<8x128xf32>,
    return
  }
}

module attributes {stable_mosaic.version = 11 : i64} {
  func.func @_fused_conv_kernel(%arg0: memref<2x1024xbf16, #tpu.memory_space<vmem>>, %arg1: memref<1024x128xbf16, #tpu.memory_space<vmem>>, %arg2: memref<1x128xf32, #tpu.memory_space<vmem>>, %arg3: memref<2x128xf32, #tpu.memory_space<vmem>>) attributes {dimension_semantics = [], scalar_prefetch = 0 : i64, scratch_operands = 0 : i64, tpu.core_type = #tpu.core_type<tc>} {
    %c0 = arith.constant 0 : index
    %c0_0 = arith.constant 0 : index
    %0 = vector.load %arg0[%c0, %c0_0] : memref<2x1024xbf16, #tpu.memory_space<vmem>>, vector<2x1024xbf16>
    %cst = arith.constant 0.000000e+00 : bf16
    %1 = vector.broadcast %cst : bf16 to vector<2x1024xbf16>
    %2 = arith.cmpf oge, %0, %1 : vector<2x1024xbf16>
    %cst_1 = arith.constant 2.001950e-01 : bf16
    %3 = vector.broadcast %cst_1 : bf16 to vector<2x1024xbf16>
    %4 = arith.mulf %0, %3 : vector<2x1024xbf16>
    %5 = arith.select %2, %0, %4 : vector<2x1024xi1>, vector<2x1024xbf16>
    %c0_2 = arith.constant 0 : index
    %c0_3 = arith.constant 0 : index
    %6 = vector.load %arg1[%c0_2, %c0_3] : memref<1024x128xbf16, #tpu.memory_space<vmem>>, vector<1024x128xbf16>
    %cst_4 = arith.constant dense<0.000000e+00> : vector<2x128xf32>
    %7 = tpu.matmul %5, %6, %cst_4 {dimension_numbers = #tpu.dot_dimension_numbers<[1], [0], [0], [1], [0, 0, 1, 1], [], []>} : vector<2x1024xbf16>, vector<1024x128xbf16>, vector<2x128xf32> -> vector<2x128xf32>
    %c0_5 = arith.constant 0 : index
    %c0_6 = arith.constant 0 : index
    %8 = vector.load %arg2[%c0_5, %c0_6] : memref<1x128xf32, #tpu.memory_space<vmem>>, vector<1x128xf32>
    %9 = vector.broadcast %8 : vector<1x128xf32> to vector<2x128xf32>
    %10 = arith.addf %7, %9 : vector<2x128xf32>
    %c0_7 = arith.constant 0 : index
    %c0_8 = arith.constant 0 : index
    %11 = vector.load %arg3[%c0_7, %c0_8] : memref<2x128xf32, #tpu.memory_space<vmem>>, vector<2x128xf32>
    tpu.vector_store %arg3[%c0_7, %c0_8], %10 {strides = array<i32>} : memref<2x128xf32, #tpu.memory_space<vmem>>, vector<2x128xf32>,
    return
  }
}

module attributes {stable_mosaic.version = 11 : i64} {
  func.func @_fused_conv_kernel(%arg0: memref<8x256xbf16, #tpu.memory_space<vmem>>, %arg1: memref<256x256xbf16, #tpu.memory_space<vmem>>, %arg2: memref<1x256xf32, #tpu.memory_space<vmem>>, %arg3: memref<8x256xf32, #tpu.memory_space<vmem>>, %arg4: memref<256x256xf32, #tpu.memory_space<vmem>>, %arg5: memref<8x256xf32, #tpu.memory_space<vmem>>) attributes {dimension_semantics = [], scalar_prefetch = 0 : i64, scratch_operands = 0 : i64, tpu.core_type = #tpu.core_type<tc>} {
    %c0 = arith.constant 0 : index
    %c0_0 = arith.constant 0 : index
    %0 = vector.load %arg0[%c0, %c0_0] : memref<8x256xbf16, #tpu.memory_space<vmem>>, vector<8x256xbf16>
    %cst = arith.constant 0.000000e+00 : bf16
    %1 = vector.broadcast %cst : bf16 to vector<8x256xbf16>
    %2 = arith.maximumf %0, %1 : vector<8x256xbf16>
    %c0_1 = arith.constant 0 : index
    %c0_2 = arith.constant 0 : index
    %3 = vector.load %arg1[%c0_1, %c0_2] : memref<256x256xbf16, #tpu.memory_space<vmem>>, vector<256x256xbf16>
    %cst_3 = arith.constant dense<0.000000e+00> : vector<8x256xf32>
    %4 = tpu.matmul %2, %3, %cst_3 {dimension_numbers = #tpu.dot_dimension_numbers<[1], [0], [0], [1], [0, 0, 1, 1], [], []>} : vector<8x256xbf16>, vector<256x256xbf16>, vector<8x256xf32> -> vector<8x256xf32>
    %c0_4 = arith.constant 0 : index
    %c0_5 = arith.constant 0 : index
    %5 = vector.load %arg2[%c0_4, %c0_5] : memref<1x256xf32, #tpu.memory_space<vmem>>, vector<1x256xf32>
    %6 = vector.broadcast %5 : vector<1x256xf32> to vector<8x256xf32>
    %7 = arith.addf %4, %6 : vector<8x256xf32>
    %c0_6 = arith.constant 0 : index
    %c0_7 = arith.constant 0 : index
    %8 = vector.load %arg3[%c0_6, %c0_7] : memref<8x256xf32, #tpu.memory_space<vmem>>, vector<8x256xf32>
    %9 = arith.mulf %7, %8 : vector<8x256xf32>
    %cst_8 = arith.constant dense<0.000000e+00> : vector<256xf32>
    %10 = vector.multi_reduction <add>, %9, %cst_8 [0] : vector<8x256xf32> to vector<256xf32>
    %11 = vector.shape_cast %10 : vector<256xf32> to vector<1x256xf32>
    %12 = arith.mulf %9, %7 : vector<8x256xf32>
    %cst_9 = arith.constant dense<0.000000e+00> : vector<256xf32>
    %13 = vector.multi_reduction <add>, %12, %cst_9 [0] : vector<8x256xf32> to vector<256xf32>
    %14 = vector.shape_cast %13 : vector<256xf32> to vector<1x256xf32>
    %c0_10 = arith.constant 0 : index
    %c0_11 = arith.constant 0 : index
    %15 = vector.load %arg4[%c0_10, %c0_11] : memref<256x256xf32, #tpu.memory_space<vmem>>, vector<256x256xf32>
    %cst_12 = arith.constant dense<0.000000e+00> : vector<1x256xf32>
    %16 = tpu.matmul %11, %15, %cst_12 {dimension_numbers = #tpu.dot_dimension_numbers<[1], [0], [0], [1], [0, 0, 1, 1], [], []>} : vector<1x256xf32>, vector<256x256xf32>, vector<1x256xf32> -> vector<1x256xf32>
    %cst_13 = arith.constant 1.250000e-01 : f32
    %17 = vector.broadcast %cst_13 : f32 to vector<1x256xf32>
    %18 = arith.mulf %16, %17 : vector<1x256xf32>
    %c0_14 = arith.constant 0 : index
    %c0_15 = arith.constant 0 : index
    %19 = vector.load %arg4[%c0_14, %c0_15] : memref<256x256xf32, #tpu.memory_space<vmem>>, vector<256x256xf32>
    %cst_16 = arith.constant dense<0.000000e+00> : vector<1x256xf32>
    %20 = tpu.matmul %14, %19, %cst_16 {dimension_numbers = #tpu.dot_dimension_numbers<[1], [0], [0], [1], [0, 0, 1, 1], [], []>} : vector<1x256xf32>, vector<256x256xf32>, vector<1x256xf32> -> vector<1x256xf32>
    %cst_17 = arith.constant 1.250000e-01 : f32
    %21 = vector.broadcast %cst_17 : f32 to vector<1x256xf32>
    %22 = arith.mulf %20, %21 : vector<1x256xf32>
    %23 = arith.mulf %18, %18 : vector<1x256xf32>
    %24 = arith.subf %22, %23 : vector<1x256xf32>
    %25 = vector.broadcast %18 : vector<1x256xf32> to vector<8x256xf32>
    %26 = arith.subf %7, %25 : vector<8x256xf32>
    %cst_18 = arith.constant 9.99999974E-6 : f32
    %27 = vector.broadcast %cst_18 : f32 to vector<1x256xf32>
    %28 = arith.addf %24, %27 : vector<1x256xf32>
    %29 = math.rsqrt %28 : vector<1x256xf32>
    %30 = vector.broadcast %29 : vector<1x256xf32> to vector<8x256xf32>
    %31 = arith.mulf %26, %30 : vector<8x256xf32>
    %c0_19 = arith.constant 0 : index
    %c0_20 = arith.constant 0 : index
    %32 = vector.load %arg5[%c0_19, %c0_20] : memref<8x256xf32, #tpu.memory_space<vmem>>, vector<8x256xf32>
    tpu.vector_store %arg5[%c0_19, %c0_20], %31 {strides = array<i32>} : memref<8x256xf32, #tpu.memory_space<vmem>>, vector<8x256xf32>,
    return
  }
}

module attributes {stable_mosaic.version = 11 : i64} {
  func.func @_fused_conv_kernel(%arg0: memref<18x512xbf16, #tpu.memory_space<vmem>>, %arg1: memref<512x128xbf16, #tpu.memory_space<vmem>>, %arg2: memref<1x128xf32, #tpu.memory_space<vmem>>, %arg3: memref<18x128xf32, #tpu.memory_space<vmem>>, %arg4: memref<128x128xf32, #tpu.memory_space<vmem>>, %arg5: memref<18x128xf32, #tpu.memory_space<vmem>>) attributes {dimension_semantics = [], scalar_prefetch = 0 : i64, scratch_operands = 0 : i64, tpu.core_type = #tpu.core_type<tc>} {
    %c0 = arith.constant 0 : index
    %c0_0 = arith.constant 0 : index
    %0 = vector.load %arg0[%c0, %c0_0] : memref<18x512xbf16, #tpu.memory_space<vmem>>, vector<18x512xbf16>
    %cst = arith.constant 0.000000e+00 : bf16
    %1 = vector.broadcast %cst : bf16 to vector<18x512xbf16>
    %2 = arith.maximumf %0, %1 : vector<18x512xbf16>
    %c0_1 = arith.constant 0 : index
    %c0_2 = arith.constant 0 : index
    %3 = vector.load %arg1[%c0_1, %c0_2] : memref<512x128xbf16, #tpu.memory_space<vmem>>, vector<512x128xbf16>
    %cst_3 = arith.constant dense<0.000000e+00> : vector<18x128xf32>
    %4 = tpu.matmul %2, %3, %cst_3 {dimension_numbers = #tpu.dot_dimension_numbers<[1], [0], [0], [1], [0, 0, 1, 1], [], []>} : vector<18x512xbf16>, vector<512x128xbf16>, vector<18x128xf32> -> vector<18x128xf32>
    %c0_4 = arith.constant 0 : index
    %c0_5 = arith.constant 0 : index
    %5 = vector.load %arg2[%c0_4, %c0_5] : memref<1x128xf32, #tpu.memory_space<vmem>>, vector<1x128xf32>
    %6 = vector.broadcast %5 : vector<1x128xf32> to vector<18x128xf32>
    %7 = arith.addf %4, %6 : vector<18x128xf32>
    %c0_6 = arith.constant 0 : index
    %c0_7 = arith.constant 0 : index
    %8 = vector.load %arg3[%c0_6, %c0_7] : memref<18x128xf32, #tpu.memory_space<vmem>>, vector<18x128xf32>
    %9 = arith.mulf %7, %8 : vector<18x128xf32>
    %cst_8 = arith.constant dense<0.000000e+00> : vector<128xf32>
    %10 = vector.multi_reduction <add>, %9, %cst_8 [0] : vector<18x128xf32> to vector<128xf32>
    %11 = vector.shape_cast %10 : vector<128xf32> to vector<1x128xf32>
    %12 = arith.mulf %9, %7 : vector<18x128xf32>
    %cst_9 = arith.constant dense<0.000000e+00> : vector<128xf32>
    %13 = vector.multi_reduction <add>, %12, %cst_9 [0] : vector<18x128xf32> to vector<128xf32>
    %14 = vector.shape_cast %13 : vector<128xf32> to vector<1x128xf32>
    %c0_10 = arith.constant 0 : index
    %c0_11 = arith.constant 0 : index
    %15 = vector.load %arg4[%c0_10, %c0_11] : memref<128x128xf32, #tpu.memory_space<vmem>>, vector<128x128xf32>
    %cst_12 = arith.constant dense<0.000000e+00> : vector<1x128xf32>
    %16 = tpu.matmul %11, %15, %cst_12 {dimension_numbers = #tpu.dot_dimension_numbers<[1], [0], [0], [1], [0, 0, 1, 1], [], []>} : vector<1x128xf32>, vector<128x128xf32>, vector<1x128xf32> -> vector<1x128xf32>
    %cst_13 = arith.constant 3.125000e-02 : f32
    %17 = vector.broadcast %cst_13 : f32 to vector<1x128xf32>
    %18 = arith.mulf %16, %17 : vector<1x128xf32>
    %c0_14 = arith.constant 0 : index
    %c0_15 = arith.constant 0 : index
    %19 = vector.load %arg4[%c0_14, %c0_15] : memref<128x128xf32, #tpu.memory_space<vmem>>, vector<128x128xf32>
    %cst_16 = arith.constant dense<0.000000e+00> : vector<1x128xf32>
    %20 = tpu.matmul %14, %19, %cst_16 {dimension_numbers = #tpu.dot_dimension_numbers<[1], [0], [0], [1], [0, 0, 1, 1], [], []>} : vector<1x128xf32>, vector<128x128xf32>, vector<1x128xf32> -> vector<1x128xf32>
    %cst_17 = arith.constant 3.125000e-02 : f32
    %21 = vector.broadcast %cst_17 : f32 to vector<1x128xf32>
    %22 = arith.mulf %20, %21 : vector<1x128xf32>
    %23 = arith.mulf %18, %18 : vector<1x128xf32>
    %24 = arith.subf %22, %23 : vector<1x128xf32>
    %25 = vector.broadcast %18 : vector<1x128xf32> to vector<18x128xf32>
    %26 = arith.subf %7, %25 : vector<18x128xf32>
    %cst_18 = arith.constant 9.99999974E-6 : f32
    %27 = vector.broadcast %cst_18 : f32 to vector<1x128xf32>
    %28 = arith.addf %24, %27 : vector<1x128xf32>
    %29 = math.rsqrt %28 : vector<1x128xf32>
    %30 = vector.broadcast %29 : vector<1x128xf32> to vector<18x128xf32>
    %31 = arith.mulf %26, %30 : vector<18x128xf32>
    %c0_19 = arith.constant 0 : index
    %c0_20 = arith.constant 0 : index
    %32 = vector.load %arg5[%c0_19, %c0_20] : memref<18x128xf32, #tpu.memory_space<vmem>>, vector<18x128xf32>
    tpu.vector_store %arg5[%c0_19, %c0_20], %31 {strides = array<i32>} : memref<18x128xf32, #tpu.memory_space<vmem>>, vector<18x128xf32>,
    return
  }
}

module attributes {stable_mosaic.version = 11 : i64} {
  func.func @_shift_fuse_kernel(%arg0: memref<8x32xf32, #tpu.memory_space<vmem>>, %arg1: memref<24x32xf32, #tpu.memory_space<vmem>>, %arg2: memref<8x24xf32, #tpu.memory_space<vmem>>, %arg3: memref<8x32xf32, #tpu.memory_space<vmem>>) attributes {dimension_semantics = [], scalar_prefetch = 0 : i64, scratch_operands = 0 : i64, tpu.core_type = #tpu.core_type<tc>} {
    %c0 = arith.constant 0 : index
    %c0_0 = arith.constant 0 : index
    %0 = vector.load %arg0[%c0, %c0_0] : memref<8x32xf32, #tpu.memory_space<vmem>>, vector<8x32xf32>
    %c0_1 = arith.constant 0 : index
    %c0_2 = arith.constant 0 : index
    %1 = vector.load %arg1[%c0_1, %c0_2] : memref<24x32xf32, #tpu.memory_space<vmem>>, vector<24x32xf32>
    %2 = arith.mulf %0, %0 : vector<8x32xf32>
    %cst = arith.constant dense<0.000000e+00> : vector<8xf32>
    %3 = vector.multi_reduction <add>, %2, %cst [1] : vector<8x32xf32> to vector<8xf32>
    %4 = vector.shape_cast %3 : vector<8xf32> to vector<8x1xf32>
    %cst_3 = arith.constant 9.99999996E-13 : f32
    %5 = vector.broadcast %cst_3 : f32 to vector<8x1xf32>
    %6 = arith.maximumf %4, %5 : vector<8x1xf32>
    %7 = math.rsqrt %6 : vector<8x1xf32>
    %8 = vector.broadcast %7 : vector<8x1xf32> to vector<8x32xf32>
    %9 = arith.mulf %0, %8 : vector<8x32xf32>
    %10 = arith.mulf %1, %1 : vector<24x32xf32>
    %cst_4 = arith.constant dense<0.000000e+00> : vector<24xf32>
    %11 = vector.multi_reduction <add>, %10, %cst_4 [1] : vector<24x32xf32> to vector<24xf32>
    %12 = vector.shape_cast %11 : vector<24xf32> to vector<24x1xf32>
    %cst_5 = arith.constant 9.99999996E-13 : f32
    %13 = vector.broadcast %cst_5 : f32 to vector<24x1xf32>
    %14 = arith.maximumf %12, %13 : vector<24x1xf32>
    %15 = math.rsqrt %14 : vector<24x1xf32>
    %16 = vector.broadcast %15 : vector<24x1xf32> to vector<24x32xf32>
    %17 = arith.mulf %1, %16 : vector<24x32xf32>
    %18 = tpu.transpose %17, [1, 0] : vector<24x32xf32> -> vector<32x24xf32>
    %cst_6 = arith.constant dense<0.000000e+00> : vector<8x24xf32>
    %19 = tpu.matmul %9, %18, %cst_6 {dimension_numbers = #tpu.dot_dimension_numbers<[1], [0], [0], [1], [0, 0, 1, 1], [], []>} : vector<8x32xf32>, vector<32x24xf32>, vector<8x24xf32> -> vector<8x24xf32>
    %c0_7 = arith.constant 0 : index
    %c0_8 = arith.constant 0 : index
    %20 = vector.load %arg2[%c0_7, %c0_8] : memref<8x24xf32, #tpu.memory_space<vmem>>, vector<8x24xf32>
    %cst_9 = arith.constant 5.000000e-01 : f32
    %21 = vector.broadcast %cst_9 : f32 to vector<8x24xf32>
    %22 = arith.cmpf ogt, %20, %21 : vector<8x24xf32>
    %cst_10 = arith.constant -1.000000e+30 : f32
    %23 = vector.broadcast %cst_10 : f32 to vector<8x24xf32>
    %24 = arith.select %22, %19, %23 : vector<8x24xi1>, vector<8x24xf32>
    %25 = tpu.iota {dimensions = array<i32: 1>} : vector<8x24xi32>
    %cst_11 = arith.constant dense<0xFF800000> : vector<8xf32>
    %26 = vector.multi_reduction <maximumf>, %24, %cst_11 [1] : vector<8x24xf32> to vector<8xf32>
    %27 = vector.shape_cast %26 : vector<8xf32> to vector<8x1xf32>
    %28 = vector.broadcast %27 : vector<8x1xf32> to vector<8x24xf32>
    %29 = arith.cmpf oge, %24, %28 : vector<8x24xf32>
    %c24_i32 = arith.constant 24 : i32
    %30 = vector.broadcast %c24_i32 : i32 to vector<8x24xi32>
    %31 = arith.select %29, %25, %30 : vector<8x24xi1>, vector<8x24xi32>
    %cst_12 = arith.constant dense<2147483647> : vector<8xi32>
    %32 = vector.multi_reduction <minsi>, %31, %cst_12 [1] : vector<8x24xi32> to vector<8xi32>
    %33 = vector.shape_cast %32 : vector<8xi32> to vector<8x1xi32>
    %34 = vector.broadcast %33 : vector<8x1xi32> to vector<8x24xi32>
    %35 = arith.cmpi eq, %25, %34 : vector<8x24xi32>
    %36 = arith.extui %35 : vector<8x24xi1> to vector<8x24xi32>
    %37 = arith.sitofp %36 : vector<8x24xi32> to vector<8x24xf32>
    %cst_13 = arith.constant dense<0.000000e+00> : vector<8x32xf32>
    %38 = tpu.matmul %37, %1, %cst_13 {dimension_numbers = #tpu.dot_dimension_numbers<[1], [0], [0], [1], [0, 0, 1, 1], [], []>} : vector<8x24xf32>, vector<24x32xf32>, vector<8x32xf32> -> vector<8x32xf32>
    %39 = arith.mulf %38, %0 : vector<8x32xf32>
    %c0_14 = arith.constant 0 : index
    %c0_15 = arith.constant 0 : index
    %40 = vector.load %arg3[%c0_14, %c0_15] : memref<8x32xf32, #tpu.memory_space<vmem>>, vector<8x32xf32>
    tpu.vector_store %arg3[%c0_14, %c0_15], %39 {strides = array<i32>} : memref<8x32xf32, #tpu.memory_space<vmem>>, vector<8x32xf32>,
    return
  }
}

module attributes {stable_mosaic.version = 11 : i64} {
  func.func @_fused_conv_kernel(%arg0: memref<32x576xbf16, #tpu.memory_space<vmem>>, %arg1: memref<576x128xbf16, #tpu.memory_space<vmem>>, %arg2: memref<1x128xf32, #tpu.memory_space<vmem>>, %arg3: memref<32x128xf32, #tpu.memory_space<vmem>>) attributes {dimension_semantics = [], scalar_prefetch = 0 : i64, scratch_operands = 0 : i64, tpu.core_type = #tpu.core_type<tc>} {
    %c0 = arith.constant 0 : index
    %c0_0 = arith.constant 0 : index
    %0 = vector.load %arg0[%c0, %c0_0] : memref<32x576xbf16, #tpu.memory_space<vmem>>, vector<32x576xbf16>
    %c0_1 = arith.constant 0 : index
    %c0_2 = arith.constant 0 : index
    %1 = vector.load %arg1[%c0_1, %c0_2] : memref<576x128xbf16, #tpu.memory_space<vmem>>, vector<576x128xbf16>
    %cst = arith.constant dense<0.000000e+00> : vector<32x128xf32>
    %2 = tpu.matmul %0, %1, %cst {dimension_numbers = #tpu.dot_dimension_numbers<[1], [0], [0], [1], [0, 0, 1, 1], [], []>} : vector<32x576xbf16>, vector<576x128xbf16>, vector<32x128xf32> -> vector<32x128xf32>
    %c0_3 = arith.constant 0 : index
    %c0_4 = arith.constant 0 : index
    %3 = vector.load %arg2[%c0_3, %c0_4] : memref<1x128xf32, #tpu.memory_space<vmem>>, vector<1x128xf32>
    %4 = vector.broadcast %3 : vector<1x128xf32> to vector<32x128xf32>
    %5 = arith.addf %2, %4 : vector<32x128xf32>
    %6 = vector.extract_strided_slice %5 {offsets = [0, 0], sizes = [16, 128], strides = [1, 1]} : vector<32x128xf32> to vector<16x128xf32>
    %cst_5 = arith.constant dense<0.000000e+00> : vector<128xf32>
    %7 = vector.multi_reduction <add>, %6, %cst_5 [0] : vector<16x128xf32> to vector<128xf32>
    %8 = vector.shape_cast %7 : vector<128xf32> to vector<1x128xf32>
    %cst_6 = arith.constant 1.600000e+01 : f32
    %9 = vector.broadcast %cst_6 : f32 to vector<1x128xf32>
    %10 = arith.divf %8, %9 : vector<1x128xf32>
    %11 = arith.mulf %6, %6 : vector<16x128xf32>
    %cst_7 = arith.constant dense<0.000000e+00> : vector<128xf32>
    %12 = vector.multi_reduction <add>, %11, %cst_7 [0] : vector<16x128xf32> to vector<128xf32>
    %13 = vector.shape_cast %12 : vector<128xf32> to vector<1x128xf32>
    %cst_8 = arith.constant 1.600000e+01 : f32
    %14 = vector.broadcast %cst_8 : f32 to vector<1x128xf32>
    %15 = arith.divf %13, %14 : vector<1x128xf32>
    %16 = arith.mulf %10, %10 : vector<1x128xf32>
    %17 = arith.subf %15, %16 : vector<1x128xf32>
    %18 = vector.broadcast %10 : vector<1x128xf32> to vector<16x128xf32>
    %19 = arith.subf %6, %18 : vector<16x128xf32>
    %cst_9 = arith.constant 9.99999974E-6 : f32
    %20 = vector.broadcast %cst_9 : f32 to vector<1x128xf32>
    %21 = arith.addf %17, %20 : vector<1x128xf32>
    %22 = math.rsqrt %21 : vector<1x128xf32>
    %23 = vector.broadcast %22 : vector<1x128xf32> to vector<16x128xf32>
    %24 = arith.mulf %19, %23 : vector<16x128xf32>
    %25 = vector.extract_strided_slice %5 {offsets = [16, 0], sizes = [16, 128], strides = [1, 1]} : vector<32x128xf32> to vector<16x128xf32>
    %cst_10 = arith.constant dense<0.000000e+00> : vector<128xf32>
    %26 = vector.multi_reduction <add>, %25, %cst_10 [0] : vector<16x128xf32> to vector<128xf32>
    %27 = vector.shape_cast %26 : vector<128xf32> to vector<1x128xf32>
    %cst_11 = arith.constant 1.600000e+01 : f32
    %28 = vector.broadcast %cst_11 : f32 to vector<1x128xf32>
    %29 = arith.divf %27, %28 : vector<1x128xf32>
    %30 = arith.mulf %25, %25 : vector<16x128xf32>
    %cst_12 = arith.constant dense<0.000000e+00> : vector<128xf32>
    %31 = vector.multi_reduction <add>, %30, %cst_12 [0] : vector<16x128xf32> to vector<128xf32>
    %32 = vector.shape_cast %31 : vector<128xf32> to vector<1x128xf32>
    %cst_13 = arith.constant 1.600000e+01 : f32
    %33 = vector.broadcast %cst_13 : f32 to vector<1x128xf32>
    %34 = arith.divf %32, %33 : vector<1x128xf32>
    %35 = arith.mulf %29, %29 : vector<1x128xf32>
    %36 = arith.subf %34, %35 : vector<1x128xf32>
    %37 = vector.broadcast %29 : vector<1x128xf32> to vector<16x128xf32>
    %38 = arith.subf %25, %37 : vector<16x128xf32>
    %cst_14 = arith.constant 9.99999974E-6 : f32
    %39 = vector.broadcast %cst_14 : f32 to vector<1x128xf32>
    %40 = arith.addf %36, %39 : vector<1x128xf32>
    %41 = math.rsqrt %40 : vector<1x128xf32>
    %42 = vector.broadcast %41 : vector<1x128xf32> to vector<16x128xf32>
    %43 = arith.mulf %38, %42 : vector<16x128xf32>
    %44 = tpu.concatenate %24, %43 in 0 : vector<16x128xf32>, vector<16x128xf32> -> vector<32x128xf32>
    %c0_15 = arith.constant 0 : index
    %c0_16 = arith.constant 0 : index
    %45 = vector.load %arg3[%c0_15, %c0_16] : memref<32x128xf32, #tpu.memory_space<vmem>>, vector<32x128xf32>
    tpu.vector_store %arg3[%c0_15, %c0_16], %44 {strides = array<i32>} : memref<32x128xf32, #tpu.memory_space<vmem>>, vector<32x128xf32>,
    return
  }
}

module attributes {stable_mosaic.version = 11 : i64} {
  func.func @_fused_conv_kernel(%arg0: memref<32x288xbf16, #tpu.memory_space<vmem>>, %arg1: memref<288x128xbf16, #tpu.memory_space<vmem>>, %arg2: memref<1x128xf32, #tpu.memory_space<vmem>>, %arg3: memref<32x128xf32, #tpu.memory_space<vmem>>) attributes {dimension_semantics = [], scalar_prefetch = 0 : i64, scratch_operands = 0 : i64, tpu.core_type = #tpu.core_type<tc>} {
    %c0 = arith.constant 0 : index
    %c0_0 = arith.constant 0 : index
    %0 = vector.load %arg0[%c0, %c0_0] : memref<32x288xbf16, #tpu.memory_space<vmem>>, vector<32x288xbf16>
    %cst = arith.constant 0.000000e+00 : bf16
    %1 = vector.broadcast %cst : bf16 to vector<32x288xbf16>
    %2 = arith.maximumf %0, %1 : vector<32x288xbf16>
    %c0_1 = arith.constant 0 : index
    %c0_2 = arith.constant 0 : index
    %3 = vector.load %arg1[%c0_1, %c0_2] : memref<288x128xbf16, #tpu.memory_space<vmem>>, vector<288x128xbf16>
    %cst_3 = arith.constant dense<0.000000e+00> : vector<32x128xf32>
    %4 = tpu.matmul %2, %3, %cst_3 {dimension_numbers = #tpu.dot_dimension_numbers<[1], [0], [0], [1], [0, 0, 1, 1], [], []>} : vector<32x288xbf16>, vector<288x128xbf16>, vector<32x128xf32> -> vector<32x128xf32>
    %c0_4 = arith.constant 0 : index
    %c0_5 = arith.constant 0 : index
    %5 = vector.load %arg2[%c0_4, %c0_5] : memref<1x128xf32, #tpu.memory_space<vmem>>, vector<1x128xf32>
    %6 = vector.broadcast %5 : vector<1x128xf32> to vector<32x128xf32>
    %7 = arith.addf %4, %6 : vector<32x128xf32>
    %8 = vector.extract_strided_slice %7 {offsets = [0, 0], sizes = [16, 128], strides = [1, 1]} : vector<32x128xf32> to vector<16x128xf32>
    %cst_6 = arith.constant dense<0.000000e+00> : vector<128xf32>
    %9 = vector.multi_reduction <add>, %8, %cst_6 [0] : vector<16x128xf32> to vector<128xf32>
    %10 = vector.shape_cast %9 : vector<128xf32> to vector<1x128xf32>
    %cst_7 = arith.constant 1.600000e+01 : f32
    %11 = vector.broadcast %cst_7 : f32 to vector<1x128xf32>
    %12 = arith.divf %10, %11 : vector<1x128xf32>
    %13 = arith.mulf %8, %8 : vector<16x128xf32>
    %cst_8 = arith.constant dense<0.000000e+00> : vector<128xf32>
    %14 = vector.multi_reduction <add>, %13, %cst_8 [0] : vector<16x128xf32> to vector<128xf32>
    %15 = vector.shape_cast %14 : vector<128xf32> to vector<1x128xf32>
    %cst_9 = arith.constant 1.600000e+01 : f32
    %16 = vector.broadcast %cst_9 : f32 to vector<1x128xf32>
    %17 = arith.divf %15, %16 : vector<1x128xf32>
    %18 = arith.mulf %12, %12 : vector<1x128xf32>
    %19 = arith.subf %17, %18 : vector<1x128xf32>
    %20 = vector.broadcast %12 : vector<1x128xf32> to vector<16x128xf32>
    %21 = arith.subf %8, %20 : vector<16x128xf32>
    %cst_10 = arith.constant 9.99999974E-6 : f32
    %22 = vector.broadcast %cst_10 : f32 to vector<1x128xf32>
    %23 = arith.addf %19, %22 : vector<1x128xf32>
    %24 = math.rsqrt %23 : vector<1x128xf32>
    %25 = vector.broadcast %24 : vector<1x128xf32> to vector<16x128xf32>
    %26 = arith.mulf %21, %25 : vector<16x128xf32>
    %27 = vector.extract_strided_slice %7 {offsets = [16, 0], sizes = [16, 128], strides = [1, 1]} : vector<32x128xf32> to vector<16x128xf32>
    %cst_11 = arith.constant dense<0.000000e+00> : vector<128xf32>
    %28 = vector.multi_reduction <add>, %27, %cst_11 [0] : vector<16x128xf32> to vector<128xf32>
    %29 = vector.shape_cast %28 : vector<128xf32> to vector<1x128xf32>
    %cst_12 = arith.constant 1.600000e+01 : f32
    %30 = vector.broadcast %cst_12 : f32 to vector<1x128xf32>
    %31 = arith.divf %29, %30 : vector<1x128xf32>
    %32 = arith.mulf %27, %27 : vector<16x128xf32>
    %cst_13 = arith.constant dense<0.000000e+00> : vector<128xf32>
    %33 = vector.multi_reduction <add>, %32, %cst_13 [0] : vector<16x128xf32> to vector<128xf32>
    %34 = vector.shape_cast %33 : vector<128xf32> to vector<1x128xf32>
    %cst_14 = arith.constant 1.600000e+01 : f32
    %35 = vector.broadcast %cst_14 : f32 to vector<1x128xf32>
    %36 = arith.divf %34, %35 : vector<1x128xf32>
    %37 = arith.mulf %31, %31 : vector<1x128xf32>
    %38 = arith.subf %36, %37 : vector<1x128xf32>
    %39 = vector.broadcast %31 : vector<1x128xf32> to vector<16x128xf32>
    %40 = arith.subf %27, %39 : vector<16x128xf32>
    %cst_15 = arith.constant 9.99999974E-6 : f32
    %41 = vector.broadcast %cst_15 : f32 to vector<1x128xf32>
    %42 = arith.addf %38, %41 : vector<1x128xf32>
    %43 = math.rsqrt %42 : vector<1x128xf32>
    %44 = vector.broadcast %43 : vector<1x128xf32> to vector<16x128xf32>
    %45 = arith.mulf %40, %44 : vector<16x128xf32>
    %46 = tpu.concatenate %26, %45 in 0 : vector<16x128xf32>, vector<16x128xf32> -> vector<32x128xf32>
    %c0_16 = arith.constant 0 : index
    %c0_17 = arith.constant 0 : index
    %47 = vector.load %arg3[%c0_16, %c0_17] : memref<32x128xf32, #tpu.memory_space<vmem>>, vector<32x128xf32>
    tpu.vector_store %arg3[%c0_16, %c0_17], %46 {strides = array<i32>} : memref<32x128xf32, #tpu.memory_space<vmem>>, vector<32x128xf32>,
    return
  }
}

module attributes {stable_mosaic.version = 11 : i64} {
  func.func @_fused_conv_kernel(%arg0: memref<50x256xbf16, #tpu.memory_space<vmem>>, %arg1: memref<256x128xbf16, #tpu.memory_space<vmem>>, %arg2: memref<1x128xf32, #tpu.memory_space<vmem>>, %arg3: memref<50x128xf32, #tpu.memory_space<vmem>>, %arg4: memref<128x128xf32, #tpu.memory_space<vmem>>, %arg5: memref<50x128xf32, #tpu.memory_space<vmem>>) attributes {dimension_semantics = [], scalar_prefetch = 0 : i64, scratch_operands = 0 : i64, tpu.core_type = #tpu.core_type<tc>} {
    %c0 = arith.constant 0 : index
    %c0_0 = arith.constant 0 : index
    %0 = vector.load %arg0[%c0, %c0_0] : memref<50x256xbf16, #tpu.memory_space<vmem>>, vector<50x256xbf16>
    %c0_1 = arith.constant 0 : index
    %c0_2 = arith.constant 0 : index
    %1 = vector.load %arg1[%c0_1, %c0_2] : memref<256x128xbf16, #tpu.memory_space<vmem>>, vector<256x128xbf16>
    %cst = arith.constant dense<0.000000e+00> : vector<50x128xf32>
    %2 = tpu.matmul %0, %1, %cst {dimension_numbers = #tpu.dot_dimension_numbers<[1], [0], [0], [1], [0, 0, 1, 1], [], []>} : vector<50x256xbf16>, vector<256x128xbf16>, vector<50x128xf32> -> vector<50x128xf32>
    %c0_3 = arith.constant 0 : index
    %c0_4 = arith.constant 0 : index
    %3 = vector.load %arg2[%c0_3, %c0_4] : memref<1x128xf32, #tpu.memory_space<vmem>>, vector<1x128xf32>
    %4 = vector.broadcast %3 : vector<1x128xf32> to vector<50x128xf32>
    %5 = arith.addf %2, %4 : vector<50x128xf32>
    %c0_5 = arith.constant 0 : index
    %c0_6 = arith.constant 0 : index
    %6 = vector.load %arg3[%c0_5, %c0_6] : memref<50x128xf32, #tpu.memory_space<vmem>>, vector<50x128xf32>
    %7 = arith.mulf %5, %6 : vector<50x128xf32>
    %cst_7 = arith.constant dense<0.000000e+00> : vector<128xf32>
    %8 = vector.multi_reduction <add>, %7, %cst_7 [0] : vector<50x128xf32> to vector<128xf32>
    %9 = vector.shape_cast %8 : vector<128xf32> to vector<1x128xf32>
    %10 = arith.mulf %7, %5 : vector<50x128xf32>
    %cst_8 = arith.constant dense<0.000000e+00> : vector<128xf32>
    %11 = vector.multi_reduction <add>, %10, %cst_8 [0] : vector<50x128xf32> to vector<128xf32>
    %12 = vector.shape_cast %11 : vector<128xf32> to vector<1x128xf32>
    %c0_9 = arith.constant 0 : index
    %c0_10 = arith.constant 0 : index
    %13 = vector.load %arg4[%c0_9, %c0_10] : memref<128x128xf32, #tpu.memory_space<vmem>>, vector<128x128xf32>
    %cst_11 = arith.constant dense<0.000000e+00> : vector<1x128xf32>
    %14 = tpu.matmul %9, %13, %cst_11 {dimension_numbers = #tpu.dot_dimension_numbers<[1], [0], [0], [1], [0, 0, 1, 1], [], []>} : vector<1x128xf32>, vector<128x128xf32>, vector<1x128xf32> -> vector<1x128xf32>
    %cst_12 = arith.constant 7.812500e-03 : f32
    %15 = vector.broadcast %cst_12 : f32 to vector<1x128xf32>
    %16 = arith.mulf %14, %15 : vector<1x128xf32>
    %c0_13 = arith.constant 0 : index
    %c0_14 = arith.constant 0 : index
    %17 = vector.load %arg4[%c0_13, %c0_14] : memref<128x128xf32, #tpu.memory_space<vmem>>, vector<128x128xf32>
    %cst_15 = arith.constant dense<0.000000e+00> : vector<1x128xf32>
    %18 = tpu.matmul %12, %17, %cst_15 {dimension_numbers = #tpu.dot_dimension_numbers<[1], [0], [0], [1], [0, 0, 1, 1], [], []>} : vector<1x128xf32>, vector<128x128xf32>, vector<1x128xf32> -> vector<1x128xf32>
    %cst_16 = arith.constant 7.812500e-03 : f32
    %19 = vector.broadcast %cst_16 : f32 to vector<1x128xf32>
    %20 = arith.mulf %18, %19 : vector<1x128xf32>
    %21 = arith.mulf %16, %16 : vector<1x128xf32>
    %22 = arith.subf %20, %21 : vector<1x128xf32>
    %23 = vector.broadcast %16 : vector<1x128xf32> to vector<50x128xf32>
    %24 = arith.subf %5, %23 : vector<50x128xf32>
    %cst_17 = arith.constant 9.99999974E-6 : f32
    %25 = vector.broadcast %cst_17 : f32 to vector<1x128xf32>
    %26 = arith.addf %22, %25 : vector<1x128xf32>
    %27 = math.rsqrt %26 : vector<1x128xf32>
    %28 = vector.broadcast %27 : vector<1x128xf32> to vector<50x128xf32>
    %29 = arith.mulf %24, %28 : vector<50x128xf32>
    %c0_18 = arith.constant 0 : index
    %c0_19 = arith.constant 0 : index
    %30 = vector.load %arg5[%c0_18, %c0_19] : memref<50x128xf32, #tpu.memory_space<vmem>>, vector<50x128xf32>
    tpu.vector_store %arg5[%c0_18, %c0_19], %29 {strides = array<i32>} : memref<50x128xf32, #tpu.memory_space<vmem>>, vector<50x128xf32>,
    return
  }
}

module attributes {stable_mosaic.version = 11 : i64} {
  func.func @_fused_conv_kernel(%arg0: memref<162x128xbf16, #tpu.memory_space<vmem>>, %arg1: memref<128x128xbf16, #tpu.memory_space<vmem>>, %arg2: memref<1x128xf32, #tpu.memory_space<vmem>>, %arg3: memref<162x128xf32, #tpu.memory_space<vmem>>, %arg4: memref<128x128xf32, #tpu.memory_space<vmem>>, %arg5: memref<162x128xf32, #tpu.memory_space<vmem>>) attributes {dimension_semantics = [], scalar_prefetch = 0 : i64, scratch_operands = 0 : i64, tpu.core_type = #tpu.core_type<tc>} {
    %c0 = arith.constant 0 : index
    %c0_0 = arith.constant 0 : index
    %0 = vector.load %arg0[%c0, %c0_0] : memref<162x128xbf16, #tpu.memory_space<vmem>>, vector<162x128xbf16>
    %cst = arith.constant 0.000000e+00 : bf16
    %1 = vector.broadcast %cst : bf16 to vector<162x128xbf16>
    %2 = arith.maximumf %0, %1 : vector<162x128xbf16>
    %c0_1 = arith.constant 0 : index
    %c0_2 = arith.constant 0 : index
    %3 = vector.load %arg1[%c0_1, %c0_2] : memref<128x128xbf16, #tpu.memory_space<vmem>>, vector<128x128xbf16>
    %cst_3 = arith.constant dense<0.000000e+00> : vector<162x128xf32>
    %4 = tpu.matmul %2, %3, %cst_3 {dimension_numbers = #tpu.dot_dimension_numbers<[1], [0], [0], [1], [0, 0, 1, 1], [], []>} : vector<162x128xbf16>, vector<128x128xbf16>, vector<162x128xf32> -> vector<162x128xf32>
    %c0_4 = arith.constant 0 : index
    %c0_5 = arith.constant 0 : index
    %5 = vector.load %arg2[%c0_4, %c0_5] : memref<1x128xf32, #tpu.memory_space<vmem>>, vector<1x128xf32>
    %6 = vector.broadcast %5 : vector<1x128xf32> to vector<162x128xf32>
    %7 = arith.addf %4, %6 : vector<162x128xf32>
    %c0_6 = arith.constant 0 : index
    %c0_7 = arith.constant 0 : index
    %8 = vector.load %arg3[%c0_6, %c0_7] : memref<162x128xf32, #tpu.memory_space<vmem>>, vector<162x128xf32>
    %9 = arith.mulf %7, %8 : vector<162x128xf32>
    %cst_8 = arith.constant dense<0.000000e+00> : vector<128xf32>
    %10 = vector.multi_reduction <add>, %9, %cst_8 [0] : vector<162x128xf32> to vector<128xf32>
    %11 = vector.shape_cast %10 : vector<128xf32> to vector<1x128xf32>
    %12 = arith.mulf %9, %7 : vector<162x128xf32>
    %cst_9 = arith.constant dense<0.000000e+00> : vector<128xf32>
    %13 = vector.multi_reduction <add>, %12, %cst_9 [0] : vector<162x128xf32> to vector<128xf32>
    %14 = vector.shape_cast %13 : vector<128xf32> to vector<1x128xf32>
    %c0_10 = arith.constant 0 : index
    %c0_11 = arith.constant 0 : index
    %15 = vector.load %arg4[%c0_10, %c0_11] : memref<128x128xf32, #tpu.memory_space<vmem>>, vector<128x128xf32>
    %cst_12 = arith.constant dense<0.000000e+00> : vector<1x128xf32>
    %16 = tpu.matmul %11, %15, %cst_12 {dimension_numbers = #tpu.dot_dimension_numbers<[1], [0], [0], [1], [0, 0, 1, 1], [], []>} : vector<1x128xf32>, vector<128x128xf32>, vector<1x128xf32> -> vector<1x128xf32>
    %cst_13 = arith.constant 0.001953125 : f32
    %17 = vector.broadcast %cst_13 : f32 to vector<1x128xf32>
    %18 = arith.mulf %16, %17 : vector<1x128xf32>
    %c0_14 = arith.constant 0 : index
    %c0_15 = arith.constant 0 : index
    %19 = vector.load %arg4[%c0_14, %c0_15] : memref<128x128xf32, #tpu.memory_space<vmem>>, vector<128x128xf32>
    %cst_16 = arith.constant dense<0.000000e+00> : vector<1x128xf32>
    %20 = tpu.matmul %14, %19, %cst_16 {dimension_numbers = #tpu.dot_dimension_numbers<[1], [0], [0], [1], [0, 0, 1, 1], [], []>} : vector<1x128xf32>, vector<128x128xf32>, vector<1x128xf32> -> vector<1x128xf32>
    %cst_17 = arith.constant 0.001953125 : f32
    %21 = vector.broadcast %cst_17 : f32 to vector<1x128xf32>
    %22 = arith.mulf %20, %21 : vector<1x128xf32>
    %23 = arith.mulf %18, %18 : vector<1x128xf32>
    %24 = arith.subf %22, %23 : vector<1x128xf32>
    %25 = vector.broadcast %18 : vector<1x128xf32> to vector<162x128xf32>
    %26 = arith.subf %7, %25 : vector<162x128xf32>
    %cst_18 = arith.constant 9.99999974E-6 : f32
    %27 = vector.broadcast %cst_18 : f32 to vector<1x128xf32>
    %28 = arith.addf %24, %27 : vector<1x128xf32>
    %29 = math.rsqrt %28 : vector<1x128xf32>
    %30 = vector.broadcast %29 : vector<1x128xf32> to vector<162x128xf32>
    %31 = arith.mulf %26, %30 : vector<162x128xf32>
    %c0_19 = arith.constant 0 : index
    %c0_20 = arith.constant 0 : index
    %32 = vector.load %arg5[%c0_19, %c0_20] : memref<162x128xf32, #tpu.memory_space<vmem>>, vector<162x128xf32>
    tpu.vector_store %arg5[%c0_19, %c0_20], %31 {strides = array<i32>} : memref<162x128xf32, #tpu.memory_space<vmem>>, vector<162x128xf32>,
    return
  }
}

module attributes {stable_mosaic.version = 11 : i64} {
  func.func @_fused_conv_kernel(%arg0: memref<578x64xbf16, #tpu.memory_space<vmem>>, %arg1: memref<64x128xbf16, #tpu.memory_space<vmem>>, %arg2: memref<1x128xf32, #tpu.memory_space<vmem>>, %arg3: memref<578x128xf32, #tpu.memory_space<vmem>>) attributes {dimension_semantics = [], scalar_prefetch = 0 : i64, scratch_operands = 0 : i64, tpu.core_type = #tpu.core_type<tc>} {
    %c0 = arith.constant 0 : index
    %c0_0 = arith.constant 0 : index
    %0 = vector.load %arg0[%c0, %c0_0] : memref<578x64xbf16, #tpu.memory_space<vmem>>, vector<578x64xbf16>
    %cst = arith.constant 0.000000e+00 : bf16
    %1 = vector.broadcast %cst : bf16 to vector<578x64xbf16>
    %2 = arith.maximumf %0, %1 : vector<578x64xbf16>
    %c0_1 = arith.constant 0 : index
    %c0_2 = arith.constant 0 : index
    %3 = vector.load %arg1[%c0_1, %c0_2] : memref<64x128xbf16, #tpu.memory_space<vmem>>, vector<64x128xbf16>
    %cst_3 = arith.constant dense<0.000000e+00> : vector<578x128xf32>
    %4 = tpu.matmul %2, %3, %cst_3 {dimension_numbers = #tpu.dot_dimension_numbers<[1], [0], [0], [1], [0, 0, 1, 1], [], []>} : vector<578x64xbf16>, vector<64x128xbf16>, vector<578x128xf32> -> vector<578x128xf32>
    %c0_4 = arith.constant 0 : index
    %c0_5 = arith.constant 0 : index
    %5 = vector.load %arg2[%c0_4, %c0_5] : memref<1x128xf32, #tpu.memory_space<vmem>>, vector<1x128xf32>
    %6 = vector.broadcast %5 : vector<1x128xf32> to vector<578x128xf32>
    %7 = arith.addf %4, %6 : vector<578x128xf32>
    %8 = math.tanh %7 : vector<578x128xf32>
    %c0_6 = arith.constant 0 : index
    %c0_7 = arith.constant 0 : index
    %9 = vector.load %arg3[%c0_6, %c0_7] : memref<578x128xf32, #tpu.memory_space<vmem>>, vector<578x128xf32>
    tpu.vector_store %arg3[%c0_6, %c0_7], %8 {strides = array<i32>} : memref<578x128xf32, #tpu.memory_space<vmem>>, vector<578x128xf32>,
    return
  }
}

</mosaic_0001>

<llo_original>
// kernel: model_forward.13
$region0: #{model_forward.13}
  #allocation0 [shape = 'u32[]', space=smem, size = 0x4, offset = 0x4, fixed_abs, tag = 'smem constant byte address 0x4 - core index']
  #allocation1 [shape = 'u32[144,128]{1,0:T(1,128)}', space=vmem, size = 0x12000, scoped, tag = 'internal scratch']
  %s0 = inlined_call_operand.vmem [shape: bf16[512,48], index: 0, kind: input, shape index: {}]
  %s1 = inlined_call_operand.vmem [shape: bf16[48,128], index: 1, kind: input, shape index: {}]
  %s2 = inlined_call_operand.vmem [shape: f32[1,128], index: 2, kind: input, shape index: {}]
  %s3 = inlined_call_operand.vmem [shape: f32[512,128], index: 3, kind: output, shape index: {}]
  %s4 = sld [smem:[#allocation0]]
  $region22: #{model_forward.13} parent=0
    _
  %s6 = ssub.s32 1, %s4
  %s7 = scalar_select 0, %s6, %s4
  // Predicated region
  $region2: #{model_forward.13} parent=0 // pred_check
    _
  $region3: #{model_forward.13} parent=0 // pred_check_branch
    %9 = sbr.rel (0) target = $region5
  $region4: #{model_forward.13} parent=0 // pred_region
    _
  $region5: #{model_forward.13} parent=0 // pred_fallthru
    _
  // Predicated region
  $region6: #{model_forward.13} parent=0 // pred_check
    _
  $region7: #{model_forward.13} parent=0 // pred_check_branch
    %11 = sbr.rel (0) target = $region9
  $region8: #{model_forward.13} parent=0 // pred_region
    _
  $region9: #{model_forward.13} parent=0 // pred_fallthru
    _
  // Predicated region
  $region10: #{model_forward.13} parent=0 // pred_check
    _
  $region11: #{model_forward.13} parent=0 // pred_check_branch
    %13 = sbr.rel (0) target = $region13
  $region12: #{model_forward.13} parent=0 // pred_region
    _
  $region13: #{model_forward.13} parent=0 // pred_fallthru
    _
  %v15 = vld [vmem:[%s0] sm:$0xf]
  %v16 = vld [vmem:[%s0 + $0x4] sm:$0xf]
  %v17 = vld [vmem:[%s0 + $0x8] sm:$0xf]
  %v18 = vld [vmem:[%s0 + $0xc] sm:$0xf]
  %v19 = vld [vmem:[%s0 + $0x10] sm:$0xf]
  %v20 = vld [vmem:[%s0 + $0x14] sm:$0xf]
  %v21 = vld [vmem:[%s0 + $0x18] sm:$0xf]
  %v22 = vld [vmem:[%s0 + $0x1c] sm:$0xf]
  %v23 = vld [vmem:[%s0 + $0x20] sm:$0xf]
  %v24 = vld [vmem:[%s0 + $0x24] sm:$0xf]
  %v25 = vld [vmem:[%s0 + $0x28] sm:$0xf]
  %v26 = vld [vmem:[%s0 + $0x2c] sm:$0xf]
  %v27 = vld [vmem:[%s0 + $0x30] sm:$0xf]
  %v28 = vld [vmem:[%s0 + $0x34] sm:$0xf]
  %v29 = vld [vmem:[%s0 + $0x38] sm:$0xf]
  %v30 = vld [vmem:[%s0 + $0x3c] sm:$0xf]
  %v31 = vld [vmem:[%s0 + $0x40] sm:$0xf]
  %v32 = vld [vmem:[%s0 + $0x44] sm:$0xf]
  %v33 = vld [vmem:[%s0 + $0x48] sm:$0xf]
  %v34 = vld [vmem:[%s0 + $0x4c] sm:$0xf]
  %v35 = vld [vmem:[%s0 + $0x50] sm:$0xf]
  %v36 = vld [vmem:[%s0 + $0x54] sm:$0xf]
  %v37 = vld [vmem:[%s0 + $0x58] sm:$0xf]
  %v38 = vld [vmem:[%s0 + $0x5c] sm:$0xf]
  %v39 = vld [vmem:[%s0 + $0x60] sm:$0xf]
  %v40 = vld [vmem:[%s0 + $0x64] sm:$0xf]
  %v41 = vld [vmem:[%s0 + $0x68] sm:$0xf]
  %v42 = vld [vmem:[%s0 + $0x6c] sm:$0xf]
  %v43 = vld [vmem:[%s0 + $0x70] sm:$0xf]
  %v44 = vld [vmem:[%s0 + $0x74] sm:$0xf]
  %v45 = vld [vmem:[%s0 + $0x78] sm:$0xf]
  %v46 = vld [vmem:[%s0 + $0x7c] sm:$0xf]
  %v47 = vld [vmem:[%s0 + $0x80] sm:$0xf]
  %v48 = vld [vmem:[%s0 + $0x84] sm:$0xf]
  %v49 = vld [vmem:[%s0 + $0x88] sm:$0xf]
  %v50 = vld [vmem:[%s0 + $0x8c] sm:$0xf]
  %v51 = vld [vmem:[%s0 + $0x90] sm:$0xf]
  %v52 = vld [vmem:[%s0 + $0x94] sm:$0xf]
  %v53 = vld [vmem:[%s0 + $0x98] sm:$0xf]
  %v54 = vld [vmem:[%s0 + $0x9c] sm:$0xf]
  %v55 = vld [vmem:[%s0 + $0xa0] sm:$0xf]
  %v56 = vld [vmem:[%s0 + $0xa4] sm:$0xf]
  %v57 = vld [vmem:[%s0 + $0xa8] sm:$0xf]
  %v58 = vld [vmem:[%s0 + $0xac] sm:$0xf]
  %v59 = vld [vmem:[%s0 + $0xb0] sm:$0xf]
  %v60 = vld [vmem:[%s0 + $0xb4] sm:$0xf]
  %v61 = vld [vmem:[%s0 + $0xb8] sm:$0xf]
  %v62 = vld [vmem:[%s0 + $0xbc] sm:$0xf]
  %v63 = vld [vmem:[%s0 + $0xc0] sm:$0xf]
  %v64 = vld [vmem:[%s0 + $0xc4] sm:$0xf]
  %v65 = vld [vmem:[%s0 + $0xc8] sm:$0xf]
  %v66 = vld [vmem:[%s0 + $0xcc] sm:$0xf]
  %v67 = vld [vmem:[%s0 + $0xd0] sm:$0xf]
  %v68 = vld [vmem:[%s0 + $0xd4] sm:$0xf]
  %v69 = vld [vmem:[%s0 + $0xd8] sm:$0xf]
  %v70 = vld [vmem:[%s0 + $0xdc] sm:$0xf]
  %v71 = vld [vmem:[%s0 + $0xe0] sm:$0xf]
  %v72 = vld [vmem:[%s0 + $0xe4] sm:$0xf]
  %v73 = vld [vmem:[%s0 + $0xe8] sm:$0xf]
  %v74 = vld [vmem:[%s0 + $0xec] sm:$0xf]
  %v75 = vld [vmem:[%s0 + $0xf0] sm:$0xf]
  %v76 = vld [vmem:[%s0 + $0xf4] sm:$0xf]
  %v77 = vld [vmem:[%s0 + $0xf8] sm:$0xf]
  %v78 = vld [vmem:[%s0 + $0xfc] sm:$0xf]
  %v79 = vld [vmem:[%s1] sm:$0xf]
  %v80 = vld [vmem:[%s1 + $0x4] sm:$0xf]
  %v81 = vld [vmem:[%s1 + $0x8] sm:$0xf]
  %v82 = vld [vmem:[%s1 + $0xc] sm:$0xf]
  %v83 = vld [vmem:[%s1 + $0x10] sm:$0xf]
  %v84 = vld [vmem:[%s1 + $0x14] sm:$0xf]
  %v85 = vld [vmem:[%s2] sm:$0x1]
  %v87 = vlaneseq
  %v88 = vshrl.u32 %v87, 7
  %v89 = vsub.s32 0, %v88
  %v90 = vrot.slane %v85, %v89
  %v156 = vunpack.c.l.b16 %v15
  %v157 = vunpack.c.l.b16 %v16
  %v158 = vunpack.c.l.b16 %v17
  %v159 = vunpack.c.l.b16 %v18
  %v160 = vunpack.c.l.b16 %v19
  %v161 = vunpack.c.l.b16 %v20
  %v162 = vunpack.c.l.b16 %v21
  %v163 = vunpack.c.l.b16 %v22
  %v164 = vunpack.c.l.b16 %v23
  %v165 = vunpack.c.l.b16 %v24
  %v166 = vunpack.c.l.b16 %v25
  %v167 = vunpack.c.l.b16 %v26
  %v168 = vunpack.c.l.b16 %v27
  %v169 = vunpack.c.l.b16 %v28
  %v170 = vunpack.c.l.b16 %v29
  %v171 = vunpack.c.l.b16 %v30
  %v172 = vunpack.c.l.b16 %v31
  %v173 = vunpack.c.l.b16 %v32
  %v174 = vunpack.c.l.b16 %v33
  %v175 = vunpack.c.l.b16 %v34
  %v176 = vunpack.c.l.b16 %v35
  %v177 = vunpack.c.l.b16 %v36
  %v178 = vunpack.c.l.b16 %v37
  %v179 = vunpack.c.l.b16 %v38
  %v180 = vunpack.c.l.b16 %v39
  %v181 = vunpack.c.l.b16 %v40
  %v182 = vunpack.c.l.b16 %v41
  %v183 = vunpack.c.l.b16 %v42
  %v184 = vunpack.c.l.b16 %v43
  %v185 = vunpack.c.l.b16 %v44
  %v186 = vunpack.c.l.b16 %v45
  %v187 = vunpack.c.l.b16 %v46
  %v188 = vunpack.c.l.b16 %v47
  %v189 = vunpack.c.l.b16 %v48
  %v190 = vunpack.c.l.b16 %v49
  %v191 = vunpack.c.l.b16 %v50
  %v192 = vunpack.c.l.b16 %v51
  %v193 = vunpack.c.l.b16 %v52
  %v194 = vunpack.c.l.b16 %v53
  %v195 = vunpack.c.l.b16 %v54
  %v196 = vunpack.c.l.b16 %v55
  %v197 = vunpack.c.l.b16 %v56
  %v198 = vunpack.c.l.b16 %v57
  %v199 = vunpack.c.l.b16 %v58
  %v200 = vunpack.c.l.b16 %v59
  %v201 = vunpack.c.l.b16 %v60
  %v202 = vunpack.c.l.b16 %v61
  %v203 = vunpack.c.l.b16 %v62
  %v204 = vunpack.c.l.b16 %v63
  %v205 = vunpack.c.l.b16 %v64
  %v206 = vunpack.c.l.b16 %v65
  %v207 = vunpack.c.l.b16 %v66
  %v208 = vunpack.c.l.b16 %v67
  %v209 = vunpack.c.l.b16 %v68
  %v210 = vunpack.c.l.b16 %v69
  %v211 = vunpack.c.l.b16 %v70
  %v212 = vunpack.c.l.b16 %v71
  %v213 = vunpack.c.l.b16 %v72
  %v214 = vunpack.c.l.b16 %v73
  %v215 = vunpack.c.l.b16 %v74
  %v216 = vunpack.c.l.b16 %v75
  %v217 = vunpack.c.l.b16 %v76
  %v218 = vunpack.c.l.b16 %v77
  %v219 = vunpack.c.l.b16 %v78
  %v220 = vpack.c.b16 %v157, %v156
  %v221 = vpack.c.b16 %v159, %v158
  %v222 = vpack.c.b16 %v161, %v160
  %v223 = vpack.c.b16 %v163, %v162
  %v224 = vpack.c.b16 %v165, %v164
  %v225 = vpack.c.b16 %v167, %v166
  %v226 = vpack.c.b16 %v169, %v168
  %v227 = vpack.c.b16 %v171, %v170
  %v228 = vpack.c.b16 %v173, %v172
  %v229 = vpack.c.b16 %v175, %v174
  %v230 = vpack.c.b16 %v177, %v176
  %v231 = vpack.c.b16 %v179, %v178
  %v232 = vpack.c.b16 %v181, %v180
  %v233 = vpack.c.b16 %v183, %v182
  %v234 = vpack.c.b16 %v185, %v184
  %v235 = vpack.c.b16 %v187, %v186
  %v236 = vpack.c.b16 %v189, %v188
  %v237 = vpack.c.b16 %v191, %v190
  %v238 = vpack.c.b16 %v193, %v192
  %v239 = vpack.c.b16 %v195, %v194
  %v240 = vpack.c.b16 %v197, %v196
  %v241 = vpack.c.b16 %v199, %v198
  %v242 = vpack.c.b16 %v201, %v200
  %v243 = vpack.c.b16 %v203, %v202
  %v244 = vpack.c.b16 %v205, %v204
  %v245 = vpack.c.b16 %v207, %v206
  %v246 = vpack.c.b16 %v209, %v208
  %v247 = vpack.c.b16 %v211, %v210
  %v248 = vpack.c.b16 %v213, %v212
  %v249 = vpack.c.b16 %v215, %v214
  %v250 = vpack.c.b16 %v217, %v216
  %v251 = vpack.c.b16 %v219, %v218
  %v258 = vunpack.c.l.b16 %v79
  %v259 = vunpack.c.l.b16 %v80
  %v260 = vunpack.c.l.b16 %v81
  %v261 = vunpack.c.l.b16 %v82
  %v262 = vunpack.c.l.b16 %v83
  %v263 = vunpack.c.l.b16 %v84
  %v264 = vpack.c.b16 %v259, %v258
  %v265 = vpack.c.b16 %v261, %v260
  %v266 = vpack.c.b16 %v263, %v262
  %vm270 = vcmask 392192
  %v272 = vsel %vm270, %v220, 0
  %v275 = vsel %vm270, %v221, 0
  %v278 = vsel %vm270, %v222, 0
  %v281 = vsel %vm270, %v223, 0
  %v284 = vsel %vm270, %v224, 0
  %v287 = vsel %vm270, %v225, 0
  %v290 = vsel %vm270, %v226, 0
  %v293 = vsel %vm270, %v227, 0
  %v296 = vsel %vm270, %v228, 0
  %v299 = vsel %vm270, %v229, 0
  %v302 = vsel %vm270, %v230, 0
  %v305 = vsel %vm270, %v231, 0
  %v308 = vsel %vm270, %v232, 0
  %v311 = vsel %vm270, %v233, 0
  %v314 = vsel %vm270, %v234, 0
  %v317 = vsel %vm270, %v235, 0
  %v320 = vsel %vm270, %v236, 0
  %v323 = vsel %vm270, %v237, 0
  %v326 = vsel %vm270, %v238, 0
  %v329 = vsel %vm270, %v239, 0
  %v332 = vsel %vm270, %v240, 0
  %v335 = vsel %vm270, %v241, 0
  %v338 = vsel %vm270, %v242, 0
  %v341 = vsel %vm270, %v243, 0
  %v344 = vsel %vm270, %v244, 0
  %v347 = vsel %vm270, %v245, 0
  %v350 = vsel %vm270, %v246, 0
  %v353 = vsel %vm270, %v247, 0
  %v356 = vsel %vm270, %v248, 0
  %v359 = vsel %vm270, %v249, 0
  %v362 = vsel %vm270, %v250, 0
  %v365 = vsel %vm270, %v251, 0
  %367 = vmatprep.subr.bf16.mxu0 0
  %368 = vmatpush1.bf16.msra.mxu0 %v264
  %369 = vmatprep.subr.bf16.mxu0 0
  %370 = vmatpush1.bf16.msra.mxu0 %v265
  %371 = vmatprep.subr.bf16.mxu0 0
  %372 = vmatpush1.bf16.msra.mxu0 %v266
  %373 = vmatprep.subr.bf16.mxu0 0
  %374 = vmatpush1.bf16.msra.mxu0 0
  %375 = vmatprep.subr.bf16.mxu0 0
  %376 = vmatpush1.bf16.msra.mxu0 0
  %377 = vmatprep.subr.bf16.mxu0 0
  %378 = vmatpush1.bf16.msra.mxu0 0
  %379 = vmatprep.subr.bf16.mxu0 0
  %380 = vmatpush1.bf16.msra.mxu0 0
  %381 = vmatprep.subr.bf16.mxu0 0
  %382 = vmatpush1.bf16.msra.mxu0 0
  %383 = vmatprep.subr.bf16.mxu0 0
  %384 = vmatpush1.bf16.msra.mxu0 0
  %385 = vmatprep.subr.bf16.mxu0 0
  %386 = vmatpush1.bf16.msra.mxu0 0
  %387 = vmatprep.subr.bf16.mxu0 0
  %388 = vmatpush1.bf16.msra.mxu0 0
  %389 = vmatprep.subr.bf16.mxu0 0
  %390 = vmatpush1.bf16.msra.mxu0 0
  %391 = vmatprep.subr.bf16.mxu0 0
  %392 = vmatpush1.bf16.msra.mxu0 0
  %393 = vmatprep.subr.bf16.mxu0 0
  %394 = vmatpush1.bf16.msra.mxu0 0
  %395 = vmatprep.subr.bf16.mxu0 0
  %396 = vmatpush1.bf16.msra.mxu0 0
  %397 = vmatprep.subr.bf16.mxu0 0
  %398 = vmatpush1.bf16.msra.mxu0 0
  %399 = vmatprep.mubr.bf16.mxu0 0
  %400 = vmatmul.mubr.bf16.gmra.mrb[0].mxu0 %v272
  %v401 = vpop.f32.mrb[0].mxu0
  %v402 = vadd.f32 %v90, %v401
  %v403 = vpop.f32.mrb[0].mxu0
  %v404 = vpop.f32.mrb[0].mxu0
  %v405 = vadd.f32 %v90, %v404
  %v406 = vpop.f32.mrb[0].mxu0
  %407 = vmatprep.mubr.bf16.mxu0 0
  %408 = vmatmul.mubr.bf16.gmra.mrb[0].mxu0 %v275
  %v409 = vpop.f32.mrb[0].mxu0
  %v410 = vadd.f32 %v90, %v409
  %v411 = vpop.f32.mrb[0].mxu0
  %v412 = vpop.f32.mrb[0].mxu0
  %v413 = vadd.f32 %v90, %v412
  %v414 = vpop.f32.mrb[0].mxu0
  %415 = vmatprep.mubr.bf16.mxu0 0
  %416 = vmatmul.mubr.bf16.gmra.mrb[0].mxu0 %v278
  %v417 = vpop.f32.mrb[0].mxu0
  %v418 = vadd.f32 %v90, %v417
  %v419 = vpop.f32.mrb[0].mxu0
  %v420 = vpop.f32.mrb[0].mxu0
  %v421 = vadd.f32 %v90, %v420
  %v422 = vpop.f32.mrb[0].mxu0
  %423 = vmatprep.mubr.bf16.mxu0 0
  %424 = vmatmul.mubr.bf16.gmra.mrb[0].mxu0 %v281
  %v425 = vpop.f32.mrb[0].mxu0
  %v426 = vadd.f32 %v90, %v425
  %v427 = vpop.f32.mrb[0].mxu0
  %v428 = vpop.f32.mrb[0].mxu0
  %v429 = vadd.f32 %v90, %v428
  %v430 = vpop.f32.mrb[0].mxu0
  %431 = vmatprep.mubr.bf16.mxu0 0
  %432 = vmatmul.mubr.bf16.gmra.mrb[0].mxu0 %v284
  %v433 = vpop.f32.mrb[0].mxu0
  %v434 = vadd.f32 %v90, %v433
  %v435 = vpop.f32.mrb[0].mxu0
  %v436 = vpop.f32.mrb[0].mxu0
  %v437 = vadd.f32 %v90, %v436
  %v438 = vpop.f32.mrb[0].mxu0
  %439 = vmatprep.mubr.bf16.mxu0 0
  %440 = vmatmul.mubr.bf16.gmra.mrb[0].mxu0 %v287
  %v441 = vpop.f32.mrb[0].mxu0
  %v442 = vadd.f32 %v90, %v441
  %v443 = vpop.f32.mrb[0].mxu0
  %v444 = vpop.f32.mrb[0].mxu0
  %v445 = vadd.f32 %v90, %v444
  %v446 = vpop.f32.mrb[0].mxu0
  %447 = vmatprep.mubr.bf16.mxu0 0
  %448 = vmatmul.mubr.bf16.gmra.mrb[0].mxu0 %v290
  %v449 = vpop.f32.mrb[0].mxu0
  %v450 = vadd.f32 %v90, %v449
  %v451 = vpop.f32.mrb[0].mxu0
  %v452 = vpop.f32.mrb[0].mxu0
  %v453 = vadd.f32 %v90, %v452
  %v454 = vpop.f32.mrb[0].mxu0
  %455 = vmatprep.mubr.bf16.mxu0 0
  %456 = vmatmul.mubr.bf16.gmra.mrb[0].mxu0 %v293
  %v457 = vpop.f32.mrb[0].mxu0
  %v458 = vadd.f32 %v90, %v457
  %v459 = vpop.f32.mrb[0].mxu0
  %v460 = vpop.f32.mrb[0].mxu0
  %v461 = vadd.f32 %v90, %v460
  %v462 = vpop.f32.mrb[0].mxu0
  %463 = vmatprep.mubr.bf16.mxu0 0
  %464 = vmatmul.mubr.bf16.gmra.mrb[0].mxu0 %v296
  %v465 = vpop.f32.mrb[0].mxu0
  %v466 = vadd.f32 %v90, %v465
  %v467 = vpop.f32.mrb[0].mxu0
  %v468 = vpop.f32.mrb[0].mxu0
  %v469 = vadd.f32 %v90, %v468
  %v470 = vpop.f32.mrb[0].mxu0
  %471 = vmatprep.mubr.bf16.mxu0 0
  %472 = vmatmul.mubr.bf16.gmra.mrb[0].mxu0 %v299
  %v473 = vpop.f32.mrb[0].mxu0
  %v474 = vadd.f32 %v90, %v473
  %v475 = vpop.f32.mrb[0].mxu0
  %v476 = vpop.f32.mrb[0].mxu0
  %v477 = vadd.f32 %v90, %v476
  %v478 = vpop.f32.mrb[0].mxu0
  %479 = vmatprep.mubr.bf16.mxu0 0
  %480 = vmatmul.mubr.bf16.gmra.mrb[0].mxu0 %v302
  %v481 = vpop.f32.mrb[0].mxu0
  %v482 = vadd.f32 %v90, %v481
  %v483 = vpop.f32.mrb[0].mxu0
  %v484 = vpop.f32.mrb[0].mxu0
  %v485 = vadd.f32 %v90, %v484
  %v486 = vpop.f32.mrb[0].mxu0
  %487 = vmatprep.mubr.bf16.mxu0 0
  %488 = vmatmul.mubr.bf16.gmra.mrb[0].mxu0 %v305
  %v489 = vpop.f32.mrb[0].mxu0
  %v490 = vadd.f32 %v90, %v489
  %v491 = vpop.f32.mrb[0].mxu0
  %v492 = vpop.f32.mrb[0].mxu0
  %v493 = vadd.f32 %v90, %v492
  %v494 = vpop.f32.mrb[0].mxu0
  %495 = vmatprep.mubr.bf16.mxu0 0
  %496 = vmatmul.mubr.bf16.gmra.mrb[0].mxu0 %v308
  %v497 = vpop.f32.mrb[0].mxu0
  %v498 = vadd.f32 %v90, %v497
  %v499 = vpop.f32.mrb[0].mxu0
  %v500 = vpop.f32.mrb[0].mxu0
  %v501 = vadd.f32 %v90, %v500
  %v502 = vpop.f32.mrb[0].mxu0
  %503 = vmatprep.mubr.bf16.mxu0 0
  %504 = vmatmul.mubr.bf16.gmra.mrb[0].mxu0 %v311
  %v505 = vpop.f32.mrb[0].mxu0
  %v506 = vadd.f32 %v90, %v505
  %v507 = vpop.f32.mrb[0].mxu0
  %v508 = vpop.f32.mrb[0].mxu0
  %v509 = vadd.f32 %v90, %v508
  %v510 = vpop.f32.mrb[0].mxu0
  %511 = vmatprep.mubr.bf16.mxu0 0
  %512 = vmatmul.mubr.bf16.gmra.mrb[0].mxu0 %v314
  %v513 = vpop.f32.mrb[0].mxu0
  %v514 = vadd.f32 %v90, %v513
  %v515 = vpop.f32.mrb[0].mxu0
  %v516 = vpop.f32.mrb[0].mxu0
  %v517 = vadd.f32 %v90, %v516
  %v518 = vpop.f32.mrb[0].mxu0
  %519 = vmatprep.mubr.bf16.mxu0 0
  %520 = vmatmul.mubr.bf16.gmra.mrb[0].mxu0 %v317
  %v521 = vpop.f32.mrb[0].mxu0
  %v522 = vadd.f32 %v90, %v521
  %v523 = vpop.f32.mrb[0].mxu0
  %v524 = vpop.f32.mrb[0].mxu0
  %v525 = vadd.f32 %v90, %v524
  %v526 = vpop.f32.mrb[0].mxu0
  %527 = vmatprep.mubr.bf16.mxu0 0
  %528 = vmatmul.mubr.bf16.gmra.mrb[0].mxu0 %v320
  %v529 = vpop.f32.mrb[0].mxu0
  %v530 = vadd.f32 %v90, %v529
  %v531 = vpop.f32.mrb[0].mxu0
  %v532 = vpop.f32.mrb[0].mxu0
  %v533 = vadd.f32 %v90, %v532
  %v534 = vpop.f32.mrb[0].mxu0
  %535 = vmatprep.mubr.bf16.mxu0 0
  %536 = vmatmul.mubr.bf16.gmra.mrb[0].mxu0 %v323
  %v537 = vpop.f32.mrb[0].mxu0
  %v538 = vadd.f32 %v90, %v537
  %v539 = vpop.f32.mrb[0].mxu0
  %v540 = vpop.f32.mrb[0].mxu0
  %v541 = vadd.f32 %v90, %v540
  %v542 = vpop.f32.mrb[0].mxu0
  %543 = vmatprep.mubr.bf16.mxu0 0
  %544 = vmatmul.mubr.bf16.gmra.mrb[0].mxu0 %v326
  %v545 = vpop.f32.mrb[0].mxu0
  %v546 = vadd.f32 %v90, %v545
  %v547 = vpop.f32.mrb[0].mxu0
  %v548 = vpop.f32.mrb[0].mxu0
  %v549 = vadd.f32 %v90, %v548
  %v550 = vpop.f32.mrb[0].mxu0
  %551 = vmatprep.mubr.bf16.mxu0 0
  %552 = vmatmul.mubr.bf16.gmra.mrb[0].mxu0 %v329
  %v553 = vpop.f32.mrb[0].mxu0
  %v554 = vadd.f32 %v90, %v553
  %v555 = vpop.f32.mrb[0].mxu0
  %v556 = vpop.f32.mrb[0].mxu0
  %v557 = vadd.f32 %v90, %v556
  %v558 = vpop.f32.mrb[0].mxu0
  %559 = vmatprep.mubr.bf16.mxu0 0
  %560 = vmatmul.mubr.bf16.gmra.mrb[0].mxu0 %v332
  %v561 = vpop.f32.mrb[0].mxu0
  %v562 = vadd.f32 %v90, %v561
  %v563 = vpop.f32.mrb[0].mxu0
  %v564 = vpop.f32.mrb[0].mxu0
  %v565 = vadd.f32 %v90, %v564
  %v566 = vpop.f32.mrb[0].mxu0
  %567 = vmatprep.mubr.bf16.mxu0 0
  %568 = vmatmul.mubr.bf16.gmra.mrb[0].mxu0 %v335
  %v569 = vpop.f32.mrb[0].mxu0
  %v570 = vadd.f32 %v90, %v569
  %v571 = vpop.f32.mrb[0].mxu0
  %v572 = vpop.f32.mrb[0].mxu0
  %v573 = vadd.f32 %v90, %v572
  %v574 = vpop.f32.mrb[0].mxu0
  %575 = vmatprep.mubr.bf16.mxu0 0
  %576 = vmatmul.mubr.bf16.gmra.mrb[0].mxu0 %v338
  %v577 = vpop.f32.mrb[0].mxu0
  %v578 = vadd.f32 %v90, %v577
  %v579 = vpop.f32.mrb[0].mxu0
  %v580 = vpop.f32.mrb[0].mxu0
  %v581 = vadd.f32 %v90, %v580
  %v582 = vpop.f32.mrb[0].mxu0
  %583 = vmatprep.mubr.bf16.mxu0 0
  %584 = vmatmul.mubr.bf16.gmra.mrb[0].mxu0 %v341
  %v585 = vpop.f32.mrb[0].mxu0
  %v586 = vadd.f32 %v90, %v585
  %v587 = vpop.f32.mrb[0].mxu0
  %v588 = vpop.f32.mrb[0].mxu0
  %v589 = vadd.f32 %v90, %v588
  %v590 = vpop.f32.mrb[0].mxu0
  %591 = vmatprep.mubr.bf16.mxu0 0
  %592 = vmatmul.mubr.bf16.gmra.mrb[0].mxu0 %v344
  %v593 = vpop.f32.mrb[0].mxu0
  %v594 = vadd.f32 %v90, %v593
  %v595 = vpop.f32.mrb[0].mxu0
  %v596 = vpop.f32.mrb[0].mxu0
  %v597 = vadd.f32 %v90, %v596
  %v598 = vpop.f32.mrb[0].mxu0
  %599 = vmatprep.mubr.bf16.mxu0 0
  %600 = vmatmul.mubr.bf16.gmra.mrb[0].mxu0 %v347
  %v601 = vpop.f32.mrb[0].mxu0
  %v602 = vadd.f32 %v90, %v601
  %v603 = vpop.f32.mrb[0].mxu0
  %v604 = vpop.f32.mrb[0].mxu0
  %v605 = vadd.f32 %v90, %v604
  %v606 = vpop.f32.mrb[0].mxu0
  %607 = vmatprep.mubr.bf16.mxu0 0
  %608 = vmatmul.mubr.bf16.gmra.mrb[0].mxu0 %v350
  %v609 = vpop.f32.mrb[0].mxu0
  %v610 = vadd.f32 %v90, %v609
  %v611 = vpop.f32.mrb[0].mxu0
  %v612 = vpop.f32.mrb[0].mxu0
  %v613 = vadd.f32 %v90, %v612
  %v614 = vpop.f32.mrb[0].mxu0
  %615 = vmatprep.mubr.bf16.mxu0 0
  %616 = vmatmul.mubr.bf16.gmra.mrb[0].mxu0 %v353
  %v617 = vpop.f32.mrb[0].mxu0
  %v618 = vadd.f32 %v90, %v617
  %v619 = vpop.f32.mrb[0].mxu0
  %v620 = vpop.f32.mrb[0].mxu0
  %v621 = vadd.f32 %v90, %v620
  %v622 = vpop.f32.mrb[0].mxu0
  %623 = vmatprep.mubr.bf16.mxu0 0
  %624 = vmatmul.mubr.bf16.gmra.mrb[0].mxu0 %v356
  %v625 = vpop.f32.mrb[0].mxu0
  %v626 = vadd.f32 %v90, %v625
  %v627 = vpop.f32.mrb[0].mxu0
  %v628 = vpop.f32.mrb[0].mxu0
  %v629 = vadd.f32 %v90, %v628
  %v630 = vpop.f32.mrb[0].mxu0
  %631 = vmatprep.mubr.bf16.mxu0 0
  %632 = vmatmul.mubr.bf16.gmra.mrb[0].mxu0 %v359
  %v633 = vpop.f32.mrb[0].mxu0
  %v634 = vadd.f32 %v90, %v633
  %v635 = vpop.f32.mrb[0].mxu0
  %v636 = vpop.f32.mrb[0].mxu0
  %v637 = vadd.f32 %v90, %v636
  %v638 = vpop.f32.mrb[0].mxu0
  %639 = vmatprep.mubr.bf16.mxu0 0
  %640 = vmatmul.mubr.bf16.gmra.mrb[0].mxu0 %v362
  %v641 = vpop.f32.mrb[0].mxu0
  %v642 = vadd.f32 %v90, %v641
  %v643 = vpop.f32.mrb[0].mxu0
  %v644 = vpop.f32.mrb[0].mxu0
  %v645 = vadd.f32 %v90, %v644
  %v646 = vpop.f32.mrb[0].mxu0
  %647 = vmatprep.mubr.bf16.mxu0 0
  %648 = vmatmul.mubr.bf16.gmra.mrb[0].mxu0 %v365
  %v649 = vpop.f32.mrb[0].mxu0
  %v650 = vadd.f32 %v90, %v649
  %v651 = vpop.f32.mrb[0].mxu0
  %v652 = vpop.f32.mrb[0].mxu0
  %v653 = vadd.f32 %v90, %v652
  %v654 = vpop.f32.mrb[0].mxu0
  %655 = vdwg.mxu0
  %656 = vst [vmem:[%s3] sm:$0xff] %v402
  %657 = vst [vmem:[%s3 + $0x8] sm:$0xff] %v405
  %658 = vst [vmem:[%s3 + $0x10] sm:$0xff] %v410
  %659 = vst [vmem:[%s3 + $0x18] sm:$0xff] %v413
  %660 = vst [vmem:[%s3 + $0x20] sm:$0xff] %v418
  %661 = vst [vmem:[%s3 + $0x28] sm:$0xff] %v421
  %662 = vst [vmem:[%s3 + $0x30] sm:$0xff] %v426
  %663 = vst [vmem:[%s3 + $0x38] sm:$0xff] %v429
  %664 = vst [vmem:[%s3 + $0x40] sm:$0xff] %v434
  %665 = vst [vmem:[%s3 + $0x48] sm:$0xff] %v437
  %666 = vst [vmem:[%s3 + $0x50] sm:$0xff] %v442
  %667 = vst [vmem:[%s3 + $0x58] sm:$0xff] %v445
  %668 = vst [vmem:[%s3 + $0x60] sm:$0xff] %v450
  %669 = vst [vmem:[%s3 + $0x68] sm:$0xff] %v453
  %670 = vst [vmem:[%s3 + $0x70] sm:$0xff] %v458
  %671 = vst [vmem:[%s3 + $0x78] sm:$0xff] %v461
  %672 = vst [vmem:[%s3 + $0x80] sm:$0xff] %v466
  %673 = vst [vmem:[%s3 + $0x88] sm:$0xff] %v469
  %674 = vst [vmem:[%s3 + $0x90] sm:$0xff] %v474
  %675 = vst [vmem:[%s3 + $0x98] sm:$0xff] %v477
  %676 = vst [vmem:[%s3 + $0xa0] sm:$0xff] %v482
  %677 = vst [vmem:[%s3 + $0xa8] sm:$0xff] %v485
  %678 = vst [vmem:[%s3 + $0xb0] sm:$0xff] %v490
  %679 = vst [vmem:[%s3 + $0xb8] sm:$0xff] %v493
  %680 = vst [vmem:[%s3 + $0xc0] sm:$0xff] %v498
  %681 = vst [vmem:[%s3 + $0xc8] sm:$0xff] %v501
  %682 = vst [vmem:[%s3 + $0xd0] sm:$0xff] %v506
  %683 = vst [vmem:[%s3 + $0xd8] sm:$0xff] %v509
  %684 = vst [vmem:[%s3 + $0xe0] sm:$0xff] %v514
  %685 = vst [vmem:[%s3 + $0xe8] sm:$0xff] %v517
  %686 = vst [vmem:[%s3 + $0xf0] sm:$0xff] %v522
  %687 = vst [vmem:[%s3 + $0xf8] sm:$0xff] %v525
  %688 = vst [vmem:[%s3 + $0x100] sm:$0xff] %v530
  %689 = vst [vmem:[%s3 + $0x108] sm:$0xff] %v533
  %690 = vst [vmem:[%s3 + $0x110] sm:$0xff] %v538
  %691 = vst [vmem:[%s3 + $0x118] sm:$0xff] %v541
  %692 = vst [vmem:[%s3 + $0x120] sm:$0xff] %v546
  %693 = vst [vmem:[%s3 + $0x128] sm:$0xff] %v549
  %694 = vst [vmem:[%s3 + $0x130] sm:$0xff] %v554
  %695 = vst [vmem:[%s3 + $0x138] sm:$0xff] %v557
  %696 = vst [vmem:[%s3 + $0x140] sm:$0xff] %v562
  %697 = vst [vmem:[%s3 + $0x148] sm:$0xff] %v565
  %698 = vst [vmem:[%s3 + $0x150] sm:$0xff] %v570
  %699 = vst [vmem:[%s3 + $0x158] sm:$0xff] %v573
  %700 = vst [vmem:[%s3 + $0x160] sm:$0xff] %v578
  %701 = vst [vmem:[%s3 + $0x168] sm:$0xff] %v581
  %702 = vst [vmem:[%s3 + $0x170] sm:$0xff] %v586
  %703 = vst [vmem:[%s3 + $0x178] sm:$0xff] %v589
  %704 = vst [vmem:[%s3 + $0x180] sm:$0xff] %v594
  %705 = vst [vmem:[%s3 + $0x188] sm:$0xff] %v597
  %706 = vst [vmem:[%s3 + $0x190] sm:$0xff] %v602
  %707 = vst [vmem:[%s3 + $0x198] sm:$0xff] %v605
  %708 = vst [vmem:[%s3 + $0x1a0] sm:$0xff] %v610
  %709 = vst [vmem:[%s3 + $0x1a8] sm:$0xff] %v613
  %710 = vst [vmem:[%s3 + $0x1b0] sm:$0xff] %v618
  %711 = vst [vmem:[%s3 + $0x1b8] sm:$0xff] %v621
  %712 = vst [vmem:[%s3 + $0x1c0] sm:$0xff] %v626
  %713 = vst [vmem:[%s3 + $0x1c8] sm:$0xff] %v629
  %714 = vst [vmem:[%s3 + $0x1d0] sm:$0xff] %v634
  %715 = vst [vmem:[%s3 + $0x1d8] sm:$0xff] %v637
  %716 = vst [vmem:[%s3 + $0x1e0] sm:$0xff] %v642
  %717 = vst [vmem:[%s3 + $0x1e8] sm:$0xff] %v645
  %718 = vst [vmem:[%s3 + $0x1f0] sm:$0xff] %v650
  %719 = vst [vmem:[%s3 + $0x1f8] sm:$0xff] %v653
  // Predicated region
  $region14: #{model_forward.13} parent=0 // pred_check
    _
  $region15: #{model_forward.13} parent=0 // pred_check_branch
    %721 = sbr.rel (0) target = $region17
  $region16: #{model_forward.13} parent=0 // pred_region
    _
  $region17: #{model_forward.13} parent=0 // pred_fallthru
    _
  // Predicated region
  $region18: #{model_forward.13} parent=0 // pred_check
    _
  $region19: #{model_forward.13} parent=0 // pred_check_branch
    %723 = sbr.rel (0) target = $region21
  $region20: #{model_forward.13} parent=0 // pred_region
    _
  $region21: #{model_forward.13} parent=0 // pred_fallthru
    _

// kernel: model_forward.14
$region0: #{model_forward.14}
  #allocation0 [shape = 'u32[]', space=smem, size = 0x4, offset = 0x4, fixed_abs, tag = 'smem constant byte address 0x4 - core index']
  #allocation1 [shape = 'u32[144,128]{1,0:T(1,128)}', space=vmem, size = 0x12000, scoped, tag = 'internal scratch']
  %s0 = inlined_call_operand.vmem [shape: bf16[128,128], index: 0, kind: input, shape index: {}]
  %s1 = inlined_call_operand.vmem [shape: bf16[128,128], index: 1, kind: input, shape index: {}]
  %s2 = inlined_call_operand.vmem [shape: f32[1,128], index: 2, kind: input, shape index: {}]
  %s3 = inlined_call_operand.vmem [shape: f32[128,128], index: 3, kind: output, shape index: {}]
  %s4 = sld [smem:[#allocation0]]
  $region22: #{model_forward.14} parent=0
    _
  %s6 = ssub.s32 1, %s4
  %s7 = scalar_select 0, %s6, %s4
  // Predicated region
  $region2: #{model_forward.14} parent=0 // pred_check
    _
  $region3: #{model_forward.14} parent=0 // pred_check_branch
    %9 = sbr.rel (0) target = $region5
  $region4: #{model_forward.14} parent=0 // pred_region
    _
  $region5: #{model_forward.14} parent=0 // pred_fallthru
    _
  // Predicated region
  $region6: #{model_forward.14} parent=0 // pred_check
    _
  $region7: #{model_forward.14} parent=0 // pred_check_branch
    %11 = sbr.rel (0) target = $region9
  $region8: #{model_forward.14} parent=0 // pred_region
    _
  $region9: #{model_forward.14} parent=0 // pred_fallthru
    _
  // Predicated region
  $region10: #{model_forward.14} parent=0 // pred_check
    _
  $region11: #{model_forward.14} parent=0 // pred_check_branch
    %13 = sbr.rel (0) target = $region13
  $region12: #{model_forward.14} parent=0 // pred_region
    _
  $region13: #{model_forward.14} parent=0 // pred_fallthru
    _
  %v16 = vld [vmem:[%s0] sm:$0xf]
  %v17 = vld [vmem:[%s0 + $0x4] sm:$0xf]
  %v18 = vld [vmem:[%s0 + $0x8] sm:$0xf]
  %v19 = vld [vmem:[%s0 + $0xc] sm:$0xf]
  %v20 = vld [vmem:[%s0 + $0x10] sm:$0xf]
  %v21 = vld [vmem:[%s0 + $0x14] sm:$0xf]
  %v22 = vld [vmem:[%s0 + $0x18] sm:$0xf]
  %v23 = vld [vmem:[%s0 + $0x1c] sm:$0xf]
  %v24 = vld [vmem:[%s0 + $0x20] sm:$0xf]
  %v25 = vld [vmem:[%s0 + $0x24] sm:$0xf]
  %v26 = vld [vmem:[%s0 + $0x28] sm:$0xf]
  %v27 = vld [vmem:[%s0 + $0x2c] sm:$0xf]
  %v28 = vld [vmem:[%s0 + $0x30] sm:$0xf]
  %v29 = vld [vmem:[%s0 + $0x34] sm:$0xf]
  %v30 = vld [vmem:[%s0 + $0x38] sm:$0xf]
  %v31 = vld [vmem:[%s0 + $0x3c] sm:$0xf]
  %vm32 = vcmp.ge.bf16.partialorder %v16, 0
  %vm33 = vcmp.ge.bf16.partialorder %v17, 0
  %vm34 = vcmp.ge.bf16.partialorder %v18, 0
  %vm35 = vcmp.ge.bf16.partialorder %v19, 0
  %vm36 = vcmp.ge.bf16.partialorder %v20, 0
  %vm37 = vcmp.ge.bf16.partialorder %v21, 0
  %vm38 = vcmp.ge.bf16.partialorder %v22, 0
  %vm39 = vcmp.ge.bf16.partialorder %v23, 0
  %vm40 = vcmp.ge.bf16.partialorder %v24, 0
  %vm41 = vcmp.ge.bf16.partialorder %v25, 0
  %vm42 = vcmp.ge.bf16.partialorder %v26, 0
  %vm43 = vcmp.ge.bf16.partialorder %v27, 0
  %vm44 = vcmp.ge.bf16.partialorder %v28, 0
  %vm45 = vcmp.ge.bf16.partialorder %v29, 0
  %vm46 = vcmp.ge.bf16.partialorder %v30, 0
  %vm47 = vcmp.ge.bf16.partialorder %v31, 0
  %v48 = vmul.bf16 %v16, 1045249613
  %v49 = vmul.bf16 %v17, 1045249613
  %v50 = vmul.bf16 %v18, 1045249613
  %v51 = vmul.bf16 %v19, 1045249613
  %v52 = vmul.bf16 %v20, 1045249613
  %v53 = vmul.bf16 %v21, 1045249613
  %v54 = vmul.bf16 %v22, 1045249613
  %v55 = vmul.bf16 %v23, 1045249613
  %v56 = vmul.bf16 %v24, 1045249613
  %v57 = vmul.bf16 %v25, 1045249613
  %v58 = vmul.bf16 %v26, 1045249613
  %v59 = vmul.bf16 %v27, 1045249613
  %v60 = vmul.bf16 %v28, 1045249613
  %v61 = vmul.bf16 %v29, 1045249613
  %v62 = vmul.bf16 %v30, 1045249613
  %v63 = vmul.bf16 %v31, 1045249613
  %v64 = vsel %vm32, %v16, %v48
  %v65 = vsel %vm33, %v17, %v49
  %v66 = vsel %vm34, %v18, %v50
  %v67 = vsel %vm35, %v19, %v51
  %v68 = vsel %vm36, %v20, %v52
  %v69 = vsel %vm37, %v21, %v53
  %v70 = vsel %vm38, %v22, %v54
  %v71 = vsel %vm39, %v23, %v55
  %v72 = vsel %vm40, %v24, %v56
  %v73 = vsel %vm41, %v25, %v57
  %v74 = vsel %vm42, %v26, %v58
  %v75 = vsel %vm43, %v27, %v59
  %v76 = vsel %vm44, %v28, %v60
  %v77 = vsel %vm45, %v29, %v61
  %v78 = vsel %vm46, %v30, %v62
  %v79 = vsel %vm47, %v31, %v63
  %v80 = vld [vmem:[%s1] sm:$0xf]
  %v81 = vld [vmem:[%s1 + $0x4] sm:$0xf]
  %v82 = vld [vmem:[%s1 + $0x8] sm:$0xf]
  %v83 = vld [vmem:[%s1 + $0xc] sm:$0xf]
  %v84 = vld [vmem:[%s1 + $0x10] sm:$0xf]
  %v85 = vld [vmem:[%s1 + $0x14] sm:$0xf]
  %v86 = vld [vmem:[%s1 + $0x18] sm:$0xf]
  %v87 = vld [vmem:[%s1 + $0x1c] sm:$0xf]
  %v88 = vld [vmem:[%s1 + $0x20] sm:$0xf]
  %v89 = vld [vmem:[%s1 + $0x24] sm:$0xf]
  %v90 = vld [vmem:[%s1 + $0x28] sm:$0xf]
  %v91 = vld [vmem:[%s1 + $0x2c] sm:$0xf]
  %v92 = vld [vmem:[%s1 + $0x30] sm:$0xf]
  %v93 = vld [vmem:[%s1 + $0x34] sm:$0xf]
  %v94 = vld [vmem:[%s1 + $0x38] sm:$0xf]
  %v95 = vld [vmem:[%s1 + $0x3c] sm:$0xf]
  %v96 = vld [vmem:[%s2] sm:$0x1]
  %v98 = vlaneseq
  %v99 = vshrl.u32 %v98, 7
  %v100 = vsub.s32 0, %v99
  %v101 = vrot.slane %v96, %v100
  %v119 = vunpack.c.l.b16 %v64
  %v120 = vunpack.c.l.b16 %v65
  %v121 = vunpack.c.l.b16 %v66
  %v122 = vunpack.c.l.b16 %v67
  %v123 = vunpack.c.l.b16 %v68
  %v124 = vunpack.c.l.b16 %v69
  %v125 = vunpack.c.l.b16 %v70
  %v126 = vunpack.c.l.b16 %v71
  %v127 = vunpack.c.l.b16 %v72
  %v128 = vunpack.c.l.b16 %v73
  %v129 = vunpack.c.l.b16 %v74
  %v130 = vunpack.c.l.b16 %v75
  %v131 = vunpack.c.l.b16 %v76
  %v132 = vunpack.c.l.b16 %v77
  %v133 = vunpack.c.l.b16 %v78
  %v134 = vunpack.c.l.b16 %v79
  %v135 = vpack.c.b16 %v120, %v119
  %v136 = vpack.c.b16 %v122, %v121
  %v137 = vpack.c.b16 %v124, %v123
  %v138 = vpack.c.b16 %v126, %v125
  %v139 = vpack.c.b16 %v128, %v127
  %v140 = vpack.c.b16 %v130, %v129
  %v141 = vpack.c.b16 %v132, %v131
  %v142 = vpack.c.b16 %v134, %v133
  %v167 = vunpack.c.l.b16 %v80
  %v168 = vunpack.c.l.b16 %v81
  %v169 = vunpack.c.l.b16 %v82
  %v170 = vunpack.c.l.b16 %v83
  %v171 = vunpack.c.l.b16 %v84
  %v172 = vunpack.c.l.b16 %v85
  %v173 = vunpack.c.l.b16 %v86
  %v174 = vunpack.c.l.b16 %v87
  %v175 = vunpack.c.l.b16 %v88
  %v176 = vunpack.c.l.b16 %v89
  %v177 = vunpack.c.l.b16 %v90
  %v178 = vunpack.c.l.b16 %v91
  %v179 = vunpack.c.l.b16 %v92
  %v180 = vunpack.c.l.b16 %v93
  %v181 = vunpack.c.l.b16 %v94
  %v182 = vunpack.c.l.b16 %v95
  %v183 = vpack.c.b16 %v168, %v167
  %v184 = vpack.c.b16 %v170, %v169
  %v185 = vpack.c.b16 %v172, %v171
  %v186 = vpack.c.b16 %v174, %v173
  %v187 = vpack.c.b16 %v176, %v175
  %v188 = vpack.c.b16 %v178, %v177
  %v189 = vpack.c.b16 %v180, %v179
  %v190 = vpack.c.b16 %v182, %v181
  %199 = vmatprep.subr.bf16.mxu0 0
  %200 = vmatpush1.bf16.msra.mxu0 %v183
  %201 = vmatprep.subr.bf16.mxu0 0
  %202 = vmatpush1.bf16.msra.mxu0 %v184
  %203 = vmatprep.subr.bf16.mxu0 0
  %204 = vmatpush1.bf16.msra.mxu0 %v185
  %205 = vmatprep.subr.bf16.mxu0 0
  %206 = vmatpush1.bf16.msra.mxu0 %v186
  %207 = vmatprep.subr.bf16.mxu0 0
  %208 = vmatpush1.bf16.msra.mxu0 %v187
  %209 = vmatprep.subr.bf16.mxu0 0
  %210 = vmatpush1.bf16.msra.mxu0 %v188
  %211 = vmatprep.subr.bf16.mxu0 0
  %212 = vmatpush1.bf16.msra.mxu0 %v189
  %213 = vmatprep.subr.bf16.mxu0 0
  %214 = vmatpush1.bf16.msra.mxu0 %v190
  %215 = vmatprep.subr.bf16.mxu0 0
  %216 = vmatpush1.bf16.msra.mxu0 0
  %217 = vmatprep.subr.bf16.mxu0 0
  %218 = vmatpush1.bf16.msra.mxu0 0
  %219 = vmatprep.subr.bf16.mxu0 0
  %220 = vmatpush1.bf16.msra.mxu0 0
  %221 = vmatprep.subr.bf16.mxu0 0
  %222 = vmatpush1.bf16.msra.mxu0 0
  %223 = vmatprep.subr.bf16.mxu0 0
  %224 = vmatpush1.bf16.msra.mxu0 0
  %225 = vmatprep.subr.bf16.mxu0 0
  %226 = vmatpush1.bf16.msra.mxu0 0
  %227 = vmatprep.subr.bf16.mxu0 0
  %228 = vmatpush1.bf16.msra.mxu0 0
  %229 = vmatprep.subr.bf16.mxu0 0
  %230 = vmatpush1.bf16.msra.mxu0 0
  %231 = vmatprep.mubr.bf16.mxu0 0
  %232 = vmatmul.mubr.bf16.gmra.mrb[0].mxu0 %v135
  %v233 = vpop.f32.mrb[0].mxu0
  %v234 = vadd.f32 %v101, %v233
  %v235 = vpop.f32.mrb[0].mxu0
  %v236 = vpop.f32.mrb[0].mxu0
  %v237 = vadd.f32 %v101, %v236
  %v238 = vpop.f32.mrb[0].mxu0
  %239 = vmatprep.mubr.bf16.mxu0 0
  %240 = vmatmul.mubr.bf16.gmra.mrb[0].mxu0 %v136
  %v241 = vpop.f32.mrb[0].mxu0
  %v242 = vadd.f32 %v101, %v241
  %v243 = vpop.f32.mrb[0].mxu0
  %v244 = vpop.f32.mrb[0].mxu0
  %v245 = vadd.f32 %v101, %v244
  %v246 = vpop.f32.mrb[0].mxu0
  %247 = vmatprep.mubr.bf16.mxu0 0
  %248 = vmatmul.mubr.bf16.gmra.mrb[0].mxu0 %v137
  %v249 = vpop.f32.mrb[0].mxu0
  %v250 = vadd.f32 %v101, %v249
  %v251 = vpop.f32.mrb[0].mxu0
  %v252 = vpop.f32.mrb[0].mxu0
  %v253 = vadd.f32 %v101, %v252
  %v254 = vpop.f32.mrb[0].mxu0
  %255 = vmatprep.mubr.bf16.mxu0 0
  %256 = vmatmul.mubr.bf16.gmra.mrb[0].mxu0 %v138
  %v257 = vpop.f32.mrb[0].mxu0
  %v258 = vadd.f32 %v101, %v257
  %v259 = vpop.f32.mrb[0].mxu0
  %v260 = vpop.f32.mrb[0].mxu0
  %v261 = vadd.f32 %v101, %v260
  %v262 = vpop.f32.mrb[0].mxu0
  %263 = vmatprep.mubr.bf16.mxu0 0
  %264 = vmatmul.mubr.bf16.gmra.mrb[0].mxu0 %v139
  %v265 = vpop.f32.mrb[0].mxu0
  %v266 = vadd.f32 %v101, %v265
  %v267 = vpop.f32.mrb[0].mxu0
  %v268 = vpop.f32.mrb[0].mxu0
  %v269 = vadd.f32 %v101, %v268
  %v270 = vpop.f32.mrb[0].mxu0
  %271 = vmatprep.mubr.bf16.mxu0 0
  %272 = vmatmul.mubr.bf16.gmra.mrb[0].mxu0 %v140
  %v273 = vpop.f32.mrb[0].mxu0
  %v274 = vadd.f32 %v101, %v273
  %v275 = vpop.f32.mrb[0].mxu0
  %v276 = vpop.f32.mrb[0].mxu0
  %v277 = vadd.f32 %v101, %v276
  %v278 = vpop.f32.mrb[0].mxu0
  %279 = vmatprep.mubr.bf16.mxu0 0
  %280 = vmatmul.mubr.bf16.gmra.mrb[0].mxu0 %v141
  %v281 = vpop.f32.mrb[0].mxu0
  %v282 = vadd.f32 %v101, %v281
  %v283 = vpop.f32.mrb[0].mxu0
  %v284 = vpop.f32.mrb[0].mxu0
  %v285 = vadd.f32 %v101, %v284
  %v286 = vpop.f32.mrb[0].mxu0
  %287 = vmatprep.mubr.bf16.mxu0 0
  %288 = vmatmul.mubr.bf16.gmra.mrb[0].mxu0 %v142
  %v289 = vpop.f32.mrb[0].mxu0
  %v290 = vadd.f32 %v101, %v289
  %v291 = vpop.f32.mrb[0].mxu0
  %v292 = vpop.f32.mrb[0].mxu0
  %v293 = vadd.f32 %v101, %v292
  %v294 = vpop.f32.mrb[0].mxu0
  %295 = vdwg.mxu0
  %v296 = vadd.f32 %v234, %v237
  %v297 = vadd.f32 %v296, %v242
  %v298 = vadd.f32 %v297, %v245
  %v299 = vadd.f32 %v298, %v250
  %v300 = vadd.f32 %v299, %v253
  %v301 = vadd.f32 %v300, %v258
  %v302 = vadd.f32 %v301, %v261
  %v303 = vadd.f32 %v302, %v266
  %v304 = vadd.f32 %v303, %v269
  %v305 = vadd.f32 %v304, %v274
  %v306 = vadd.f32 %v305, %v277
  %v307 = vadd.f32 %v306, %v282
  %v308 = vadd.f32 %v307, %v285
  %v309 = vadd.f32 %v308, %v290
  %v310 = vadd.f32 %v309, %v293
  %v311 = vrot.slane %v310, 4
  %v312 = vadd.f32 %v310, %v311
  %v313 = vrot.slane %v312, 2
  %v314 = vadd.f32 %v312, %v313
  %v315 = vrot.slane %v314, 1
  %v316 = vadd.f32 %v314, %v315
  %v317 = vrcp.pop 128.0
  %v318 = vmul.f32 %v316, %v317
  %v319 = vmul.f32 %v234, %v234
  %v320 = vmul.f32 %v237, %v237
  %v321 = vmul.f32 %v242, %v242
  %v322 = vmul.f32 %v245, %v245
  %v323 = vmul.f32 %v250, %v250
  %v324 = vmul.f32 %v253, %v253
  %v325 = vmul.f32 %v258, %v258
  %v326 = vmul.f32 %v261, %v261
  %v327 = vmul.f32 %v266, %v266
  %v328 = vmul.f32 %v269, %v269
  %v329 = vmul.f32 %v274, %v274
  %v330 = vmul.f32 %v277, %v277
  %v331 = vmul.f32 %v282, %v282
  %v332 = vmul.f32 %v285, %v285
  %v333 = vmul.f32 %v290, %v290
  %v334 = vmul.f32 %v293, %v293
  %v335 = vadd.f32 %v319, %v320
  %v336 = vadd.f32 %v335, %v321
  %v337 = vadd.f32 %v336, %v322
  %v338 = vadd.f32 %v337, %v323
  %v339 = vadd.f32 %v338, %v324
  %v340 = vadd.f32 %v339, %v325
  %v341 = vadd.f32 %v340, %v326
  %v342 = vadd.f32 %v341, %v327
  %v343 = vadd.f32 %v342, %v328
  %v344 = vadd.f32 %v343, %v329
  %v345 = vadd.f32 %v344, %v330
  %v346 = vadd.f32 %v345, %v331
  %v347 = vadd.f32 %v346, %v332
  %v348 = vadd.f32 %v347, %v333
  %v349 = vadd.f32 %v348, %v334
  %v350 = vrot.slane %v349, 4
  %v351 = vadd.f32 %v349, %v350
  %v352 = vrot.slane %v351, 2
  %v353 = vadd.f32 %v351, %v352
  %v354 = vrot.slane %v353, 1
  %v355 = vadd.f32 %v353, %v354
  %v356 = vmul.f32 %v355, %v317
  %v357 = vmul.f32 %v318, %v318
  %v358 = vsub.f32 %v356, %v357
  %v359 = vsub.f32 %v234, %v318
  %v360 = vsub.f32 %v237, %v318
  %v361 = vsub.f32 %v242, %v318
  %v362 = vsub.f32 %v245, %v318
  %v363 = vsub.f32 %v250, %v318
  %v364 = vsub.f32 %v253, %v318
  %v365 = vsub.f32 %v258, %v318
  %v366 = vsub.f32 %v261, %v318
  %v367 = vsub.f32 %v266, %v318
  %v368 = vsub.f32 %v269, %v318
  %v369 = vsub.f32 %v274, %v318
  %v370 = vsub.f32 %v277, %v318
  %v371 = vsub.f32 %v282, %v318
  %v372 = vsub.f32 %v285, %v318
  %v373 = vsub.f32 %v290, %v318
  %v374 = vsub.f32 %v293, %v318
  %v375 = vadd.f32 %v358, 1e-05
  %v376 = vrsqrt.pop %v375
  %v377 = vmul.f32 %v359, %v376
  %v378 = vmul.f32 %v360, %v376
  %v379 = vmul.f32 %v361, %v376
  %v380 = vmul.f32 %v362, %v376
  %v381 = vmul.f32 %v363, %v376
  %v382 = vmul.f32 %v364, %v376
  %v383 = vmul.f32 %v365, %v376
  %v384 = vmul.f32 %v366, %v376
  %v385 = vmul.f32 %v367, %v376
  %v386 = vmul.f32 %v368, %v376
  %v387 = vmul.f32 %v369, %v376
  %v388 = vmul.f32 %v370, %v376
  %v389 = vmul.f32 %v371, %v376
  %v390 = vmul.f32 %v372, %v376
  %v391 = vmul.f32 %v373, %v376
  %v392 = vmul.f32 %v374, %v376
  %393 = vst [vmem:[%s3] sm:$0xff] %v377
  %394 = vst [vmem:[%s3 + $0x8] sm:$0xff] %v378
  %395 = vst [vmem:[%s3 + $0x10] sm:$0xff] %v379
  %396 = vst [vmem:[%s3 + $0x18] sm:$0xff] %v380
  %397 = vst [vmem:[%s3 + $0x20] sm:$0xff] %v381
  %398 = vst [vmem:[%s3 + $0x28] sm:$0xff] %v382
  %399 = vst [vmem:[%s3 + $0x30] sm:$0xff] %v383
  %400 = vst [vmem:[%s3 + $0x38] sm:$0xff] %v384
  %401 = vst [vmem:[%s3 + $0x40] sm:$0xff] %v385
  %402 = vst [vmem:[%s3 + $0x48] sm:$0xff] %v386
  %403 = vst [vmem:[%s3 + $0x50] sm:$0xff] %v387
  %404 = vst [vmem:[%s3 + $0x58] sm:$0xff] %v388
  %405 = vst [vmem:[%s3 + $0x60] sm:$0xff] %v389
  %406 = vst [vmem:[%s3 + $0x68] sm:$0xff] %v390
  %407 = vst [vmem:[%s3 + $0x70] sm:$0xff] %v391
  %408 = vst [vmem:[%s3 + $0x78] sm:$0xff] %v392
  // Predicated region
  $region14: #{model_forward.14} parent=0 // pred_check
    _
  $region15: #{model_forward.14} parent=0 // pred_check_branch
    %410 = sbr.rel (0) target = $region17
  $region16: #{model_forward.14} parent=0 // pred_region
    _
  $region17: #{model_forward.14} parent=0 // pred_fallthru
    _
  // Predicated region
  $region18: #{model_forward.14} parent=0 // pred_check
    _
  $region19: #{model_forward.14} parent=0 // pred_check_branch
    %412 = sbr.rel (0) target = $region21
  $region20: #{model_forward.14} parent=0 // pred_region
    _
  $region21: #{model_forward.14} parent=0 // pred_fallthru
    _

// kernel: model_forward.15
$region0: #{model_forward.15}
  #allocation0 [shape = 'u32[]', space=smem, size = 0x4, offset = 0x4, fixed_abs, tag = 'smem constant byte address 0x4 - core index']
  #allocation1 [shape = 'u32[144,128]{1,0:T(1,128)}', space=vmem, size = 0x12000, scoped, tag = 'internal scratch']
  %s0 = inlined_call_operand.vmem [shape: bf16[32,256], index: 0, kind: input, shape index: {}]
  %s1 = inlined_call_operand.vmem [shape: bf16[256,128], index: 1, kind: input, shape index: {}]
  %s2 = inlined_call_operand.vmem [shape: f32[1,128], index: 2, kind: input, shape index: {}]
  %s3 = inlined_call_operand.vmem [shape: f32[32,128], index: 3, kind: output, shape index: {}]
  %s4 = sld [smem:[#allocation0]]
  $region22: #{model_forward.15} parent=0
    _
  %s6 = ssub.s32 1, %s4
  %s7 = scalar_select 0, %s6, %s4
  // Predicated region
  $region2: #{model_forward.15} parent=0 // pred_check
    _
  $region3: #{model_forward.15} parent=0 // pred_check_branch
    %9 = sbr.rel (0) target = $region5
  $region4: #{model_forward.15} parent=0 // pred_region
    _
  $region5: #{model_forward.15} parent=0 // pred_fallthru
    _
  // Predicated region
  $region6: #{model_forward.15} parent=0 // pred_check
    _
  $region7: #{model_forward.15} parent=0 // pred_check_branch
    %11 = sbr.rel (0) target = $region9
  $region8: #{model_forward.15} parent=0 // pred_region
    _
  $region9: #{model_forward.15} parent=0 // pred_fallthru
    _
  // Predicated region
  $region10: #{model_forward.15} parent=0 // pred_check
    _
  $region11: #{model_forward.15} parent=0 // pred_check_branch
    %13 = sbr.rel (0) target = $region13
  $region12: #{model_forward.15} parent=0 // pred_region
    _
  $region13: #{model_forward.15} parent=0 // pred_fallthru
    _
  %v16 = vld [vmem:[%s0] sm:$0xff]
  %v17 = vld [vmem:[%s0 + $0x8] sm:$0xff]
  %v18 = vld [vmem:[%s0 + $0x10] sm:$0xff]
  %v19 = vld [vmem:[%s0 + $0x18] sm:$0xff]
  %vm20 = vcmp.ge.bf16.partialorder %v16, 0
  %vm21 = vcmp.ge.bf16.partialorder %v17, 0
  %vm22 = vcmp.ge.bf16.partialorder %v18, 0
  %vm23 = vcmp.ge.bf16.partialorder %v19, 0
  %v24 = vmul.bf16 %v16, 1045249613
  %v25 = vmul.bf16 %v17, 1045249613
  %v26 = vmul.bf16 %v18, 1045249613
  %v27 = vmul.bf16 %v19, 1045249613
  %v28 = vsel %vm20, %v16, %v24
  %v29 = vsel %vm21, %v17, %v25
  %v30 = vsel %vm22, %v18, %v26
  %v31 = vsel %vm23, %v19, %v27
  %v32 = vld [vmem:[%s1] sm:$0xf]
  %v33 = vld [vmem:[%s1 + $0x4] sm:$0xf]
  %v34 = vld [vmem:[%s1 + $0x8] sm:$0xf]
  %v35 = vld [vmem:[%s1 + $0xc] sm:$0xf]
  %v36 = vld [vmem:[%s1 + $0x10] sm:$0xf]
  %v37 = vld [vmem:[%s1 + $0x14] sm:$0xf]
  %v38 = vld [vmem:[%s1 + $0x18] sm:$0xf]
  %v39 = vld [vmem:[%s1 + $0x1c] sm:$0xf]
  %v40 = vld [vmem:[%s1 + $0x20] sm:$0xf]
  %v41 = vld [vmem:[%s1 + $0x24] sm:$0xf]
  %v42 = vld [vmem:[%s1 + $0x28] sm:$0xf]
  %v43 = vld [vmem:[%s1 + $0x2c] sm:$0xf]
  %v44 = vld [vmem:[%s1 + $0x30] sm:$0xf]
  %v45 = vld [vmem:[%s1 + $0x34] sm:$0xf]
  %v46 = vld [vmem:[%s1 + $0x38] sm:$0xf]
  %v47 = vld [vmem:[%s1 + $0x3c] sm:$0xf]
  %v48 = vld [vmem:[%s1 + $0x40] sm:$0xf]
  %v49 = vld [vmem:[%s1 + $0x44] sm:$0xf]
  %v50 = vld [vmem:[%s1 + $0x48] sm:$0xf]
  %v51 = vld [vmem:[%s1 + $0x4c] sm:$0xf]
  %v52 = vld [vmem:[%s1 + $0x50] sm:$0xf]
  %v53 = vld [vmem:[%s1 + $0x54] sm:$0xf]
  %v54 = vld [vmem:[%s1 + $0x58] sm:$0xf]
  %v55 = vld [vmem:[%s1 + $0x5c] sm:$0xf]
  %v56 = vld [vmem:[%s1 + $0x60] sm:$0xf]
  %v57 = vld [vmem:[%s1 + $0x64] sm:$0xf]
  %v58 = vld [vmem:[%s1 + $0x68] sm:$0xf]
  %v59 = vld [vmem:[%s1 + $0x6c] sm:$0xf]
  %v60 = vld [vmem:[%s1 + $0x70] sm:$0xf]
  %v61 = vld [vmem:[%s1 + $0x74] sm:$0xf]
  %v62 = vld [vmem:[%s1 + $0x78] sm:$0xf]
  %v63 = vld [vmem:[%s1 + $0x7c] sm:$0xf]
  %v64 = vld [vmem:[%s2] sm:$0x1]
  %v66 = vlaneseq
  %v67 = vshrl.u32 %v66, 7
  %v68 = vsub.s32 0, %v67
  %v69 = vrot.slane %v64, %v68
  %v75 = vunpack.c.l.b16 %v28
  %v76 = vunpack.c.h.b16 %v28
  %v77 = vunpack.c.l.b16 %v29
  %v78 = vunpack.c.h.b16 %v29
  %v79 = vunpack.c.l.b16 %v30
  %v80 = vunpack.c.h.b16 %v30
  %v81 = vunpack.c.l.b16 %v31
  %v82 = vunpack.c.h.b16 %v31
  %v83 = vpack.c.b16 %v77, %v75
  %v84 = vpack.c.b16 %v78, %v76
  %v85 = vpack.c.b16 %v81, %v79
  %v86 = vpack.c.b16 %v82, %v80
  %v123 = vunpack.c.l.b16 %v32
  %v124 = vunpack.c.l.b16 %v33
  %v125 = vunpack.c.l.b16 %v34
  %v126 = vunpack.c.l.b16 %v35
  %v127 = vunpack.c.l.b16 %v36
  %v128 = vunpack.c.l.b16 %v37
  %v129 = vunpack.c.l.b16 %v38
  %v130 = vunpack.c.l.b16 %v39
  %v131 = vunpack.c.l.b16 %v40
  %v132 = vunpack.c.l.b16 %v41
  %v133 = vunpack.c.l.b16 %v42
  %v134 = vunpack.c.l.b16 %v43
  %v135 = vunpack.c.l.b16 %v44
  %v136 = vunpack.c.l.b16 %v45
  %v137 = vunpack.c.l.b16 %v46
  %v138 = vunpack.c.l.b16 %v47
  %v139 = vunpack.c.l.b16 %v48
  %v140 = vunpack.c.l.b16 %v49
  %v141 = vunpack.c.l.b16 %v50
  %v142 = vunpack.c.l.b16 %v51
  %v143 = vunpack.c.l.b16 %v52
  %v144 = vunpack.c.l.b16 %v53
  %v145 = vunpack.c.l.b16 %v54
  %v146 = vunpack.c.l.b16 %v55
  %v147 = vunpack.c.l.b16 %v56
  %v148 = vunpack.c.l.b16 %v57
  %v149 = vunpack.c.l.b16 %v58
  %v150 = vunpack.c.l.b16 %v59
  %v151 = vunpack.c.l.b16 %v60
  %v152 = vunpack.c.l.b16 %v61
  %v153 = vunpack.c.l.b16 %v62
  %v154 = vunpack.c.l.b16 %v63
  %v155 = vpack.c.b16 %v124, %v123
  %v156 = vpack.c.b16 %v126, %v125
  %v157 = vpack.c.b16 %v128, %v127
  %v158 = vpack.c.b16 %v130, %v129
  %v159 = vpack.c.b16 %v132, %v131
  %v160 = vpack.c.b16 %v134, %v133
  %v161 = vpack.c.b16 %v136, %v135
  %v162 = vpack.c.b16 %v138, %v137
  %v163 = vpack.c.b16 %v140, %v139
  %v164 = vpack.c.b16 %v142, %v141
  %v165 = vpack.c.b16 %v144, %v143
  %v166 = vpack.c.b16 %v146, %v145
  %v167 = vpack.c.b16 %v148, %v147
  %v168 = vpack.c.b16 %v150, %v149
  %v169 = vpack.c.b16 %v152, %v151
  %v170 = vpack.c.b16 %v154, %v153
  %187 = vmatprep.subr.bf16.mxu0 0
  %188 = vmatpush1.bf16.msra.mxu0 %v155
  %189 = vmatprep.subr.bf16.mxu0 0
  %190 = vmatpush1.bf16.msra.mxu0 %v156
  %191 = vmatprep.subr.bf16.mxu0 0
  %192 = vmatpush1.bf16.msra.mxu0 %v157
  %193 = vmatprep.subr.bf16.mxu0 0
  %194 = vmatpush1.bf16.msra.mxu0 %v158
  %195 = vmatprep.subr.bf16.mxu0 0
  %196 = vmatpush1.bf16.msra.mxu0 %v159
  %197 = vmatprep.subr.bf16.mxu0 0
  %198 = vmatpush1.bf16.msra.mxu0 %v160
  %199 = vmatprep.subr.bf16.mxu0 0
  %200 = vmatpush1.bf16.msra.mxu0 %v161
  %201 = vmatprep.subr.bf16.mxu0 0
  %202 = vmatpush1.bf16.msra.mxu0 %v162
  %203 = vmatprep.subr.bf16.mxu0 0
  %204 = vmatpush1.bf16.msra.mxu0 %v163
  %205 = vmatprep.subr.bf16.mxu0 0
  %206 = vmatpush1.bf16.msra.mxu0 %v164
  %207 = vmatprep.subr.bf16.mxu0 0
  %208 = vmatpush1.bf16.msra.mxu0 %v165
  %209 = vmatprep.subr.bf16.mxu0 0
  %210 = vmatpush1.bf16.msra.mxu0 %v166
  %211 = vmatprep.subr.bf16.mxu0 0
  %212 = vmatpush1.bf16.msra.mxu0 %v167
  %213 = vmatprep.subr.bf16.mxu0 0
  %214 = vmatpush1.bf16.msra.mxu0 %v168
  %215 = vmatprep.subr.bf16.mxu0 0
  %216 = vmatpush1.bf16.msra.mxu0 %v169
  %217 = vmatprep.subr.bf16.mxu0 0
  %218 = vmatpush1.bf16.msra.mxu0 %v170
  %219 = vmatprep.mubr.bf16.mxu0 %v84
  %220 = vmatmul.mubr.bf16.gmra.mrb[0].mxu0 %v83
  %v221 = vpop.f32.mrb[0].mxu0
  %v222 = vadd.f32 %v69, %v221
  %v223 = vpop.f32.mrb[0].mxu0
  %v224 = vpop.f32.mrb[0].mxu0
  %v225 = vadd.f32 %v69, %v224
  %v226 = vpop.f32.mrb[0].mxu0
  %227 = vmatprep.mubr.bf16.mxu0 %v86
  %228 = vmatmul.mubr.bf16.gmra.mrb[0].mxu0 %v85
  %v229 = vpop.f32.mrb[0].mxu0
  %v230 = vadd.f32 %v69, %v229
  %v231 = vpop.f32.mrb[0].mxu0
  %v232 = vpop.f32.mrb[0].mxu0
  %v233 = vadd.f32 %v69, %v232
  %v234 = vpop.f32.mrb[0].mxu0
  %235 = vdwg.mxu0
  %v236 = vadd.f32 %v222, %v225
  %v237 = vadd.f32 %v236, %v230
  %v238 = vadd.f32 %v237, %v233
  %v239 = vrot.slane %v238, 4
  %v240 = vadd.f32 %v238, %v239
  %v241 = vrot.slane %v240, 2
  %v242 = vadd.f32 %v240, %v241
  %v243 = vrot.slane %v242, 1
  %v244 = vadd.f32 %v242, %v243
  %v245 = vrcp.pop 32.0
  %v246 = vmul.f32 %v244, %v245
  %v247 = vmul.f32 %v222, %v222
  %v248 = vmul.f32 %v225, %v225
  %v249 = vmul.f32 %v230, %v230
  %v250 = vmul.f32 %v233, %v233
  %v251 = vadd.f32 %v247, %v248
  %v252 = vadd.f32 %v251, %v249
  %v253 = vadd.f32 %v252, %v250
  %v254 = vrot.slane %v253, 4
  %v255 = vadd.f32 %v253, %v254
  %v256 = vrot.slane %v255, 2
  %v257 = vadd.f32 %v255, %v256
  %v258 = vrot.slane %v257, 1
  %v259 = vadd.f32 %v257, %v258
  %v260 = vmul.f32 %v259, %v245
  %v261 = vmul.f32 %v246, %v246
  %v262 = vsub.f32 %v260, %v261
  %v263 = vsub.f32 %v222, %v246
  %v264 = vsub.f32 %v225, %v246
  %v265 = vsub.f32 %v230, %v246
  %v266 = vsub.f32 %v233, %v246
  %v267 = vadd.f32 %v262, 1e-05
  %v268 = vrsqrt.pop %v267
  %v269 = vmul.f32 %v263, %v268
  %v270 = vmul.f32 %v264, %v268
  %v271 = vmul.f32 %v265, %v268
  %v272 = vmul.f32 %v266, %v268
  %273 = vst [vmem:[%s3] sm:$0xff] %v269
  %274 = vst [vmem:[%s3 + $0x8] sm:$0xff] %v270
  %275 = vst [vmem:[%s3 + $0x10] sm:$0xff] %v271
  %276 = vst [vmem:[%s3 + $0x18] sm:$0xff] %v272
  // Predicated region
  $region14: #{model_forward.15} parent=0 // pred_check
    _
  $region15: #{model_forward.15} parent=0 // pred_check_branch
    %278 = sbr.rel (0) target = $region17
  $region16: #{model_forward.15} parent=0 // pred_region
    _
  $region17: #{model_forward.15} parent=0 // pred_fallthru
    _
  // Predicated region
  $region18: #{model_forward.15} parent=0 // pred_check
    _
  $region19: #{model_forward.15} parent=0 // pred_check_branch
    %280 = sbr.rel (0) target = $region21
  $region20: #{model_forward.15} parent=0 // pred_region
    _
  $region21: #{model_forward.15} parent=0 // pred_fallthru
    _

// kernel: model_forward.16
$region0: #{model_forward.16}
  #allocation0 [shape = 'u32[]', space=smem, size = 0x4, offset = 0x4, fixed_abs, tag = 'smem constant byte address 0x4 - core index']
  #allocation1 [shape = 'u32[144,128]{1,0:T(1,128)}', space=vmem, size = 0x12000, scoped, tag = 'internal scratch']
  %s0 = inlined_call_operand.vmem [shape: bf16[8,512], index: 0, kind: input, shape index: {}]
  %s1 = inlined_call_operand.vmem [shape: bf16[512,128], index: 1, kind: input, shape index: {}]
  %s2 = inlined_call_operand.vmem [shape: f32[1,128], index: 2, kind: input, shape index: {}]
  %s3 = inlined_call_operand.vmem [shape: f32[8,128], index: 3, kind: output, shape index: {}]
  %s4 = sld [smem:[#allocation0]]
  $region22: #{model_forward.16} parent=0
    _
  %s6 = ssub.s32 1, %s4
  %s7 = scalar_select 0, %s6, %s4
  // Predicated region
  $region2: #{model_forward.16} parent=0 // pred_check
    _
  $region3: #{model_forward.16} parent=0 // pred_check_branch
    %9 = sbr.rel (0) target = $region5
  $region4: #{model_forward.16} parent=0 // pred_region
    _
  $region5: #{model_forward.16} parent=0 // pred_fallthru
    _
  // Predicated region
  $region6: #{model_forward.16} parent=0 // pred_check
    _
  $region7: #{model_forward.16} parent=0 // pred_check_branch
    %11 = sbr.rel (0) target = $region9
  $region8: #{model_forward.16} parent=0 // pred_region
    _
  $region9: #{model_forward.16} parent=0 // pred_fallthru
    _
  // Predicated region
  $region10: #{model_forward.16} parent=0 // pred_check
    _
  $region11: #{model_forward.16} parent=0 // pred_check_branch
    %13 = sbr.rel (0) target = $region13
  $region12: #{model_forward.16} parent=0 // pred_region
    _
  $region13: #{model_forward.16} parent=0 // pred_fallthru
    _
  %v16 = vld [vmem:[%s0] sm:$0xff]
  %v17 = vld [vmem:[%s0 + $0x8] sm:$0xff]
  %vm18 = vcmp.ge.bf16.partialorder %v16, 0
  %vm19 = vcmp.ge.bf16.partialorder %v17, 0
  %v20 = vmul.bf16 %v16, 1045249613
  %v21 = vmul.bf16 %v17, 1045249613
  %v22 = vsel %vm18, %v16, %v20
  %v23 = vsel %vm19, %v17, %v21
  %v24 = vld [vmem:[%s1] sm:$0xf]
  %v25 = vld [vmem:[%s1 + $0x4] sm:$0xf]
  %v26 = vld [vmem:[%s1 + $0x8] sm:$0xf]
  %v27 = vld [vmem:[%s1 + $0xc] sm:$0xf]
  %v28 = vld [vmem:[%s1 + $0x10] sm:$0xf]
  %v29 = vld [vmem:[%s1 + $0x14] sm:$0xf]
  %v30 = vld [vmem:[%s1 + $0x18] sm:$0xf]
  %v31 = vld [vmem:[%s1 + $0x1c] sm:$0xf]
  %v32 = vld [vmem:[%s1 + $0x20] sm:$0xf]
  %v33 = vld [vmem:[%s1 + $0x24] sm:$0xf]
  %v34 = vld [vmem:[%s1 + $0x28] sm:$0xf]
  %v35 = vld [vmem:[%s1 + $0x2c] sm:$0xf]
  %v36 = vld [vmem:[%s1 + $0x30] sm:$0xf]
  %v37 = vld [vmem:[%s1 + $0x34] sm:$0xf]
  %v38 = vld [vmem:[%s1 + $0x38] sm:$0xf]
  %v39 = vld [vmem:[%s1 + $0x3c] sm:$0xf]
  %v40 = vld [vmem:[%s1 + $0x40] sm:$0xf]
  %v41 = vld [vmem:[%s1 + $0x44] sm:$0xf]
  %v42 = vld [vmem:[%s1 + $0x48] sm:$0xf]
  %v43 = vld [vmem:[%s1 + $0x4c] sm:$0xf]
  %v44 = vld [vmem:[%s1 + $0x50] sm:$0xf]
  %v45 = vld [vmem:[%s1 + $0x54] sm:$0xf]
  %v46 = vld [vmem:[%s1 + $0x58] sm:$0xf]
  %v47 = vld [vmem:[%s1 + $0x5c] sm:$0xf]
  %v48 = vld [vmem:[%s1 + $0x60] sm:$0xf]
  %v49 = vld [vmem:[%s1 + $0x64] sm:$0xf]
  %v50 = vld [vmem:[%s1 + $0x68] sm:$0xf]
  %v51 = vld [vmem:[%s1 + $0x6c] sm:$0xf]
  %v52 = vld [vmem:[%s1 + $0x70] sm:$0xf]
  %v53 = vld [vmem:[%s1 + $0x74] sm:$0xf]
  %v54 = vld [vmem:[%s1 + $0x78] sm:$0xf]
  %v55 = vld [vmem:[%s1 + $0x7c] sm:$0xf]
  %v56 = vld [vmem:[%s1 + $0x80] sm:$0xf]
  %v57 = vld [vmem:[%s1 + $0x84] sm:$0xf]
  %v58 = vld [vmem:[%s1 + $0x88] sm:$0xf]
  %v59 = vld [vmem:[%s1 + $0x8c] sm:$0xf]
  %v60 = vld [vmem:[%s1 + $0x90] sm:$0xf]
  %v61 = vld [vmem:[%s1 + $0x94] sm:$0xf]
  %v62 = vld [vmem:[%s1 + $0x98] sm:$0xf]
  %v63 = vld [vmem:[%s1 + $0x9c] sm:$0xf]
  %v64 = vld [vmem:[%s1 + $0xa0] sm:$0xf]
  %v65 = vld [vmem:[%s1 + $0xa4] sm:$0xf]
  %v66 = vld [vmem:[%s1 + $0xa8] sm:$0xf]
  %v67 = vld [vmem:[%s1 + $0xac] sm:$0xf]
  %v68 = vld [vmem:[%s1 + $0xb0] sm:$0xf]
  %v69 = vld [vmem:[%s1 + $0xb4] sm:$0xf]
  %v70 = vld [vmem:[%s1 + $0xb8] sm:$0xf]
  %v71 = vld [vmem:[%s1 + $0xbc] sm:$0xf]
  %v72 = vld [vmem:[%s1 + $0xc0] sm:$0xf]
  %v73 = vld [vmem:[%s1 + $0xc4] sm:$0xf]
  %v74 = vld [vmem:[%s1 + $0xc8] sm:$0xf]
  %v75 = vld [vmem:[%s1 + $0xcc] sm:$0xf]
  %v76 = vld [vmem:[%s1 + $0xd0] sm:$0xf]
  %v77 = vld [vmem:[%s1 + $0xd4] sm:$0xf]
  %v78 = vld [vmem:[%s1 + $0xd8] sm:$0xf]
  %v79 = vld [vmem:[%s1 + $0xdc] sm:$0xf]
  %v80 = vld [vmem:[%s1 + $0xe0] sm:$0xf]
  %v81 = vld [vmem:[%s1 + $0xe4] sm:$0xf]
  %v82 = vld [vmem:[%s1 + $0xe8] sm:$0xf]
  %v83 = vld [vmem:[%s1 + $0xec] sm:$0xf]
  %v84 = vld [vmem:[%s1 + $0xf0] sm:$0xf]
  %v85 = vld [vmem:[%s1 + $0xf4] sm:$0xf]
  %v86 = vld [vmem:[%s1 + $0xf8] sm:$0xf]
  %v87 = vld [vmem:[%s1 + $0xfc] sm:$0xf]
  %v88 = vld [vmem:[%s2] sm:$0x1]
  %v90 = vlaneseq
  %v91 = vshrl.u32 %v90, 7
  %v92 = vsub.s32 0, %v91
  %v93 = vrot.slane %v88, %v92
  %v97 = vunpack.c.l.b16 %v22
  %v98 = vunpack.c.h.b16 %v22
  %v99 = vunpack.c.l.b16 %v23
  %v100 = vunpack.c.h.b16 %v23
  %v101 = vpack.c.b16 %v97, %v97
  %v102 = vpack.c.b16 %v98, %v98
  %v103 = vpack.c.b16 %v99, %v99
  %v104 = vpack.c.b16 %v100, %v100
  %v173 = vunpack.c.l.b16 %v24
  %v174 = vunpack.c.l.b16 %v25
  %v175 = vunpack.c.l.b16 %v26
  %v176 = vunpack.c.l.b16 %v27
  %v177 = vunpack.c.l.b16 %v28
  %v178 = vunpack.c.l.b16 %v29
  %v179 = vunpack.c.l.b16 %v30
  %v180 = vunpack.c.l.b16 %v31
  %v181 = vunpack.c.l.b16 %v32
  %v182 = vunpack.c.l.b16 %v33
  %v183 = vunpack.c.l.b16 %v34
  %v184 = vunpack.c.l.b16 %v35
  %v185 = vunpack.c.l.b16 %v36
  %v186 = vunpack.c.l.b16 %v37
  %v187 = vunpack.c.l.b16 %v38
  %v188 = vunpack.c.l.b16 %v39
  %v189 = vunpack.c.l.b16 %v40
  %v190 = vunpack.c.l.b16 %v41
  %v191 = vunpack.c.l.b16 %v42
  %v192 = vunpack.c.l.b16 %v43
  %v193 = vunpack.c.l.b16 %v44
  %v194 = vunpack.c.l.b16 %v45
  %v195 = vunpack.c.l.b16 %v46
  %v196 = vunpack.c.l.b16 %v47
  %v197 = vunpack.c.l.b16 %v48
  %v198 = vunpack.c.l.b16 %v49
  %v199 = vunpack.c.l.b16 %v50
  %v200 = vunpack.c.l.b16 %v51
  %v201 = vunpack.c.l.b16 %v52
  %v202 = vunpack.c.l.b16 %v53
  %v203 = vunpack.c.l.b16 %v54
  %v204 = vunpack.c.l.b16 %v55
  %v205 = vunpack.c.l.b16 %v56
  %v206 = vunpack.c.l.b16 %v57
  %v207 = vunpack.c.l.b16 %v58
  %v208 = vunpack.c.l.b16 %v59
  %v209 = vunpack.c.l.b16 %v60
  %v210 = vunpack.c.l.b16 %v61
  %v211 = vunpack.c.l.b16 %v62
  %v212 = vunpack.c.l.b16 %v63
  %v213 = vunpack.c.l.b16 %v64
  %v214 = vunpack.c.l.b16 %v65
  %v215 = vunpack.c.l.b16 %v66
  %v216 = vunpack.c.l.b16 %v67
  %v217 = vunpack.c.l.b16 %v68
  %v218 = vunpack.c.l.b16 %v69
  %v219 = vunpack.c.l.b16 %v70
  %v220 = vunpack.c.l.b16 %v71
  %v221 = vunpack.c.l.b16 %v72
  %v222 = vunpack.c.l.b16 %v73
  %v223 = vunpack.c.l.b16 %v74
  %v224 = vunpack.c.l.b16 %v75
  %v225 = vunpack.c.l.b16 %v76
  %v226 = vunpack.c.l.b16 %v77
  %v227 = vunpack.c.l.b16 %v78
  %v228 = vunpack.c.l.b16 %v79
  %v229 = vunpack.c.l.b16 %v80
  %v230 = vunpack.c.l.b16 %v81
  %v231 = vunpack.c.l.b16 %v82
  %v232 = vunpack.c.l.b16 %v83
  %v233 = vunpack.c.l.b16 %v84
  %v234 = vunpack.c.l.b16 %v85
  %v235 = vunpack.c.l.b16 %v86
  %v236 = vunpack.c.l.b16 %v87
  %v237 = vpack.c.b16 %v174, %v173
  %v238 = vpack.c.b16 %v176, %v175
  %v239 = vpack.c.b16 %v178, %v177
  %v240 = vpack.c.b16 %v180, %v179
  %v241 = vpack.c.b16 %v182, %v181
  %v242 = vpack.c.b16 %v184, %v183
  %v243 = vpack.c.b16 %v186, %v185
  %v244 = vpack.c.b16 %v188, %v187
  %v245 = vpack.c.b16 %v190, %v189
  %v246 = vpack.c.b16 %v192, %v191
  %v247 = vpack.c.b16 %v194, %v193
  %v248 = vpack.c.b16 %v196, %v195
  %v249 = vpack.c.b16 %v198, %v197
  %v250 = vpack.c.b16 %v200, %v199
  %v251 = vpack.c.b16 %v202, %v201
  %v252 = vpack.c.b16 %v204, %v203
  %v253 = vpack.c.b16 %v206, %v205
  %v254 = vpack.c.b16 %v208, %v207
  %v255 = vpack.c.b16 %v210, %v209
  %v256 = vpack.c.b16 %v212, %v211
  %v257 = vpack.c.b16 %v214, %v213
  %v258 = vpack.c.b16 %v216, %v215
  %v259 = vpack.c.b16 %v218, %v217
  %v260 = vpack.c.b16 %v220, %v219
  %v261 = vpack.c.b16 %v222, %v221
  %v262 = vpack.c.b16 %v224, %v223
  %v263 = vpack.c.b16 %v226, %v225
  %v264 = vpack.c.b16 %v228, %v227
  %v265 = vpack.c.b16 %v230, %v229
  %v266 = vpack.c.b16 %v232, %v231
  %v267 = vpack.c.b16 %v234, %v233
  %v268 = vpack.c.b16 %v236, %v235
  %301 = vmatprep.subr.bf16.mxu0 0
  %302 = vmatpush1.bf16.msra.mxu0 %v237
  %303 = vmatprep.subr.bf16.mxu0 0
  %304 = vmatpush1.bf16.msra.mxu0 %v238
  %305 = vmatprep.subr.bf16.mxu0 0
  %306 = vmatpush1.bf16.msra.mxu0 %v239
  %307 = vmatprep.subr.bf16.mxu0 0
  %308 = vmatpush1.bf16.msra.mxu0 %v240
  %309 = vmatprep.subr.bf16.mxu0 0
  %310 = vmatpush1.bf16.msra.mxu0 %v241
  %311 = vmatprep.subr.bf16.mxu0 0
  %312 = vmatpush1.bf16.msra.mxu0 %v242
  %313 = vmatprep.subr.bf16.mxu0 0
  %314 = vmatpush1.bf16.msra.mxu0 %v243
  %315 = vmatprep.subr.bf16.mxu0 0
  %316 = vmatpush1.bf16.msra.mxu0 %v244
  %317 = vmatprep.subr.bf16.mxu0 0
  %318 = vmatpush1.bf16.msra.mxu0 %v245
  %319 = vmatprep.subr.bf16.mxu0 0
  %320 = vmatpush1.bf16.msra.mxu0 %v246
  %321 = vmatprep.subr.bf16.mxu0 0
  %322 = vmatpush1.bf16.msra.mxu0 %v247
  %323 = vmatprep.subr.bf16.mxu0 0
  %324 = vmatpush1.bf16.msra.mxu0 %v248
  %325 = vmatprep.subr.bf16.mxu0 0
  %326 = vmatpush1.bf16.msra.mxu0 %v249
  %327 = vmatprep.subr.bf16.mxu0 0
  %328 = vmatpush1.bf16.msra.mxu0 %v250
  %329 = vmatprep.subr.bf16.mxu0 0
  %330 = vmatpush1.bf16.msra.mxu0 %v251
  %331 = vmatprep.subr.bf16.mxu0 0
  %332 = vmatpush1.bf16.msra.mxu0 %v252
  %333 = vmatprep.mubr.bf16.mxu0 %v102
  %334 = vmatmul.mubr.bf16.gmra.mrb[0].mxu0 %v101
  %v335 = vpop.f32.mrb[0].mxu0
  %v336 = vadd.f32 %v93, %v335
  %v337 = vpop.f32.mrb[0].mxu0
  %v338 = vpop.f32.mrb[0].mxu0
  %v339 = vpop.f32.mrb[0].mxu0
  %340 = vdwg.mxu0
  %341 = vmatprep.subr.bf16.mxu0 0
  %342 = vmatpush1.bf16.msra.mxu0 %v253
  %343 = vmatprep.subr.bf16.mxu0 0
  %344 = vmatpush1.bf16.msra.mxu0 %v254
  %345 = vmatprep.subr.bf16.mxu0 0
  %346 = vmatpush1.bf16.msra.mxu0 %v255
  %347 = vmatprep.subr.bf16.mxu0 0
  %348 = vmatpush1.bf16.msra.mxu0 %v256
  %349 = vmatprep.subr.bf16.mxu0 0
  %350 = vmatpush1.bf16.msra.mxu0 %v257
  %351 = vmatprep.subr.bf16.mxu0 0
  %352 = vmatpush1.bf16.msra.mxu0 %v258
  %353 = vmatprep.subr.bf16.mxu0 0
  %354 = vmatpush1.bf16.msra.mxu0 %v259
  %355 = vmatprep.subr.bf16.mxu0 0
  %356 = vmatpush1.bf16.msra.mxu0 %v260
  %357 = vmatprep.subr.bf16.mxu0 0
  %358 = vmatpush1.bf16.msra.mxu0 %v261
  %359 = vmatprep.subr.bf16.mxu0 0
  %360 = vmatpush1.bf16.msra.mxu0 %v262
  %361 = vmatprep.subr.bf16.mxu0 0
  %362 = vmatpush1.bf16.msra.mxu0 %v263
  %363 = vmatprep.subr.bf16.mxu0 0
  %364 = vmatpush1.bf16.msra.mxu0 %v264
  %365 = vmatprep.subr.bf16.mxu0 0
  %366 = vmatpush1.bf16.msra.mxu0 %v265
  %367 = vmatprep.subr.bf16.mxu0 0
  %368 = vmatpush1.bf16.msra.mxu0 %v266
  %369 = vmatprep.subr.bf16.mxu0 0
  %370 = vmatpush1.bf16.msra.mxu0 %v267
  %371 = vmatprep.subr.bf16.mxu0 0
  %372 = vmatpush1.bf16.msra.mxu0 %v268
  %373 = vmatprep.mubr.bf16.mxu0 %v104
  %374 = vmatmul.mubr.bf16.gmra.mrb[0].mxu0 %v103
  %v375 = vpop.f32.mrb[0].mxu0
  %v376 = vadd.f32 %v336, %v375
  %v377 = vpop.f32.mrb[0].mxu0
  %v378 = vpop.f32.mrb[0].mxu0
  %v379 = vpop.f32.mrb[0].mxu0
  %380 = vdwg.mxu0
  %v381 = vrot.slane %v376, 4
  %v382 = vadd.f32 %v376, %v381
  %v383 = vrot.slane %v382, 2
  %v384 = vadd.f32 %v382, %v383
  %v385 = vrot.slane %v384, 1
  %v386 = vadd.f32 %v384, %v385
  %v387 = vrcp.pop 8.0
  %v388 = vmul.f32 %v386, %v387
  %v389 = vmul.f32 %v376, %v376
  %v390 = vrot.slane %v389, 4
  %v391 = vadd.f32 %v389, %v390
  %v392 = vrot.slane %v391, 2
  %v393 = vadd.f32 %v391, %v392
  %v394 = vrot.slane %v393, 1
  %v395 = vadd.f32 %v393, %v394
  %v396 = vmul.f32 %v395, %v387
  %v397 = vmul.f32 %v388, %v388
  %v398 = vsub.f32 %v396, %v397
  %v399 = vsub.f32 %v376, %v388
  %v400 = vadd.f32 %v398, 1e-05
  %v401 = vrsqrt.pop %v400
  %v402 = vmul.f32 %v399, %v401
  %403 = vst [vmem:[%s3] sm:$0xff] %v402
  // Predicated region
  $region14: #{model_forward.16} parent=0 // pred_check
    _
  $region15: #{model_forward.16} parent=0 // pred_check_branch
    %405 = sbr.rel (0) target = $region17
  $region16: #{model_forward.16} parent=0 // pred_region
    _
  $region17: #{model_forward.16} parent=0 // pred_fallthru
    _
  // Predicated region
  $region18: #{model_forward.16} parent=0 // pred_check
    _
  $region19: #{model_forward.16} parent=0 // pred_check_branch
    %407 = sbr.rel (0) target = $region21
  $region20: #{model_forward.16} parent=0 // pred_region
    _
  $region21: #{model_forward.16} parent=0 // pred_fallthru
    _

// kernel: model_forward.17
$region0: #{model_forward.17}
  #allocation0 [shape = 'u32[]', space=smem, size = 0x4, offset = 0x4, fixed_abs, tag = 'smem constant byte address 0x4 - core index']
  #allocation1 [shape = 'u32[144,128]{1,0:T(1,128)}', space=vmem, size = 0x12000, scoped, tag = 'internal scratch']
  %s0 = inlined_call_operand.vmem [shape: bf16[2,1024], index: 0, kind: input, shape index: {}]
  %s1 = inlined_call_operand.vmem [shape: bf16[1024,128], index: 1, kind: input, shape index: {}]
  %s2 = inlined_call_operand.vmem [shape: f32[1,128], index: 2, kind: input, shape index: {}]
  %s3 = inlined_call_operand.vmem [shape: f32[2,128], index: 3, kind: output, shape index: {}]
  %s4 = sld [smem:[#allocation0]]
  $region22: #{model_forward.17} parent=0
    _
  %s6 = ssub.s32 1, %s4
  %s7 = scalar_select 0, %s6, %s4
  // Predicated region
  $region2: #{model_forward.17} parent=0 // pred_check
    _
  $region3: #{model_forward.17} parent=0 // pred_check_branch
    %9 = sbr.rel (0) target = $region5
  $region4: #{model_forward.17} parent=0 // pred_region
    _
  $region5: #{model_forward.17} parent=0 // pred_fallthru
    _
  // Predicated region
  $region6: #{model_forward.17} parent=0 // pred_check
    _
  $region7: #{model_forward.17} parent=0 // pred_check_branch
    %11 = sbr.rel (0) target = $region9
  $region8: #{model_forward.17} parent=0 // pred_region
    _
  $region9: #{model_forward.17} parent=0 // pred_fallthru
    _
  // Predicated region
  $region10: #{model_forward.17} parent=0 // pred_check
    _
  $region11: #{model_forward.17} parent=0 // pred_check_branch
    %13 = sbr.rel (0) target = $region13
  $region12: #{model_forward.17} parent=0 // pred_region
    _
  $region13: #{model_forward.17} parent=0 // pred_fallthru
    _
  %v16 = vld [vmem:[%s0] sm:$0xff]
  %vm17 = vcmp.ge.bf16.partialorder %v16, 0
  %v18 = vmul.bf16 %v16, 1045249613
  %v19 = vsel %vm17, %v16, %v18
  %v20 = vld [vmem:[%s1] sm:$0xf]
  %v21 = vld [vmem:[%s1 + $0x4] sm:$0xf]
  %v22 = vld [vmem:[%s1 + $0x8] sm:$0xf]
  %v23 = vld [vmem:[%s1 + $0xc] sm:$0xf]
  %v24 = vld [vmem:[%s1 + $0x10] sm:$0xf]
  %v25 = vld [vmem:[%s1 + $0x14] sm:$0xf]
  %v26 = vld [vmem:[%s1 + $0x18] sm:$0xf]
  %v27 = vld [vmem:[%s1 + $0x1c] sm:$0xf]
  %v28 = vld [vmem:[%s1 + $0x20] sm:$0xf]
  %v29 = vld [vmem:[%s1 + $0x24] sm:$0xf]
  %v30 = vld [vmem:[%s1 + $0x28] sm:$0xf]
  %v31 = vld [vmem:[%s1 + $0x2c] sm:$0xf]
  %v32 = vld [vmem:[%s1 + $0x30] sm:$0xf]
  %v33 = vld [vmem:[%s1 + $0x34] sm:$0xf]
  %v34 = vld [vmem:[%s1 + $0x38] sm:$0xf]
  %v35 = vld [vmem:[%s1 + $0x3c] sm:$0xf]
  %v36 = vld [vmem:[%s1 + $0x40] sm:$0xf]
  %v37 = vld [vmem:[%s1 + $0x44] sm:$0xf]
  %v38 = vld [vmem:[%s1 + $0x48] sm:$0xf]
  %v39 = vld [vmem:[%s1 + $0x4c] sm:$0xf]
  %v40 = vld [vmem:[%s1 + $0x50] sm:$0xf]
  %v41 = vld [vmem:[%s1 + $0x54] sm:$0xf]
  %v42 = vld [vmem:[%s1 + $0x58] sm:$0xf]
  %v43 = vld [vmem:[%s1 + $0x5c] sm:$0xf]
  %v44 = vld [vmem:[%s1 + $0x60] sm:$0xf]
  %v45 = vld [vmem:[%s1 + $0x64] sm:$0xf]
  %v46 = vld [vmem:[%s1 + $0x68] sm:$0xf]
  %v47 = vld [vmem:[%s1 + $0x6c] sm:$0xf]
  %v48 = vld [vmem:[%s1 + $0x70] sm:$0xf]
  %v49 = vld [vmem:[%s1 + $0x74] sm:$0xf]
  %v50 = vld [vmem:[%s1 + $0x78] sm:$0xf]
  %v51 = vld [vmem:[%s1 + $0x7c] sm:$0xf]
  %v52 = vld [vmem:[%s1 + $0x80] sm:$0xf]
  %v53 = vld [vmem:[%s1 + $0x84] sm:$0xf]
  %v54 = vld [vmem:[%s1 + $0x88] sm:$0xf]
  %v55 = vld [vmem:[%s1 + $0x8c] sm:$0xf]
  %v56 = vld [vmem:[%s1 + $0x90] sm:$0xf]
  %v57 = vld [vmem:[%s1 + $0x94] sm:$0xf]
  %v58 = vld [vmem:[%s1 + $0x98] sm:$0xf]
  %v59 = vld [vmem:[%s1 + $0x9c] sm:$0xf]
  %v60 = vld [vmem:[%s1 + $0xa0] sm:$0xf]
  %v61 = vld [vmem:[%s1 + $0xa4] sm:$0xf]
  %v62 = vld [vmem:[%s1 + $0xa8] sm:$0xf]
  %v63 = vld [vmem:[%s1 + $0xac] sm:$0xf]
  %v64 = vld [vmem:[%s1 + $0xb0] sm:$0xf]
  %v65 = vld [vmem:[%s1 + $0xb4] sm:$0xf]
  %v66 = vld [vmem:[%s1 + $0xb8] sm:$0xf]
  %v67 = vld [vmem:[%s1 + $0xbc] sm:$0xf]
  %v68 = vld [vmem:[%s1 + $0xc0] sm:$0xf]
  %v69 = vld [vmem:[%s1 + $0xc4] sm:$0xf]
  %v70 = vld [vmem:[%s1 + $0xc8] sm:$0xf]
  %v71 = vld [vmem:[%s1 + $0xcc] sm:$0xf]
  %v72 = vld [vmem:[%s1 + $0xd0] sm:$0xf]
  %v73 = vld [vmem:[%s1 + $0xd4] sm:$0xf]
  %v74 = vld [vmem:[%s1 + $0xd8] sm:$0xf]
  %v75 = vld [vmem:[%s1 + $0xdc] sm:$0xf]
  %v76 = vld [vmem:[%s1 + $0xe0] sm:$0xf]
  %v77 = vld [vmem:[%s1 + $0xe4] sm:$0xf]
  %v78 = vld [vmem:[%s1 + $0xe8] sm:$0xf]
  %v79 = vld [vmem:[%s1 + $0xec] sm:$0xf]
  %v80 = vld [vmem:[%s1 + $0xf0] sm:$0xf]
  %v81 = vld [vmem:[%s1 + $0xf4] sm:$0xf]
  %v82 = vld [vmem:[%s1 + $0xf8] sm:$0xf]
  %v83 = vld [vmem:[%s1 + $0xfc] sm:$0xf]
  %v84 = vld [vmem:[%s1 + $0x100] sm:$0xf]
  %v85 = vld [vmem:[%s1 + $0x104] sm:$0xf]
  %v86 = vld [vmem:[%s1 + $0x108] sm:$0xf]
  %v87 = vld [vmem:[%s1 + $0x10c] sm:$0xf]
  %v88 = vld [vmem:[%s1 + $0x110] sm:$0xf]
  %v89 = vld [vmem:[%s1 + $0x114] sm:$0xf]
  %v90 = vld [vmem:[%s1 + $0x118] sm:$0xf]
  %v91 = vld [vmem:[%s1 + $0x11c] sm:$0xf]
  %v92 = vld [vmem:[%s1 + $0x120] sm:$0xf]
  %v93 = vld [vmem:[%s1 + $0x124] sm:$0xf]
  %v94 = vld [vmem:[%s1 + $0x128] sm:$0xf]
  %v95 = vld [vmem:[%s1 + $0x12c] sm:$0xf]
  %v96 = vld [vmem:[%s1 + $0x130] sm:$0xf]
  %v97 = vld [vmem:[%s1 + $0x134] sm:$0xf]
  %v98 = vld [vmem:[%s1 + $0x138] sm:$0xf]
  %v99 = vld [vmem:[%s1 + $0x13c] sm:$0xf]
  %v100 = vld [vmem:[%s1 + $0x140] sm:$0xf]
  %v101 = vld [vmem:[%s1 + $0x144] sm:$0xf]
  %v102 = vld [vmem:[%s1 + $0x148] sm:$0xf]
  %v103 = vld [vmem:[%s1 + $0x14c] sm:$0xf]
  %v104 = vld [vmem:[%s1 + $0x150] sm:$0xf]
  %v105 = vld [vmem:[%s1 + $0x154] sm:$0xf]
  %v106 = vld [vmem:[%s1 + $0x158] sm:$0xf]
  %v107 = vld [vmem:[%s1 + $0x15c] sm:$0xf]
  %v108 = vld [vmem:[%s1 + $0x160] sm:$0xf]
  %v109 = vld [vmem:[%s1 + $0x164] sm:$0xf]
  %v110 = vld [vmem:[%s1 + $0x168] sm:$0xf]
  %v111 = vld [vmem:[%s1 + $0x16c] sm:$0xf]
  %v112 = vld [vmem:[%s1 + $0x170] sm:$0xf]
  %v113 = vld [vmem:[%s1 + $0x174] sm:$0xf]
  %v114 = vld [vmem:[%s1 + $0x178] sm:$0xf]
  %v115 = vld [vmem:[%s1 + $0x17c] sm:$0xf]
  %v116 = vld [vmem:[%s1 + $0x180] sm:$0xf]
  %v117 = vld [vmem:[%s1 + $0x184] sm:$0xf]
  %v118 = vld [vmem:[%s1 + $0x188] sm:$0xf]
  %v119 = vld [vmem:[%s1 + $0x18c] sm:$0xf]
  %v120 = vld [vmem:[%s1 + $0x190] sm:$0xf]
  %v121 = vld [vmem:[%s1 + $0x194] sm:$0xf]
  %v122 = vld [vmem:[%s1 + $0x198] sm:$0xf]
  %v123 = vld [vmem:[%s1 + $0x19c] sm:$0xf]
  %v124 = vld [vmem:[%s1 + $0x1a0] sm:$0xf]
  %v125 = vld [vmem:[%s1 + $0x1a4] sm:$0xf]
  %v126 = vld [vmem:[%s1 + $0x1a8] sm:$0xf]
  %v127 = vld [vmem:[%s1 + $0x1ac] sm:$0xf]
  %v128 = vld [vmem:[%s1 + $0x1b0] sm:$0xf]
  %v129 = vld [vmem:[%s1 + $0x1b4] sm:$0xf]
  %v130 = vld [vmem:[%s1 + $0x1b8] sm:$0xf]
  %v131 = vld [vmem:[%s1 + $0x1bc] sm:$0xf]
  %v132 = vld [vmem:[%s1 + $0x1c0] sm:$0xf]
  %v133 = vld [vmem:[%s1 + $0x1c4] sm:$0xf]
  %v134 = vld [vmem:[%s1 + $0x1c8] sm:$0xf]
  %v135 = vld [vmem:[%s1 + $0x1cc] sm:$0xf]
  %v136 = vld [vmem:[%s1 + $0x1d0] sm:$0xf]
  %v137 = vld [vmem:[%s1 + $0x1d4] sm:$0xf]
  %v138 = vld [vmem:[%s1 + $0x1d8] sm:$0xf]
  %v139 = vld [vmem:[%s1 + $0x1dc] sm:$0xf]
  %v140 = vld [vmem:[%s1 + $0x1e0] sm:$0xf]
  %v141 = vld [vmem:[%s1 + $0x1e4] sm:$0xf]
  %v142 = vld [vmem:[%s1 + $0x1e8] sm:$0xf]
  %v143 = vld [vmem:[%s1 + $0x1ec] sm:$0xf]
  %v144 = vld [vmem:[%s1 + $0x1f0] sm:$0xf]
  %v145 = vld [vmem:[%s1 + $0x1f4] sm:$0xf]
  %v146 = vld [vmem:[%s1 + $0x1f8] sm:$0xf]
  %v147 = vld [vmem:[%s1 + $0x1fc] sm:$0xf]
  %v148 = vld [vmem:[%s2] sm:$0x1]
  %v150 = vlaneseq
  %v151 = vshrl.u32 %v150, 7
  %v152 = vsub.s32 0, %v151
  %v153 = vrot.slane %v148, %v152
  %v156 = vcombine.high %v19, %v19
  %v158 = vunpack.c.l.s4 1966171168
  %v159 = vunpack.c.0.s8 %v158
  %v160 = vlaneseq
  %v161 = vshrl.u32 %v160, 7
  %v162 = vsub.s32 %v159, %v161
  %v163 = vrot.slane %v19, %v162
  %v165 = vunpack.c.l.s4 1966171168
  %v166 = vunpack.c.0.s8 %v165
  %v167 = vlaneseq
  %v168 = vshrl.u32 %v167, 7
  %v169 = vsub.s32 %v166, %v168
  %v170 = vrot.slane %v156, %v169
  %v171 = vcombine.high %v163, %v163
  %v172 = vcombine.high %v170, %v170
  %v174 = vunpack.c.l.s4 1966171168
  %v175 = vunpack.c.0.s8 %v174
  %v176 = vlaneseq
  %v177 = vshrl.u32 %v176, 7
  %v178 = vsub.s32 %v175, %v177
  %v179 = vrot.slane %v163, %v178
  %v181 = vunpack.c.l.s4 1966171168
  %v182 = vunpack.c.0.s8 %v181
  %v183 = vlaneseq
  %v184 = vshrl.u32 %v183, 7
  %v185 = vsub.s32 %v182, %v184
  %v186 = vrot.slane %v170, %v185
  %v188 = vunpack.c.l.s4 1966171168
  %v189 = vunpack.c.0.s8 %v188
  %v190 = vlaneseq
  %v191 = vshrl.u32 %v190, 7
  %v192 = vsub.s32 %v189, %v191
  %v193 = vrot.slane %v171, %v192
  %v195 = vunpack.c.l.s4 1966171168
  %v196 = vunpack.c.0.s8 %v195
  %v197 = vlaneseq
  %v198 = vshrl.u32 %v197, 7
  %v199 = vsub.s32 %v196, %v198
  %v200 = vrot.slane %v172, %v199
  %v201 = vcombine.high %v179, %v179
  %v202 = vcombine.high %v186, %v186
  %v203 = vcombine.high %v193, %v193
  %v204 = vcombine.high %v200, %v200
  %v341 = vunpack.c.l.b16 %v20
  %v342 = vunpack.c.l.b16 %v21
  %v343 = vunpack.c.l.b16 %v22
  %v344 = vunpack.c.l.b16 %v23
  %v345 = vunpack.c.l.b16 %v24
  %v346 = vunpack.c.l.b16 %v25
  %v347 = vunpack.c.l.b16 %v26
  %v348 = vunpack.c.l.b16 %v27
  %v349 = vunpack.c.l.b16 %v28
  %v350 = vunpack.c.l.b16 %v29
  %v351 = vunpack.c.l.b16 %v30
  %v352 = vunpack.c.l.b16 %v31
  %v353 = vunpack.c.l.b16 %v32
  %v354 = vunpack.c.l.b16 %v33
  %v355 = vunpack.c.l.b16 %v34
  %v356 = vunpack.c.l.b16 %v35
  %v357 = vunpack.c.l.b16 %v36
  %v358 = vunpack.c.l.b16 %v37
  %v359 = vunpack.c.l.b16 %v38
  %v360 = vunpack.c.l.b16 %v39
  %v361 = vunpack.c.l.b16 %v40
  %v362 = vunpack.c.l.b16 %v41
  %v363 = vunpack.c.l.b16 %v42
  %v364 = vunpack.c.l.b16 %v43
  %v365 = vunpack.c.l.b16 %v44
  %v366 = vunpack.c.l.b16 %v45
  %v367 = vunpack.c.l.b16 %v46
  %v368 = vunpack.c.l.b16 %v47
  %v369 = vunpack.c.l.b16 %v48
  %v370 = vunpack.c.l.b16 %v49
  %v371 = vunpack.c.l.b16 %v50
  %v372 = vunpack.c.l.b16 %v51
  %v373 = vunpack.c.l.b16 %v52
  %v374 = vunpack.c.l.b16 %v53
  %v375 = vunpack.c.l.b16 %v54
  %v376 = vunpack.c.l.b16 %v55
  %v377 = vunpack.c.l.b16 %v56
  %v378 = vunpack.c.l.b16 %v57
  %v379 = vunpack.c.l.b16 %v58
  %v380 = vunpack.c.l.b16 %v59
  %v381 = vunpack.c.l.b16 %v60
  %v382 = vunpack.c.l.b16 %v61
  %v383 = vunpack.c.l.b16 %v62
  %v384 = vunpack.c.l.b16 %v63
  %v385 = vunpack.c.l.b16 %v64
  %v386 = vunpack.c.l.b16 %v65
  %v387 = vunpack.c.l.b16 %v66
  %v388 = vunpack.c.l.b16 %v67
  %v389 = vunpack.c.l.b16 %v68
  %v390 = vunpack.c.l.b16 %v69
  %v391 = vunpack.c.l.b16 %v70
  %v392 = vunpack.c.l.b16 %v71
  %v393 = vunpack.c.l.b16 %v72
  %v394 = vunpack.c.l.b16 %v73
  %v395 = vunpack.c.l.b16 %v74
  %v396 = vunpack.c.l.b16 %v75
  %v397 = vunpack.c.l.b16 %v76
  %v398 = vunpack.c.l.b16 %v77
  %v399 = vunpack.c.l.b16 %v78
  %v400 = vunpack.c.l.b16 %v79
  %v401 = vunpack.c.l.b16 %v80
  %v402 = vunpack.c.l.b16 %v81
  %v403 = vunpack.c.l.b16 %v82
  %v404 = vunpack.c.l.b16 %v83
  %v405 = vunpack.c.l.b16 %v84
  %v406 = vunpack.c.l.b16 %v85
  %v407 = vunpack.c.l.b16 %v86
  %v408 = vunpack.c.l.b16 %v87
  %v409 = vunpack.c.l.b16 %v88
  %v410 = vunpack.c.l.b16 %v89
  %v411 = vunpack.c.l.b16 %v90
  %v412 = vunpack.c.l.b16 %v91
  %v413 = vunpack.c.l.b16 %v92
  %v414 = vunpack.c.l.b16 %v93
  %v415 = vunpack.c.l.b16 %v94
  %v416 = vunpack.c.l.b16 %v95
  %v417 = vunpack.c.l.b16 %v96
  %v418 = vunpack.c.l.b16 %v97
  %v419 = vunpack.c.l.b16 %v98
  %v420 = vunpack.c.l.b16 %v99
  %v421 = vunpack.c.l.b16 %v100
  %v422 = vunpack.c.l.b16 %v101
  %v423 = vunpack.c.l.b16 %v102
  %v424 = vunpack.c.l.b16 %v103
  %v425 = vunpack.c.l.b16 %v104
  %v426 = vunpack.c.l.b16 %v105
  %v427 = vunpack.c.l.b16 %v106
  %v428 = vunpack.c.l.b16 %v107
  %v429 = vunpack.c.l.b16 %v108
  %v430 = vunpack.c.l.b16 %v109
  %v431 = vunpack.c.l.b16 %v110
  %v432 = vunpack.c.l.b16 %v111
  %v433 = vunpack.c.l.b16 %v112
  %v434 = vunpack.c.l.b16 %v113
  %v435 = vunpack.c.l.b16 %v114
  %v436 = vunpack.c.l.b16 %v115
  %v437 = vunpack.c.l.b16 %v116
  %v438 = vunpack.c.l.b16 %v117
  %v439 = vunpack.c.l.b16 %v118
  %v440 = vunpack.c.l.b16 %v119
  %v441 = vunpack.c.l.b16 %v120
  %v442 = vunpack.c.l.b16 %v121
  %v443 = vunpack.c.l.b16 %v122
  %v444 = vunpack.c.l.b16 %v123
  %v445 = vunpack.c.l.b16 %v124
  %v446 = vunpack.c.l.b16 %v125
  %v447 = vunpack.c.l.b16 %v126
  %v448 = vunpack.c.l.b16 %v127
  %v449 = vunpack.c.l.b16 %v128
  %v450 = vunpack.c.l.b16 %v129
  %v451 = vunpack.c.l.b16 %v130
  %v452 = vunpack.c.l.b16 %v131
  %v453 = vunpack.c.l.b16 %v132
  %v454 = vunpack.c.l.b16 %v133
  %v455 = vunpack.c.l.b16 %v134
  %v456 = vunpack.c.l.b16 %v135
  %v457 = vunpack.c.l.b16 %v136
  %v458 = vunpack.c.l.b16 %v137
  %v459 = vunpack.c.l.b16 %v138
  %v460 = vunpack.c.l.b16 %v139
  %v461 = vunpack.c.l.b16 %v140
  %v462 = vunpack.c.l.b16 %v141
  %v463 = vunpack.c.l.b16 %v142
  %v464 = vunpack.c.l.b16 %v143
  %v465 = vunpack.c.l.b16 %v144
  %v466 = vunpack.c.l.b16 %v145
  %v467 = vunpack.c.l.b16 %v146
  %v468 = vunpack.c.l.b16 %v147
  %v469 = vpack.c.b16 %v342, %v341
  %v470 = vpack.c.b16 %v344, %v343
  %v471 = vpack.c.b16 %v346, %v345
  %v472 = vpack.c.b16 %v348, %v347
  %v473 = vpack.c.b16 %v350, %v349
  %v474 = vpack.c.b16 %v352, %v351
  %v475 = vpack.c.b16 %v354, %v353
  %v476 = vpack.c.b16 %v356, %v355
  %v477 = vpack.c.b16 %v358, %v357
  %v478 = vpack.c.b16 %v360, %v359
  %v479 = vpack.c.b16 %v362, %v361
  %v480 = vpack.c.b16 %v364, %v363
  %v481 = vpack.c.b16 %v366, %v365
  %v482 = vpack.c.b16 %v368, %v367
  %v483 = vpack.c.b16 %v370, %v369
  %v484 = vpack.c.b16 %v372, %v371
  %v485 = vpack.c.b16 %v374, %v373
  %v486 = vpack.c.b16 %v376, %v375
  %v487 = vpack.c.b16 %v378, %v377
  %v488 = vpack.c.b16 %v380, %v379
  %v489 = vpack.c.b16 %v382, %v381
  %v490 = vpack.c.b16 %v384, %v383
  %v491 = vpack.c.b16 %v386, %v385
  %v492 = vpack.c.b16 %v388, %v387
  %v493 = vpack.c.b16 %v390, %v389
  %v494 = vpack.c.b16 %v392, %v391
  %v495 = vpack.c.b16 %v394, %v393
  %v496 = vpack.c.b16 %v396, %v395
  %v497 = vpack.c.b16 %v398, %v397
  %v498 = vpack.c.b16 %v400, %v399
  %v499 = vpack.c.b16 %v402, %v401
  %v500 = vpack.c.b16 %v404, %v403
  %v501 = vpack.c.b16 %v406, %v405
  %v502 = vpack.c.b16 %v408, %v407
  %v503 = vpack.c.b16 %v410, %v409
  %v504 = vpack.c.b16 %v412, %v411
  %v505 = vpack.c.b16 %v414, %v413
  %v506 = vpack.c.b16 %v416, %v415
  %v507 = vpack.c.b16 %v418, %v417
  %v508 = vpack.c.b16 %v420, %v419
  %v509 = vpack.c.b16 %v422, %v421
  %v510 = vpack.c.b16 %v424, %v423
  %v511 = vpack.c.b16 %v426, %v425
  %v512 = vpack.c.b16 %v428, %v427
  %v513 = vpack.c.b16 %v430, %v429
  %v514 = vpack.c.b16 %v432, %v431
  %v515 = vpack.c.b16 %v434, %v433
  %v516 = vpack.c.b16 %v436, %v435
  %v517 = vpack.c.b16 %v438, %v437
  %v518 = vpack.c.b16 %v440, %v439
  %v519 = vpack.c.b16 %v442, %v441
  %v520 = vpack.c.b16 %v444, %v443
  %v521 = vpack.c.b16 %v446, %v445
  %v522 = vpack.c.b16 %v448, %v447
  %v523 = vpack.c.b16 %v450, %v449
  %v524 = vpack.c.b16 %v452, %v451
  %v525 = vpack.c.b16 %v454, %v453
  %v526 = vpack.c.b16 %v456, %v455
  %v527 = vpack.c.b16 %v458, %v457
  %v528 = vpack.c.b16 %v460, %v459
  %v529 = vpack.c.b16 %v462, %v461
  %v530 = vpack.c.b16 %v464, %v463
  %v531 = vpack.c.b16 %v466, %v465
  %v532 = vpack.c.b16 %v468, %v467
  %597 = vmatprep.subr.bf16.mxu0 0
  %598 = vmatpush1.bf16.msra.mxu0 %v469
  %599 = vmatprep.subr.bf16.mxu0 0
  %600 = vmatpush1.bf16.msra.mxu0 %v470
  %601 = vmatprep.subr.bf16.mxu0 0
  %602 = vmatpush1.bf16.msra.mxu0 %v471
  %603 = vmatprep.subr.bf16.mxu0 0
  %604 = vmatpush1.bf16.msra.mxu0 %v472
  %605 = vmatprep.subr.bf16.mxu0 0
  %606 = vmatpush1.bf16.msra.mxu0 %v473
  %607 = vmatprep.subr.bf16.mxu0 0
  %608 = vmatpush1.bf16.msra.mxu0 %v474
  %609 = vmatprep.subr.bf16.mxu0 0
  %610 = vmatpush1.bf16.msra.mxu0 %v475
  %611 = vmatprep.subr.bf16.mxu0 0
  %612 = vmatpush1.bf16.msra.mxu0 %v476
  %613 = vmatprep.subr.bf16.mxu0 0
  %614 = vmatpush1.bf16.msra.mxu0 %v477
  %615 = vmatprep.subr.bf16.mxu0 0
  %616 = vmatpush1.bf16.msra.mxu0 %v478
  %617 = vmatprep.subr.bf16.mxu0 0
  %618 = vmatpush1.bf16.msra.mxu0 %v479
  %619 = vmatprep.subr.bf16.mxu0 0
  %620 = vmatpush1.bf16.msra.mxu0 %v480
  %621 = vmatprep.subr.bf16.mxu0 0
  %622 = vmatpush1.bf16.msra.mxu0 %v481
  %623 = vmatprep.subr.bf16.mxu0 0
  %624 = vmatpush1.bf16.msra.mxu0 %v482
  %625 = vmatprep.subr.bf16.mxu0 0
  %626 = vmatpush1.bf16.msra.mxu0 %v483
  %627 = vmatprep.subr.bf16.mxu0 0
  %628 = vmatpush1.bf16.msra.mxu0 %v484
  %629 = vmatprep.mubr.bf16.mxu0 %v193
  %630 = vmatmul.mubr.bf16.gmra.mrb[0].mxu0 %v179
  %v631 = vpop.f32.mrb[0].mxu0
  %v632 = vadd.f32 %v153, %v631
  %v633 = vpop.f32.mrb[0].mxu0
  %v634 = vpop.f32.mrb[0].mxu0
  %v635 = vpop.f32.mrb[0].mxu0
  %636 = vdwg.mxu0
  %637 = vmatprep.subr.bf16.mxu0 0
  %638 = vmatpush1.bf16.msra.mxu0 %v485
  %639 = vmatprep.subr.bf16.mxu0 0
  %640 = vmatpush1.bf16.msra.mxu0 %v486
  %641 = vmatprep.subr.bf16.mxu0 0
  %642 = vmatpush1.bf16.msra.mxu0 %v487
  %643 = vmatprep.subr.bf16.mxu0 0
  %644 = vmatpush1.bf16.msra.mxu0 %v488
  %645 = vmatprep.subr.bf16.mxu0 0
  %646 = vmatpush1.bf16.msra.mxu0 %v489
  %647 = vmatprep.subr.bf16.mxu0 0
  %648 = vmatpush1.bf16.msra.mxu0 %v490
  %649 = vmatprep.subr.bf16.mxu0 0
  %650 = vmatpush1.bf16.msra.mxu0 %v491
  %651 = vmatprep.subr.bf16.mxu0 0
  %652 = vmatpush1.bf16.msra.mxu0 %v492
  %653 = vmatprep.subr.bf16.mxu0 0
  %654 = vmatpush1.bf16.msra.mxu0 %v493
  %655 = vmatprep.subr.bf16.mxu0 0
  %656 = vmatpush1.bf16.msra.mxu0 %v494
  %657 = vmatprep.subr.bf16.mxu0 0
  %658 = vmatpush1.bf16.msra.mxu0 %v495
  %659 = vmatprep.subr.bf16.mxu0 0
  %660 = vmatpush1.bf16.msra.mxu0 %v496
  %661 = vmatprep.subr.bf16.mxu0 0
  %662 = vmatpush1.bf16.msra.mxu0 %v497
  %663 = vmatprep.subr.bf16.mxu0 0
  %664 = vmatpush1.bf16.msra.mxu0 %v498
  %665 = vmatprep.subr.bf16.mxu0 0
  %666 = vmatpush1.bf16.msra.mxu0 %v499
  %667 = vmatprep.subr.bf16.mxu0 0
  %668 = vmatpush1.bf16.msra.mxu0 %v500
  %669 = vmatprep.mubr.bf16.mxu0 %v203
  %670 = vmatmul.mubr.bf16.gmra.mrb[0].mxu0 %v201
  %v671 = vpop.f32.mrb[0].mxu0
  %v672 = vadd.f32 %v632, %v671
  %v673 = vpop.f32.mrb[0].mxu0
  %v674 = vpop.f32.mrb[0].mxu0
  %v675 = vpop.f32.mrb[0].mxu0
  %676 = vdwg.mxu0
  %677 = vmatprep.subr.bf16.mxu0 0
  %678 = vmatpush1.bf16.msra.mxu0 %v501
  %679 = vmatprep.subr.bf16.mxu0 0
  %680 = vmatpush1.bf16.msra.mxu0 %v502
  %681 = vmatprep.subr.bf16.mxu0 0
  %682 = vmatpush1.bf16.msra.mxu0 %v503
  %683 = vmatprep.subr.bf16.mxu0 0
  %684 = vmatpush1.bf16.msra.mxu0 %v504
  %685 = vmatprep.subr.bf16.mxu0 0
  %686 = vmatpush1.bf16.msra.mxu0 %v505
  %687 = vmatprep.subr.bf16.mxu0 0
  %688 = vmatpush1.bf16.msra.mxu0 %v506
  %689 = vmatprep.subr.bf16.mxu0 0
  %690 = vmatpush1.bf16.msra.mxu0 %v507
  %691 = vmatprep.subr.bf16.mxu0 0
  %692 = vmatpush1.bf16.msra.mxu0 %v508
  %693 = vmatprep.subr.bf16.mxu0 0
  %694 = vmatpush1.bf16.msra.mxu0 %v509
  %695 = vmatprep.subr.bf16.mxu0 0
  %696 = vmatpush1.bf16.msra.mxu0 %v510
  %697 = vmatprep.subr.bf16.mxu0 0
  %698 = vmatpush1.bf16.msra.mxu0 %v511
  %699 = vmatprep.subr.bf16.mxu0 0
  %700 = vmatpush1.bf16.msra.mxu0 %v512
  %701 = vmatprep.subr.bf16.mxu0 0
  %702 = vmatpush1.bf16.msra.mxu0 %v513
  %703 = vmatprep.subr.bf16.mxu0 0
  %704 = vmatpush1.bf16.msra.mxu0 %v514
  %705 = vmatprep.subr.bf16.mxu0 0
  %706 = vmatpush1.bf16.msra.mxu0 %v515
  %707 = vmatprep.subr.bf16.mxu0 0
  %708 = vmatpush1.bf16.msra.mxu0 %v516
  %709 = vmatprep.mubr.bf16.mxu0 %v200
  %710 = vmatmul.mubr.bf16.gmra.mrb[0].mxu0 %v186
  %v711 = vpop.f32.mrb[0].mxu0
  %v712 = vadd.f32 %v672, %v711
  %v713 = vpop.f32.mrb[0].mxu0
  %v714 = vpop.f32.mrb[0].mxu0
  %v715 = vpop.f32.mrb[0].mxu0
  %716 = vdwg.mxu0
  %717 = vmatprep.subr.bf16.mxu0 0
  %718 = vmatpush1.bf16.msra.mxu0 %v517
  %719 = vmatprep.subr.bf16.mxu0 0
  %720 = vmatpush1.bf16.msra.mxu0 %v518
  %721 = vmatprep.subr.bf16.mxu0 0
  %722 = vmatpush1.bf16.msra.mxu0 %v519
  %723 = vmatprep.subr.bf16.mxu0 0
  %724 = vmatpush1.bf16.msra.mxu0 %v520
  %725 = vmatprep.subr.bf16.mxu0 0
  %726 = vmatpush1.bf16.msra.mxu0 %v521
  %727 = vmatprep.subr.bf16.mxu0 0
  %728 = vmatpush1.bf16.msra.mxu0 %v522
  %729 = vmatprep.subr.bf16.mxu0 0
  %730 = vmatpush1.bf16.msra.mxu0 %v523
  %731 = vmatprep.subr.bf16.mxu0 0
  %732 = vmatpush1.bf16.msra.mxu0 %v524
  %733 = vmatprep.subr.bf16.mxu0 0
  %734 = vmatpush1.bf16.msra.mxu0 %v525
  %735 = vmatprep.subr.bf16.mxu0 0
  %736 = vmatpush1.bf16.msra.mxu0 %v526
  %737 = vmatprep.subr.bf16.mxu0 0
  %738 = vmatpush1.bf16.msra.mxu0 %v527
  %739 = vmatprep.subr.bf16.mxu0 0
  %740 = vmatpush1.bf16.msra.mxu0 %v528
  %741 = vmatprep.subr.bf16.mxu0 0
  %742 = vmatpush1.bf16.msra.mxu0 %v529
  %743 = vmatprep.subr.bf16.mxu0 0
  %744 = vmatpush1.bf16.msra.mxu0 %v530
  %745 = vmatprep.subr.bf16.mxu0 0
  %746 = vmatpush1.bf16.msra.mxu0 %v531
  %747 = vmatprep.subr.bf16.mxu0 0
  %748 = vmatpush1.bf16.msra.mxu0 %v532
  %749 = vmatprep.mubr.bf16.mxu0 %v204
  %750 = vmatmul.mubr.bf16.gmra.mrb[0].mxu0 %v202
  %v751 = vpop.f32.mrb[0].mxu0
  %v752 = vadd.f32 %v712, %v751
  %v753 = vpop.f32.mrb[0].mxu0
  %v754 = vpop.f32.mrb[0].mxu0
  %v755 = vpop.f32.mrb[0].mxu0
  %756 = vdwg.mxu0
  %757 = vst [vmem:[%s3] sm:$0x3] %v752
  // Predicated region
  $region14: #{model_forward.17} parent=0 // pred_check
    _
  $region15: #{model_forward.17} parent=0 // pred_check_branch
    %759 = sbr.rel (0) target = $region17
  $region16: #{model_forward.17} parent=0 // pred_region
    _
  $region17: #{model_forward.17} parent=0 // pred_fallthru
    _
  // Predicated region
  $region18: #{model_forward.17} parent=0 // pred_check
    _
  $region19: #{model_forward.17} parent=0 // pred_check_branch
    %761 = sbr.rel (0) target = $region21
  $region20: #{model_forward.17} parent=0 // pred_region
    _
  $region21: #{model_forward.17} parent=0 // pred_fallthru
    _

// kernel: model_forward.18
$region0: #{model_forward.18}
  #allocation0 [shape = 'u32[]', space=smem, size = 0x4, offset = 0x4, fixed_abs, tag = 'smem constant byte address 0x4 - core index']
  #allocation1 [shape = 'u32[144,128]{1,0:T(1,128)}', space=vmem, size = 0x12000, scoped, tag = 'internal scratch']
  %s0 = inlined_call_operand.vmem [shape: bf16[8,256], index: 0, kind: input, shape index: {}]
  %s1 = inlined_call_operand.vmem [shape: bf16[256,256], index: 1, kind: input, shape index: {}]
  %s2 = inlined_call_operand.vmem [shape: f32[1,256], index: 2, kind: input, shape index: {}]
  %s3 = inlined_call_operand.vmem [shape: f32[8,256], index: 3, kind: input, shape index: {}]
  %s4 = inlined_call_operand.vmem [shape: f32[256,256], index: 4, kind: input, shape index: {}]
  %s5 = inlined_call_operand.vmem [shape: f32[8,256], index: 5, kind: output, shape index: {}]
  %s6 = sld [smem:[#allocation0]]
  $region30: #{model_forward.18} parent=0
    _
  %s8 = ssub.s32 1, %s6
  %s9 = scalar_select 0, %s8, %s6
  // Predicated region
  $region2: #{model_forward.18} parent=0 // pred_check
    _
  $region3: #{model_forward.18} parent=0 // pred_check_branch
    %11 = sbr.rel (0) target = $region5
  $region4: #{model_forward.18} parent=0 // pred_region
    _
  $region5: #{model_forward.18} parent=0 // pred_fallthru
    _
  // Predicated region
  $region6: #{model_forward.18} parent=0 // pred_check
    _
  $region7: #{model_forward.18} parent=0 // pred_check_branch
    %13 = sbr.rel (0) target = $region9
  $region8: #{model_forward.18} parent=0 // pred_region
    _
  $region9: #{model_forward.18} parent=0 // pred_fallthru
    _
  // Predicated region
  $region10: #{model_forward.18} parent=0 // pred_check
    _
  $region11: #{model_forward.18} parent=0 // pred_check_branch
    %15 = sbr.rel (0) target = $region13
  $region12: #{model_forward.18} parent=0 // pred_region
    _
  $region13: #{model_forward.18} parent=0 // pred_fallthru
    _
  // Predicated region
  $region14: #{model_forward.18} parent=0 // pred_check
    _
  $region15: #{model_forward.18} parent=0 // pred_check_branch
    %17 = sbr.rel (0) target = $region17
  $region16: #{model_forward.18} parent=0 // pred_region
    _
  $region17: #{model_forward.18} parent=0 // pred_fallthru
    _
  // Predicated region
  $region18: #{model_forward.18} parent=0 // pred_check
    _
  $region19: #{model_forward.18} parent=0 // pred_check_branch
    %19 = sbr.rel (0) target = $region21
  $region20: #{model_forward.18} parent=0 // pred_region
    _
  $region21: #{model_forward.18} parent=0 // pred_fallthru
    _
  %v21 = vld [vmem:[%s0] sm:$0xff]
  %v22 = vmax.bf16 %v21, 0
  %v23 = vld [vmem:[%s1] sm:$0xff]
  %v24 = vld [vmem:[%s1 + $0x8] sm:$0xff]
  %v25 = vld [vmem:[%s1 + $0x10] sm:$0xff]
  %v26 = vld [vmem:[%s1 + $0x18] sm:$0xff]
  %v27 = vld [vmem:[%s1 + $0x20] sm:$0xff]
  %v28 = vld [vmem:[%s1 + $0x28] sm:$0xff]
  %v29 = vld [vmem:[%s1 + $0x30] sm:$0xff]
  %v30 = vld [vmem:[%s1 + $0x38] sm:$0xff]
  %v31 = vld [vmem:[%s1 + $0x40] sm:$0xff]
  %v32 = vld [vmem:[%s1 + $0x48] sm:$0xff]
  %v33 = vld [vmem:[%s1 + $0x50] sm:$0xff]
  %v34 = vld [vmem:[%s1 + $0x58] sm:$0xff]
  %v35 = vld [vmem:[%s1 + $0x60] sm:$0xff]
  %v36 = vld [vmem:[%s1 + $0x68] sm:$0xff]
  %v37 = vld [vmem:[%s1 + $0x70] sm:$0xff]
  %v38 = vld [vmem:[%s1 + $0x78] sm:$0xff]
  %v39 = vld [vmem:[%s1 + $0x80] sm:$0xff]
  %v40 = vld [vmem:[%s1 + $0x88] sm:$0xff]
  %v41 = vld [vmem:[%s1 + $0x90] sm:$0xff]
  %v42 = vld [vmem:[%s1 + $0x98] sm:$0xff]
  %v43 = vld [vmem:[%s1 + $0xa0] sm:$0xff]
  %v44 = vld [vmem:[%s1 + $0xa8] sm:$0xff]
  %v45 = vld [vmem:[%s1 + $0xb0] sm:$0xff]
  %v46 = vld [vmem:[%s1 + $0xb8] sm:$0xff]
  %v47 = vld [vmem:[%s1 + $0xc0] sm:$0xff]
  %v48 = vld [vmem:[%s1 + $0xc8] sm:$0xff]
  %v49 = vld [vmem:[%s1 + $0xd0] sm:$0xff]
  %v50 = vld [vmem:[%s1 + $0xd8] sm:$0xff]
  %v51 = vld [vmem:[%s1 + $0xe0] sm:$0xff]
  %v52 = vld [vmem:[%s1 + $0xe8] sm:$0xff]
  %v53 = vld [vmem:[%s1 + $0xf0] sm:$0xff]
  %v54 = vld [vmem:[%s1 + $0xf8] sm:$0xff]
  %v55 = vld [vmem:[%s2] sm:$0x3]
  %v57 = vlaneseq
  %v58 = vshrl.u32 %v57, 7
  %v59 = vsub.s32 0, %v58
  %v60 = vrot.slane %v55, %v59
  %v61 = vlaneseq
  %v62 = vshrl.u32 %v61, 7
  %v63 = vsub.s32 1, %v62
  %v64 = vrot.slane %v55, %v63
  %v68 = vunpack.c.l.b16 %v22
  %v69 = vunpack.c.h.b16 %v22
  %v70 = vpack.c.b16 %v68, %v68
  %v71 = vpack.c.b16 %v69, %v69
  %v106 = vunpack.c.l.b16 %v23
  %v107 = vunpack.c.h.b16 %v23
  %v108 = vunpack.c.l.b16 %v24
  %v109 = vunpack.c.h.b16 %v24
  %v110 = vunpack.c.l.b16 %v25
  %v111 = vunpack.c.h.b16 %v25
  %v112 = vunpack.c.l.b16 %v26
  %v113 = vunpack.c.h.b16 %v26
  %v114 = vunpack.c.l.b16 %v27
  %v115 = vunpack.c.h.b16 %v27
  %v116 = vunpack.c.l.b16 %v28
  %v117 = vunpack.c.h.b16 %v28
  %v118 = vunpack.c.l.b16 %v29
  %v119 = vunpack.c.h.b16 %v29
  %v120 = vunpack.c.l.b16 %v30
  %v121 = vunpack.c.h.b16 %v30
  %v122 = vunpack.c.l.b16 %v31
  %v123 = vunpack.c.h.b16 %v31
  %v124 = vunpack.c.l.b16 %v32
  %v125 = vunpack.c.h.b16 %v32
  %v126 = vunpack.c.l.b16 %v33
  %v127 = vunpack.c.h.b16 %v33
  %v128 = vunpack.c.l.b16 %v34
  %v129 = vunpack.c.h.b16 %v34
  %v130 = vunpack.c.l.b16 %v35
  %v131 = vunpack.c.h.b16 %v35
  %v132 = vunpack.c.l.b16 %v36
  %v133 = vunpack.c.h.b16 %v36
  %v134 = vunpack.c.l.b16 %v37
  %v135 = vunpack.c.h.b16 %v37
  %v136 = vunpack.c.l.b16 %v38
  %v137 = vunpack.c.h.b16 %v38
  %v138 = vunpack.c.l.b16 %v39
  %v139 = vunpack.c.h.b16 %v39
  %v140 = vunpack.c.l.b16 %v40
  %v141 = vunpack.c.h.b16 %v40
  %v142 = vunpack.c.l.b16 %v41
  %v143 = vunpack.c.h.b16 %v41
  %v144 = vunpack.c.l.b16 %v42
  %v145 = vunpack.c.h.b16 %v42
  %v146 = vunpack.c.l.b16 %v43
  %v147 = vunpack.c.h.b16 %v43
  %v148 = vunpack.c.l.b16 %v44
  %v149 = vunpack.c.h.b16 %v44
  %v150 = vunpack.c.l.b16 %v45
  %v151 = vunpack.c.h.b16 %v45
  %v152 = vunpack.c.l.b16 %v46
  %v153 = vunpack.c.h.b16 %v46
  %v154 = vunpack.c.l.b16 %v47
  %v155 = vunpack.c.h.b16 %v47
  %v156 = vunpack.c.l.b16 %v48
  %v157 = vunpack.c.h.b16 %v48
  %v158 = vunpack.c.l.b16 %v49
  %v159 = vunpack.c.h.b16 %v49
  %v160 = vunpack.c.l.b16 %v50
  %v161 = vunpack.c.h.b16 %v50
  %v162 = vunpack.c.l.b16 %v51
  %v163 = vunpack.c.h.b16 %v51
  %v164 = vunpack.c.l.b16 %v52
  %v165 = vunpack.c.h.b16 %v52
  %v166 = vunpack.c.l.b16 %v53
  %v167 = vunpack.c.h.b16 %v53
  %v168 = vunpack.c.l.b16 %v54
  %v169 = vunpack.c.h.b16 %v54
  %v170 = vpack.c.b16 %v108, %v106
  %v171 = vpack.c.b16 %v109, %v107
  %v172 = vpack.c.b16 %v112, %v110
  %v173 = vpack.c.b16 %v113, %v111
  %v174 = vpack.c.b16 %v116, %v114
  %v175 = vpack.c.b16 %v117, %v115
  %v176 = vpack.c.b16 %v120, %v118
  %v177 = vpack.c.b16 %v121, %v119
  %v178 = vpack.c.b16 %v124, %v122
  %v179 = vpack.c.b16 %v125, %v123
  %v180 = vpack.c.b16 %v128, %v126
  %v181 = vpack.c.b16 %v129, %v127
  %v182 = vpack.c.b16 %v132, %v130
  %v183 = vpack.c.b16 %v133, %v131
  %v184 = vpack.c.b16 %v136, %v134
  %v185 = vpack.c.b16 %v137, %v135
  %v186 = vpack.c.b16 %v140, %v138
  %v187 = vpack.c.b16 %v141, %v139
  %v188 = vpack.c.b16 %v144, %v142
  %v189 = vpack.c.b16 %v145, %v143
  %v190 = vpack.c.b16 %v148, %v146
  %v191 = vpack.c.b16 %v149, %v147
  %v192 = vpack.c.b16 %v152, %v150
  %v193 = vpack.c.b16 %v153, %v151
  %v194 = vpack.c.b16 %v156, %v154
  %v195 = vpack.c.b16 %v157, %v155
  %v196 = vpack.c.b16 %v160, %v158
  %v197 = vpack.c.b16 %v161, %v159
  %v198 = vpack.c.b16 %v164, %v162
  %v199 = vpack.c.b16 %v165, %v163
  %v200 = vpack.c.b16 %v168, %v166
  %v201 = vpack.c.b16 %v169, %v167
  %234 = vmatprep.subr.bf16.mxu0 %v171
  %235 = vmatpush1.bf16.msra.mxu0 %v170
  %236 = vmatprep.subr.bf16.mxu0 %v173
  %237 = vmatpush1.bf16.msra.mxu0 %v172
  %238 = vmatprep.subr.bf16.mxu0 %v175
  %239 = vmatpush1.bf16.msra.mxu0 %v174
  %240 = vmatprep.subr.bf16.mxu0 %v177
  %241 = vmatpush1.bf16.msra.mxu0 %v176
  %242 = vmatprep.subr.bf16.mxu0 %v179
  %243 = vmatpush1.bf16.msra.mxu0 %v178
  %244 = vmatprep.subr.bf16.mxu0 %v181
  %245 = vmatpush1.bf16.msra.mxu0 %v180
  %246 = vmatprep.subr.bf16.mxu0 %v183
  %247 = vmatpush1.bf16.msra.mxu0 %v182
  %248 = vmatprep.subr.bf16.mxu0 %v185
  %249 = vmatpush1.bf16.msra.mxu0 %v184
  %250 = vmatprep.subr.bf16.mxu0 %v187
  %251 = vmatpush1.bf16.msra.mxu0 %v186
  %252 = vmatprep.subr.bf16.mxu0 %v189
  %253 = vmatpush1.bf16.msra.mxu0 %v188
  %254 = vmatprep.subr.bf16.mxu0 %v191
  %255 = vmatpush1.bf16.msra.mxu0 %v190
  %256 = vmatprep.subr.bf16.mxu0 %v193
  %257 = vmatpush1.bf16.msra.mxu0 %v192
  %258 = vmatprep.subr.bf16.mxu0 %v195
  %259 = vmatpush1.bf16.msra.mxu0 %v194
  %260 = vmatprep.subr.bf16.mxu0 %v197
  %261 = vmatpush1.bf16.msra.mxu0 %v196
  %262 = vmatprep.subr.bf16.mxu0 %v199
  %263 = vmatpush1.bf16.msra.mxu0 %v198
  %264 = vmatprep.subr.bf16.mxu0 %v201
  %265 = vmatpush1.bf16.msra.mxu0 %v200
  %266 = vmatprep.mubr.bf16.mxu0 %v71
  %267 = vmatmul.mubr.bf16.gmra.mrb[0].mxu0 %v70
  %v268 = vpop.f32.mrb[0].mxu0
  %v269 = vadd.f32 %v60, %v268
  %v270 = vpop.f32.mrb[0].mxu0
  %v271 = vadd.f32 %v64, %v270
  %v272 = vpop.f32.mrb[0].mxu0
  %v273 = vpop.f32.mrb[0].mxu0
  %274 = vdwg.mxu0
  %v275 = vld [vmem:[%s3] sm:$0xff]
  %v276 = vld [vmem:[%s3 + $0x8] sm:$0xff]
  %v277 = vmul.f32 %v269, %v275
  %v278 = vmul.f32 %v271, %v276
  %v279 = vrot.slane %v277, 4
  %v280 = vadd.f32 %v277, %v279
  %v281 = vrot.slane %v280, 2
  %v282 = vadd.f32 %v280, %v281
  %v283 = vrot.slane %v282, 1
  %v284 = vadd.f32 %v282, %v283
  %v285 = vrot.slane %v278, 4
  %v286 = vadd.f32 %v278, %v285
  %v287 = vrot.slane %v286, 2
  %v288 = vadd.f32 %v286, %v287
  %v289 = vrot.slane %v288, 1
  %v290 = vadd.f32 %v288, %v289
  %v291 = vmul.f32 %v277, %v269
  %v292 = vmul.f32 %v278, %v271
  %v293 = vrot.slane %v291, 4
  %v294 = vadd.f32 %v291, %v293
  %v295 = vrot.slane %v294, 2
  %v296 = vadd.f32 %v294, %v295
  %v297 = vrot.slane %v296, 1
  %v298 = vadd.f32 %v296, %v297
  %v299 = vrot.slane %v292, 4
  %v300 = vadd.f32 %v292, %v299
  %v301 = vrot.slane %v300, 2
  %v302 = vadd.f32 %v300, %v301
  %v303 = vrot.slane %v302, 1
  %v304 = vadd.f32 %v302, %v303
  %v305 = vld [vmem:[%s4] sm:$0xff]
  %v306 = vld [vmem:[%s4 + $0x8] sm:$0xff]
  %v307 = vld [vmem:[%s4 + $0x10] sm:$0xff]
  %v308 = vld [vmem:[%s4 + $0x18] sm:$0xff]
  %v309 = vld [vmem:[%s4 + $0x20] sm:$0xff]
  %v310 = vld [vmem:[%s4 + $0x28] sm:$0xff]
  %v311 = vld [vmem:[%s4 + $0x30] sm:$0xff]
  %v312 = vld [vmem:[%s4 + $0x38] sm:$0xff]
  %v313 = vld [vmem:[%s4 + $0x40] sm:$0xff]
  %v314 = vld [vmem:[%s4 + $0x48] sm:$0xff]
  %v315 = vld [vmem:[%s4 + $0x50] sm:$0xff]
  %v316 = vld [vmem:[%s4 + $0x58] sm:$0xff]
  %v317 = vld [vmem:[%s4 + $0x60] sm:$0xff]
  %v318 = vld [vmem:[%s4 + $0x68] sm:$0xff]
  %v319 = vld [vmem:[%s4 + $0x70] sm:$0xff]
  %v320 = vld [vmem:[%s4 + $0x78] sm:$0xff]
  %v321 = vld [vmem:[%s4 + $0x80] sm:$0xff]
  %v322 = vld [vmem:[%s4 + $0x88] sm:$0xff]
  %v323 = vld [vmem:[%s4 + $0x90] sm:$0xff]
  %v324 = vld [vmem:[%s4 + $0x98] sm:$0xff]
  %v325 = vld [vmem:[%s4 + $0xa0] sm:$0xff]
  %v326 = vld [vmem:[%s4 + $0xa8] sm:$0xff]
  %v327 = vld [vmem:[%s4 + $0xb0] sm:$0xff]
  %v328 = vld [vmem:[%s4 + $0xb8] sm:$0xff]
  %v329 = vld [vmem:[%s4 + $0xc0] sm:$0xff]
  %v330 = vld [vmem:[%s4 + $0xc8] sm:$0xff]
  %v331 = vld [vmem:[%s4 + $0xd0] sm:$0xff]
  %v332 = vld [vmem:[%s4 + $0xd8] sm:$0xff]
  %v333 = vld [vmem:[%s4 + $0xe0] sm:$0xff]
  %v334 = vld [vmem:[%s4 + $0xe8] sm:$0xff]
  %v335 = vld [vmem:[%s4 + $0xf0] sm:$0xff]
  %v336 = vld [vmem:[%s4 + $0xf8] sm:$0xff]
  %v337 = vld [vmem:[%s4 + $0x100] sm:$0xff]
  %v338 = vld [vmem:[%s4 + $0x108] sm:$0xff]
  %v339 = vld [vmem:[%s4 + $0x110] sm:$0xff]
  %v340 = vld [vmem:[%s4 + $0x118] sm:$0xff]
  %v341 = vld [vmem:[%s4 + $0x120] sm:$0xff]
  %v342 = vld [vmem:[%s4 + $0x128] sm:$0xff]
  %v343 = vld [vmem:[%s4 + $0x130] sm:$0xff]
  %v344 = vld [vmem:[%s4 + $0x138] sm:$0xff]
  %v345 = vld [vmem:[%s4 + $0x140] sm:$0xff]
  %v346 = vld [vmem:[%s4 + $0x148] sm:$0xff]
  %v347 = vld [vmem:[%s4 + $0x150] sm:$0xff]
  %v348 = vld [vmem:[%s4 + $0x158] sm:$0xff]
  %v349 = vld [vmem:[%s4 + $0x160] sm:$0xff]
  %v350 = vld [vmem:[%s4 + $0x168] sm:$0xff]
  %v351 = vld [vmem:[%s4 + $0x170] sm:$0xff]
  %v352 = vld [vmem:[%s4 + $0x178] sm:$0xff]
  %v353 = vld [vmem:[%s4 + $0x180] sm:$0xff]
  %v354 = vld [vmem:[%s4 + $0x188] sm:$0xff]
  %v355 = vld [vmem:[%s4 + $0x190] sm:$0xff]
  %v356 = vld [vmem:[%s4 + $0x198] sm:$0xff]
  %v357 = vld [vmem:[%s4 + $0x1a0] sm:$0xff]
  %v358 = vld [vmem:[%s4 + $0x1a8] sm:$0xff]
  %v359 = vld [vmem:[%s4 + $0x1b0] sm:$0xff]
  %v360 = vld [vmem:[%s4 + $0x1b8] sm:$0xff]
  %v361 = vld [vmem:[%s4 + $0x1c0] sm:$0xff]
  %v362 = vld [vmem:[%s4 + $0x1c8] sm:$0xff]
  %v363 = vld [vmem:[%s4 + $0x1d0] sm:$0xff]
  %v364 = vld [vmem:[%s4 + $0x1d8] sm:$0xff]
  %v365 = vld [vmem:[%s4 + $0x1e0] sm:$0xff]
  %v366 = vld [vmem:[%s4 + $0x1e8] sm:$0xff]
  %v367 = vld [vmem:[%s4 + $0x1f0] sm:$0xff]
  %v368 = vld [vmem:[%s4 + $0x1f8] sm:$0xff]
  %369 = vmatprep.subr.mxu0 %v306
  %370 = vmatpush1.msra.mxu0 %v305
  %371 = vmatprep.subr.mxu0 %v308
  %372 = vmatpush1.msra.mxu0 %v307
  %373 = vmatprep.subr.mxu0 %v310
  %374 = vmatpush1.msra.mxu0 %v309
  %375 = vmatprep.subr.mxu0 %v312
  %376 = vmatpush1.msra.mxu0 %v311
  %377 = vmatprep.subr.mxu0 %v314
  %378 = vmatpush1.msra.mxu0 %v313
  %379 = vmatprep.subr.mxu0 %v316
  %380 = vmatpush1.msra.mxu0 %v315
  %381 = vmatprep.subr.mxu0 %v318
  %382 = vmatpush1.msra.mxu0 %v317
  %383 = vmatprep.subr.mxu0 %v320
  %384 = vmatpush1.msra.mxu0 %v319
  %385 = vmatprep.subr.mxu0 %v322
  %386 = vmatpush1.msra.mxu0 %v321
  %387 = vmatprep.subr.mxu0 %v324
  %388 = vmatpush1.msra.mxu0 %v323
  %389 = vmatprep.subr.mxu0 %v326
  %390 = vmatpush1.msra.mxu0 %v325
  %391 = vmatprep.subr.mxu0 %v328
  %392 = vmatpush1.msra.mxu0 %v327
  %393 = vmatprep.subr.mxu0 %v330
  %394 = vmatpush1.msra.mxu0 %v329
  %395 = vmatprep.subr.mxu0 %v332
  %396 = vmatpush1.msra.mxu0 %v331
  %397 = vmatprep.subr.mxu0 %v334
  %398 = vmatpush1.msra.mxu0 %v333
  %399 = vmatprep.subr.mxu0 %v336
  %400 = vmatpush1.msra.mxu0 %v335
  %401 = vmatprep.subr.mxu0 %v338
  %402 = vmatpush1.msra.mxu0 %v337
  %403 = vmatprep.subr.mxu0 %v340
  %404 = vmatpush1.msra.mxu0 %v339
  %405 = vmatprep.subr.mxu0 %v342
  %406 = vmatpush1.msra.mxu0 %v341
  %407 = vmatprep.subr.mxu0 %v344
  %408 = vmatpush1.msra.mxu0 %v343
  %409 = vmatprep.subr.mxu0 %v346
  %410 = vmatpush1.msra.mxu0 %v345
  %411 = vmatprep.subr.mxu0 %v348
  %412 = vmatpush1.msra.mxu0 %v347
  %413 = vmatprep.subr.mxu0 %v350
  %414 = vmatpush1.msra.mxu0 %v349
  %415 = vmatprep.subr.mxu0 %v352
  %416 = vmatpush1.msra.mxu0 %v351
  %417 = vmatprep.subr.mxu0 %v354
  %418 = vmatpush1.msra.mxu0 %v353
  %419 = vmatprep.subr.mxu0 %v356
  %420 = vmatpush1.msra.mxu0 %v355
  %421 = vmatprep.subr.mxu0 %v358
  %422 = vmatpush1.msra.mxu0 %v357
  %423 = vmatprep.subr.mxu0 %v360
  %424 = vmatpush1.msra.mxu0 %v359
  %425 = vmatprep.subr.mxu0 %v362
  %426 = vmatpush1.msra.mxu0 %v361
  %427 = vmatprep.subr.mxu0 %v364
  %428 = vmatpush1.msra.mxu0 %v363
  %429 = vmatprep.subr.mxu0 %v366
  %430 = vmatpush1.msra.mxu0 %v365
  %431 = vmatprep.subr.mxu0 %v368
  %432 = vmatpush1.msra.mxu0 %v367
  %433 = vmatprep.mubr.f32.mxu0 %v290
  %434 = vmatmul.mubr.f32.gmra.mrb[0].mxu0 %v284
  %v435 = vpop.f32.mrb[0].mxu0
  %v436 = vadd.f32 0.0, %v435
  %v437 = vpop.f32.mrb[0].mxu0
  %v438 = vadd.f32 0.0, %v437
  %439 = vdwg.mxu0
  %v440 = vmul.f32 %v436, 0.125
  %v441 = vmul.f32 %v438, 0.125
  %442 = vmatprep.subr.mxu0 %v306
  %443 = vmatpush1.msra.mxu0 %v305
  %444 = vmatprep.subr.mxu0 %v308
  %445 = vmatpush1.msra.mxu0 %v307
  %446 = vmatprep.subr.mxu0 %v310
  %447 = vmatpush1.msra.mxu0 %v309
  %448 = vmatprep.subr.mxu0 %v312
  %449 = vmatpush1.msra.mxu0 %v311
  %450 = vmatprep.subr.mxu0 %v314
  %451 = vmatpush1.msra.mxu0 %v313
  %452 = vmatprep.subr.mxu0 %v316
  %453 = vmatpush1.msra.mxu0 %v315
  %454 = vmatprep.subr.mxu0 %v318
  %455 = vmatpush1.msra.mxu0 %v317
  %456 = vmatprep.subr.mxu0 %v320
  %457 = vmatpush1.msra.mxu0 %v319
  %458 = vmatprep.subr.mxu0 %v322
  %459 = vmatpush1.msra.mxu0 %v321
  %460 = vmatprep.subr.mxu0 %v324
  %461 = vmatpush1.msra.mxu0 %v323
  %462 = vmatprep.subr.mxu0 %v326
  %463 = vmatpush1.msra.mxu0 %v325
  %464 = vmatprep.subr.mxu0 %v328
  %465 = vmatpush1.msra.mxu0 %v327
  %466 = vmatprep.subr.mxu0 %v330
  %467 = vmatpush1.msra.mxu0 %v329
  %468 = vmatprep.subr.mxu0 %v332
  %469 = vmatpush1.msra.mxu0 %v331
  %470 = vmatprep.subr.mxu0 %v334
  %471 = vmatpush1.msra.mxu0 %v333
  %472 = vmatprep.subr.mxu0 %v336
  %473 = vmatpush1.msra.mxu0 %v335
  %474 = vmatprep.subr.mxu0 %v338
  %475 = vmatpush1.msra.mxu0 %v337
  %476 = vmatprep.subr.mxu0 %v340
  %477 = vmatpush1.msra.mxu0 %v339
  %478 = vmatprep.subr.mxu0 %v342
  %479 = vmatpush1.msra.mxu0 %v341
  %480 = vmatprep.subr.mxu0 %v344
  %481 = vmatpush1.msra.mxu0 %v343
  %482 = vmatprep.subr.mxu0 %v346
  %483 = vmatpush1.msra.mxu0 %v345
  %484 = vmatprep.subr.mxu0 %v348
  %485 = vmatpush1.msra.mxu0 %v347
  %486 = vmatprep.subr.mxu0 %v350
  %487 = vmatpush1.msra.mxu0 %v349
  %488 = vmatprep.subr.mxu0 %v352
  %489 = vmatpush1.msra.mxu0 %v351
  %490 = vmatprep.subr.mxu0 %v354
  %491 = vmatpush1.msra.mxu0 %v353
  %492 = vmatprep.subr.mxu0 %v356
  %493 = vmatpush1.msra.mxu0 %v355
  %494 = vmatprep.subr.mxu0 %v358
  %495 = vmatpush1.msra.mxu0 %v357
  %496 = vmatprep.subr.mxu0 %v360
  %497 = vmatpush1.msra.mxu0 %v359
  %498 = vmatprep.subr.mxu0 %v362
  %499 = vmatpush1.msra.mxu0 %v361
  %500 = vmatprep.subr.mxu0 %v364
  %501 = vmatpush1.msra.mxu0 %v363
  %502 = vmatprep.subr.mxu0 %v366
  %503 = vmatpush1.msra.mxu0 %v365
  %504 = vmatprep.subr.mxu0 %v368
  %505 = vmatpush1.msra.mxu0 %v367
  %506 = vmatprep.mubr.f32.mxu0 %v304
  %507 = vmatmul.mubr.f32.gmra.mrb[0].mxu0 %v298
  %v508 = vpop.f32.mrb[0].mxu0
  %v509 = vadd.f32 0.0, %v508
  %v510 = vpop.f32.mrb[0].mxu0
  %v511 = vadd.f32 0.0, %v510
  %512 = vdwg.mxu0
  %v513 = vmul.f32 %v509, 0.125
  %v514 = vmul.f32 %v511, 0.125
  %v515 = vmul.f32 %v440, %v440
  %v516 = vmul.f32 %v441, %v441
  %v517 = vsub.f32 %v513, %v515
  %v518 = vsub.f32 %v514, %v516
  %v519 = vlaneseq
  %v520 = vshrl.u32 %v519, 7
  %v521 = vsub.s32 0, %v520
  %v522 = vrot.slane %v440, %v521
  %v523 = vlaneseq
  %v524 = vshrl.u32 %v523, 7
  %v525 = vsub.s32 0, %v524
  %v526 = vrot.slane %v441, %v525
  %v527 = vsub.f32 %v269, %v522
  %v528 = vsub.f32 %v271, %v526
  %v529 = vadd.f32 %v517, 1e-05
  %v530 = vadd.f32 %v518, 1e-05
  %v531 = vrsqrt.pop %v529
  %v532 = vrsqrt.pop %v530
  %v533 = vlaneseq
  %v534 = vshrl.u32 %v533, 7
  %v535 = vsub.s32 0, %v534
  %v536 = vrot.slane %v531, %v535
  %v537 = vlaneseq
  %v538 = vshrl.u32 %v537, 7
  %v539 = vsub.s32 0, %v538
  %v540 = vrot.slane %v532, %v539
  %v541 = vmul.f32 %v527, %v536
  %v542 = vmul.f32 %v528, %v540
  %543 = vst [vmem:[%s5] sm:$0xff] %v541
  %544 = vst [vmem:[%s5 + $0x8] sm:$0xff] %v542
  // Predicated region
  $region22: #{model_forward.18} parent=0 // pred_check
    _
  $region23: #{model_forward.18} parent=0 // pred_check_branch
    %546 = sbr.rel (0) target = $region25
  $region24: #{model_forward.18} parent=0 // pred_region
    _
  $region25: #{model_forward.18} parent=0 // pred_fallthru
    _
  // Predicated region
  $region26: #{model_forward.18} parent=0 // pred_check
    _
  $region27: #{model_forward.18} parent=0 // pred_check_branch
    %548 = sbr.rel (0) target = $region29
  $region28: #{model_forward.18} parent=0 // pred_region
    _
  $region29: #{model_forward.18} parent=0 // pred_fallthru
    _

// kernel: model_forward.19
$region0: #{model_forward.19}
  #allocation0 [shape = 'u32[]', space=smem, size = 0x4, offset = 0x4, fixed_abs, tag = 'smem constant byte address 0x4 - core index']
  #allocation1 [shape = 'u32[144,128]{1,0:T(1,128)}', space=vmem, size = 0x12000, scoped, tag = 'internal scratch']
  %s0 = inlined_call_operand.vmem [shape: bf16[18,512], index: 0, kind: input, shape index: {}]
  %s1 = inlined_call_operand.vmem [shape: bf16[512,128], index: 1, kind: input, shape index: {}]
  %s2 = inlined_call_operand.vmem [shape: f32[1,128], index: 2, kind: input, shape index: {}]
  %s3 = inlined_call_operand.vmem [shape: f32[18,128], index: 3, kind: input, shape index: {}]
  %s4 = inlined_call_operand.vmem [shape: f32[128,128], index: 4, kind: input, shape index: {}]
  %s5 = inlined_call_operand.vmem [shape: f32[18,128], index: 5, kind: output, shape index: {}]
  %s6 = sld [smem:[#allocation0]]
  $region30: #{model_forward.19} parent=0
    _
  %s8 = ssub.s32 1, %s6
  %s9 = scalar_select 0, %s8, %s6
  // Predicated region
  $region2: #{model_forward.19} parent=0 // pred_check
    _
  $region3: #{model_forward.19} parent=0 // pred_check_branch
    %11 = sbr.rel (0) target = $region5
  $region4: #{model_forward.19} parent=0 // pred_region
    _
  $region5: #{model_forward.19} parent=0 // pred_fallthru
    _
  // Predicated region
  $region6: #{model_forward.19} parent=0 // pred_check
    _
  $region7: #{model_forward.19} parent=0 // pred_check_branch
    %13 = sbr.rel (0) target = $region9
  $region8: #{model_forward.19} parent=0 // pred_region
    _
  $region9: #{model_forward.19} parent=0 // pred_fallthru
    _
  // Predicated region
  $region10: #{model_forward.19} parent=0 // pred_check
    _
  $region11: #{model_forward.19} parent=0 // pred_check_branch
    %15 = sbr.rel (0) target = $region13
  $region12: #{model_forward.19} parent=0 // pred_region
    _
  $region13: #{model_forward.19} parent=0 // pred_fallthru
    _
  // Predicated region
  $region14: #{model_forward.19} parent=0 // pred_check
    _
  $region15: #{model_forward.19} parent=0 // pred_check_branch
    %17 = sbr.rel (0) target = $region17
  $region16: #{model_forward.19} parent=0 // pred_region
    _
  $region17: #{model_forward.19} parent=0 // pred_fallthru
    _
  // Predicated region
  $region18: #{model_forward.19} parent=0 // pred_check
    _
  $region19: #{model_forward.19} parent=0 // pred_check_branch
    %19 = sbr.rel (0) target = $region21
  $region20: #{model_forward.19} parent=0 // pred_region
    _
  $region21: #{model_forward.19} parent=0 // pred_fallthru
    _
  %v21 = vld [vmem:[%s0] sm:$0xff]
  %v22 = vld [vmem:[%s0 + $0x8] sm:$0xff]
  %v23 = vld [vmem:[%s0 + $0x10] sm:$0xff]
  %v24 = vld [vmem:[%s0 + $0x18] sm:$0xff]
  %v25 = vld [vmem:[%s0 + $0x20] sm:$0x11]
  %v26 = vld [vmem:[%s0 + $0x28] sm:$0x11]
  %v27 = vmax.bf16 %v21, 0
  %v28 = vmax.bf16 %v22, 0
  %v29 = vmax.bf16 %v23, 0
  %v30 = vmax.bf16 %v24, 0
  %v31 = vmax.bf16 %v25, 0
  %v32 = vmax.bf16 %v26, 0
  %v33 = vld [vmem:[%s1] sm:$0xf]
  %v34 = vld [vmem:[%s1 + $0x4] sm:$0xf]
  %v35 = vld [vmem:[%s1 + $0x8] sm:$0xf]
  %v36 = vld [vmem:[%s1 + $0xc] sm:$0xf]
  %v37 = vld [vmem:[%s1 + $0x10] sm:$0xf]
  %v38 = vld [vmem:[%s1 + $0x14] sm:$0xf]
  %v39 = vld [vmem:[%s1 + $0x18] sm:$0xf]
  %v40 = vld [vmem:[%s1 + $0x1c] sm:$0xf]
  %v41 = vld [vmem:[%s1 + $0x20] sm:$0xf]
  %v42 = vld [vmem:[%s1 + $0x24] sm:$0xf]
  %v43 = vld [vmem:[%s1 + $0x28] sm:$0xf]
  %v44 = vld [vmem:[%s1 + $0x2c] sm:$0xf]
  %v45 = vld [vmem:[%s1 + $0x30] sm:$0xf]
  %v46 = vld [vmem:[%s1 + $0x34] sm:$0xf]
  %v47 = vld [vmem:[%s1 + $0x38] sm:$0xf]
  %v48 = vld [vmem:[%s1 + $0x3c] sm:$0xf]
  %v49 = vld [vmem:[%s1 + $0x40] sm:$0xf]
  %v50 = vld [vmem:[%s1 + $0x44] sm:$0xf]
  %v51 = vld [vmem:[%s1 + $0x48] sm:$0xf]
  %v52 = vld [vmem:[%s1 + $0x4c] sm:$0xf]
  %v53 = vld [vmem:[%s1 + $0x50] sm:$0xf]
  %v54 = vld [vmem:[%s1 + $0x54] sm:$0xf]
  %v55 = vld [vmem:[%s1 + $0x58] sm:$0xf]
  %v56 = vld [vmem:[%s1 + $0x5c] sm:$0xf]
  %v57 = vld [vmem:[%s1 + $0x60] sm:$0xf]
  %v58 = vld [vmem:[%s1 + $0x64] sm:$0xf]
  %v59 = vld [vmem:[%s1 + $0x68] sm:$0xf]
  %v60 = vld [vmem:[%s1 + $0x6c] sm:$0xf]
  %v61 = vld [vmem:[%s1 + $0x70] sm:$0xf]
  %v62 = vld [vmem:[%s1 + $0x74] sm:$0xf]
  %v63 = vld [vmem:[%s1 + $0x78] sm:$0xf]
  %v64 = vld [vmem:[%s1 + $0x7c] sm:$0xf]
  %v65 = vld [vmem:[%s1 + $0x80] sm:$0xf]
  %v66 = vld [vmem:[%s1 + $0x84] sm:$0xf]
  %v67 = vld [vmem:[%s1 + $0x88] sm:$0xf]
  %v68 = vld [vmem:[%s1 + $0x8c] sm:$0xf]
  %v69 = vld [vmem:[%s1 + $0x90] sm:$0xf]
  %v70 = vld [vmem:[%s1 + $0x94] sm:$0xf]
  %v71 = vld [vmem:[%s1 + $0x98] sm:$0xf]
  %v72 = vld [vmem:[%s1 + $0x9c] sm:$0xf]
  %v73 = vld [vmem:[%s1 + $0xa0] sm:$0xf]
  %v74 = vld [vmem:[%s1 + $0xa4] sm:$0xf]
  %v75 = vld [vmem:[%s1 + $0xa8] sm:$0xf]
  %v76 = vld [vmem:[%s1 + $0xac] sm:$0xf]
  %v77 = vld [vmem:[%s1 + $0xb0] sm:$0xf]
  %v78 = vld [vmem:[%s1 + $0xb4] sm:$0xf]
  %v79 = vld [vmem:[%s1 + $0xb8] sm:$0xf]
  %v80 = vld [vmem:[%s1 + $0xbc] sm:$0xf]
  %v81 = vld [vmem:[%s1 + $0xc0] sm:$0xf]
  %v82 = vld [vmem:[%s1 + $0xc4] sm:$0xf]
  %v83 = vld [vmem:[%s1 + $0xc8] sm:$0xf]
  %v84 = vld [vmem:[%s1 + $0xcc] sm:$0xf]
  %v85 = vld [vmem:[%s1 + $0xd0] sm:$0xf]
  %v86 = vld [vmem:[%s1 + $0xd4] sm:$0xf]
  %v87 = vld [vmem:[%s1 + $0xd8] sm:$0xf]
  %v88 = vld [vmem:[%s1 + $0xdc] sm:$0xf]
  %v89 = vld [vmem:[%s1 + $0xe0] sm:$0xf]
  %v90 = vld [vmem:[%s1 + $0xe4] sm:$0xf]
  %v91 = vld [vmem:[%s1 + $0xe8] sm:$0xf]
  %v92 = vld [vmem:[%s1 + $0xec] sm:$0xf]
  %v93 = vld [vmem:[%s1 + $0xf0] sm:$0xf]
  %v94 = vld [vmem:[%s1 + $0xf4] sm:$0xf]
  %v95 = vld [vmem:[%s1 + $0xf8] sm:$0xf]
  %v96 = vld [vmem:[%s1 + $0xfc] sm:$0xf]
  %v97 = vld [vmem:[%s2] sm:$0x1]
  %v99 = vlaneseq
  %v100 = vshrl.u32 %v99, 7
  %v101 = vsub.s32 0, %v100
  %v102 = vrot.slane %v97, %v101
  %v110 = vunpack.c.l.b16 %v27
  %v111 = vunpack.c.h.b16 %v27
  %v112 = vunpack.c.l.b16 %v28
  %v113 = vunpack.c.h.b16 %v28
  %v114 = vunpack.c.l.b16 %v29
  %v115 = vunpack.c.h.b16 %v29
  %v116 = vunpack.c.l.b16 %v30
  %v117 = vunpack.c.h.b16 %v30
  %v118 = vunpack.c.l.b16 %v31
  %v119 = vunpack.c.h.b16 %v31
  %v120 = vunpack.c.l.b16 %v32
  %v121 = vunpack.c.h.b16 %v32
  %v122 = vpack.c.b16 %v114, %v110
  %v123 = vpack.c.b16 %v115, %v111
  %v124 = vpack.c.b16 %v116, %v112
  %v125 = vpack.c.b16 %v117, %v113
  %v126 = vpack.c.b16 %v118, %v118
  %v127 = vpack.c.b16 %v119, %v119
  %v128 = vpack.c.b16 %v120, %v120
  %v129 = vpack.c.b16 %v121, %v121
  %v202 = vunpack.c.l.b16 %v33
  %v203 = vunpack.c.l.b16 %v34
  %v204 = vunpack.c.l.b16 %v35
  %v205 = vunpack.c.l.b16 %v36
  %v206 = vunpack.c.l.b16 %v37
  %v207 = vunpack.c.l.b16 %v38
  %v208 = vunpack.c.l.b16 %v39
  %v209 = vunpack.c.l.b16 %v40
  %v210 = vunpack.c.l.b16 %v41
  %v211 = vunpack.c.l.b16 %v42
  %v212 = vunpack.c.l.b16 %v43
  %v213 = vunpack.c.l.b16 %v44
  %v214 = vunpack.c.l.b16 %v45
  %v215 = vunpack.c.l.b16 %v46
  %v216 = vunpack.c.l.b16 %v47
  %v217 = vunpack.c.l.b16 %v48
  %v218 = vunpack.c.l.b16 %v49
  %v219 = vunpack.c.l.b16 %v50
  %v220 = vunpack.c.l.b16 %v51
  %v221 = vunpack.c.l.b16 %v52
  %v222 = vunpack.c.l.b16 %v53
  %v223 = vunpack.c.l.b16 %v54
  %v224 = vunpack.c.l.b16 %v55
  %v225 = vunpack.c.l.b16 %v56
  %v226 = vunpack.c.l.b16 %v57
  %v227 = vunpack.c.l.b16 %v58
  %v228 = vunpack.c.l.b16 %v59
  %v229 = vunpack.c.l.b16 %v60
  %v230 = vunpack.c.l.b16 %v61
  %v231 = vunpack.c.l.b16 %v62
  %v232 = vunpack.c.l.b16 %v63
  %v233 = vunpack.c.l.b16 %v64
  %v234 = vunpack.c.l.b16 %v65
  %v235 = vunpack.c.l.b16 %v66
  %v236 = vunpack.c.l.b16 %v67
  %v237 = vunpack.c.l.b16 %v68
  %v238 = vunpack.c.l.b16 %v69
  %v239 = vunpack.c.l.b16 %v70
  %v240 = vunpack.c.l.b16 %v71
  %v241 = vunpack.c.l.b16 %v72
  %v242 = vunpack.c.l.b16 %v73
  %v243 = vunpack.c.l.b16 %v74
  %v244 = vunpack.c.l.b16 %v75
  %v245 = vunpack.c.l.b16 %v76
  %v246 = vunpack.c.l.b16 %v77
  %v247 = vunpack.c.l.b16 %v78
  %v248 = vunpack.c.l.b16 %v79
  %v249 = vunpack.c.l.b16 %v80
  %v250 = vunpack.c.l.b16 %v81
  %v251 = vunpack.c.l.b16 %v82
  %v252 = vunpack.c.l.b16 %v83
  %v253 = vunpack.c.l.b16 %v84
  %v254 = vunpack.c.l.b16 %v85
  %v255 = vunpack.c.l.b16 %v86
  %v256 = vunpack.c.l.b16 %v87
  %v257 = vunpack.c.l.b16 %v88
  %v258 = vunpack.c.l.b16 %v89
  %v259 = vunpack.c.l.b16 %v90
  %v260 = vunpack.c.l.b16 %v91
  %v261 = vunpack.c.l.b16 %v92
  %v262 = vunpack.c.l.b16 %v93
  %v263 = vunpack.c.l.b16 %v94
  %v264 = vunpack.c.l.b16 %v95
  %v265 = vunpack.c.l.b16 %v96
  %v266 = vpack.c.b16 %v203, %v202
  %v267 = vpack.c.b16 %v205, %v204
  %v268 = vpack.c.b16 %v207, %v206
  %v269 = vpack.c.b16 %v209, %v208
  %v270 = vpack.c.b16 %v211, %v210
  %v271 = vpack.c.b16 %v213, %v212
  %v272 = vpack.c.b16 %v215, %v214
  %v273 = vpack.c.b16 %v217, %v216
  %v274 = vpack.c.b16 %v219, %v218
  %v275 = vpack.c.b16 %v221, %v220
  %v276 = vpack.c.b16 %v223, %v222
  %v277 = vpack.c.b16 %v225, %v224
  %v278 = vpack.c.b16 %v227, %v226
  %v279 = vpack.c.b16 %v229, %v228
  %v280 = vpack.c.b16 %v231, %v230
  %v281 = vpack.c.b16 %v233, %v232
  %v282 = vpack.c.b16 %v235, %v234
  %v283 = vpack.c.b16 %v237, %v236
  %v284 = vpack.c.b16 %v239, %v238
  %v285 = vpack.c.b16 %v241, %v240
  %v286 = vpack.c.b16 %v243, %v242
  %v287 = vpack.c.b16 %v245, %v244
  %v288 = vpack.c.b16 %v247, %v246
  %v289 = vpack.c.b16 %v249, %v248
  %v290 = vpack.c.b16 %v251, %v250
  %v291 = vpack.c.b16 %v253, %v252
  %v292 = vpack.c.b16 %v255, %v254
  %v293 = vpack.c.b16 %v257, %v256
  %v294 = vpack.c.b16 %v259, %v258
  %v295 = vpack.c.b16 %v261, %v260
  %v296 = vpack.c.b16 %v263, %v262
  %v297 = vpack.c.b16 %v265, %v264
  %330 = vmatprep.subr.bf16.mxu0 0
  %331 = vmatpush1.bf16.msra.mxu0 %v266
  %332 = vmatprep.subr.bf16.mxu0 0
  %333 = vmatpush1.bf16.msra.mxu0 %v267
  %334 = vmatprep.subr.bf16.mxu0 0
  %335 = vmatpush1.bf16.msra.mxu0 %v268
  %336 = vmatprep.subr.bf16.mxu0 0
  %337 = vmatpush1.bf16.msra.mxu0 %v269
  %338 = vmatprep.subr.bf16.mxu0 0
  %339 = vmatpush1.bf16.msra.mxu0 %v270
  %340 = vmatprep.subr.bf16.mxu0 0
  %341 = vmatpush1.bf16.msra.mxu0 %v271
  %342 = vmatprep.subr.bf16.mxu0 0
  %343 = vmatpush1.bf16.msra.mxu0 %v272
  %344 = vmatprep.subr.bf16.mxu0 0
  %345 = vmatpush1.bf16.msra.mxu0 %v273
  %346 = vmatprep.subr.bf16.mxu0 0
  %347 = vmatpush1.bf16.msra.mxu0 %v274
  %348 = vmatprep.subr.bf16.mxu0 0
  %349 = vmatpush1.bf16.msra.mxu0 %v275
  %350 = vmatprep.subr.bf16.mxu0 0
  %351 = vmatpush1.bf16.msra.mxu0 %v276
  %352 = vmatprep.subr.bf16.mxu0 0
  %353 = vmatpush1.bf16.msra.mxu0 %v277
  %354 = vmatprep.subr.bf16.mxu0 0
  %355 = vmatpush1.bf16.msra.mxu0 %v278
  %356 = vmatprep.subr.bf16.mxu0 0
  %357 = vmatpush1.bf16.msra.mxu0 %v279
  %358 = vmatprep.subr.bf16.mxu0 0
  %359 = vmatpush1.bf16.msra.mxu0 %v280
  %360 = vmatprep.subr.bf16.mxu0 0
  %361 = vmatpush1.bf16.msra.mxu0 %v281
  %362 = vmatprep.mubr.bf16.mxu0 %v123
  %363 = vmatmul.mubr.bf16.gmra.mrb[0].mxu0 %v122
  %v364 = vpop.f32.mrb[0].mxu0
  %v365 = vadd.f32 %v102, %v364
  %v366 = vpop.f32.mrb[0].mxu0
  %v367 = vpop.f32.mrb[0].mxu0
  %v368 = vadd.f32 %v102, %v367
  %v369 = vpop.f32.mrb[0].mxu0
  %370 = vmatprep.mubr.bf16.mxu0 %v127
  %371 = vmatmul.mubr.bf16.gmra.mrb[0].mxu0 %v126
  %v372 = vpop.f32.mrb[0].mxu0
  %v373 = vadd.f32 %v102, %v372
  %v374 = vpop.f32.mrb[0].mxu0
  %v375 = vpop.f32.mrb[0].mxu0
  %v376 = vpop.f32.mrb[0].mxu0
  %377 = vdwg.mxu0
  %378 = vmatprep.subr.bf16.mxu0 0
  %379 = vmatpush1.bf16.msra.mxu0 %v282
  %380 = vmatprep.subr.bf16.mxu0 0
  %381 = vmatpush1.bf16.msra.mxu0 %v283
  %382 = vmatprep.subr.bf16.mxu0 0
  %383 = vmatpush1.bf16.msra.mxu0 %v284
  %384 = vmatprep.subr.bf16.mxu0 0
  %385 = vmatpush1.bf16.msra.mxu0 %v285
  %386 = vmatprep.subr.bf16.mxu0 0
  %387 = vmatpush1.bf16.msra.mxu0 %v286
  %388 = vmatprep.subr.bf16.mxu0 0
  %389 = vmatpush1.bf16.msra.mxu0 %v287
  %390 = vmatprep.subr.bf16.mxu0 0
  %391 = vmatpush1.bf16.msra.mxu0 %v288
  %392 = vmatprep.subr.bf16.mxu0 0
  %393 = vmatpush1.bf16.msra.mxu0 %v289
  %394 = vmatprep.subr.bf16.mxu0 0
  %395 = vmatpush1.bf16.msra.mxu0 %v290
  %396 = vmatprep.subr.bf16.mxu0 0
  %397 = vmatpush1.bf16.msra.mxu0 %v291
  %398 = vmatprep.subr.bf16.mxu0 0
  %399 = vmatpush1.bf16.msra.mxu0 %v292
  %400 = vmatprep.subr.bf16.mxu0 0
  %401 = vmatpush1.bf16.msra.mxu0 %v293
  %402 = vmatprep.subr.bf16.mxu0 0
  %403 = vmatpush1.bf16.msra.mxu0 %v294
  %404 = vmatprep.subr.bf16.mxu0 0
  %405 = vmatpush1.bf16.msra.mxu0 %v295
  %406 = vmatprep.subr.bf16.mxu0 0
  %407 = vmatpush1.bf16.msra.mxu0 %v296
  %408 = vmatprep.subr.bf16.mxu0 0
  %409 = vmatpush1.bf16.msra.mxu0 %v297
  %410 = vmatprep.mubr.bf16.mxu0 %v125
  %411 = vmatmul.mubr.bf16.gmra.mrb[0].mxu0 %v124
  %v412 = vpop.f32.mrb[0].mxu0
  %v413 = vadd.f32 %v365, %v412
  %v414 = vpop.f32.mrb[0].mxu0
  %v415 = vpop.f32.mrb[0].mxu0
  %v416 = vadd.f32 %v368, %v415
  %v417 = vpop.f32.mrb[0].mxu0
  %418 = vmatprep.mubr.bf16.mxu0 %v129
  %419 = vmatmul.mubr.bf16.gmra.mrb[0].mxu0 %v128
  %v420 = vpop.f32.mrb[0].mxu0
  %v421 = vadd.f32 %v373, %v420
  %v422 = vpop.f32.mrb[0].mxu0
  %v423 = vpop.f32.mrb[0].mxu0
  %v424 = vpop.f32.mrb[0].mxu0
  %425 = vdwg.mxu0
  %v426 = vld [vmem:[%s3] sm:$0xff]
  %v427 = vld [vmem:[%s3 + $0x8] sm:$0xff]
  %v428 = vld [vmem:[%s3 + $0x10] sm:$0x3]
  %v429 = vmul.f32 %v413, %v426
  %v430 = vmul.f32 %v416, %v427
  %v431 = vmul.f32 %v421, %v428
  %v432 = vadd.f32 %v429, %v430
  %vm433 = vcmask 1041408
  %v434 = vsel %vm433, %v431, 0.0
  %v435 = vadd.f32 %v432, %v434
  %v436 = vrot.slane %v435, 4
  %v437 = vadd.f32 %v435, %v436
  %v438 = vrot.slane %v437, 2
  %v439 = vadd.f32 %v437, %v438
  %v440 = vrot.slane %v439, 1
  %v441 = vadd.f32 %v439, %v440
  %v442 = vmul.f32 %v429, %v413
  %v443 = vmul.f32 %v430, %v416
  %v444 = vmul.f32 %v431, %v421
  %v445 = vadd.f32 %v442, %v443
  %v446 = vsel %vm433, %v444, 0.0
  %v447 = vadd.f32 %v445, %v446
  %v448 = vrot.slane %v447, 4
  %v449 = vadd.f32 %v447, %v448
  %v450 = vrot.slane %v449, 2
  %v451 = vadd.f32 %v449, %v450
  %v452 = vrot.slane %v451, 1
  %v453 = vadd.f32 %v451, %v452
  %v454 = vld [vmem:[%s4] sm:$0xff]
  %v455 = vld [vmem:[%s4 + $0x8] sm:$0xff]
  %v456 = vld [vmem:[%s4 + $0x10] sm:$0xff]
  %v457 = vld [vmem:[%s4 + $0x18] sm:$0xff]
  %v458 = vld [vmem:[%s4 + $0x20] sm:$0xff]
  %v459 = vld [vmem:[%s4 + $0x28] sm:$0xff]
  %v460 = vld [vmem:[%s4 + $0x30] sm:$0xff]
  %v461 = vld [vmem:[%s4 + $0x38] sm:$0xff]
  %v462 = vld [vmem:[%s4 + $0x40] sm:$0xff]
  %v463 = vld [vmem:[%s4 + $0x48] sm:$0xff]
  %v464 = vld [vmem:[%s4 + $0x50] sm:$0xff]
  %v465 = vld [vmem:[%s4 + $0x58] sm:$0xff]
  %v466 = vld [vmem:[%s4 + $0x60] sm:$0xff]
  %v467 = vld [vmem:[%s4 + $0x68] sm:$0xff]
  %v468 = vld [vmem:[%s4 + $0x70] sm:$0xff]
  %v469 = vld [vmem:[%s4 + $0x78] sm:$0xff]
  %470 = vmatprep.subr.mxu0 0.0
  %471 = vmatpush1.msra.mxu0 %v454
  %472 = vmatprep.subr.mxu0 0.0
  %473 = vmatpush1.msra.mxu0 %v455
  %474 = vmatprep.subr.mxu0 0.0
  %475 = vmatpush1.msra.mxu0 %v456
  %476 = vmatprep.subr.mxu0 0.0
  %477 = vmatpush1.msra.mxu0 %v457
  %478 = vmatprep.subr.mxu0 0.0
  %479 = vmatpush1.msra.mxu0 %v458
  %480 = vmatprep.subr.mxu0 0.0
  %481 = vmatpush1.msra.mxu0 %v459
  %482 = vmatprep.subr.mxu0 0.0
  %483 = vmatpush1.msra.mxu0 %v460
  %484 = vmatprep.subr.mxu0 0.0
  %485 = vmatpush1.msra.mxu0 %v461
  %486 = vmatprep.subr.mxu0 0.0
  %487 = vmatpush1.msra.mxu0 %v462
  %488 = vmatprep.subr.mxu0 0.0
  %489 = vmatpush1.msra.mxu0 %v463
  %490 = vmatprep.subr.mxu0 0.0
  %491 = vmatpush1.msra.mxu0 %v464
  %492 = vmatprep.subr.mxu0 0.0
  %493 = vmatpush1.msra.mxu0 %v465
  %494 = vmatprep.subr.mxu0 0.0
  %495 = vmatpush1.msra.mxu0 %v466
  %496 = vmatprep.subr.mxu0 0.0
  %497 = vmatpush1.msra.mxu0 %v467
  %498 = vmatprep.subr.mxu0 0.0
  %499 = vmatpush1.msra.mxu0 %v468
  %500 = vmatprep.subr.mxu0 0.0
  %501 = vmatpush1.msra.mxu0 %v469
  %502 = vmatprep.subr.mxu0 0.0
  %503 = vmatpush1.msra.mxu0 0.0
  %504 = vmatprep.subr.mxu0 0.0
  %505 = vmatpush1.msra.mxu0 0.0
  %506 = vmatprep.subr.mxu0 0.0
  %507 = vmatpush1.msra.mxu0 0.0
  %508 = vmatprep.subr.mxu0 0.0
  %509 = vmatpush1.msra.mxu0 0.0
  %510 = vmatprep.subr.mxu0 0.0
  %511 = vmatpush1.msra.mxu0 0.0
  %512 = vmatprep.subr.mxu0 0.0
  %513 = vmatpush1.msra.mxu0 0.0
  %514 = vmatprep.subr.mxu0 0.0
  %515 = vmatpush1.msra.mxu0 0.0
  %516 = vmatprep.subr.mxu0 0.0
  %517 = vmatpush1.msra.mxu0 0.0
  %518 = vmatprep.subr.mxu0 0.0
  %519 = vmatpush1.msra.mxu0 0.0
  %520 = vmatprep.subr.mxu0 0.0
  %521 = vmatpush1.msra.mxu0 0.0
  %522 = vmatprep.subr.mxu0 0.0
  %523 = vmatpush1.msra.mxu0 0.0
  %524 = vmatprep.subr.mxu0 0.0
  %525 = vmatpush1.msra.mxu0 0.0
  %526 = vmatprep.subr.mxu0 0.0
  %527 = vmatpush1.msra.mxu0 0.0
  %528 = vmatprep.subr.mxu0 0.0
  %529 = vmatpush1.msra.mxu0 0.0
  %530 = vmatprep.subr.mxu0 0.0
  %531 = vmatpush1.msra.mxu0 0.0
  %532 = vmatprep.subr.mxu0 0.0
  %533 = vmatpush1.msra.mxu0 0.0
  %534 = vmatprep.mubr.f32.mxu0 0.0
  %535 = vmatmul.mubr.f32.gmra.mrb[0].mxu0 %v441
  %v536 = vpop.f32.mrb[0].mxu0
  %v537 = vadd.f32 0.0, %v536
  %v538 = vpop.f32.mrb[0].mxu0
  %539 = vdwg.mxu0
  %v540 = vmul.f32 %v537, 0.03125
  %541 = vmatprep.subr.mxu0 0.0
  %542 = vmatpush1.msra.mxu0 %v454
  %543 = vmatprep.subr.mxu0 0.0
  %544 = vmatpush1.msra.mxu0 %v455
  %545 = vmatprep.subr.mxu0 0.0
  %546 = vmatpush1.msra.mxu0 %v456
  %547 = vmatprep.subr.mxu0 0.0
  %548 = vmatpush1.msra.mxu0 %v457
  %549 = vmatprep.subr.mxu0 0.0
  %550 = vmatpush1.msra.mxu0 %v458
  %551 = vmatprep.subr.mxu0 0.0
  %552 = vmatpush1.msra.mxu0 %v459
  %553 = vmatprep.subr.mxu0 0.0
  %554 = vmatpush1.msra.mxu0 %v460
  %555 = vmatprep.subr.mxu0 0.0
  %556 = vmatpush1.msra.mxu0 %v461
  %557 = vmatprep.subr.mxu0 0.0
  %558 = vmatpush1.msra.mxu0 %v462
  %559 = vmatprep.subr.mxu0 0.0
  %560 = vmatpush1.msra.mxu0 %v463
  %561 = vmatprep.subr.mxu0 0.0
  %562 = vmatpush1.msra.mxu0 %v464
  %563 = vmatprep.subr.mxu0 0.0
  %564 = vmatpush1.msra.mxu0 %v465
  %565 = vmatprep.subr.mxu0 0.0
  %566 = vmatpush1.msra.mxu0 %v466
  %567 = vmatprep.subr.mxu0 0.0
  %568 = vmatpush1.msra.mxu0 %v467
  %569 = vmatprep.subr.mxu0 0.0
  %570 = vmatpush1.msra.mxu0 %v468
  %571 = vmatprep.subr.mxu0 0.0
  %572 = vmatpush1.msra.mxu0 %v469
  %573 = vmatprep.subr.mxu0 0.0
  %574 = vmatpush1.msra.mxu0 0.0
  %575 = vmatprep.subr.mxu0 0.0
  %576 = vmatpush1.msra.mxu0 0.0
  %577 = vmatprep.subr.mxu0 0.0
  %578 = vmatpush1.msra.mxu0 0.0
  %579 = vmatprep.subr.mxu0 0.0
  %580 = vmatpush1.msra.mxu0 0.0
  %581 = vmatprep.subr.mxu0 0.0
  %582 = vmatpush1.msra.mxu0 0.0
  %583 = vmatprep.subr.mxu0 0.0
  %584 = vmatpush1.msra.mxu0 0.0
  %585 = vmatprep.subr.mxu0 0.0
  %586 = vmatpush1.msra.mxu0 0.0
  %587 = vmatprep.subr.mxu0 0.0
  %588 = vmatpush1.msra.mxu0 0.0
  %589 = vmatprep.subr.mxu0 0.0
  %590 = vmatpush1.msra.mxu0 0.0
  %591 = vmatprep.subr.mxu0 0.0
  %592 = vmatpush1.msra.mxu0 0.0
  %593 = vmatprep.subr.mxu0 0.0
  %594 = vmatpush1.msra.mxu0 0.0
  %595 = vmatprep.subr.mxu0 0.0
  %596 = vmatpush1.msra.mxu0 0.0
  %597 = vmatprep.subr.mxu0 0.0
  %598 = vmatpush1.msra.mxu0 0.0
  %599 = vmatprep.subr.mxu0 0.0
  %600 = vmatpush1.msra.mxu0 0.0
  %601 = vmatprep.subr.mxu0 0.0
  %602 = vmatpush1.msra.mxu0 0.0
  %603 = vmatprep.subr.mxu0 0.0
  %604 = vmatpush1.msra.mxu0 0.0
  %605 = vmatprep.mubr.f32.mxu0 0.0
  %606 = vmatmul.mubr.f32.gmra.mrb[0].mxu0 %v453
  %v607 = vpop.f32.mrb[0].mxu0
  %v608 = vadd.f32 0.0, %v607
  %v609 = vpop.f32.mrb[0].mxu0
  %610 = vdwg.mxu0
  %v611 = vmul.f32 %v608, 0.03125
  %v612 = vmul.f32 %v540, %v540
  %v613 = vsub.f32 %v611, %v612
  %v614 = vlaneseq
  %v615 = vshrl.u32 %v614, 7
  %v616 = vsub.s32 0, %v615
  %v617 = vrot.slane %v540, %v616
  %v618 = vsub.f32 %v413, %v617
  %v619 = vsub.f32 %v416, %v617
  %v620 = vsub.f32 %v421, %v617
  %v621 = vadd.f32 %v613, 1e-05
  %v622 = vrsqrt.pop %v621
  %v623 = vlaneseq
  %v624 = vshrl.u32 %v623, 7
  %v625 = vsub.s32 0, %v624
  %v626 = vrot.slane %v622, %v625
  %v627 = vmul.f32 %v618, %v626
  %v628 = vmul.f32 %v619, %v626
  %v629 = vmul.f32 %v620, %v626
  %630 = vst [vmem:[%s5] sm:$0xff] %v627
  %631 = vst [vmem:[%s5 + $0x8] sm:$0xff] %v628
  %632 = vst [vmem:[%s5 + $0x10] sm:$0x3] %v629
  // Predicated region
  $region22: #{model_forward.19} parent=0 // pred_check
    _
  $region23: #{model_forward.19} parent=0 // pred_check_branch
    %634 = sbr.rel (0) target = $region25
  $region24: #{model_forward.19} parent=0 // pred_region
    _
  $region25: #{model_forward.19} parent=0 // pred_fallthru
    _
  // Predicated region
  $region26: #{model_forward.19} parent=0 // pred_check
    _
  $region27: #{model_forward.19} parent=0 // pred_check_branch
    %636 = sbr.rel (0) target = $region29
  $region28: #{model_forward.19} parent=0 // pred_region
    _
  $region29: #{model_forward.19} parent=0 // pred_fallthru
    _

// kernel: model_forward.20
$region0: #{model_forward.20}
  #allocation0 [shape = 'u32[]', space=smem, size = 0x4, offset = 0x4, fixed_abs, tag = 'smem constant byte address 0x4 - core index']
  #allocation1 [shape = 'u32[144,128]{1,0:T(1,128)}', space=vmem, size = 0x12000, scoped, tag = 'internal scratch']
  %s0 = inlined_call_operand.vmem [shape: f32[8,32], index: 0, kind: input, shape index: {}]
  %s1 = inlined_call_operand.vmem [shape: f32[24,32], index: 1, kind: input, shape index: {}]
  %s2 = inlined_call_operand.vmem [shape: f32[8,24], index: 2, kind: input, shape index: {}]
  %s3 = inlined_call_operand.vmem [shape: f32[8,32], index: 3, kind: output, shape index: {}]
  %s4 = sld [smem:[#allocation0]]
  $region22: #{model_forward.20} parent=0
    _
  %s6 = ssub.s32 1, %s4
  %s7 = scalar_select 0, %s6, %s4
  // Predicated region
  $region2: #{model_forward.20} parent=0 // pred_check
    _
  $region3: #{model_forward.20} parent=0 // pred_check_branch
    %9 = sbr.rel (0) target = $region5
  $region4: #{model_forward.20} parent=0 // pred_region
    _
  $region5: #{model_forward.20} parent=0 // pred_fallthru
    _
  // Predicated region
  $region6: #{model_forward.20} parent=0 // pred_check
    _
  $region7: #{model_forward.20} parent=0 // pred_check_branch
    %11 = sbr.rel (0) target = $region9
  $region8: #{model_forward.20} parent=0 // pred_region
    _
  $region9: #{model_forward.20} parent=0 // pred_fallthru
    _
  // Predicated region
  $region10: #{model_forward.20} parent=0 // pred_check
    _
  $region11: #{model_forward.20} parent=0 // pred_check_branch
    %13 = sbr.rel (0) target = $region13
  $region12: #{model_forward.20} parent=0 // pred_region
    _
  $region13: #{model_forward.20} parent=0 // pred_fallthru
    _
  %v14 = vld [vmem:[%s0] sm:$0xff]
  %v15 = vld [vmem:[%s1] sm:$0xff]
  %v16 = vld [vmem:[%s1 + $0x8] sm:$0xff]
  %v17 = vld [vmem:[%s1 + $0x10] sm:$0xff]
  %v18 = vmul.f32 %v14, %v14
  %vm19 = vcmask 261120
  %v20 = vsel %vm19, %v18, 0.0
  %21 = vadd.xlane.f32.xlu0 %v20
  %v22 = vpop.xlane.xlu0 %21
  %v23 = vmax.f32 %v22, 1e-12
  %v24 = vrsqrt.pop %v23
  %v25 = vmul.f32 %v14, %v24
  %v26 = vmul.f32 %v15, %v15
  %v27 = vmul.f32 %v16, %v16
  %v28 = vmul.f32 %v17, %v17
  %v29 = vsel %vm19, %v26, 0.0
  %30 = vadd.xlane.f32.xlu0 %v29
  %v31 = vpop.xlane.xlu0 %30
  %v32 = vsel %vm19, %v27, 0.0
  %33 = vadd.xlane.f32.xlu0 %v32
  %v34 = vpop.xlane.xlu0 %33
  %v35 = vsel %vm19, %v28, 0.0
  %36 = vadd.xlane.f32.xlu0 %v35
  %v37 = vpop.xlane.xlu0 %36
  %v38 = vmax.f32 %v31, 1e-12
  %v39 = vmax.f32 %v34, 1e-12
  %v40 = vmax.f32 %v37, 1e-12
  %v41 = vrsqrt.pop %v38
  %v42 = vrsqrt.pop %v39
  %v43 = vrsqrt.pop %v40
  %v44 = vmul.f32 %v15, %v41
  %v45 = vmul.f32 %v16, %v42
  %v46 = vmul.f32 %v17, %v43
  %v48 = vsel %vm19, %v25, 0
  %v51 = vsel %vm19, %v44, 0
  %v54 = vsel %vm19, %v45, 0
  %v57 = vsel %vm19, %v46, 0
  %59 = vmatprep.subr.mxu0 0.0
  %60 = vmatpush1.xpose.msra.mxu0 %v51
  %61 = vmatprep.subr.mxu0 0.0
  %62 = vmatpush1.xpose.msra.mxu0 %v54
  %63 = vmatprep.subr.mxu0 0.0
  %64 = vmatpush1.xpose.msra.mxu0 %v57
  %65 = vmatprep.subr.mxu0 0.0
  %66 = vmatpush1.xpose.msra.mxu0 0.0
  %67 = vmatprep.subr.mxu0 0.0
  %68 = vmatpush1.xpose.msra.mxu0 0.0
  %69 = vmatprep.subr.mxu0 0.0
  %70 = vmatpush1.xpose.msra.mxu0 0.0
  %71 = vmatprep.subr.mxu0 0.0
  %72 = vmatpush1.xpose.msra.mxu0 0.0
  %73 = vmatprep.subr.mxu0 0.0
  %74 = vmatpush1.xpose.msra.mxu0 0.0
  %75 = vmatprep.subr.mxu0 0.0
  %76 = vmatpush1.xpose.msra.mxu0 0.0
  %77 = vmatprep.subr.mxu0 0.0
  %78 = vmatpush1.xpose.msra.mxu0 0.0
  %79 = vmatprep.subr.mxu0 0.0
  %80 = vmatpush1.xpose.msra.mxu0 0.0
  %81 = vmatprep.subr.mxu0 0.0
  %82 = vmatpush1.xpose.msra.mxu0 0.0
  %83 = vmatprep.subr.mxu0 0.0
  %84 = vmatpush1.xpose.msra.mxu0 0.0
  %85 = vmatprep.subr.mxu0 0.0
  %86 = vmatpush1.xpose.msra.mxu0 0.0
  %87 = vmatprep.subr.mxu0 0.0
  %88 = vmatpush1.xpose.msra.mxu0 0.0
  %89 = vmatprep.subr.mxu0 0.0
  %90 = vmatpush1.xpose.msra.mxu0 0.0
  %91 = vmatprep.subr.mxu0 0.0
  %92 = vmatpush1.xpose.msra.mxu0 0.0
  %93 = vmatprep.subr.mxu0 0.0
  %94 = vmatpush1.xpose.msra.mxu0 0.0
  %95 = vmatprep.subr.mxu0 0.0
  %96 = vmatpush1.xpose.msra.mxu0 0.0
  %97 = vmatprep.subr.mxu0 0.0
  %98 = vmatpush1.xpose.msra.mxu0 0.0
  %99 = vmatprep.subr.mxu0 0.0
  %100 = vmatpush1.xpose.msra.mxu0 0.0
  %101 = vmatprep.subr.mxu0 0.0
  %102 = vmatpush1.xpose.msra.mxu0 0.0
  %103 = vmatprep.subr.mxu0 0.0
  %104 = vmatpush1.xpose.msra.mxu0 0.0
  %105 = vmatprep.subr.mxu0 0.0
  %106 = vmatpush1.xpose.msra.mxu0 0.0
  %107 = vmatprep.subr.mxu0 0.0
  %108 = vmatpush1.xpose.msra.mxu0 0.0
  %109 = vmatprep.subr.mxu0 0.0
  %110 = vmatpush1.xpose.msra.mxu0 0.0
  %111 = vmatprep.subr.mxu0 0.0
  %112 = vmatpush1.xpose.msra.mxu0 0.0
  %113 = vmatprep.subr.mxu0 0.0
  %114 = vmatpush1.xpose.msra.mxu0 0.0
  %115 = vmatprep.subr.mxu0 0.0
  %116 = vmatpush1.xpose.msra.mxu0 0.0
  %117 = vmatprep.subr.mxu0 0.0
  %118 = vmatpush1.xpose.msra.mxu0 0.0
  %119 = vmatprep.subr.mxu0 0.0
  %120 = vmatpush1.xpose.msra.mxu0 0.0
  %121 = vmatprep.subr.mxu0 0.0
  %122 = vmatpush1.xpose.msra.mxu0 0.0
  %123 = vmatprep.mubr.f32.mxu0 0.0
  %124 = vmatmul.mubr.f32.gmra.mrb[0].mxu0 %v48
  %v125 = vpop.f32.mrb[0].mxu0
  %v126 = vadd.f32 0.0, %v125
  %v127 = vpop.f32.mrb[0].mxu0
  %128 = vdwg.mxu0
  %v129 = vld [vmem:[%s2] sm:$0xff]
  %vm130 = vcmp.gt.f32.partialorder %v129, 0.5
  %v131 = vsel %vm130, %v126, -1e+30
  %v132 = vlaneseq
  %v133 = vand.u32 %v132, 127
  %vm134 = vcmask 195584
  %v135 = vsel %vm134, %v131, -inf
  %136 = vmax.xlane.f32.xlu0 %v135
  %v137 = vpop.xlane.xlu0 %136
  %vm138 = vcmp.ge.f32.partialorder %v131, %v137
  %v139 = vsel %vm138, %v133, 24
  %v140 = vsel %vm134, %v139, 2147483647
  %v141 = vand.u32 %v140, 65535
  %v142 = vshra.s32 %v140, 16
  %v143 = vcvt.s32.f32 %v141
  %v144 = vcvt.s32.f32 %v142
  %145 = vmin.xlane.f32.xlu0 %v144
  %v146 = vpop.xlane.xlu0 %145
  %vm147 = vcmp.eq.f32.partialorder %v144, %v146
  %v148 = vsel %vm147, %v143, inf
  %149 = vmin.xlane.f32.xlu0 %v148
  %v150 = vpop.xlane.xlu0 %149
  %v151 = vcvt.f32.s32 %v150
  %v152 = vcvt.f32.s32 %v146
  %v153 = vshll.u32 %v152, 16
  %v154 = vadd.s32 %v153, %v151
  %vm155 = vcmp.eq.s32.totalorder %v133, %v154
  %v156 = vsel %vm155, 1, 0
  %v157 = vcvt.s32.f32 %v156
  %v159 = vsel %vm134, %v157, 0
  %161 = vmatprep.subr.mxu0 0.0
  %162 = vmatpush1.msra.mxu0 %v15
  %163 = vmatprep.subr.mxu0 0.0
  %164 = vmatpush1.msra.mxu0 %v16
  %165 = vmatprep.subr.mxu0 0.0
  %166 = vmatpush1.msra.mxu0 %v17
  %167 = vmatprep.subr.mxu0 0.0
  %168 = vmatpush1.msra.mxu0 0.0
  %169 = vmatprep.subr.mxu0 0.0
  %170 = vmatpush1.msra.mxu0 0.0
  %171 = vmatprep.subr.mxu0 0.0
  %172 = vmatpush1.msra.mxu0 0.0
  %173 = vmatprep.subr.mxu0 0.0
  %174 = vmatpush1.msra.mxu0 0.0
  %175 = vmatprep.subr.mxu0 0.0
  %176 = vmatpush1.msra.mxu0 0.0
  %177 = vmatprep.subr.mxu0 0.0
  %178 = vmatpush1.msra.mxu0 0.0
  %179 = vmatprep.subr.mxu0 0.0
  %180 = vmatpush1.msra.mxu0 0.0
  %181 = vmatprep.subr.mxu0 0.0
  %182 = vmatpush1.msra.mxu0 0.0
  %183 = vmatprep.subr.mxu0 0.0
  %184 = vmatpush1.msra.mxu0 0.0
  %185 = vmatprep.subr.mxu0 0.0
  %186 = vmatpush1.msra.mxu0 0.0
  %187 = vmatprep.subr.mxu0 0.0
  %188 = vmatpush1.msra.mxu0 0.0
  %189 = vmatprep.subr.mxu0 0.0
  %190 = vmatpush1.msra.mxu0 0.0
  %191 = vmatprep.subr.mxu0 0.0
  %192 = vmatpush1.msra.mxu0 0.0
  %193 = vmatprep.subr.mxu0 0.0
  %194 = vmatpush1.msra.mxu0 0.0
  %195 = vmatprep.subr.mxu0 0.0
  %196 = vmatpush1.msra.mxu0 0.0
  %197 = vmatprep.subr.mxu0 0.0
  %198 = vmatpush1.msra.mxu0 0.0
  %199 = vmatprep.subr.mxu0 0.0
  %200 = vmatpush1.msra.mxu0 0.0
  %201 = vmatprep.subr.mxu0 0.0
  %202 = vmatpush1.msra.mxu0 0.0
  %203 = vmatprep.subr.mxu0 0.0
  %204 = vmatpush1.msra.mxu0 0.0
  %205 = vmatprep.subr.mxu0 0.0
  %206 = vmatpush1.msra.mxu0 0.0
  %207 = vmatprep.subr.mxu0 0.0
  %208 = vmatpush1.msra.mxu0 0.0
  %209 = vmatprep.subr.mxu0 0.0
  %210 = vmatpush1.msra.mxu0 0.0
  %211 = vmatprep.subr.mxu0 0.0
  %212 = vmatpush1.msra.mxu0 0.0
  %213 = vmatprep.subr.mxu0 0.0
  %214 = vmatpush1.msra.mxu0 0.0
  %215 = vmatprep.subr.mxu0 0.0
  %216 = vmatpush1.msra.mxu0 0.0
  %217 = vmatprep.subr.mxu0 0.0
  %218 = vmatpush1.msra.mxu0 0.0
  %219 = vmatprep.subr.mxu0 0.0
  %220 = vmatpush1.msra.mxu0 0.0
  %221 = vmatprep.subr.mxu0 0.0
  %222 = vmatpush1.msra.mxu0 0.0
  %223 = vmatprep.subr.mxu0 0.0
  %224 = vmatpush1.msra.mxu0 0.0
  %225 = vmatprep.mubr.f32.mxu0 0.0
  %226 = vmatmul.mubr.f32.gmra.mrb[0].mxu0 %v159
  %v227 = vpop.f32.mrb[0].mxu0
  %v228 = vadd.f32 0.0, %v227
  %v229 = vpop.f32.mrb[0].mxu0
  %230 = vdwg.mxu0
  %v231 = vmul.f32 %v228, %v14
  %232 = vst.msk [vmem:[%s3] sm:$0xff] %vm19, %v231
  // Predicated region
  $region14: #{model_forward.20} parent=0 // pred_check
    _
  $region15: #{model_forward.20} parent=0 // pred_check_branch
    %234 = sbr.rel (0) target = $region17
  $region16: #{model_forward.20} parent=0 // pred_region
    _
  $region17: #{model_forward.20} parent=0 // pred_fallthru
    _
  // Predicated region
  $region18: #{model_forward.20} parent=0 // pred_check
    _
  $region19: #{model_forward.20} parent=0 // pred_check_branch
    %236 = sbr.rel (0) target = $region21
  $region20: #{model_forward.20} parent=0 // pred_region
    _
  $region21: #{model_forward.20} parent=0 // pred_fallthru
    _

// kernel: model_forward.21
$region0: #{model_forward.21}
  #allocation0 [shape = 'u32[]', space=smem, size = 0x4, offset = 0x4, fixed_abs, tag = 'smem constant byte address 0x4 - core index']
  #allocation1 [shape = 'u32[144,128]{1,0:T(1,128)}', space=vmem, size = 0x12000, scoped, tag = 'internal scratch']
  %s0 = inlined_call_operand.vmem [shape: bf16[32,576], index: 0, kind: input, shape index: {}]
  %s1 = inlined_call_operand.vmem [shape: bf16[576,128], index: 1, kind: input, shape index: {}]
  %s2 = inlined_call_operand.vmem [shape: f32[1,128], index: 2, kind: input, shape index: {}]
  %s3 = inlined_call_operand.vmem [shape: f32[32,128], index: 3, kind: output, shape index: {}]
  %s4 = sld [smem:[#allocation0]]
  $region22: #{model_forward.21} parent=0
    _
  %s6 = ssub.s32 1, %s4
  %s7 = scalar_select 0, %s6, %s4
  // Predicated region
  $region2: #{model_forward.21} parent=0 // pred_check
    _
  $region3: #{model_forward.21} parent=0 // pred_check_branch
    %9 = sbr.rel (0) target = $region5
  $region4: #{model_forward.21} parent=0 // pred_region
    _
  $region5: #{model_forward.21} parent=0 // pred_fallthru
    _
  // Predicated region
  $region6: #{model_forward.21} parent=0 // pred_check
    _
  $region7: #{model_forward.21} parent=0 // pred_check_branch
    %11 = sbr.rel (0) target = $region9
  $region8: #{model_forward.21} parent=0 // pred_region
    _
  $region9: #{model_forward.21} parent=0 // pred_fallthru
    _
  // Predicated region
  $region10: #{model_forward.21} parent=0 // pred_check
    _
  $region11: #{model_forward.21} parent=0 // pred_check_branch
    %13 = sbr.rel (0) target = $region13
  $region12: #{model_forward.21} parent=0 // pred_region
    _
  $region13: #{model_forward.21} parent=0 // pred_fallthru
    _
  %v15 = vld [vmem:[%s0] sm:$0xff]
  %v16 = vld [vmem:[%s0 + $0x8] sm:$0xff]
  %v17 = vld [vmem:[%s0 + $0x10] sm:$0xf]
  %v18 = vld [vmem:[%s0 + $0x14] sm:$0xff]
  %v19 = vld [vmem:[%s0 + $0x1c] sm:$0xff]
  %v20 = vld [vmem:[%s0 + $0x24] sm:$0xf]
  %v21 = vld [vmem:[%s0 + $0x28] sm:$0xff]
  %v22 = vld [vmem:[%s0 + $0x30] sm:$0xff]
  %v23 = vld [vmem:[%s0 + $0x38] sm:$0xf]
  %v24 = vld [vmem:[%s0 + $0x3c] sm:$0xff]
  %v25 = vld [vmem:[%s0 + $0x44] sm:$0xff]
  %v26 = vld [vmem:[%s0 + $0x4c] sm:$0xf]
  %v27 = vld [vmem:[%s1] sm:$0xf]
  %v28 = vld [vmem:[%s1 + $0x4] sm:$0xf]
  %v29 = vld [vmem:[%s1 + $0x8] sm:$0xf]
  %v30 = vld [vmem:[%s1 + $0xc] sm:$0xf]
  %v31 = vld [vmem:[%s1 + $0x10] sm:$0xf]
  %v32 = vld [vmem:[%s1 + $0x14] sm:$0xf]
  %v33 = vld [vmem:[%s1 + $0x18] sm:$0xf]
  %v34 = vld [vmem:[%s1 + $0x1c] sm:$0xf]
  %v35 = vld [vmem:[%s1 + $0x20] sm:$0xf]
  %v36 = vld [vmem:[%s1 + $0x24] sm:$0xf]
  %v37 = vld [vmem:[%s1 + $0x28] sm:$0xf]
  %v38 = vld [vmem:[%s1 + $0x2c] sm:$0xf]
  %v39 = vld [vmem:[%s1 + $0x30] sm:$0xf]
  %v40 = vld [vmem:[%s1 + $0x34] sm:$0xf]
  %v41 = vld [vmem:[%s1 + $0x38] sm:$0xf]
  %v42 = vld [vmem:[%s1 + $0x3c] sm:$0xf]
  %v43 = vld [vmem:[%s1 + $0x40] sm:$0xf]
  %v44 = vld [vmem:[%s1 + $0x44] sm:$0xf]
  %v45 = vld [vmem:[%s1 + $0x48] sm:$0xf]
  %v46 = vld [vmem:[%s1 + $0x4c] sm:$0xf]
  %v47 = vld [vmem:[%s1 + $0x50] sm:$0xf]
  %v48 = vld [vmem:[%s1 + $0x54] sm:$0xf]
  %v49 = vld [vmem:[%s1 + $0x58] sm:$0xf]
  %v50 = vld [vmem:[%s1 + $0x5c] sm:$0xf]
  %v51 = vld [vmem:[%s1 + $0x60] sm:$0xf]
  %v52 = vld [vmem:[%s1 + $0x64] sm:$0xf]
  %v53 = vld [vmem:[%s1 + $0x68] sm:$0xf]
  %v54 = vld [vmem:[%s1 + $0x6c] sm:$0xf]
  %v55 = vld [vmem:[%s1 + $0x70] sm:$0xf]
  %v56 = vld [vmem:[%s1 + $0x74] sm:$0xf]
  %v57 = vld [vmem:[%s1 + $0x78] sm:$0xf]
  %v58 = vld [vmem:[%s1 + $0x7c] sm:$0xf]
  %v59 = vld [vmem:[%s1 + $0x80] sm:$0xf]
  %v60 = vld [vmem:[%s1 + $0x84] sm:$0xf]
  %v61 = vld [vmem:[%s1 + $0x88] sm:$0xf]
  %v62 = vld [vmem:[%s1 + $0x8c] sm:$0xf]
  %v63 = vld [vmem:[%s1 + $0x90] sm:$0xf]
  %v64 = vld [vmem:[%s1 + $0x94] sm:$0xf]
  %v65 = vld [vmem:[%s1 + $0x98] sm:$0xf]
  %v66 = vld [vmem:[%s1 + $0x9c] sm:$0xf]
  %v67 = vld [vmem:[%s1 + $0xa0] sm:$0xf]
  %v68 = vld [vmem:[%s1 + $0xa4] sm:$0xf]
  %v69 = vld [vmem:[%s1 + $0xa8] sm:$0xf]
  %v70 = vld [vmem:[%s1 + $0xac] sm:$0xf]
  %v71 = vld [vmem:[%s1 + $0xb0] sm:$0xf]
  %v72 = vld [vmem:[%s1 + $0xb4] sm:$0xf]
  %v73 = vld [vmem:[%s1 + $0xb8] sm:$0xf]
  %v74 = vld [vmem:[%s1 + $0xbc] sm:$0xf]
  %v75 = vld [vmem:[%s1 + $0xc0] sm:$0xf]
  %v76 = vld [vmem:[%s1 + $0xc4] sm:$0xf]
  %v77 = vld [vmem:[%s1 + $0xc8] sm:$0xf]
  %v78 = vld [vmem:[%s1 + $0xcc] sm:$0xf]
  %v79 = vld [vmem:[%s1 + $0xd0] sm:$0xf]
  %v80 = vld [vmem:[%s1 + $0xd4] sm:$0xf]
  %v81 = vld [vmem:[%s1 + $0xd8] sm:$0xf]
  %v82 = vld [vmem:[%s1 + $0xdc] sm:$0xf]
  %v83 = vld [vmem:[%s1 + $0xe0] sm:$0xf]
  %v84 = vld [vmem:[%s1 + $0xe4] sm:$0xf]
  %v85 = vld [vmem:[%s1 + $0xe8] sm:$0xf]
  %v86 = vld [vmem:[%s1 + $0xec] sm:$0xf]
  %v87 = vld [vmem:[%s1 + $0xf0] sm:$0xf]
  %v88 = vld [vmem:[%s1 + $0xf4] sm:$0xf]
  %v89 = vld [vmem:[%s1 + $0xf8] sm:$0xf]
  %v90 = vld [vmem:[%s1 + $0xfc] sm:$0xf]
  %v91 = vld [vmem:[%s1 + $0x100] sm:$0xf]
  %v92 = vld [vmem:[%s1 + $0x104] sm:$0xf]
  %v93 = vld [vmem:[%s1 + $0x108] sm:$0xf]
  %v94 = vld [vmem:[%s1 + $0x10c] sm:$0xf]
  %v95 = vld [vmem:[%s1 + $0x110] sm:$0xf]
  %v96 = vld [vmem:[%s1 + $0x114] sm:$0xf]
  %v97 = vld [vmem:[%s1 + $0x118] sm:$0xf]
  %v98 = vld [vmem:[%s1 + $0x11c] sm:$0xf]
  %v99 = vld [vmem:[%s2] sm:$0x1]
  %v101 = vlaneseq
  %v102 = vshrl.u32 %v101, 7
  %v103 = vsub.s32 0, %v102
  %v104 = vrot.slane %v99, %v103
  %v118 = vunpack.c.l.b16 %v15
  %v119 = vunpack.c.h.b16 %v15
  %v120 = vunpack.c.l.b16 %v16
  %v121 = vunpack.c.h.b16 %v16
  %v122 = vunpack.c.l.b16 %v17
  %v123 = vunpack.c.l.b16 %v18
  %v124 = vunpack.c.h.b16 %v18
  %v125 = vunpack.c.l.b16 %v19
  %v126 = vunpack.c.h.b16 %v19
  %v127 = vunpack.c.l.b16 %v20
  %v128 = vunpack.c.l.b16 %v21
  %v129 = vunpack.c.h.b16 %v21
  %v130 = vunpack.c.l.b16 %v22
  %v131 = vunpack.c.h.b16 %v22
  %v132 = vunpack.c.l.b16 %v23
  %v133 = vunpack.c.l.b16 %v24
  %v134 = vunpack.c.h.b16 %v24
  %v135 = vunpack.c.l.b16 %v25
  %v136 = vunpack.c.h.b16 %v25
  %v137 = vunpack.c.l.b16 %v26
  %v138 = vpack.c.b16 %v123, %v118
  %v139 = vpack.c.b16 %v124, %v119
  %v140 = vpack.c.b16 %v125, %v120
  %v141 = vpack.c.b16 %v126, %v121
  %v142 = vpack.c.b16 %v127, %v122
  %v143 = vpack.c.b16 %v133, %v128
  %v144 = vpack.c.b16 %v134, %v129
  %v145 = vpack.c.b16 %v135, %v130
  %v146 = vpack.c.b16 %v136, %v131
  %v147 = vpack.c.b16 %v137, %v132
  %v228 = vunpack.c.l.b16 %v27
  %v229 = vunpack.c.l.b16 %v28
  %v230 = vunpack.c.l.b16 %v29
  %v231 = vunpack.c.l.b16 %v30
  %v232 = vunpack.c.l.b16 %v31
  %v233 = vunpack.c.l.b16 %v32
  %v234 = vunpack.c.l.b16 %v33
  %v235 = vunpack.c.l.b16 %v34
  %v236 = vunpack.c.l.b16 %v35
  %v237 = vunpack.c.l.b16 %v36
  %v238 = vunpack.c.l.b16 %v37
  %v239 = vunpack.c.l.b16 %v38
  %v240 = vunpack.c.l.b16 %v39
  %v241 = vunpack.c.l.b16 %v40
  %v242 = vunpack.c.l.b16 %v41
  %v243 = vunpack.c.l.b16 %v42
  %v244 = vunpack.c.l.b16 %v43
  %v245 = vunpack.c.l.b16 %v44
  %v246 = vunpack.c.l.b16 %v45
  %v247 = vunpack.c.l.b16 %v46
  %v248 = vunpack.c.l.b16 %v47
  %v249 = vunpack.c.l.b16 %v48
  %v250 = vunpack.c.l.b16 %v49
  %v251 = vunpack.c.l.b16 %v50
  %v252 = vunpack.c.l.b16 %v51
  %v253 = vunpack.c.l.b16 %v52
  %v254 = vunpack.c.l.b16 %v53
  %v255 = vunpack.c.l.b16 %v54
  %v256 = vunpack.c.l.b16 %v55
  %v257 = vunpack.c.l.b16 %v56
  %v258 = vunpack.c.l.b16 %v57
  %v259 = vunpack.c.l.b16 %v58
  %v260 = vunpack.c.l.b16 %v59
  %v261 = vunpack.c.l.b16 %v60
  %v262 = vunpack.c.l.b16 %v61
  %v263 = vunpack.c.l.b16 %v62
  %v264 = vunpack.c.l.b16 %v63
  %v265 = vunpack.c.l.b16 %v64
  %v266 = vunpack.c.l.b16 %v65
  %v267 = vunpack.c.l.b16 %v66
  %v268 = vunpack.c.l.b16 %v67
  %v269 = vunpack.c.l.b16 %v68
  %v270 = vunpack.c.l.b16 %v69
  %v271 = vunpack.c.l.b16 %v70
  %v272 = vunpack.c.l.b16 %v71
  %v273 = vunpack.c.l.b16 %v72
  %v274 = vunpack.c.l.b16 %v73
  %v275 = vunpack.c.l.b16 %v74
  %v276 = vunpack.c.l.b16 %v75
  %v277 = vunpack.c.l.b16 %v76
  %v278 = vunpack.c.l.b16 %v77
  %v279 = vunpack.c.l.b16 %v78
  %v280 = vunpack.c.l.b16 %v79
  %v281 = vunpack.c.l.b16 %v80
  %v282 = vunpack.c.l.b16 %v81
  %v283 = vunpack.c.l.b16 %v82
  %v284 = vunpack.c.l.b16 %v83
  %v285 = vunpack.c.l.b16 %v84
  %v286 = vunpack.c.l.b16 %v85
  %v287 = vunpack.c.l.b16 %v86
  %v288 = vunpack.c.l.b16 %v87
  %v289 = vunpack.c.l.b16 %v88
  %v290 = vunpack.c.l.b16 %v89
  %v291 = vunpack.c.l.b16 %v90
  %v292 = vunpack.c.l.b16 %v91
  %v293 = vunpack.c.l.b16 %v92
  %v294 = vunpack.c.l.b16 %v93
  %v295 = vunpack.c.l.b16 %v94
  %v296 = vunpack.c.l.b16 %v95
  %v297 = vunpack.c.l.b16 %v96
  %v298 = vunpack.c.l.b16 %v97
  %v299 = vunpack.c.l.b16 %v98
  %v300 = vpack.c.b16 %v229, %v228
  %v301 = vpack.c.b16 %v231, %v230
  %v302 = vpack.c.b16 %v233, %v232
  %v303 = vpack.c.b16 %v235, %v234
  %v304 = vpack.c.b16 %v237, %v236
  %v305 = vpack.c.b16 %v239, %v238
  %v306 = vpack.c.b16 %v241, %v240
  %v307 = vpack.c.b16 %v243, %v242
  %v308 = vpack.c.b16 %v245, %v244
  %v309 = vpack.c.b16 %v247, %v246
  %v310 = vpack.c.b16 %v249, %v248
  %v311 = vpack.c.b16 %v251, %v250
  %v312 = vpack.c.b16 %v253, %v252
  %v313 = vpack.c.b16 %v255, %v254
  %v314 = vpack.c.b16 %v257, %v256
  %v315 = vpack.c.b16 %v259, %v258
  %v316 = vpack.c.b16 %v261, %v260
  %v317 = vpack.c.b16 %v263, %v262
  %v318 = vpack.c.b16 %v265, %v264
  %v319 = vpack.c.b16 %v267, %v266
  %v320 = vpack.c.b16 %v269, %v268
  %v321 = vpack.c.b16 %v271, %v270
  %v322 = vpack.c.b16 %v273, %v272
  %v323 = vpack.c.b16 %v275, %v274
  %v324 = vpack.c.b16 %v277, %v276
  %v325 = vpack.c.b16 %v279, %v278
  %v326 = vpack.c.b16 %v281, %v280
  %v327 = vpack.c.b16 %v283, %v282
  %v328 = vpack.c.b16 %v285, %v284
  %v329 = vpack.c.b16 %v287, %v286
  %v330 = vpack.c.b16 %v289, %v288
  %v331 = vpack.c.b16 %v291, %v290
  %v332 = vpack.c.b16 %v293, %v292
  %v333 = vpack.c.b16 %v295, %v294
  %v334 = vpack.c.b16 %v297, %v296
  %v335 = vpack.c.b16 %v299, %v298
  %vm372 = vcmask 523264
  %v374 = vsel %vm372, %v142, 0
  %v377 = vsel %vm372, %v147, 0
  %379 = vmatprep.subr.bf16.mxu0 0
  %380 = vmatpush1.bf16.msra.mxu0 %v300
  %381 = vmatprep.subr.bf16.mxu0 0
  %382 = vmatpush1.bf16.msra.mxu0 %v301
  %383 = vmatprep.subr.bf16.mxu0 0
  %384 = vmatpush1.bf16.msra.mxu0 %v302
  %385 = vmatprep.subr.bf16.mxu0 0
  %386 = vmatpush1.bf16.msra.mxu0 %v303
  %387 = vmatprep.subr.bf16.mxu0 0
  %388 = vmatpush1.bf16.msra.mxu0 %v304
  %389 = vmatprep.subr.bf16.mxu0 0
  %390 = vmatpush1.bf16.msra.mxu0 %v305
  %391 = vmatprep.subr.bf16.mxu0 0
  %392 = vmatpush1.bf16.msra.mxu0 %v306
  %393 = vmatprep.subr.bf16.mxu0 0
  %394 = vmatpush1.bf16.msra.mxu0 %v307
  %395 = vmatprep.subr.bf16.mxu0 0
  %396 = vmatpush1.bf16.msra.mxu0 %v308
  %397 = vmatprep.subr.bf16.mxu0 0
  %398 = vmatpush1.bf16.msra.mxu0 %v309
  %399 = vmatprep.subr.bf16.mxu0 0
  %400 = vmatpush1.bf16.msra.mxu0 %v310
  %401 = vmatprep.subr.bf16.mxu0 0
  %402 = vmatpush1.bf16.msra.mxu0 %v311
  %403 = vmatprep.subr.bf16.mxu0 0
  %404 = vmatpush1.bf16.msra.mxu0 %v312
  %405 = vmatprep.subr.bf16.mxu0 0
  %406 = vmatpush1.bf16.msra.mxu0 %v313
  %407 = vmatprep.subr.bf16.mxu0 0
  %408 = vmatpush1.bf16.msra.mxu0 %v314
  %409 = vmatprep.subr.bf16.mxu0 0
  %410 = vmatpush1.bf16.msra.mxu0 %v315
  %411 = vmatprep.mubr.bf16.mxu0 %v139
  %412 = vmatmul.mubr.bf16.gmra.mrb[0].mxu0 %v138
  %v413 = vpop.f32.mrb[0].mxu0
  %v414 = vadd.f32 %v104, %v413
  %v415 = vpop.f32.mrb[0].mxu0
  %v416 = vpop.f32.mrb[0].mxu0
  %v417 = vadd.f32 %v104, %v416
  %v418 = vpop.f32.mrb[0].mxu0
  %419 = vmatprep.mubr.bf16.mxu0 %v144
  %420 = vmatmul.mubr.bf16.gmra.mrb[0].mxu0 %v143
  %v421 = vpop.f32.mrb[0].mxu0
  %v422 = vadd.f32 %v104, %v421
  %v423 = vpop.f32.mrb[0].mxu0
  %v424 = vpop.f32.mrb[0].mxu0
  %v425 = vadd.f32 %v104, %v424
  %v426 = vpop.f32.mrb[0].mxu0
  %427 = vdwg.mxu0
  %428 = vmatprep.subr.bf16.mxu0 0
  %429 = vmatpush1.bf16.msra.mxu0 %v316
  %430 = vmatprep.subr.bf16.mxu0 0
  %431 = vmatpush1.bf16.msra.mxu0 %v317
  %432 = vmatprep.subr.bf16.mxu0 0
  %433 = vmatpush1.bf16.msra.mxu0 %v318
  %434 = vmatprep.subr.bf16.mxu0 0
  %435 = vmatpush1.bf16.msra.mxu0 %v319
  %436 = vmatprep.subr.bf16.mxu0 0
  %437 = vmatpush1.bf16.msra.mxu0 %v320
  %438 = vmatprep.subr.bf16.mxu0 0
  %439 = vmatpush1.bf16.msra.mxu0 %v321
  %440 = vmatprep.subr.bf16.mxu0 0
  %441 = vmatpush1.bf16.msra.mxu0 %v322
  %442 = vmatprep.subr.bf16.mxu0 0
  %443 = vmatpush1.bf16.msra.mxu0 %v323
  %444 = vmatprep.subr.bf16.mxu0 0
  %445 = vmatpush1.bf16.msra.mxu0 %v324
  %446 = vmatprep.subr.bf16.mxu0 0
  %447 = vmatpush1.bf16.msra.mxu0 %v325
  %448 = vmatprep.subr.bf16.mxu0 0
  %449 = vmatpush1.bf16.msra.mxu0 %v326
  %450 = vmatprep.subr.bf16.mxu0 0
  %451 = vmatpush1.bf16.msra.mxu0 %v327
  %452 = vmatprep.subr.bf16.mxu0 0
  %453 = vmatpush1.bf16.msra.mxu0 %v328
  %454 = vmatprep.subr.bf16.mxu0 0
  %455 = vmatpush1.bf16.msra.mxu0 %v329
  %456 = vmatprep.subr.bf16.mxu0 0
  %457 = vmatpush1.bf16.msra.mxu0 %v330
  %458 = vmatprep.subr.bf16.mxu0 0
  %459 = vmatpush1.bf16.msra.mxu0 %v331
  %460 = vmatprep.mubr.bf16.mxu0 %v141
  %461 = vmatmul.mubr.bf16.gmra.mrb[0].mxu0 %v140
  %v462 = vpop.f32.mrb[0].mxu0
  %v463 = vadd.f32 %v414, %v462
  %v464 = vpop.f32.mrb[0].mxu0
  %v465 = vpop.f32.mrb[0].mxu0
  %v466 = vadd.f32 %v417, %v465
  %v467 = vpop.f32.mrb[0].mxu0
  %468 = vmatprep.mubr.bf16.mxu0 %v146
  %469 = vmatmul.mubr.bf16.gmra.mrb[0].mxu0 %v145
  %v470 = vpop.f32.mrb[0].mxu0
  %v471 = vadd.f32 %v422, %v470
  %v472 = vpop.f32.mrb[0].mxu0
  %v473 = vpop.f32.mrb[0].mxu0
  %v474 = vadd.f32 %v425, %v473
  %v475 = vpop.f32.mrb[0].mxu0
  %476 = vdwg.mxu0
  %477 = vmatprep.subr.bf16.mxu0 0
  %478 = vmatpush1.bf16.msra.mxu0 %v332
  %479 = vmatprep.subr.bf16.mxu0 0
  %480 = vmatpush1.bf16.msra.mxu0 %v333
  %481 = vmatprep.subr.bf16.mxu0 0
  %482 = vmatpush1.bf16.msra.mxu0 %v334
  %483 = vmatprep.subr.bf16.mxu0 0
  %484 = vmatpush1.bf16.msra.mxu0 %v335
  %485 = vmatprep.subr.bf16.mxu0 0
  %486 = vmatpush1.bf16.msra.mxu0 0
  %487 = vmatprep.subr.bf16.mxu0 0
  %488 = vmatpush1.bf16.msra.mxu0 0
  %489 = vmatprep.subr.bf16.mxu0 0
  %490 = vmatpush1.bf16.msra.mxu0 0
  %491 = vmatprep.subr.bf16.mxu0 0
  %492 = vmatpush1.bf16.msra.mxu0 0
  %493 = vmatprep.subr.bf16.mxu0 0
  %494 = vmatpush1.bf16.msra.mxu0 0
  %495 = vmatprep.subr.bf16.mxu0 0
  %496 = vmatpush1.bf16.msra.mxu0 0
  %497 = vmatprep.subr.bf16.mxu0 0
  %498 = vmatpush1.bf16.msra.mxu0 0
  %499 = vmatprep.subr.bf16.mxu0 0
  %500 = vmatpush1.bf16.msra.mxu0 0
  %501 = vmatprep.subr.bf16.mxu0 0
  %502 = vmatpush1.bf16.msra.mxu0 0
  %503 = vmatprep.subr.bf16.mxu0 0
  %504 = vmatpush1.bf16.msra.mxu0 0
  %505 = vmatprep.subr.bf16.mxu0 0
  %506 = vmatpush1.bf16.msra.mxu0 0
  %507 = vmatprep.subr.bf16.mxu0 0
  %508 = vmatpush1.bf16.msra.mxu0 0
  %509 = vmatprep.mubr.bf16.mxu0 0
  %510 = vmatmul.mubr.bf16.gmra.mrb[0].mxu0 %v374
  %v511 = vpop.f32.mrb[0].mxu0
  %v512 = vadd.f32 %v463, %v511
  %v513 = vpop.f32.mrb[0].mxu0
  %v514 = vpop.f32.mrb[0].mxu0
  %v515 = vadd.f32 %v466, %v514
  %v516 = vpop.f32.mrb[0].mxu0
  %517 = vmatprep.mubr.bf16.mxu0 0
  %518 = vmatmul.mubr.bf16.gmra.mrb[0].mxu0 %v377
  %v519 = vpop.f32.mrb[0].mxu0
  %v520 = vadd.f32 %v471, %v519
  %v521 = vpop.f32.mrb[0].mxu0
  %v522 = vpop.f32.mrb[0].mxu0
  %v523 = vadd.f32 %v474, %v522
  %v524 = vpop.f32.mrb[0].mxu0
  %525 = vdwg.mxu0
  %v526 = vadd.f32 %v512, %v515
  %v527 = vrot.slane %v526, 4
  %v528 = vadd.f32 %v526, %v527
  %v529 = vrot.slane %v528, 2
  %v530 = vadd.f32 %v528, %v529
  %v531 = vrot.slane %v530, 1
  %v532 = vadd.f32 %v530, %v531
  %v533 = vrcp.pop 16.0
  %v534 = vmul.f32 %v532, %v533
  %v535 = vmul.f32 %v512, %v512
  %v536 = vmul.f32 %v515, %v515
  %v537 = vadd.f32 %v535, %v536
  %v538 = vrot.slane %v537, 4
  %v539 = vadd.f32 %v537, %v538
  %v540 = vrot.slane %v539, 2
  %v541 = vadd.f32 %v539, %v540
  %v542 = vrot.slane %v541, 1
  %v543 = vadd.f32 %v541, %v542
  %v544 = vmul.f32 %v543, %v533
  %v545 = vmul.f32 %v534, %v534
  %v546 = vsub.f32 %v544, %v545
  %v547 = vsub.f32 %v512, %v534
  %v548 = vsub.f32 %v515, %v534
  %v549 = vadd.f32 %v546, 1e-05
  %v550 = vrsqrt.pop %v549
  %v551 = vmul.f32 %v547, %v550
  %v552 = vmul.f32 %v548, %v550
  %v553 = vadd.f32 %v520, %v523
  %v554 = vrot.slane %v553, 4
  %v555 = vadd.f32 %v553, %v554
  %v556 = vrot.slane %v555, 2
  %v557 = vadd.f32 %v555, %v556
  %v558 = vrot.slane %v557, 1
  %v559 = vadd.f32 %v557, %v558
  %v560 = vmul.f32 %v559, %v533
  %v561 = vmul.f32 %v520, %v520
  %v562 = vmul.f32 %v523, %v523
  %v563 = vadd.f32 %v561, %v562
  %v564 = vrot.slane %v563, 4
  %v565 = vadd.f32 %v563, %v564
  %v566 = vrot.slane %v565, 2
  %v567 = vadd.f32 %v565, %v566
  %v568 = vrot.slane %v567, 1
  %v569 = vadd.f32 %v567, %v568
  %v570 = vmul.f32 %v569, %v533
  %v571 = vmul.f32 %v560, %v560
  %v572 = vsub.f32 %v570, %v571
  %v573 = vsub.f32 %v520, %v560
  %v574 = vsub.f32 %v523, %v560
  %v575 = vadd.f32 %v572, 1e-05
  %v576 = vrsqrt.pop %v575
  %v577 = vmul.f32 %v573, %v576
  %v578 = vmul.f32 %v574, %v576
  %579 = vst [vmem:[%s3] sm:$0xff] %v551
  %580 = vst [vmem:[%s3 + $0x8] sm:$0xff] %v552
  %581 = vst [vmem:[%s3 + $0x10] sm:$0xff] %v577
  %582 = vst [vmem:[%s3 + $0x18] sm:$0xff] %v578
  // Predicated region
  $region14: #{model_forward.21} parent=0 // pred_check
    _
  $region15: #{model_forward.21} parent=0 // pred_check_branch
    %584 = sbr.rel (0) target = $region17
  $region16: #{model_forward.21} parent=0 // pred_region
    _
  $region17: #{model_forward.21} parent=0 // pred_fallthru
    _
  // Predicated region
  $region18: #{model_forward.21} parent=0 // pred_check
    _
  $region19: #{model_forward.21} parent=0 // pred_check_branch
    %586 = sbr.rel (0) target = $region21
  $region20: #{model_forward.21} parent=0 // pred_region
    _
  $region21: #{model_forward.21} parent=0 // pred_fallthru
    _

// kernel: model_forward.22
$region0: #{model_forward.22}
  #allocation0 [shape = 'u32[]', space=smem, size = 0x4, offset = 0x4, fixed_abs, tag = 'smem constant byte address 0x4 - core index']
  #allocation1 [shape = 'u32[144,128]{1,0:T(1,128)}', space=vmem, size = 0x12000, scoped, tag = 'internal scratch']
  %s0 = inlined_call_operand.vmem [shape: bf16[32,288], index: 0, kind: input, shape index: {}]
  %s1 = inlined_call_operand.vmem [shape: bf16[288,128], index: 1, kind: input, shape index: {}]
  %s2 = inlined_call_operand.vmem [shape: f32[1,128], index: 2, kind: input, shape index: {}]
  %s3 = inlined_call_operand.vmem [shape: f32[32,128], index: 3, kind: output, shape index: {}]
  %s4 = sld [smem:[#allocation0]]
  $region22: #{model_forward.22} parent=0
    _
  %s6 = ssub.s32 1, %s4
  %s7 = scalar_select 0, %s6, %s4
  // Predicated region
  $region2: #{model_forward.22} parent=0 // pred_check
    _
  $region3: #{model_forward.22} parent=0 // pred_check_branch
    %9 = sbr.rel (0) target = $region5
  $region4: #{model_forward.22} parent=0 // pred_region
    _
  $region5: #{model_forward.22} parent=0 // pred_fallthru
    _
  // Predicated region
  $region6: #{model_forward.22} parent=0 // pred_check
    _
  $region7: #{model_forward.22} parent=0 // pred_check_branch
    %11 = sbr.rel (0) target = $region9
  $region8: #{model_forward.22} parent=0 // pred_region
    _
  $region9: #{model_forward.22} parent=0 // pred_fallthru
    _
  // Predicated region
  $region10: #{model_forward.22} parent=0 // pred_check
    _
  $region11: #{model_forward.22} parent=0 // pred_check_branch
    %13 = sbr.rel (0) target = $region13
  $region12: #{model_forward.22} parent=0 // pred_region
    _
  $region13: #{model_forward.22} parent=0 // pred_fallthru
    _
  %v15 = vld [vmem:[%s0] sm:$0xff]
  %v16 = vld [vmem:[%s0 + $0x8] sm:$0xf]
  %v17 = vld [vmem:[%s0 + $0xc] sm:$0xff]
  %v18 = vld [vmem:[%s0 + $0x14] sm:$0xf]
  %v19 = vld [vmem:[%s0 + $0x18] sm:$0xff]
  %v20 = vld [vmem:[%s0 + $0x20] sm:$0xf]
  %v21 = vld [vmem:[%s0 + $0x24] sm:$0xff]
  %v22 = vld [vmem:[%s0 + $0x2c] sm:$0xf]
  %v23 = vmax.bf16 %v15, 0
  %v24 = vmax.bf16 %v16, 0
  %v25 = vmax.bf16 %v17, 0
  %v26 = vmax.bf16 %v18, 0
  %v27 = vmax.bf16 %v19, 0
  %v28 = vmax.bf16 %v20, 0
  %v29 = vmax.bf16 %v21, 0
  %v30 = vmax.bf16 %v22, 0
  %v31 = vld [vmem:[%s1] sm:$0xf]
  %v32 = vld [vmem:[%s1 + $0x4] sm:$0xf]
  %v33 = vld [vmem:[%s1 + $0x8] sm:$0xf]
  %v34 = vld [vmem:[%s1 + $0xc] sm:$0xf]
  %v35 = vld [vmem:[%s1 + $0x10] sm:$0xf]
  %v36 = vld [vmem:[%s1 + $0x14] sm:$0xf]
  %v37 = vld [vmem:[%s1 + $0x18] sm:$0xf]
  %v38 = vld [vmem:[%s1 + $0x1c] sm:$0xf]
  %v39 = vld [vmem:[%s1 + $0x20] sm:$0xf]
  %v40 = vld [vmem:[%s1 + $0x24] sm:$0xf]
  %v41 = vld [vmem:[%s1 + $0x28] sm:$0xf]
  %v42 = vld [vmem:[%s1 + $0x2c] sm:$0xf]
  %v43 = vld [vmem:[%s1 + $0x30] sm:$0xf]
  %v44 = vld [vmem:[%s1 + $0x34] sm:$0xf]
  %v45 = vld [vmem:[%s1 + $0x38] sm:$0xf]
  %v46 = vld [vmem:[%s1 + $0x3c] sm:$0xf]
  %v47 = vld [vmem:[%s1 + $0x40] sm:$0xf]
  %v48 = vld [vmem:[%s1 + $0x44] sm:$0xf]
  %v49 = vld [vmem:[%s1 + $0x48] sm:$0xf]
  %v50 = vld [vmem:[%s1 + $0x4c] sm:$0xf]
  %v51 = vld [vmem:[%s1 + $0x50] sm:$0xf]
  %v52 = vld [vmem:[%s1 + $0x54] sm:$0xf]
  %v53 = vld [vmem:[%s1 + $0x58] sm:$0xf]
  %v54 = vld [vmem:[%s1 + $0x5c] sm:$0xf]
  %v55 = vld [vmem:[%s1 + $0x60] sm:$0xf]
  %v56 = vld [vmem:[%s1 + $0x64] sm:$0xf]
  %v57 = vld [vmem:[%s1 + $0x68] sm:$0xf]
  %v58 = vld [vmem:[%s1 + $0x6c] sm:$0xf]
  %v59 = vld [vmem:[%s1 + $0x70] sm:$0xf]
  %v60 = vld [vmem:[%s1 + $0x74] sm:$0xf]
  %v61 = vld [vmem:[%s1 + $0x78] sm:$0xf]
  %v62 = vld [vmem:[%s1 + $0x7c] sm:$0xf]
  %v63 = vld [vmem:[%s1 + $0x80] sm:$0xf]
  %v64 = vld [vmem:[%s1 + $0x84] sm:$0xf]
  %v65 = vld [vmem:[%s1 + $0x88] sm:$0xf]
  %v66 = vld [vmem:[%s1 + $0x8c] sm:$0xf]
  %v67 = vld [vmem:[%s2] sm:$0x1]
  %v69 = vlaneseq
  %v70 = vshrl.u32 %v69, 7
  %v71 = vsub.s32 0, %v70
  %v72 = vrot.slane %v67, %v71
  %v82 = vunpack.c.l.b16 %v23
  %v83 = vunpack.c.h.b16 %v23
  %v84 = vunpack.c.l.b16 %v24
  %v85 = vunpack.c.l.b16 %v25
  %v86 = vunpack.c.h.b16 %v25
  %v87 = vunpack.c.l.b16 %v26
  %v88 = vunpack.c.l.b16 %v27
  %v89 = vunpack.c.h.b16 %v27
  %v90 = vunpack.c.l.b16 %v28
  %v91 = vunpack.c.l.b16 %v29
  %v92 = vunpack.c.h.b16 %v29
  %v93 = vunpack.c.l.b16 %v30
  %v94 = vpack.c.b16 %v85, %v82
  %v95 = vpack.c.b16 %v86, %v83
  %v96 = vpack.c.b16 %v87, %v84
  %v97 = vpack.c.b16 %v91, %v88
  %v98 = vpack.c.b16 %v92, %v89
  %v99 = vpack.c.b16 %v93, %v90
  %v140 = vunpack.c.l.b16 %v31
  %v141 = vunpack.c.l.b16 %v32
  %v142 = vunpack.c.l.b16 %v33
  %v143 = vunpack.c.l.b16 %v34
  %v144 = vunpack.c.l.b16 %v35
  %v145 = vunpack.c.l.b16 %v36
  %v146 = vunpack.c.l.b16 %v37
  %v147 = vunpack.c.l.b16 %v38
  %v148 = vunpack.c.l.b16 %v39
  %v149 = vunpack.c.l.b16 %v40
  %v150 = vunpack.c.l.b16 %v41
  %v151 = vunpack.c.l.b16 %v42
  %v152 = vunpack.c.l.b16 %v43
  %v153 = vunpack.c.l.b16 %v44
  %v154 = vunpack.c.l.b16 %v45
  %v155 = vunpack.c.l.b16 %v46
  %v156 = vunpack.c.l.b16 %v47
  %v157 = vunpack.c.l.b16 %v48
  %v158 = vunpack.c.l.b16 %v49
  %v159 = vunpack.c.l.b16 %v50
  %v160 = vunpack.c.l.b16 %v51
  %v161 = vunpack.c.l.b16 %v52
  %v162 = vunpack.c.l.b16 %v53
  %v163 = vunpack.c.l.b16 %v54
  %v164 = vunpack.c.l.b16 %v55
  %v165 = vunpack.c.l.b16 %v56
  %v166 = vunpack.c.l.b16 %v57
  %v167 = vunpack.c.l.b16 %v58
  %v168 = vunpack.c.l.b16 %v59
  %v169 = vunpack.c.l.b16 %v60
  %v170 = vunpack.c.l.b16 %v61
  %v171 = vunpack.c.l.b16 %v62
  %v172 = vunpack.c.l.b16 %v63
  %v173 = vunpack.c.l.b16 %v64
  %v174 = vunpack.c.l.b16 %v65
  %v175 = vunpack.c.l.b16 %v66
  %v176 = vpack.c.b16 %v141, %v140
  %v177 = vpack.c.b16 %v143, %v142
  %v178 = vpack.c.b16 %v145, %v144
  %v179 = vpack.c.b16 %v147, %v146
  %v180 = vpack.c.b16 %v149, %v148
  %v181 = vpack.c.b16 %v151, %v150
  %v182 = vpack.c.b16 %v153, %v152
  %v183 = vpack.c.b16 %v155, %v154
  %v184 = vpack.c.b16 %v157, %v156
  %v185 = vpack.c.b16 %v159, %v158
  %v186 = vpack.c.b16 %v161, %v160
  %v187 = vpack.c.b16 %v163, %v162
  %v188 = vpack.c.b16 %v165, %v164
  %v189 = vpack.c.b16 %v167, %v166
  %v190 = vpack.c.b16 %v169, %v168
  %v191 = vpack.c.b16 %v171, %v170
  %v192 = vpack.c.b16 %v173, %v172
  %v193 = vpack.c.b16 %v175, %v174
  %vm212 = vcmask 261120
  %v214 = vsel %vm212, %v96, 0
  %v217 = vsel %vm212, %v99, 0
  %219 = vmatprep.subr.bf16.mxu0 0
  %220 = vmatpush1.bf16.msra.mxu0 %v176
  %221 = vmatprep.subr.bf16.mxu0 0
  %222 = vmatpush1.bf16.msra.mxu0 %v177
  %223 = vmatprep.subr.bf16.mxu0 0
  %224 = vmatpush1.bf16.msra.mxu0 %v178
  %225 = vmatprep.subr.bf16.mxu0 0
  %226 = vmatpush1.bf16.msra.mxu0 %v179
  %227 = vmatprep.subr.bf16.mxu0 0
  %228 = vmatpush1.bf16.msra.mxu0 %v180
  %229 = vmatprep.subr.bf16.mxu0 0
  %230 = vmatpush1.bf16.msra.mxu0 %v181
  %231 = vmatprep.subr.bf16.mxu0 0
  %232 = vmatpush1.bf16.msra.mxu0 %v182
  %233 = vmatprep.subr.bf16.mxu0 0
  %234 = vmatpush1.bf16.msra.mxu0 %v183
  %235 = vmatprep.subr.bf16.mxu0 0
  %236 = vmatpush1.bf16.msra.mxu0 %v184
  %237 = vmatprep.subr.bf16.mxu0 0
  %238 = vmatpush1.bf16.msra.mxu0 %v185
  %239 = vmatprep.subr.bf16.mxu0 0
  %240 = vmatpush1.bf16.msra.mxu0 %v186
  %241 = vmatprep.subr.bf16.mxu0 0
  %242 = vmatpush1.bf16.msra.mxu0 %v187
  %243 = vmatprep.subr.bf16.mxu0 0
  %244 = vmatpush1.bf16.msra.mxu0 %v188
  %245 = vmatprep.subr.bf16.mxu0 0
  %246 = vmatpush1.bf16.msra.mxu0 %v189
  %247 = vmatprep.subr.bf16.mxu0 0
  %248 = vmatpush1.bf16.msra.mxu0 %v190
  %249 = vmatprep.subr.bf16.mxu0 0
  %250 = vmatpush1.bf16.msra.mxu0 %v191
  %251 = vmatprep.mubr.bf16.mxu0 %v95
  %252 = vmatmul.mubr.bf16.gmra.mrb[0].mxu0 %v94
  %v253 = vpop.f32.mrb[0].mxu0
  %v254 = vadd.f32 %v72, %v253
  %v255 = vpop.f32.mrb[0].mxu0
  %v256 = vpop.f32.mrb[0].mxu0
  %v257 = vadd.f32 %v72, %v256
  %v258 = vpop.f32.mrb[0].mxu0
  %259 = vmatprep.mubr.bf16.mxu0 %v98
  %260 = vmatmul.mubr.bf16.gmra.mrb[0].mxu0 %v97
  %v261 = vpop.f32.mrb[0].mxu0
  %v262 = vadd.f32 %v72, %v261
  %v263 = vpop.f32.mrb[0].mxu0
  %v264 = vpop.f32.mrb[0].mxu0
  %v265 = vadd.f32 %v72, %v264
  %v266 = vpop.f32.mrb[0].mxu0
  %267 = vdwg.mxu0
  %268 = vmatprep.subr.bf16.mxu0 0
  %269 = vmatpush1.bf16.msra.mxu0 %v192
  %270 = vmatprep.subr.bf16.mxu0 0
  %271 = vmatpush1.bf16.msra.mxu0 %v193
  %272 = vmatprep.subr.bf16.mxu0 0
  %273 = vmatpush1.bf16.msra.mxu0 0
  %274 = vmatprep.subr.bf16.mxu0 0
  %275 = vmatpush1.bf16.msra.mxu0 0
  %276 = vmatprep.subr.bf16.mxu0 0
  %277 = vmatpush1.bf16.msra.mxu0 0
  %278 = vmatprep.subr.bf16.mxu0 0
  %279 = vmatpush1.bf16.msra.mxu0 0
  %280 = vmatprep.subr.bf16.mxu0 0
  %281 = vmatpush1.bf16.msra.mxu0 0
  %282 = vmatprep.subr.bf16.mxu0 0
  %283 = vmatpush1.bf16.msra.mxu0 0
  %284 = vmatprep.subr.bf16.mxu0 0
  %285 = vmatpush1.bf16.msra.mxu0 0
  %286 = vmatprep.subr.bf16.mxu0 0
  %287 = vmatpush1.bf16.msra.mxu0 0
  %288 = vmatprep.subr.bf16.mxu0 0
  %289 = vmatpush1.bf16.msra.mxu0 0
  %290 = vmatprep.subr.bf16.mxu0 0
  %291 = vmatpush1.bf16.msra.mxu0 0
  %292 = vmatprep.subr.bf16.mxu0 0
  %293 = vmatpush1.bf16.msra.mxu0 0
  %294 = vmatprep.subr.bf16.mxu0 0
  %295 = vmatpush1.bf16.msra.mxu0 0
  %296 = vmatprep.subr.bf16.mxu0 0
  %297 = vmatpush1.bf16.msra.mxu0 0
  %298 = vmatprep.subr.bf16.mxu0 0
  %299 = vmatpush1.bf16.msra.mxu0 0
  %300 = vmatprep.mubr.bf16.mxu0 0
  %301 = vmatmul.mubr.bf16.gmra.mrb[0].mxu0 %v214
  %v302 = vpop.f32.mrb[0].mxu0
  %v303 = vadd.f32 %v254, %v302
  %v304 = vpop.f32.mrb[0].mxu0
  %v305 = vpop.f32.mrb[0].mxu0
  %v306 = vadd.f32 %v257, %v305
  %v307 = vpop.f32.mrb[0].mxu0
  %308 = vmatprep.mubr.bf16.mxu0 0
  %309 = vmatmul.mubr.bf16.gmra.mrb[0].mxu0 %v217
  %v310 = vpop.f32.mrb[0].mxu0
  %v311 = vadd.f32 %v262, %v310
  %v312 = vpop.f32.mrb[0].mxu0
  %v313 = vpop.f32.mrb[0].mxu0
  %v314 = vadd.f32 %v265, %v313
  %v315 = vpop.f32.mrb[0].mxu0
  %316 = vdwg.mxu0
  %v317 = vadd.f32 %v303, %v306
  %v318 = vrot.slane %v317, 4
  %v319 = vadd.f32 %v317, %v318
  %v320 = vrot.slane %v319, 2
  %v321 = vadd.f32 %v319, %v320
  %v322 = vrot.slane %v321, 1
  %v323 = vadd.f32 %v321, %v322
  %v324 = vrcp.pop 16.0
  %v325 = vmul.f32 %v323, %v324
  %v326 = vmul.f32 %v303, %v303
  %v327 = vmul.f32 %v306, %v306
  %v328 = vadd.f32 %v326, %v327
  %v329 = vrot.slane %v328, 4
  %v330 = vadd.f32 %v328, %v329
  %v331 = vrot.slane %v330, 2
  %v332 = vadd.f32 %v330, %v331
  %v333 = vrot.slane %v332, 1
  %v334 = vadd.f32 %v332, %v333
  %v335 = vmul.f32 %v334, %v324
  %v336 = vmul.f32 %v325, %v325
  %v337 = vsub.f32 %v335, %v336
  %v338 = vsub.f32 %v303, %v325
  %v339 = vsub.f32 %v306, %v325
  %v340 = vadd.f32 %v337, 1e-05
  %v341 = vrsqrt.pop %v340
  %v342 = vmul.f32 %v338, %v341
  %v343 = vmul.f32 %v339, %v341
  %v344 = vadd.f32 %v311, %v314
  %v345 = vrot.slane %v344, 4
  %v346 = vadd.f32 %v344, %v345
  %v347 = vrot.slane %v346, 2
  %v348 = vadd.f32 %v346, %v347
  %v349 = vrot.slane %v348, 1
  %v350 = vadd.f32 %v348, %v349
  %v351 = vmul.f32 %v350, %v324
  %v352 = vmul.f32 %v311, %v311
  %v353 = vmul.f32 %v314, %v314
  %v354 = vadd.f32 %v352, %v353
  %v355 = vrot.slane %v354, 4
  %v356 = vadd.f32 %v354, %v355
  %v357 = vrot.slane %v356, 2
  %v358 = vadd.f32 %v356, %v357
  %v359 = vrot.slane %v358, 1
  %v360 = vadd.f32 %v358, %v359
  %v361 = vmul.f32 %v360, %v324
  %v362 = vmul.f32 %v351, %v351
  %v363 = vsub.f32 %v361, %v362
  %v364 = vsub.f32 %v311, %v351
  %v365 = vsub.f32 %v314, %v351
  %v366 = vadd.f32 %v363, 1e-05
  %v367 = vrsqrt.pop %v366
  %v368 = vmul.f32 %v364, %v367
  %v369 = vmul.f32 %v365, %v367
  %370 = vst [vmem:[%s3] sm:$0xff] %v342
  %371 = vst [vmem:[%s3 + $0x8] sm:$0xff] %v343
  %372 = vst [vmem:[%s3 + $0x10] sm:$0xff] %v368
  %373 = vst [vmem:[%s3 + $0x18] sm:$0xff] %v369
  // Predicated region
  $region14: #{model_forward.22} parent=0 // pred_check
    _
  $region15: #{model_forward.22} parent=0 // pred_check_branch
    %375 = sbr.rel (0) target = $region17
  $region16: #{model_forward.22} parent=0 // pred_region
    _
  $region17: #{model_forward.22} parent=0 // pred_fallthru
    _
  // Predicated region
  $region18: #{model_forward.22} parent=0 // pred_check
    _
  $region19: #{model_forward.22} parent=0 // pred_check_branch
    %377 = sbr.rel (0) target = $region21
  $region20: #{model_forward.22} parent=0 // pred_region
    _
  $region21: #{model_forward.22} parent=0 // pred_fallthru
    _

// kernel: model_forward.23
$region0: #{model_forward.23}
  #allocation0 [shape = 'u32[]', space=smem, size = 0x4, offset = 0x4, fixed_abs, tag = 'smem constant byte address 0x4 - core index']
  #allocation1 [shape = 'u32[144,128]{1,0:T(1,128)}', space=vmem, size = 0x12000, scoped, tag = 'internal scratch']
  %s0 = inlined_call_operand.vmem [shape: bf16[50,256], index: 0, kind: input, shape index: {}]
  %s1 = inlined_call_operand.vmem [shape: bf16[256,128], index: 1, kind: input, shape index: {}]
  %s2 = inlined_call_operand.vmem [shape: f32[1,128], index: 2, kind: input, shape index: {}]
  %s3 = inlined_call_operand.vmem [shape: f32[50,128], index: 3, kind: input, shape index: {}]
  %s4 = inlined_call_operand.vmem [shape: f32[128,128], index: 4, kind: input, shape index: {}]
  %s5 = inlined_call_operand.vmem [shape: f32[50,128], index: 5, kind: output, shape index: {}]
  %s6 = sld [smem:[#allocation0]]
  $region30: #{model_forward.23} parent=0
    _
  %s8 = ssub.s32 1, %s6
  %s9 = scalar_select 0, %s8, %s6
  // Predicated region
  $region2: #{model_forward.23} parent=0 // pred_check
    _
  $region3: #{model_forward.23} parent=0 // pred_check_branch
    %11 = sbr.rel (0) target = $region5
  $region4: #{model_forward.23} parent=0 // pred_region
    _
  $region5: #{model_forward.23} parent=0 // pred_fallthru
    _
  // Predicated region
  $region6: #{model_forward.23} parent=0 // pred_check
    _
  $region7: #{model_forward.23} parent=0 // pred_check_branch
    %13 = sbr.rel (0) target = $region9
  $region8: #{model_forward.23} parent=0 // pred_region
    _
  $region9: #{model_forward.23} parent=0 // pred_fallthru
    _
  // Predicated region
  $region10: #{model_forward.23} parent=0 // pred_check
    _
  $region11: #{model_forward.23} parent=0 // pred_check_branch
    %15 = sbr.rel (0) target = $region13
  $region12: #{model_forward.23} parent=0 // pred_region
    _
  $region13: #{model_forward.23} parent=0 // pred_fallthru
    _
  // Predicated region
  $region14: #{model_forward.23} parent=0 // pred_check
    _
  $region15: #{model_forward.23} parent=0 // pred_check_branch
    %17 = sbr.rel (0) target = $region17
  $region16: #{model_forward.23} parent=0 // pred_region
    _
  $region17: #{model_forward.23} parent=0 // pred_fallthru
    _
  // Predicated region
  $region18: #{model_forward.23} parent=0 // pred_check
    _
  $region19: #{model_forward.23} parent=0 // pred_check_branch
    %19 = sbr.rel (0) target = $region21
  $region20: #{model_forward.23} parent=0 // pred_region
    _
  $region21: #{model_forward.23} parent=0 // pred_fallthru
    _
  %v21 = vld [vmem:[%s0] sm:$0xff]
  %v22 = vld [vmem:[%s0 + $0x8] sm:$0xff]
  %v23 = vld [vmem:[%s0 + $0x10] sm:$0xff]
  %v24 = vld [vmem:[%s0 + $0x18] sm:$0xff]
  %v25 = vld [vmem:[%s0 + $0x20] sm:$0xff]
  %v26 = vld [vmem:[%s0 + $0x28] sm:$0xff]
  %v27 = vld [vmem:[%s0 + $0x30] sm:$0x11]
  %v28 = vld [vmem:[%s1] sm:$0xf]
  %v29 = vld [vmem:[%s1 + $0x4] sm:$0xf]
  %v30 = vld [vmem:[%s1 + $0x8] sm:$0xf]
  %v31 = vld [vmem:[%s1 + $0xc] sm:$0xf]
  %v32 = vld [vmem:[%s1 + $0x10] sm:$0xf]
  %v33 = vld [vmem:[%s1 + $0x14] sm:$0xf]
  %v34 = vld [vmem:[%s1 + $0x18] sm:$0xf]
  %v35 = vld [vmem:[%s1 + $0x1c] sm:$0xf]
  %v36 = vld [vmem:[%s1 + $0x20] sm:$0xf]
  %v37 = vld [vmem:[%s1 + $0x24] sm:$0xf]
  %v38 = vld [vmem:[%s1 + $0x28] sm:$0xf]
  %v39 = vld [vmem:[%s1 + $0x2c] sm:$0xf]
  %v40 = vld [vmem:[%s1 + $0x30] sm:$0xf]
  %v41 = vld [vmem:[%s1 + $0x34] sm:$0xf]
  %v42 = vld [vmem:[%s1 + $0x38] sm:$0xf]
  %v43 = vld [vmem:[%s1 + $0x3c] sm:$0xf]
  %v44 = vld [vmem:[%s1 + $0x40] sm:$0xf]
  %v45 = vld [vmem:[%s1 + $0x44] sm:$0xf]
  %v46 = vld [vmem:[%s1 + $0x48] sm:$0xf]
  %v47 = vld [vmem:[%s1 + $0x4c] sm:$0xf]
  %v48 = vld [vmem:[%s1 + $0x50] sm:$0xf]
  %v49 = vld [vmem:[%s1 + $0x54] sm:$0xf]
  %v50 = vld [vmem:[%s1 + $0x58] sm:$0xf]
  %v51 = vld [vmem:[%s1 + $0x5c] sm:$0xf]
  %v52 = vld [vmem:[%s1 + $0x60] sm:$0xf]
  %v53 = vld [vmem:[%s1 + $0x64] sm:$0xf]
  %v54 = vld [vmem:[%s1 + $0x68] sm:$0xf]
  %v55 = vld [vmem:[%s1 + $0x6c] sm:$0xf]
  %v56 = vld [vmem:[%s1 + $0x70] sm:$0xf]
  %v57 = vld [vmem:[%s1 + $0x74] sm:$0xf]
  %v58 = vld [vmem:[%s1 + $0x78] sm:$0xf]
  %v59 = vld [vmem:[%s1 + $0x7c] sm:$0xf]
  %v60 = vld [vmem:[%s2] sm:$0x1]
  %v62 = vlaneseq
  %v63 = vshrl.u32 %v62, 7
  %v64 = vsub.s32 0, %v63
  %v65 = vrot.slane %v60, %v64
  %v74 = vunpack.c.l.b16 %v21
  %v75 = vunpack.c.h.b16 %v21
  %v76 = vunpack.c.l.b16 %v22
  %v77 = vunpack.c.h.b16 %v22
  %v78 = vunpack.c.l.b16 %v23
  %v79 = vunpack.c.h.b16 %v23
  %v80 = vunpack.c.l.b16 %v24
  %v81 = vunpack.c.h.b16 %v24
  %v82 = vunpack.c.l.b16 %v25
  %v83 = vunpack.c.h.b16 %v25
  %v84 = vunpack.c.l.b16 %v26
  %v85 = vunpack.c.h.b16 %v26
  %v86 = vunpack.c.l.b16 %v27
  %v87 = vunpack.c.h.b16 %v27
  %v88 = vpack.c.b16 %v76, %v74
  %v89 = vpack.c.b16 %v77, %v75
  %v90 = vpack.c.b16 %v80, %v78
  %v91 = vpack.c.b16 %v81, %v79
  %v92 = vpack.c.b16 %v84, %v82
  %v93 = vpack.c.b16 %v85, %v83
  %v94 = vpack.c.b16 %v86, %v86
  %v95 = vpack.c.b16 %v87, %v87
  %v136 = vunpack.c.l.b16 %v28
  %v137 = vunpack.c.l.b16 %v29
  %v138 = vunpack.c.l.b16 %v30
  %v139 = vunpack.c.l.b16 %v31
  %v140 = vunpack.c.l.b16 %v32
  %v141 = vunpack.c.l.b16 %v33
  %v142 = vunpack.c.l.b16 %v34
  %v143 = vunpack.c.l.b16 %v35
  %v144 = vunpack.c.l.b16 %v36
  %v145 = vunpack.c.l.b16 %v37
  %v146 = vunpack.c.l.b16 %v38
  %v147 = vunpack.c.l.b16 %v39
  %v148 = vunpack.c.l.b16 %v40
  %v149 = vunpack.c.l.b16 %v41
  %v150 = vunpack.c.l.b16 %v42
  %v151 = vunpack.c.l.b16 %v43
  %v152 = vunpack.c.l.b16 %v44
  %v153 = vunpack.c.l.b16 %v45
  %v154 = vunpack.c.l.b16 %v46
  %v155 = vunpack.c.l.b16 %v47
  %v156 = vunpack.c.l.b16 %v48
  %v157 = vunpack.c.l.b16 %v49
  %v158 = vunpack.c.l.b16 %v50
  %v159 = vunpack.c.l.b16 %v51
  %v160 = vunpack.c.l.b16 %v52
  %v161 = vunpack.c.l.b16 %v53
  %v162 = vunpack.c.l.b16 %v54
  %v163 = vunpack.c.l.b16 %v55
  %v164 = vunpack.c.l.b16 %v56
  %v165 = vunpack.c.l.b16 %v57
  %v166 = vunpack.c.l.b16 %v58
  %v167 = vunpack.c.l.b16 %v59
  %v168 = vpack.c.b16 %v137, %v136
  %v169 = vpack.c.b16 %v139, %v138
  %v170 = vpack.c.b16 %v141, %v140
  %v171 = vpack.c.b16 %v143, %v142
  %v172 = vpack.c.b16 %v145, %v144
  %v173 = vpack.c.b16 %v147, %v146
  %v174 = vpack.c.b16 %v149, %v148
  %v175 = vpack.c.b16 %v151, %v150
  %v176 = vpack.c.b16 %v153, %v152
  %v177 = vpack.c.b16 %v155, %v154
  %v178 = vpack.c.b16 %v157, %v156
  %v179 = vpack.c.b16 %v159, %v158
  %v180 = vpack.c.b16 %v161, %v160
  %v181 = vpack.c.b16 %v163, %v162
  %v182 = vpack.c.b16 %v165, %v164
  %v183 = vpack.c.b16 %v167, %v166
  %200 = vmatprep.subr.bf16.mxu0 0
  %201 = vmatpush1.bf16.msra.mxu0 %v168
  %202 = vmatprep.subr.bf16.mxu0 0
  %203 = vmatpush1.bf16.msra.mxu0 %v169
  %204 = vmatprep.subr.bf16.mxu0 0
  %205 = vmatpush1.bf16.msra.mxu0 %v170
  %206 = vmatprep.subr.bf16.mxu0 0
  %207 = vmatpush1.bf16.msra.mxu0 %v171
  %208 = vmatprep.subr.bf16.mxu0 0
  %209 = vmatpush1.bf16.msra.mxu0 %v172
  %210 = vmatprep.subr.bf16.mxu0 0
  %211 = vmatpush1.bf16.msra.mxu0 %v173
  %212 = vmatprep.subr.bf16.mxu0 0
  %213 = vmatpush1.bf16.msra.mxu0 %v174
  %214 = vmatprep.subr.bf16.mxu0 0
  %215 = vmatpush1.bf16.msra.mxu0 %v175
  %216 = vmatprep.subr.bf16.mxu0 0
  %217 = vmatpush1.bf16.msra.mxu0 %v176
  %218 = vmatprep.subr.bf16.mxu0 0
  %219 = vmatpush1.bf16.msra.mxu0 %v177
  %220 = vmatprep.subr.bf16.mxu0 0
  %221 = vmatpush1.bf16.msra.mxu0 %v178
  %222 = vmatprep.subr.bf16.mxu0 0
  %223 = vmatpush1.bf16.msra.mxu0 %v179
  %224 = vmatprep.subr.bf16.mxu0 0
  %225 = vmatpush1.bf16.msra.mxu0 %v180
  %226 = vmatprep.subr.bf16.mxu0 0
  %227 = vmatpush1.bf16.msra.mxu0 %v181
  %228 = vmatprep.subr.bf16.mxu0 0
  %229 = vmatpush1.bf16.msra.mxu0 %v182
  %230 = vmatprep.subr.bf16.mxu0 0
  %231 = vmatpush1.bf16.msra.mxu0 %v183
  %232 = vmatprep.mubr.bf16.mxu0 %v89
  %233 = vmatmul.mubr.bf16.gmra.mrb[0].mxu0 %v88
  %v234 = vpop.f32.mrb[0].mxu0
  %v235 = vadd.f32 %v65, %v234
  %v236 = vpop.f32.mrb[0].mxu0
  %v237 = vpop.f32.mrb[0].mxu0
  %v238 = vadd.f32 %v65, %v237
  %v239 = vpop.f32.mrb[0].mxu0
  %240 = vmatprep.mubr.bf16.mxu0 %v91
  %241 = vmatmul.mubr.bf16.gmra.mrb[0].mxu0 %v90
  %v242 = vpop.f32.mrb[0].mxu0
  %v243 = vadd.f32 %v65, %v242
  %v244 = vpop.f32.mrb[0].mxu0
  %v245 = vpop.f32.mrb[0].mxu0
  %v246 = vadd.f32 %v65, %v245
  %v247 = vpop.f32.mrb[0].mxu0
  %248 = vmatprep.mubr.bf16.mxu0 %v93
  %249 = vmatmul.mubr.bf16.gmra.mrb[0].mxu0 %v92
  %v250 = vpop.f32.mrb[0].mxu0
  %v251 = vadd.f32 %v65, %v250
  %v252 = vpop.f32.mrb[0].mxu0
  %v253 = vpop.f32.mrb[0].mxu0
  %v254 = vadd.f32 %v65, %v253
  %v255 = vpop.f32.mrb[0].mxu0
  %256 = vmatprep.mubr.bf16.mxu0 %v95
  %257 = vmatmul.mubr.bf16.gmra.mrb[0].mxu0 %v94
  %v258 = vpop.f32.mrb[0].mxu0
  %v259 = vadd.f32 %v65, %v258
  %v260 = vpop.f32.mrb[0].mxu0
  %v261 = vpop.f32.mrb[0].mxu0
  %v262 = vpop.f32.mrb[0].mxu0
  %263 = vdwg.mxu0
  %v264 = vld [vmem:[%s3] sm:$0xff]
  %v265 = vld [vmem:[%s3 + $0x8] sm:$0xff]
  %v266 = vld [vmem:[%s3 + $0x10] sm:$0xff]
  %v267 = vld [vmem:[%s3 + $0x18] sm:$0xff]
  %v268 = vld [vmem:[%s3 + $0x20] sm:$0xff]
  %v269 = vld [vmem:[%s3 + $0x28] sm:$0xff]
  %v270 = vld [vmem:[%s3 + $0x30] sm:$0x3]
  %v271 = vmul.f32 %v235, %v264
  %v272 = vmul.f32 %v238, %v265
  %v273 = vmul.f32 %v243, %v266
  %v274 = vmul.f32 %v246, %v267
  %v275 = vmul.f32 %v251, %v268
  %v276 = vmul.f32 %v254, %v269
  %v277 = vmul.f32 %v259, %v270
  %v278 = vadd.f32 %v271, %v272
  %v279 = vadd.f32 %v278, %v273
  %v280 = vadd.f32 %v279, %v274
  %v281 = vadd.f32 %v280, %v275
  %v282 = vadd.f32 %v281, %v276
  %vm283 = vcmask 1041408
  %v284 = vsel %vm283, %v277, 0.0
  %v285 = vadd.f32 %v282, %v284
  %v286 = vrot.slane %v285, 4
  %v287 = vadd.f32 %v285, %v286
  %v288 = vrot.slane %v287, 2
  %v289 = vadd.f32 %v287, %v288
  %v290 = vrot.slane %v289, 1
  %v291 = vadd.f32 %v289, %v290
  %v292 = vmul.f32 %v271, %v235
  %v293 = vmul.f32 %v272, %v238
  %v294 = vmul.f32 %v273, %v243
  %v295 = vmul.f32 %v274, %v246
  %v296 = vmul.f32 %v275, %v251
  %v297 = vmul.f32 %v276, %v254
  %v298 = vmul.f32 %v277, %v259
  %v299 = vadd.f32 %v292, %v293
  %v300 = vadd.f32 %v299, %v294
  %v301 = vadd.f32 %v300, %v295
  %v302 = vadd.f32 %v301, %v296
  %v303 = vadd.f32 %v302, %v297
  %v304 = vsel %vm283, %v298, 0.0
  %v305 = vadd.f32 %v303, %v304
  %v306 = vrot.slane %v305, 4
  %v307 = vadd.f32 %v305, %v306
  %v308 = vrot.slane %v307, 2
  %v309 = vadd.f32 %v307, %v308
  %v310 = vrot.slane %v309, 1
  %v311 = vadd.f32 %v309, %v310
  %v312 = vld [vmem:[%s4] sm:$0xff]
  %v313 = vld [vmem:[%s4 + $0x8] sm:$0xff]
  %v314 = vld [vmem:[%s4 + $0x10] sm:$0xff]
  %v315 = vld [vmem:[%s4 + $0x18] sm:$0xff]
  %v316 = vld [vmem:[%s4 + $0x20] sm:$0xff]
  %v317 = vld [vmem:[%s4 + $0x28] sm:$0xff]
  %v318 = vld [vmem:[%s4 + $0x30] sm:$0xff]
  %v319 = vld [vmem:[%s4 + $0x38] sm:$0xff]
  %v320 = vld [vmem:[%s4 + $0x40] sm:$0xff]
  %v321 = vld [vmem:[%s4 + $0x48] sm:$0xff]
  %v322 = vld [vmem:[%s4 + $0x50] sm:$0xff]
  %v323 = vld [vmem:[%s4 + $0x58] sm:$0xff]
  %v324 = vld [vmem:[%s4 + $0x60] sm:$0xff]
  %v325 = vld [vmem:[%s4 + $0x68] sm:$0xff]
  %v326 = vld [vmem:[%s4 + $0x70] sm:$0xff]
  %v327 = vld [vmem:[%s4 + $0x78] sm:$0xff]
  %328 = vmatprep.subr.mxu0 0.0
  %329 = vmatpush1.msra.mxu0 %v312
  %330 = vmatprep.subr.mxu0 0.0
  %331 = vmatpush1.msra.mxu0 %v313
  %332 = vmatprep.subr.mxu0 0.0
  %333 = vmatpush1.msra.mxu0 %v314
  %334 = vmatprep.subr.mxu0 0.0
  %335 = vmatpush1.msra.mxu0 %v315
  %336 = vmatprep.subr.mxu0 0.0
  %337 = vmatpush1.msra.mxu0 %v316
  %338 = vmatprep.subr.mxu0 0.0
  %339 = vmatpush1.msra.mxu0 %v317
  %340 = vmatprep.subr.mxu0 0.0
  %341 = vmatpush1.msra.mxu0 %v318
  %342 = vmatprep.subr.mxu0 0.0
  %343 = vmatpush1.msra.mxu0 %v319
  %344 = vmatprep.subr.mxu0 0.0
  %345 = vmatpush1.msra.mxu0 %v320
  %346 = vmatprep.subr.mxu0 0.0
  %347 = vmatpush1.msra.mxu0 %v321
  %348 = vmatprep.subr.mxu0 0.0
  %349 = vmatpush1.msra.mxu0 %v322
  %350 = vmatprep.subr.mxu0 0.0
  %351 = vmatpush1.msra.mxu0 %v323
  %352 = vmatprep.subr.mxu0 0.0
  %353 = vmatpush1.msra.mxu0 %v324
  %354 = vmatprep.subr.mxu0 0.0
  %355 = vmatpush1.msra.mxu0 %v325
  %356 = vmatprep.subr.mxu0 0.0
  %357 = vmatpush1.msra.mxu0 %v326
  %358 = vmatprep.subr.mxu0 0.0
  %359 = vmatpush1.msra.mxu0 %v327
  %360 = vmatprep.subr.mxu0 0.0
  %361 = vmatpush1.msra.mxu0 0.0
  %362 = vmatprep.subr.mxu0 0.0
  %363 = vmatpush1.msra.mxu0 0.0
  %364 = vmatprep.subr.mxu0 0.0
  %365 = vmatpush1.msra.mxu0 0.0
  %366 = vmatprep.subr.mxu0 0.0
  %367 = vmatpush1.msra.mxu0 0.0
  %368 = vmatprep.subr.mxu0 0.0
  %369 = vmatpush1.msra.mxu0 0.0
  %370 = vmatprep.subr.mxu0 0.0
  %371 = vmatpush1.msra.mxu0 0.0
  %372 = vmatprep.subr.mxu0 0.0
  %373 = vmatpush1.msra.mxu0 0.0
  %374 = vmatprep.subr.mxu0 0.0
  %375 = vmatpush1.msra.mxu0 0.0
  %376 = vmatprep.subr.mxu0 0.0
  %377 = vmatpush1.msra.mxu0 0.0
  %378 = vmatprep.subr.mxu0 0.0
  %379 = vmatpush1.msra.mxu0 0.0
  %380 = vmatprep.subr.mxu0 0.0
  %381 = vmatpush1.msra.mxu0 0.0
  %382 = vmatprep.subr.mxu0 0.0
  %383 = vmatpush1.msra.mxu0 0.0
  %384 = vmatprep.subr.mxu0 0.0
  %385 = vmatpush1.msra.mxu0 0.0
  %386 = vmatprep.subr.mxu0 0.0
  %387 = vmatpush1.msra.mxu0 0.0
  %388 = vmatprep.subr.mxu0 0.0
  %389 = vmatpush1.msra.mxu0 0.0
  %390 = vmatprep.subr.mxu0 0.0
  %391 = vmatpush1.msra.mxu0 0.0
  %392 = vmatprep.mubr.f32.mxu0 0.0
  %393 = vmatmul.mubr.f32.gmra.mrb[0].mxu0 %v291
  %v394 = vpop.f32.mrb[0].mxu0
  %v395 = vadd.f32 0.0, %v394
  %v396 = vpop.f32.mrb[0].mxu0
  %397 = vdwg.mxu0
  %v398 = vmul.f32 %v395, 0.0078125
  %399 = vmatprep.subr.mxu0 0.0
  %400 = vmatpush1.msra.mxu0 %v312
  %401 = vmatprep.subr.mxu0 0.0
  %402 = vmatpush1.msra.mxu0 %v313
  %403 = vmatprep.subr.mxu0 0.0
  %404 = vmatpush1.msra.mxu0 %v314
  %405 = vmatprep.subr.mxu0 0.0
  %406 = vmatpush1.msra.mxu0 %v315
  %407 = vmatprep.subr.mxu0 0.0
  %408 = vmatpush1.msra.mxu0 %v316
  %409 = vmatprep.subr.mxu0 0.0
  %410 = vmatpush1.msra.mxu0 %v317
  %411 = vmatprep.subr.mxu0 0.0
  %412 = vmatpush1.msra.mxu0 %v318
  %413 = vmatprep.subr.mxu0 0.0
  %414 = vmatpush1.msra.mxu0 %v319
  %415 = vmatprep.subr.mxu0 0.0
  %416 = vmatpush1.msra.mxu0 %v320
  %417 = vmatprep.subr.mxu0 0.0
  %418 = vmatpush1.msra.mxu0 %v321
  %419 = vmatprep.subr.mxu0 0.0
  %420 = vmatpush1.msra.mxu0 %v322
  %421 = vmatprep.subr.mxu0 0.0
  %422 = vmatpush1.msra.mxu0 %v323
  %423 = vmatprep.subr.mxu0 0.0
  %424 = vmatpush1.msra.mxu0 %v324
  %425 = vmatprep.subr.mxu0 0.0
  %426 = vmatpush1.msra.mxu0 %v325
  %427 = vmatprep.subr.mxu0 0.0
  %428 = vmatpush1.msra.mxu0 %v326
  %429 = vmatprep.subr.mxu0 0.0
  %430 = vmatpush1.msra.mxu0 %v327
  %431 = vmatprep.subr.mxu0 0.0
  %432 = vmatpush1.msra.mxu0 0.0
  %433 = vmatprep.subr.mxu0 0.0
  %434 = vmatpush1.msra.mxu0 0.0
  %435 = vmatprep.subr.mxu0 0.0
  %436 = vmatpush1.msra.mxu0 0.0
  %437 = vmatprep.subr.mxu0 0.0
  %438 = vmatpush1.msra.mxu0 0.0
  %439 = vmatprep.subr.mxu0 0.0
  %440 = vmatpush1.msra.mxu0 0.0
  %441 = vmatprep.subr.mxu0 0.0
  %442 = vmatpush1.msra.mxu0 0.0
  %443 = vmatprep.subr.mxu0 0.0
  %444 = vmatpush1.msra.mxu0 0.0
  %445 = vmatprep.subr.mxu0 0.0
  %446 = vmatpush1.msra.mxu0 0.0
  %447 = vmatprep.subr.mxu0 0.0
  %448 = vmatpush1.msra.mxu0 0.0
  %449 = vmatprep.subr.mxu0 0.0
  %450 = vmatpush1.msra.mxu0 0.0
  %451 = vmatprep.subr.mxu0 0.0
  %452 = vmatpush1.msra.mxu0 0.0
  %453 = vmatprep.subr.mxu0 0.0
  %454 = vmatpush1.msra.mxu0 0.0
  %455 = vmatprep.subr.mxu0 0.0
  %456 = vmatpush1.msra.mxu0 0.0
  %457 = vmatprep.subr.mxu0 0.0
  %458 = vmatpush1.msra.mxu0 0.0
  %459 = vmatprep.subr.mxu0 0.0
  %460 = vmatpush1.msra.mxu0 0.0
  %461 = vmatprep.subr.mxu0 0.0
  %462 = vmatpush1.msra.mxu0 0.0
  %463 = vmatprep.mubr.f32.mxu0 0.0
  %464 = vmatmul.mubr.f32.gmra.mrb[0].mxu0 %v311
  %v465 = vpop.f32.mrb[0].mxu0
  %v466 = vadd.f32 0.0, %v465
  %v467 = vpop.f32.mrb[0].mxu0
  %468 = vdwg.mxu0
  %v469 = vmul.f32 %v466, 0.0078125
  %v470 = vmul.f32 %v398, %v398
  %v471 = vsub.f32 %v469, %v470
  %v472 = vlaneseq
  %v473 = vshrl.u32 %v472, 7
  %v474 = vsub.s32 0, %v473
  %v475 = vrot.slane %v398, %v474
  %v476 = vsub.f32 %v235, %v475
  %v477 = vsub.f32 %v238, %v475
  %v478 = vsub.f32 %v243, %v475
  %v479 = vsub.f32 %v246, %v475
  %v480 = vsub.f32 %v251, %v475
  %v481 = vsub.f32 %v254, %v475
  %v482 = vsub.f32 %v259, %v475
  %v483 = vadd.f32 %v471, 1e-05
  %v484 = vrsqrt.pop %v483
  %v485 = vlaneseq
  %v486 = vshrl.u32 %v485, 7
  %v487 = vsub.s32 0, %v486
  %v488 = vrot.slane %v484, %v487
  %v489 = vmul.f32 %v476, %v488
  %v490 = vmul.f32 %v477, %v488
  %v491 = vmul.f32 %v478, %v488
  %v492 = vmul.f32 %v479, %v488
  %v493 = vmul.f32 %v480, %v488
  %v494 = vmul.f32 %v481, %v488
  %v495 = vmul.f32 %v482, %v488
  %496 = vst [vmem:[%s5] sm:$0xff] %v489
  %497 = vst [vmem:[%s5 + $0x8] sm:$0xff] %v490
  %498 = vst [vmem:[%s5 + $0x10] sm:$0xff] %v491
  %499 = vst [vmem:[%s5 + $0x18] sm:$0xff] %v492
  %500 = vst [vmem:[%s5 + $0x20] sm:$0xff] %v493
  %501 = vst [vmem:[%s5 + $0x28] sm:$0xff] %v494
  %502 = vst [vmem:[%s5 + $0x30] sm:$0x3] %v495
  // Predicated region
  $region22: #{model_forward.23} parent=0 // pred_check
    _
  $region23: #{model_forward.23} parent=0 // pred_check_branch
    %504 = sbr.rel (0) target = $region25
  $region24: #{model_forward.23} parent=0 // pred_region
    _
  $region25: #{model_forward.23} parent=0 // pred_fallthru
    _
  // Predicated region
  $region26: #{model_forward.23} parent=0 // pred_check
    _
  $region27: #{model_forward.23} parent=0 // pred_check_branch
    %506 = sbr.rel (0) target = $region29
  $region28: #{model_forward.23} parent=0 // pred_region
    _
  $region29: #{model_forward.23} parent=0 // pred_fallthru
    _

// kernel: model_forward.24
$region0: #{model_forward.24}
  #allocation0 [shape = 'u32[]', space=smem, size = 0x4, offset = 0x4, fixed_abs, tag = 'smem constant byte address 0x4 - core index']
  #allocation1 [shape = 'u32[144,128]{1,0:T(1,128)}', space=vmem, size = 0x12000, scoped, tag = 'internal scratch']
  %s0 = inlined_call_operand.vmem [shape: bf16[162,128], index: 0, kind: input, shape index: {}]
  %s1 = inlined_call_operand.vmem [shape: bf16[128,128], index: 1, kind: input, shape index: {}]
  %s2 = inlined_call_operand.vmem [shape: f32[1,128], index: 2, kind: input, shape index: {}]
  %s3 = inlined_call_operand.vmem [shape: f32[162,128], index: 3, kind: input, shape index: {}]
  %s4 = inlined_call_operand.vmem [shape: f32[128,128], index: 4, kind: input, shape index: {}]
  %s5 = inlined_call_operand.vmem [shape: f32[162,128], index: 5, kind: output, shape index: {}]
  %s6 = sld [smem:[#allocation0]]
  $region30: #{model_forward.24} parent=0
    _
  %s8 = ssub.s32 1, %s6
  %s9 = scalar_select 0, %s8, %s6
  // Predicated region
  $region2: #{model_forward.24} parent=0 // pred_check
    _
  $region3: #{model_forward.24} parent=0 // pred_check_branch
    %11 = sbr.rel (0) target = $region5
  $region4: #{model_forward.24} parent=0 // pred_region
    _
  $region5: #{model_forward.24} parent=0 // pred_fallthru
    _
  // Predicated region
  $region6: #{model_forward.24} parent=0 // pred_check
    _
  $region7: #{model_forward.24} parent=0 // pred_check_branch
    %13 = sbr.rel (0) target = $region9
  $region8: #{model_forward.24} parent=0 // pred_region
    _
  $region9: #{model_forward.24} parent=0 // pred_fallthru
    _
  // Predicated region
  $region10: #{model_forward.24} parent=0 // pred_check
    _
  $region11: #{model_forward.24} parent=0 // pred_check_branch
    %15 = sbr.rel (0) target = $region13
  $region12: #{model_forward.24} parent=0 // pred_region
    _
  $region13: #{model_forward.24} parent=0 // pred_fallthru
    _
  // Predicated region
  $region14: #{model_forward.24} parent=0 // pred_check
    _
  $region15: #{model_forward.24} parent=0 // pred_check_branch
    %17 = sbr.rel (0) target = $region17
  $region16: #{model_forward.24} parent=0 // pred_region
    _
  $region17: #{model_forward.24} parent=0 // pred_fallthru
    _
  // Predicated region
  $region18: #{model_forward.24} parent=0 // pred_check
    _
  $region19: #{model_forward.24} parent=0 // pred_check_branch
    %19 = sbr.rel (0) target = $region21
  $region20: #{model_forward.24} parent=0 // pred_region
    _
  $region21: #{model_forward.24} parent=0 // pred_fallthru
    _
  %v21 = vld [vmem:[%s0] sm:$0xf]
  %v22 = vld [vmem:[%s0 + $0x4] sm:$0xf]
  %v23 = vld [vmem:[%s0 + $0x8] sm:$0xf]
  %v24 = vld [vmem:[%s0 + $0xc] sm:$0xf]
  %v25 = vld [vmem:[%s0 + $0x10] sm:$0xf]
  %v26 = vld [vmem:[%s0 + $0x14] sm:$0xf]
  %v27 = vld [vmem:[%s0 + $0x18] sm:$0xf]
  %v28 = vld [vmem:[%s0 + $0x1c] sm:$0xf]
  %v29 = vld [vmem:[%s0 + $0x20] sm:$0xf]
  %v30 = vld [vmem:[%s0 + $0x24] sm:$0xf]
  %v31 = vld [vmem:[%s0 + $0x28] sm:$0xf]
  %v32 = vld [vmem:[%s0 + $0x2c] sm:$0xf]
  %v33 = vld [vmem:[%s0 + $0x30] sm:$0xf]
  %v34 = vld [vmem:[%s0 + $0x34] sm:$0xf]
  %v35 = vld [vmem:[%s0 + $0x38] sm:$0xf]
  %v36 = vld [vmem:[%s0 + $0x3c] sm:$0xf]
  %v37 = vld [vmem:[%s0 + $0x40] sm:$0xf]
  %v38 = vld [vmem:[%s0 + $0x44] sm:$0xf]
  %v39 = vld [vmem:[%s0 + $0x48] sm:$0xf]
  %v40 = vld [vmem:[%s0 + $0x4c] sm:$0xf]
  %v41 = vld [vmem:[%s0 + $0x50] sm:$0x1]
  %v42 = vmax.bf16 %v21, 0
  %v43 = vmax.bf16 %v22, 0
  %v44 = vmax.bf16 %v23, 0
  %v45 = vmax.bf16 %v24, 0
  %v46 = vmax.bf16 %v25, 0
  %v47 = vmax.bf16 %v26, 0
  %v48 = vmax.bf16 %v27, 0
  %v49 = vmax.bf16 %v28, 0
  %v50 = vmax.bf16 %v29, 0
  %v51 = vmax.bf16 %v30, 0
  %v52 = vmax.bf16 %v31, 0
  %v53 = vmax.bf16 %v32, 0
  %v54 = vmax.bf16 %v33, 0
  %v55 = vmax.bf16 %v34, 0
  %v56 = vmax.bf16 %v35, 0
  %v57 = vmax.bf16 %v36, 0
  %v58 = vmax.bf16 %v37, 0
  %v59 = vmax.bf16 %v38, 0
  %v60 = vmax.bf16 %v39, 0
  %v61 = vmax.bf16 %v40, 0
  %v62 = vmax.bf16 %v41, 0
  %v63 = vld [vmem:[%s1] sm:$0xf]
  %v64 = vld [vmem:[%s1 + $0x4] sm:$0xf]
  %v65 = vld [vmem:[%s1 + $0x8] sm:$0xf]
  %v66 = vld [vmem:[%s1 + $0xc] sm:$0xf]
  %v67 = vld [vmem:[%s1 + $0x10] sm:$0xf]
  %v68 = vld [vmem:[%s1 + $0x14] sm:$0xf]
  %v69 = vld [vmem:[%s1 + $0x18] sm:$0xf]
  %v70 = vld [vmem:[%s1 + $0x1c] sm:$0xf]
  %v71 = vld [vmem:[%s1 + $0x20] sm:$0xf]
  %v72 = vld [vmem:[%s1 + $0x24] sm:$0xf]
  %v73 = vld [vmem:[%s1 + $0x28] sm:$0xf]
  %v74 = vld [vmem:[%s1 + $0x2c] sm:$0xf]
  %v75 = vld [vmem:[%s1 + $0x30] sm:$0xf]
  %v76 = vld [vmem:[%s1 + $0x34] sm:$0xf]
  %v77 = vld [vmem:[%s1 + $0x38] sm:$0xf]
  %v78 = vld [vmem:[%s1 + $0x3c] sm:$0xf]
  %v79 = vld [vmem:[%s2] sm:$0x1]
  %v81 = vlaneseq
  %v82 = vshrl.u32 %v81, 7
  %v83 = vsub.s32 0, %v82
  %v84 = vrot.slane %v79, %v83
  %v107 = vunpack.c.l.b16 %v42
  %v108 = vunpack.c.l.b16 %v43
  %v109 = vunpack.c.l.b16 %v44
  %v110 = vunpack.c.l.b16 %v45
  %v111 = vunpack.c.l.b16 %v46
  %v112 = vunpack.c.l.b16 %v47
  %v113 = vunpack.c.l.b16 %v48
  %v114 = vunpack.c.l.b16 %v49
  %v115 = vunpack.c.l.b16 %v50
  %v116 = vunpack.c.l.b16 %v51
  %v117 = vunpack.c.l.b16 %v52
  %v118 = vunpack.c.l.b16 %v53
  %v119 = vunpack.c.l.b16 %v54
  %v120 = vunpack.c.l.b16 %v55
  %v121 = vunpack.c.l.b16 %v56
  %v122 = vunpack.c.l.b16 %v57
  %v123 = vunpack.c.l.b16 %v58
  %v124 = vunpack.c.l.b16 %v59
  %v125 = vunpack.c.l.b16 %v60
  %v126 = vunpack.c.l.b16 %v61
  %v127 = vunpack.c.l.b16 %v62
  %v128 = vpack.c.b16 %v108, %v107
  %v129 = vpack.c.b16 %v110, %v109
  %v130 = vpack.c.b16 %v112, %v111
  %v131 = vpack.c.b16 %v114, %v113
  %v132 = vpack.c.b16 %v116, %v115
  %v133 = vpack.c.b16 %v118, %v117
  %v134 = vpack.c.b16 %v120, %v119
  %v135 = vpack.c.b16 %v122, %v121
  %v136 = vpack.c.b16 %v124, %v123
  %v137 = vpack.c.b16 %v126, %v125
  %v138 = vpack.c.b16 %v127, %v127
  %v166 = vunpack.c.l.b16 %v63
  %v167 = vunpack.c.l.b16 %v64
  %v168 = vunpack.c.l.b16 %v65
  %v169 = vunpack.c.l.b16 %v66
  %v170 = vunpack.c.l.b16 %v67
  %v171 = vunpack.c.l.b16 %v68
  %v172 = vunpack.c.l.b16 %v69
  %v173 = vunpack.c.l.b16 %v70
  %v174 = vunpack.c.l.b16 %v71
  %v175 = vunpack.c.l.b16 %v72
  %v176 = vunpack.c.l.b16 %v73
  %v177 = vunpack.c.l.b16 %v74
  %v178 = vunpack.c.l.b16 %v75
  %v179 = vunpack.c.l.b16 %v76
  %v180 = vunpack.c.l.b16 %v77
  %v181 = vunpack.c.l.b16 %v78
  %v182 = vpack.c.b16 %v167, %v166
  %v183 = vpack.c.b16 %v169, %v168
  %v184 = vpack.c.b16 %v171, %v170
  %v185 = vpack.c.b16 %v173, %v172
  %v186 = vpack.c.b16 %v175, %v174
  %v187 = vpack.c.b16 %v177, %v176
  %v188 = vpack.c.b16 %v179, %v178
  %v189 = vpack.c.b16 %v181, %v180
  %198 = vmatprep.subr.bf16.mxu0 0
  %199 = vmatpush1.bf16.msra.mxu0 %v182
  %200 = vmatprep.subr.bf16.mxu0 0
  %201 = vmatpush1.bf16.msra.mxu0 %v183
  %202 = vmatprep.subr.bf16.mxu0 0
  %203 = vmatpush1.bf16.msra.mxu0 %v184
  %204 = vmatprep.subr.bf16.mxu0 0
  %205 = vmatpush1.bf16.msra.mxu0 %v185
  %206 = vmatprep.subr.bf16.mxu0 0
  %207 = vmatpush1.bf16.msra.mxu0 %v186
  %208 = vmatprep.subr.bf16.mxu0 0
  %209 = vmatpush1.bf16.msra.mxu0 %v187
  %210 = vmatprep.subr.bf16.mxu0 0
  %211 = vmatpush1.bf16.msra.mxu0 %v188
  %212 = vmatprep.subr.bf16.mxu0 0
  %213 = vmatpush1.bf16.msra.mxu0 %v189
  %214 = vmatprep.subr.bf16.mxu0 0
  %215 = vmatpush1.bf16.msra.mxu0 0
  %216 = vmatprep.subr.bf16.mxu0 0
  %217 = vmatpush1.bf16.msra.mxu0 0
  %218 = vmatprep.subr.bf16.mxu0 0
  %219 = vmatpush1.bf16.msra.mxu0 0
  %220 = vmatprep.subr.bf16.mxu0 0
  %221 = vmatpush1.bf16.msra.mxu0 0
  %222 = vmatprep.subr.bf16.mxu0 0
  %223 = vmatpush1.bf16.msra.mxu0 0
  %224 = vmatprep.subr.bf16.mxu0 0
  %225 = vmatpush1.bf16.msra.mxu0 0
  %226 = vmatprep.subr.bf16.mxu0 0
  %227 = vmatpush1.bf16.msra.mxu0 0
  %228 = vmatprep.subr.bf16.mxu0 0
  %229 = vmatpush1.bf16.msra.mxu0 0
  %230 = vmatprep.mubr.bf16.mxu0 0
  %231 = vmatmul.mubr.bf16.gmra.mrb[0].mxu0 %v128
  %v232 = vpop.f32.mrb[0].mxu0
  %v233 = vadd.f32 %v84, %v232
  %v234 = vpop.f32.mrb[0].mxu0
  %v235 = vpop.f32.mrb[0].mxu0
  %v236 = vadd.f32 %v84, %v235
  %v237 = vpop.f32.mrb[0].mxu0
  %238 = vmatprep.mubr.bf16.mxu0 0
  %239 = vmatmul.mubr.bf16.gmra.mrb[0].mxu0 %v129
  %v240 = vpop.f32.mrb[0].mxu0
  %v241 = vadd.f32 %v84, %v240
  %v242 = vpop.f32.mrb[0].mxu0
  %v243 = vpop.f32.mrb[0].mxu0
  %v244 = vadd.f32 %v84, %v243
  %v245 = vpop.f32.mrb[0].mxu0
  %246 = vmatprep.mubr.bf16.mxu0 0
  %247 = vmatmul.mubr.bf16.gmra.mrb[0].mxu0 %v130
  %v248 = vpop.f32.mrb[0].mxu0
  %v249 = vadd.f32 %v84, %v248
  %v250 = vpop.f32.mrb[0].mxu0
  %v251 = vpop.f32.mrb[0].mxu0
  %v252 = vadd.f32 %v84, %v251
  %v253 = vpop.f32.mrb[0].mxu0
  %254 = vmatprep.mubr.bf16.mxu0 0
  %255 = vmatmul.mubr.bf16.gmra.mrb[0].mxu0 %v131
  %v256 = vpop.f32.mrb[0].mxu0
  %v257 = vadd.f32 %v84, %v256
  %v258 = vpop.f32.mrb[0].mxu0
  %v259 = vpop.f32.mrb[0].mxu0
  %v260 = vadd.f32 %v84, %v259
  %v261 = vpop.f32.mrb[0].mxu0
  %262 = vmatprep.mubr.bf16.mxu0 0
  %263 = vmatmul.mubr.bf16.gmra.mrb[0].mxu0 %v132
  %v264 = vpop.f32.mrb[0].mxu0
  %v265 = vadd.f32 %v84, %v264
  %v266 = vpop.f32.mrb[0].mxu0
  %v267 = vpop.f32.mrb[0].mxu0
  %v268 = vadd.f32 %v84, %v267
  %v269 = vpop.f32.mrb[0].mxu0
  %270 = vmatprep.mubr.bf16.mxu0 0
  %271 = vmatmul.mubr.bf16.gmra.mrb[0].mxu0 %v133
  %v272 = vpop.f32.mrb[0].mxu0
  %v273 = vadd.f32 %v84, %v272
  %v274 = vpop.f32.mrb[0].mxu0
  %v275 = vpop.f32.mrb[0].mxu0
  %v276 = vadd.f32 %v84, %v275
  %v277 = vpop.f32.mrb[0].mxu0
  %278 = vmatprep.mubr.bf16.mxu0 0
  %279 = vmatmul.mubr.bf16.gmra.mrb[0].mxu0 %v134
  %v280 = vpop.f32.mrb[0].mxu0
  %v281 = vadd.f32 %v84, %v280
  %v282 = vpop.f32.mrb[0].mxu0
  %v283 = vpop.f32.mrb[0].mxu0
  %v284 = vadd.f32 %v84, %v283
  %v285 = vpop.f32.mrb[0].mxu0
  %286 = vmatprep.mubr.bf16.mxu0 0
  %287 = vmatmul.mubr.bf16.gmra.mrb[0].mxu0 %v135
  %v288 = vpop.f32.mrb[0].mxu0
  %v289 = vadd.f32 %v84, %v288
  %v290 = vpop.f32.mrb[0].mxu0
  %v291 = vpop.f32.mrb[0].mxu0
  %v292 = vadd.f32 %v84, %v291
  %v293 = vpop.f32.mrb[0].mxu0
  %294 = vmatprep.mubr.bf16.mxu0 0
  %295 = vmatmul.mubr.bf16.gmra.mrb[0].mxu0 %v136
  %v296 = vpop.f32.mrb[0].mxu0
  %v297 = vadd.f32 %v84, %v296
  %v298 = vpop.f32.mrb[0].mxu0
  %v299 = vpop.f32.mrb[0].mxu0
  %v300 = vadd.f32 %v84, %v299
  %v301 = vpop.f32.mrb[0].mxu0
  %302 = vmatprep.mubr.bf16.mxu0 0
  %303 = vmatmul.mubr.bf16.gmra.mrb[0].mxu0 %v137
  %v304 = vpop.f32.mrb[0].mxu0
  %v305 = vadd.f32 %v84, %v304
  %v306 = vpop.f32.mrb[0].mxu0
  %v307 = vpop.f32.mrb[0].mxu0
  %v308 = vadd.f32 %v84, %v307
  %v309 = vpop.f32.mrb[0].mxu0
  %310 = vmatprep.mubr.bf16.mxu0 0
  %311 = vmatmul.mubr.bf16.gmra.mrb[0].mxu0 %v138
  %v312 = vpop.f32.mrb[0].mxu0
  %v313 = vadd.f32 %v84, %v312
  %v314 = vpop.f32.mrb[0].mxu0
  %v315 = vpop.f32.mrb[0].mxu0
  %v316 = vpop.f32.mrb[0].mxu0
  %317 = vdwg.mxu0
  %v318 = vld [vmem:[%s3] sm:$0xff]
  %v319 = vld [vmem:[%s3 + $0x8] sm:$0xff]
  %v320 = vld [vmem:[%s3 + $0x10] sm:$0xff]
  %v321 = vld [vmem:[%s3 + $0x18] sm:$0xff]
  %v322 = vld [vmem:[%s3 + $0x20] sm:$0xff]
  %v323 = vld [vmem:[%s3 + $0x28] sm:$0xff]
  %v324 = vld [vmem:[%s3 + $0x30] sm:$0xff]
  %v325 = vld [vmem:[%s3 + $0x38] sm:$0xff]
  %v326 = vld [vmem:[%s3 + $0x40] sm:$0xff]
  %v327 = vld [vmem:[%s3 + $0x48] sm:$0xff]
  %v328 = vld [vmem:[%s3 + $0x50] sm:$0xff]
  %v329 = vld [vmem:[%s3 + $0x58] sm:$0xff]
  %v330 = vld [vmem:[%s3 + $0x60] sm:$0xff]
  %v331 = vld [vmem:[%s3 + $0x68] sm:$0xff]
  %v332 = vld [vmem:[%s3 + $0x70] sm:$0xff]
  %v333 = vld [vmem:[%s3 + $0x78] sm:$0xff]
  %v334 = vld [vmem:[%s3 + $0x80] sm:$0xff]
  %v335 = vld [vmem:[%s3 + $0x88] sm:$0xff]
  %v336 = vld [vmem:[%s3 + $0x90] sm:$0xff]
  %v337 = vld [vmem:[%s3 + $0x98] sm:$0xff]
  %v338 = vld [vmem:[%s3 + $0xa0] sm:$0x3]
  %v339 = vmul.f32 %v233, %v318
  %v340 = vmul.f32 %v236, %v319
  %v341 = vmul.f32 %v241, %v320
  %v342 = vmul.f32 %v244, %v321
  %v343 = vmul.f32 %v249, %v322
  %v344 = vmul.f32 %v252, %v323
  %v345 = vmul.f32 %v257, %v324
  %v346 = vmul.f32 %v260, %v325
  %v347 = vmul.f32 %v265, %v326
  %v348 = vmul.f32 %v268, %v327
  %v349 = vmul.f32 %v273, %v328
  %v350 = vmul.f32 %v276, %v329
  %v351 = vmul.f32 %v281, %v330
  %v352 = vmul.f32 %v284, %v331
  %v353 = vmul.f32 %v289, %v332
  %v354 = vmul.f32 %v292, %v333
  %v355 = vmul.f32 %v297, %v334
  %v356 = vmul.f32 %v300, %v335
  %v357 = vmul.f32 %v305, %v336
  %v358 = vmul.f32 %v308, %v337
  %v359 = vmul.f32 %v313, %v338
  %v360 = vadd.f32 %v339, %v340
  %v361 = vadd.f32 %v360, %v341
  %v362 = vadd.f32 %v361, %v342
  %v363 = vadd.f32 %v362, %v343
  %v364 = vadd.f32 %v363, %v344
  %v365 = vadd.f32 %v364, %v345
  %v366 = vadd.f32 %v365, %v346
  %v367 = vadd.f32 %v366, %v347
  %v368 = vadd.f32 %v367, %v348
  %v369 = vadd.f32 %v368, %v349
  %v370 = vadd.f32 %v369, %v350
  %v371 = vadd.f32 %v370, %v351
  %v372 = vadd.f32 %v371, %v352
  %v373 = vadd.f32 %v372, %v353
  %v374 = vadd.f32 %v373, %v354
  %v375 = vadd.f32 %v374, %v355
  %v376 = vadd.f32 %v375, %v356
  %v377 = vadd.f32 %v376, %v357
  %v378 = vadd.f32 %v377, %v358
  %vm379 = vcmask 1041408
  %v380 = vsel %vm379, %v359, 0.0
  %v381 = vadd.f32 %v378, %v380
  %v382 = vrot.slane %v381, 4
  %v383 = vadd.f32 %v381, %v382
  %v384 = vrot.slane %v383, 2
  %v385 = vadd.f32 %v383, %v384
  %v386 = vrot.slane %v385, 1
  %v387 = vadd.f32 %v385, %v386
  %v388 = vmul.f32 %v339, %v233
  %v389 = vmul.f32 %v340, %v236
  %v390 = vmul.f32 %v341, %v241
  %v391 = vmul.f32 %v342, %v244
  %v392 = vmul.f32 %v343, %v249
  %v393 = vmul.f32 %v344, %v252
  %v394 = vmul.f32 %v345, %v257
  %v395 = vmul.f32 %v346, %v260
  %v396 = vmul.f32 %v347, %v265
  %v397 = vmul.f32 %v348, %v268
  %v398 = vmul.f32 %v349, %v273
  %v399 = vmul.f32 %v350, %v276
  %v400 = vmul.f32 %v351, %v281
  %v401 = vmul.f32 %v352, %v284
  %v402 = vmul.f32 %v353, %v289
  %v403 = vmul.f32 %v354, %v292
  %v404 = vmul.f32 %v355, %v297
  %v405 = vmul.f32 %v356, %v300
  %v406 = vmul.f32 %v357, %v305
  %v407 = vmul.f32 %v358, %v308
  %v408 = vmul.f32 %v359, %v313
  %v409 = vadd.f32 %v388, %v389
  %v410 = vadd.f32 %v409, %v390
  %v411 = vadd.f32 %v410, %v391
  %v412 = vadd.f32 %v411, %v392
  %v413 = vadd.f32 %v412, %v393
  %v414 = vadd.f32 %v413, %v394
  %v415 = vadd.f32 %v414, %v395
  %v416 = vadd.f32 %v415, %v396
  %v417 = vadd.f32 %v416, %v397
  %v418 = vadd.f32 %v417, %v398
  %v419 = vadd.f32 %v418, %v399
  %v420 = vadd.f32 %v419, %v400
  %v421 = vadd.f32 %v420, %v401
  %v422 = vadd.f32 %v421, %v402
  %v423 = vadd.f32 %v422, %v403
  %v424 = vadd.f32 %v423, %v404
  %v425 = vadd.f32 %v424, %v405
  %v426 = vadd.f32 %v425, %v406
  %v427 = vadd.f32 %v426, %v407
  %v428 = vsel %vm379, %v408, 0.0
  %v429 = vadd.f32 %v427, %v428
  %v430 = vrot.slane %v429, 4
  %v431 = vadd.f32 %v429, %v430
  %v432 = vrot.slane %v431, 2
  %v433 = vadd.f32 %v431, %v432
  %v434 = vrot.slane %v433, 1
  %v435 = vadd.f32 %v433, %v434
  %v436 = vld [vmem:[%s4] sm:$0xff]
  %v437 = vld [vmem:[%s4 + $0x8] sm:$0xff]
  %v438 = vld [vmem:[%s4 + $0x10] sm:$0xff]
  %v439 = vld [vmem:[%s4 + $0x18] sm:$0xff]
  %v440 = vld [vmem:[%s4 + $0x20] sm:$0xff]
  %v441 = vld [vmem:[%s4 + $0x28] sm:$0xff]
  %v442 = vld [vmem:[%s4 + $0x30] sm:$0xff]
  %v443 = vld [vmem:[%s4 + $0x38] sm:$0xff]
  %v444 = vld [vmem:[%s4 + $0x40] sm:$0xff]
  %v445 = vld [vmem:[%s4 + $0x48] sm:$0xff]
  %v446 = vld [vmem:[%s4 + $0x50] sm:$0xff]
  %v447 = vld [vmem:[%s4 + $0x58] sm:$0xff]
  %v448 = vld [vmem:[%s4 + $0x60] sm:$0xff]
  %v449 = vld [vmem:[%s4 + $0x68] sm:$0xff]
  %v450 = vld [vmem:[%s4 + $0x70] sm:$0xff]
  %v451 = vld [vmem:[%s4 + $0x78] sm:$0xff]
  %452 = vmatprep.subr.mxu0 0.0
  %453 = vmatpush1.msra.mxu0 %v436
  %454 = vmatprep.subr.mxu0 0.0
  %455 = vmatpush1.msra.mxu0 %v437
  %456 = vmatprep.subr.mxu0 0.0
  %457 = vmatpush1.msra.mxu0 %v438
  %458 = vmatprep.subr.mxu0 0.0
  %459 = vmatpush1.msra.mxu0 %v439
  %460 = vmatprep.subr.mxu0 0.0
  %461 = vmatpush1.msra.mxu0 %v440
  %462 = vmatprep.subr.mxu0 0.0
  %463 = vmatpush1.msra.mxu0 %v441
  %464 = vmatprep.subr.mxu0 0.0
  %465 = vmatpush1.msra.mxu0 %v442
  %466 = vmatprep.subr.mxu0 0.0
  %467 = vmatpush1.msra.mxu0 %v443
  %468 = vmatprep.subr.mxu0 0.0
  %469 = vmatpush1.msra.mxu0 %v444
  %470 = vmatprep.subr.mxu0 0.0
  %471 = vmatpush1.msra.mxu0 %v445
  %472 = vmatprep.subr.mxu0 0.0
  %473 = vmatpush1.msra.mxu0 %v446
  %474 = vmatprep.subr.mxu0 0.0
  %475 = vmatpush1.msra.mxu0 %v447
  %476 = vmatprep.subr.mxu0 0.0
  %477 = vmatpush1.msra.mxu0 %v448
  %478 = vmatprep.subr.mxu0 0.0
  %479 = vmatpush1.msra.mxu0 %v449
  %480 = vmatprep.subr.mxu0 0.0
  %481 = vmatpush1.msra.mxu0 %v450
  %482 = vmatprep.subr.mxu0 0.0
  %483 = vmatpush1.msra.mxu0 %v451
  %484 = vmatprep.subr.mxu0 0.0
  %485 = vmatpush1.msra.mxu0 0.0
  %486 = vmatprep.subr.mxu0 0.0
  %487 = vmatpush1.msra.mxu0 0.0
  %488 = vmatprep.subr.mxu0 0.0
  %489 = vmatpush1.msra.mxu0 0.0
  %490 = vmatprep.subr.mxu0 0.0
  %491 = vmatpush1.msra.mxu0 0.0
  %492 = vmatprep.subr.mxu0 0.0
  %493 = vmatpush1.msra.mxu0 0.0
  %494 = vmatprep.subr.mxu0 0.0
  %495 = vmatpush1.msra.mxu0 0.0
  %496 = vmatprep.subr.mxu0 0.0
  %497 = vmatpush1.msra.mxu0 0.0
  %498 = vmatprep.subr.mxu0 0.0
  %499 = vmatpush1.msra.mxu0 0.0
  %500 = vmatprep.subr.mxu0 0.0
  %501 = vmatpush1.msra.mxu0 0.0
  %502 = vmatprep.subr.mxu0 0.0
  %503 = vmatpush1.msra.mxu0 0.0
  %504 = vmatprep.subr.mxu0 0.0
  %505 = vmatpush1.msra.mxu0 0.0
  %506 = vmatprep.subr.mxu0 0.0
  %507 = vmatpush1.msra.mxu0 0.0
  %508 = vmatprep.subr.mxu0 0.0
  %509 = vmatpush1.msra.mxu0 0.0
  %510 = vmatprep.subr.mxu0 0.0
  %511 = vmatpush1.msra.mxu0 0.0
  %512 = vmatprep.subr.mxu0 0.0
  %513 = vmatpush1.msra.mxu0 0.0
  %514 = vmatprep.subr.mxu0 0.0
  %515 = vmatpush1.msra.mxu0 0.0
  %516 = vmatprep.mubr.f32.mxu0 0.0
  %517 = vmatmul.mubr.f32.gmra.mrb[0].mxu0 %v387
  %v518 = vpop.f32.mrb[0].mxu0
  %v519 = vadd.f32 0.0, %v518
  %v520 = vpop.f32.mrb[0].mxu0
  %521 = vdwg.mxu0
  %v522 = vmul.f32 %v519, 0.001953125
  %523 = vmatprep.subr.mxu0 0.0
  %524 = vmatpush1.msra.mxu0 %v436
  %525 = vmatprep.subr.mxu0 0.0
  %526 = vmatpush1.msra.mxu0 %v437
  %527 = vmatprep.subr.mxu0 0.0
  %528 = vmatpush1.msra.mxu0 %v438
  %529 = vmatprep.subr.mxu0 0.0
  %530 = vmatpush1.msra.mxu0 %v439
  %531 = vmatprep.subr.mxu0 0.0
  %532 = vmatpush1.msra.mxu0 %v440
  %533 = vmatprep.subr.mxu0 0.0
  %534 = vmatpush1.msra.mxu0 %v441
  %535 = vmatprep.subr.mxu0 0.0
  %536 = vmatpush1.msra.mxu0 %v442
  %537 = vmatprep.subr.mxu0 0.0
  %538 = vmatpush1.msra.mxu0 %v443
  %539 = vmatprep.subr.mxu0 0.0
  %540 = vmatpush1.msra.mxu0 %v444
  %541 = vmatprep.subr.mxu0 0.0
  %542 = vmatpush1.msra.mxu0 %v445
  %543 = vmatprep.subr.mxu0 0.0
  %544 = vmatpush1.msra.mxu0 %v446
  %545 = vmatprep.subr.mxu0 0.0
  %546 = vmatpush1.msra.mxu0 %v447
  %547 = vmatprep.subr.mxu0 0.0
  %548 = vmatpush1.msra.mxu0 %v448
  %549 = vmatprep.subr.mxu0 0.0
  %550 = vmatpush1.msra.mxu0 %v449
  %551 = vmatprep.subr.mxu0 0.0
  %552 = vmatpush1.msra.mxu0 %v450
  %553 = vmatprep.subr.mxu0 0.0
  %554 = vmatpush1.msra.mxu0 %v451
  %555 = vmatprep.subr.mxu0 0.0
  %556 = vmatpush1.msra.mxu0 0.0
  %557 = vmatprep.subr.mxu0 0.0
  %558 = vmatpush1.msra.mxu0 0.0
  %559 = vmatprep.subr.mxu0 0.0
  %560 = vmatpush1.msra.mxu0 0.0
  %561 = vmatprep.subr.mxu0 0.0
  %562 = vmatpush1.msra.mxu0 0.0
  %563 = vmatprep.subr.mxu0 0.0
  %564 = vmatpush1.msra.mxu0 0.0
  %565 = vmatprep.subr.mxu0 0.0
  %566 = vmatpush1.msra.mxu0 0.0
  %567 = vmatprep.subr.mxu0 0.0
  %568 = vmatpush1.msra.mxu0 0.0
  %569 = vmatprep.subr.mxu0 0.0
  %570 = vmatpush1.msra.mxu0 0.0
  %571 = vmatprep.subr.mxu0 0.0
  %572 = vmatpush1.msra.mxu0 0.0
  %573 = vmatprep.subr.mxu0 0.0
  %574 = vmatpush1.msra.mxu0 0.0
  %575 = vmatprep.subr.mxu0 0.0
  %576 = vmatpush1.msra.mxu0 0.0
  %577 = vmatprep.subr.mxu0 0.0
  %578 = vmatpush1.msra.mxu0 0.0
  %579 = vmatprep.subr.mxu0 0.0
  %580 = vmatpush1.msra.mxu0 0.0
  %581 = vmatprep.subr.mxu0 0.0
  %582 = vmatpush1.msra.mxu0 0.0
  %583 = vmatprep.subr.mxu0 0.0
  %584 = vmatpush1.msra.mxu0 0.0
  %585 = vmatprep.subr.mxu0 0.0
  %586 = vmatpush1.msra.mxu0 0.0
  %587 = vmatprep.mubr.f32.mxu0 0.0
  %588 = vmatmul.mubr.f32.gmra.mrb[0].mxu0 %v435
  %v589 = vpop.f32.mrb[0].mxu0
  %v590 = vadd.f32 0.0, %v589
  %v591 = vpop.f32.mrb[0].mxu0
  %592 = vdwg.mxu0
  %v593 = vmul.f32 %v590, 0.001953125
  %v594 = vmul.f32 %v522, %v522
  %v595 = vsub.f32 %v593, %v594
  %v596 = vlaneseq
  %v597 = vshrl.u32 %v596, 7
  %v598 = vsub.s32 0, %v597
  %v599 = vrot.slane %v522, %v598
  %v600 = vsub.f32 %v233, %v599
  %v601 = vsub.f32 %v236, %v599
  %v602 = vsub.f32 %v241, %v599
  %v603 = vsub.f32 %v244, %v599
  %v604 = vsub.f32 %v249, %v599
  %v605 = vsub.f32 %v252, %v599
  %v606 = vsub.f32 %v257, %v599
  %v607 = vsub.f32 %v260, %v599
  %v608 = vsub.f32 %v265, %v599
  %v609 = vsub.f32 %v268, %v599
  %v610 = vsub.f32 %v273, %v599
  %v611 = vsub.f32 %v276, %v599
  %v612 = vsub.f32 %v281, %v599
  %v613 = vsub.f32 %v284, %v599
  %v614 = vsub.f32 %v289, %v599
  %v615 = vsub.f32 %v292, %v599
  %v616 = vsub.f32 %v297, %v599
  %v617 = vsub.f32 %v300, %v599
  %v618 = vsub.f32 %v305, %v599
  %v619 = vsub.f32 %v308, %v599
  %v620 = vsub.f32 %v313, %v599
  %v621 = vadd.f32 %v595, 1e-05
  %v622 = vrsqrt.pop %v621
  %v623 = vlaneseq
  %v624 = vshrl.u32 %v623, 7
  %v625 = vsub.s32 0, %v624
  %v626 = vrot.slane %v622, %v625
  %v627 = vmul.f32 %v600, %v626
  %v628 = vmul.f32 %v601, %v626
  %v629 = vmul.f32 %v602, %v626
  %v630 = vmul.f32 %v603, %v626
  %v631 = vmul.f32 %v604, %v626
  %v632 = vmul.f32 %v605, %v626
  %v633 = vmul.f32 %v606, %v626
  %v634 = vmul.f32 %v607, %v626
  %v635 = vmul.f32 %v608, %v626
  %v636 = vmul.f32 %v609, %v626
  %v637 = vmul.f32 %v610, %v626
  %v638 = vmul.f32 %v611, %v626
  %v639 = vmul.f32 %v612, %v626
  %v640 = vmul.f32 %v613, %v626
  %v641 = vmul.f32 %v614, %v626
  %v642 = vmul.f32 %v615, %v626
  %v643 = vmul.f32 %v616, %v626
  %v644 = vmul.f32 %v617, %v626
  %v645 = vmul.f32 %v618, %v626
  %v646 = vmul.f32 %v619, %v626
  %v647 = vmul.f32 %v620, %v626
  %648 = vst [vmem:[%s5] sm:$0xff] %v627
  %649 = vst [vmem:[%s5 + $0x8] sm:$0xff] %v628
  %650 = vst [vmem:[%s5 + $0x10] sm:$0xff] %v629
  %651 = vst [vmem:[%s5 + $0x18] sm:$0xff] %v630
  %652 = vst [vmem:[%s5 + $0x20] sm:$0xff] %v631
  %653 = vst [vmem:[%s5 + $0x28] sm:$0xff] %v632
  %654 = vst [vmem:[%s5 + $0x30] sm:$0xff] %v633
  %655 = vst [vmem:[%s5 + $0x38] sm:$0xff] %v634
  %656 = vst [vmem:[%s5 + $0x40] sm:$0xff] %v635
  %657 = vst [vmem:[%s5 + $0x48] sm:$0xff] %v636
  %658 = vst [vmem:[%s5 + $0x50] sm:$0xff] %v637
  %659 = vst [vmem:[%s5 + $0x58] sm:$0xff] %v638
  %660 = vst [vmem:[%s5 + $0x60] sm:$0xff] %v639
  %661 = vst [vmem:[%s5 + $0x68] sm:$0xff] %v640
  %662 = vst [vmem:[%s5 + $0x70] sm:$0xff] %v641
  %663 = vst [vmem:[%s5 + $0x78] sm:$0xff] %v642
  %664 = vst [vmem:[%s5 + $0x80] sm:$0xff] %v643
  %665 = vst [vmem:[%s5 + $0x88] sm:$0xff] %v644
  %666 = vst [vmem:[%s5 + $0x90] sm:$0xff] %v645
  %667 = vst [vmem:[%s5 + $0x98] sm:$0xff] %v646
  %668 = vst [vmem:[%s5 + $0xa0] sm:$0x3] %v647
  // Predicated region
  $region22: #{model_forward.24} parent=0 // pred_check
    _
  $region23: #{model_forward.24} parent=0 // pred_check_branch
    %670 = sbr.rel (0) target = $region25
  $region24: #{model_forward.24} parent=0 // pred_region
    _
  $region25: #{model_forward.24} parent=0 // pred_fallthru
    _
  // Predicated region
  $region26: #{model_forward.24} parent=0 // pred_check
    _
  $region27: #{model_forward.24} parent=0 // pred_check_branch
    %672 = sbr.rel (0) target = $region29
  $region28: #{model_forward.24} parent=0 // pred_region
    _
  $region29: #{model_forward.24} parent=0 // pred_fallthru
    _

// kernel: model_forward.25
$region0: #{model_forward.25}
  #allocation0 [shape = 'u32[]', space=smem, size = 0x4, offset = 0x4, fixed_abs, tag = 'smem constant byte address 0x4 - core index']
  #allocation1 [shape = 'u32[144,128]{1,0:T(1,128)}', space=vmem, size = 0x12000, scoped, tag = 'internal scratch']
  %s0 = inlined_call_operand.vmem [shape: bf16[578,64], index: 0, kind: input, shape index: {}]
  %s1 = inlined_call_operand.vmem [shape: bf16[64,128], index: 1, kind: input, shape index: {}]
  %s2 = inlined_call_operand.vmem [shape: f32[1,128], index: 2, kind: input, shape index: {}]
  %s3 = inlined_call_operand.vmem [shape: f32[578,128], index: 3, kind: output, shape index: {}]
  %s4 = sld [smem:[#allocation0]]
  $region22: #{model_forward.25} parent=0
    _
  %s6 = ssub.s32 1, %s4
  %s7 = scalar_select 0, %s6, %s4
  // Predicated region
  $region2: #{model_forward.25} parent=0 // pred_check
    _
  $region3: #{model_forward.25} parent=0 // pred_check_branch
    %9 = sbr.rel (0) target = $region5
  $region4: #{model_forward.25} parent=0 // pred_region
    _
  $region5: #{model_forward.25} parent=0 // pred_fallthru
    _
  // Predicated region
  $region6: #{model_forward.25} parent=0 // pred_check
    _
  $region7: #{model_forward.25} parent=0 // pred_check_branch
    %11 = sbr.rel (0) target = $region9
  $region8: #{model_forward.25} parent=0 // pred_region
    _
  $region9: #{model_forward.25} parent=0 // pred_fallthru
    _
  // Predicated region
  $region10: #{model_forward.25} parent=0 // pred_check
    _
  $region11: #{model_forward.25} parent=0 // pred_check_branch
    %13 = sbr.rel (0) target = $region13
  $region12: #{model_forward.25} parent=0 // pred_region
    _
  $region13: #{model_forward.25} parent=0 // pred_fallthru
    _
  %v15 = vld [vmem:[%s0] sm:$0xf]
  %v16 = vld [vmem:[%s0 + $0x4] sm:$0xf]
  %v17 = vld [vmem:[%s0 + $0x8] sm:$0xf]
  %v18 = vld [vmem:[%s0 + $0xc] sm:$0xf]
  %v19 = vld [vmem:[%s0 + $0x10] sm:$0xf]
  %v20 = vld [vmem:[%s0 + $0x14] sm:$0xf]
  %v21 = vld [vmem:[%s0 + $0x18] sm:$0xf]
  %v22 = vld [vmem:[%s0 + $0x1c] sm:$0xf]
  %v23 = vld [vmem:[%s0 + $0x20] sm:$0xf]
  %v24 = vld [vmem:[%s0 + $0x24] sm:$0xf]
  %v25 = vld [vmem:[%s0 + $0x28] sm:$0xf]
  %v26 = vld [vmem:[%s0 + $0x2c] sm:$0xf]
  %v27 = vld [vmem:[%s0 + $0x30] sm:$0xf]
  %v28 = vld [vmem:[%s0 + $0x34] sm:$0xf]
  %v29 = vld [vmem:[%s0 + $0x38] sm:$0xf]
  %v30 = vld [vmem:[%s0 + $0x3c] sm:$0xf]
  %v31 = vld [vmem:[%s0 + $0x40] sm:$0xf]
  %v32 = vld [vmem:[%s0 + $0x44] sm:$0xf]
  %v33 = vld [vmem:[%s0 + $0x48] sm:$0xf]
  %v34 = vld [vmem:[%s0 + $0x4c] sm:$0xf]
  %v35 = vld [vmem:[%s0 + $0x50] sm:$0xf]
  %v36 = vld [vmem:[%s0 + $0x54] sm:$0xf]
  %v37 = vld [vmem:[%s0 + $0x58] sm:$0xf]
  %v38 = vld [vmem:[%s0 + $0x5c] sm:$0xf]
  %v39 = vld [vmem:[%s0 + $0x60] sm:$0xf]
  %v40 = vld [vmem:[%s0 + $0x64] sm:$0xf]
  %v41 = vld [vmem:[%s0 + $0x68] sm:$0xf]
  %v42 = vld [vmem:[%s0 + $0x6c] sm:$0xf]
  %v43 = vld [vmem:[%s0 + $0x70] sm:$0xf]
  %v44 = vld [vmem:[%s0 + $0x74] sm:$0xf]
  %v45 = vld [vmem:[%s0 + $0x78] sm:$0xf]
  %v46 = vld [vmem:[%s0 + $0x7c] sm:$0xf]
  %v47 = vld [vmem:[%s0 + $0x80] sm:$0xf]
  %v48 = vld [vmem:[%s0 + $0x84] sm:$0xf]
  %v49 = vld [vmem:[%s0 + $0x88] sm:$0xf]
  %v50 = vld [vmem:[%s0 + $0x8c] sm:$0xf]
  %v51 = vld [vmem:[%s0 + $0x90] sm:$0xf]
  %v52 = vld [vmem:[%s0 + $0x94] sm:$0xf]
  %v53 = vld [vmem:[%s0 + $0x98] sm:$0xf]
  %v54 = vld [vmem:[%s0 + $0x9c] sm:$0xf]
  %v55 = vld [vmem:[%s0 + $0xa0] sm:$0xf]
  %v56 = vld [vmem:[%s0 + $0xa4] sm:$0xf]
  %v57 = vld [vmem:[%s0 + $0xa8] sm:$0xf]
  %v58 = vld [vmem:[%s0 + $0xac] sm:$0xf]
  %v59 = vld [vmem:[%s0 + $0xb0] sm:$0xf]
  %v60 = vld [vmem:[%s0 + $0xb4] sm:$0xf]
  %v61 = vld [vmem:[%s0 + $0xb8] sm:$0xf]
  %v62 = vld [vmem:[%s0 + $0xbc] sm:$0xf]
  %v63 = vld [vmem:[%s0 + $0xc0] sm:$0xf]
  %v64 = vld [vmem:[%s0 + $0xc4] sm:$0xf]
  %v65 = vld [vmem:[%s0 + $0xc8] sm:$0xf]
  %v66 = vld [vmem:[%s0 + $0xcc] sm:$0xf]
  %v67 = vld [vmem:[%s0 + $0xd0] sm:$0xf]
  %v68 = vld [vmem:[%s0 + $0xd4] sm:$0xf]
  %v69 = vld [vmem:[%s0 + $0xd8] sm:$0xf]
  %v70 = vld [vmem:[%s0 + $0xdc] sm:$0xf]
  %v71 = vld [vmem:[%s0 + $0xe0] sm:$0xf]
  %v72 = vld [vmem:[%s0 + $0xe4] sm:$0xf]
  %v73 = vld [vmem:[%s0 + $0xe8] sm:$0xf]
  %v74 = vld [vmem:[%s0 + $0xec] sm:$0xf]
  %v75 = vld [vmem:[%s0 + $0xf0] sm:$0xf]
  %v76 = vld [vmem:[%s0 + $0xf4] sm:$0xf]
  %v77 = vld [vmem:[%s0 + $0xf8] sm:$0xf]
  %v78 = vld [vmem:[%s0 + $0xfc] sm:$0xf]
  %v79 = vld [vmem:[%s0 + $0x100] sm:$0xf]
  %v80 = vld [vmem:[%s0 + $0x104] sm:$0xf]
  %v81 = vld [vmem:[%s0 + $0x108] sm:$0xf]
  %v82 = vld [vmem:[%s0 + $0x10c] sm:$0xf]
  %v83 = vld [vmem:[%s0 + $0x110] sm:$0xf]
  %v84 = vld [vmem:[%s0 + $0x114] sm:$0xf]
  %v85 = vld [vmem:[%s0 + $0x118] sm:$0xf]
  %v86 = vld [vmem:[%s0 + $0x11c] sm:$0xf]
  %v87 = vld [vmem:[%s0 + $0x120] sm:$0x1]
  %v88 = vmax.bf16 %v15, 0
  %v89 = vmax.bf16 %v16, 0
  %v90 = vmax.bf16 %v17, 0
  %v91 = vmax.bf16 %v18, 0
  %v92 = vmax.bf16 %v19, 0
  %v93 = vmax.bf16 %v20, 0
  %v94 = vmax.bf16 %v21, 0
  %v95 = vmax.bf16 %v22, 0
  %v96 = vmax.bf16 %v23, 0
  %v97 = vmax.bf16 %v24, 0
  %v98 = vmax.bf16 %v25, 0
  %v99 = vmax.bf16 %v26, 0
  %v100 = vmax.bf16 %v27, 0
  %v101 = vmax.bf16 %v28, 0
  %v102 = vmax.bf16 %v29, 0
  %v103 = vmax.bf16 %v30, 0
  %v104 = vmax.bf16 %v31, 0
  %v105 = vmax.bf16 %v32, 0
  %v106 = vmax.bf16 %v33, 0
  %v107 = vmax.bf16 %v34, 0
  %v108 = vmax.bf16 %v35, 0
  %v109 = vmax.bf16 %v36, 0
  %v110 = vmax.bf16 %v37, 0
  %v111 = vmax.bf16 %v38, 0
  %v112 = vmax.bf16 %v39, 0
  %v113 = vmax.bf16 %v40, 0
  %v114 = vmax.bf16 %v41, 0
  %v115 = vmax.bf16 %v42, 0
  %v116 = vmax.bf16 %v43, 0
  %v117 = vmax.bf16 %v44, 0
  %v118 = vmax.bf16 %v45, 0
  %v119 = vmax.bf16 %v46, 0
  %v120 = vmax.bf16 %v47, 0
  %v121 = vmax.bf16 %v48, 0
  %v122 = vmax.bf16 %v49, 0
  %v123 = vmax.bf16 %v50, 0
  %v124 = vmax.bf16 %v51, 0
  %v125 = vmax.bf16 %v52, 0
  %v126 = vmax.bf16 %v53, 0
  %v127 = vmax.bf16 %v54, 0
  %v128 = vmax.bf16 %v55, 0
  %v129 = vmax.bf16 %v56, 0
  %v130 = vmax.bf16 %v57, 0
  %v131 = vmax.bf16 %v58, 0
  %v132 = vmax.bf16 %v59, 0
  %v133 = vmax.bf16 %v60, 0
  %v134 = vmax.bf16 %v61, 0
  %v135 = vmax.bf16 %v62, 0
  %v136 = vmax.bf16 %v63, 0
  %v137 = vmax.bf16 %v64, 0
  %v138 = vmax.bf16 %v65, 0
  %v139 = vmax.bf16 %v66, 0
  %v140 = vmax.bf16 %v67, 0
  %v141 = vmax.bf16 %v68, 0
  %v142 = vmax.bf16 %v69, 0
  %v143 = vmax.bf16 %v70, 0
  %v144 = vmax.bf16 %v71, 0
  %v145 = vmax.bf16 %v72, 0
  %v146 = vmax.bf16 %v73, 0
  %v147 = vmax.bf16 %v74, 0
  %v148 = vmax.bf16 %v75, 0
  %v149 = vmax.bf16 %v76, 0
  %v150 = vmax.bf16 %v77, 0
  %v151 = vmax.bf16 %v78, 0
  %v152 = vmax.bf16 %v79, 0
  %v153 = vmax.bf16 %v80, 0
  %v154 = vmax.bf16 %v81, 0
  %v155 = vmax.bf16 %v82, 0
  %v156 = vmax.bf16 %v83, 0
  %v157 = vmax.bf16 %v84, 0
  %v158 = vmax.bf16 %v85, 0
  %v159 = vmax.bf16 %v86, 0
  %v160 = vmax.bf16 %v87, 0
  %v161 = vld [vmem:[%s1] sm:$0xf]
  %v162 = vld [vmem:[%s1 + $0x4] sm:$0xf]
  %v163 = vld [vmem:[%s1 + $0x8] sm:$0xf]
  %v164 = vld [vmem:[%s1 + $0xc] sm:$0xf]
  %v165 = vld [vmem:[%s1 + $0x10] sm:$0xf]
  %v166 = vld [vmem:[%s1 + $0x14] sm:$0xf]
  %v167 = vld [vmem:[%s1 + $0x18] sm:$0xf]
  %v168 = vld [vmem:[%s1 + $0x1c] sm:$0xf]
  %v169 = vld [vmem:[%s2] sm:$0x1]
  %v171 = vlaneseq
  %v172 = vshrl.u32 %v171, 7
  %v173 = vsub.s32 0, %v172
  %v174 = vrot.slane %v169, %v173
  %v249 = vunpack.c.l.b16 %v88
  %v250 = vunpack.c.l.b16 %v89
  %v251 = vunpack.c.l.b16 %v90
  %v252 = vunpack.c.l.b16 %v91
  %v253 = vunpack.c.l.b16 %v92
  %v254 = vunpack.c.l.b16 %v93
  %v255 = vunpack.c.l.b16 %v94
  %v256 = vunpack.c.l.b16 %v95
  %v257 = vunpack.c.l.b16 %v96
  %v258 = vunpack.c.l.b16 %v97
  %v259 = vunpack.c.l.b16 %v98
  %v260 = vunpack.c.l.b16 %v99
  %v261 = vunpack.c.l.b16 %v100
  %v262 = vunpack.c.l.b16 %v101
  %v263 = vunpack.c.l.b16 %v102
  %v264 = vunpack.c.l.b16 %v103
  %v265 = vunpack.c.l.b16 %v104
  %v266 = vunpack.c.l.b16 %v105
  %v267 = vunpack.c.l.b16 %v106
  %v268 = vunpack.c.l.b16 %v107
  %v269 = vunpack.c.l.b16 %v108
  %v270 = vunpack.c.l.b16 %v109
  %v271 = vunpack.c.l.b16 %v110
  %v272 = vunpack.c.l.b16 %v111
  %v273 = vunpack.c.l.b16 %v112
  %v274 = vunpack.c.l.b16 %v113
  %v275 = vunpack.c.l.b16 %v114
  %v276 = vunpack.c.l.b16 %v115
  %v277 = vunpack.c.l.b16 %v116
  %v278 = vunpack.c.l.b16 %v117
  %v279 = vunpack.c.l.b16 %v118
  %v280 = vunpack.c.l.b16 %v119
  %v281 = vunpack.c.l.b16 %v120
  %v282 = vunpack.c.l.b16 %v121
  %v283 = vunpack.c.l.b16 %v122
  %v284 = vunpack.c.l.b16 %v123
  %v285 = vunpack.c.l.b16 %v124
  %v286 = vunpack.c.l.b16 %v125
  %v287 = vunpack.c.l.b16 %v126
  %v288 = vunpack.c.l.b16 %v127
  %v289 = vunpack.c.l.b16 %v128
  %v290 = vunpack.c.l.b16 %v129
  %v291 = vunpack.c.l.b16 %v130
  %v292 = vunpack.c.l.b16 %v131
  %v293 = vunpack.c.l.b16 %v132
  %v294 = vunpack.c.l.b16 %v133
  %v295 = vunpack.c.l.b16 %v134
  %v296 = vunpack.c.l.b16 %v135
  %v297 = vunpack.c.l.b16 %v136
  %v298 = vunpack.c.l.b16 %v137
  %v299 = vunpack.c.l.b16 %v138
  %v300 = vunpack.c.l.b16 %v139
  %v301 = vunpack.c.l.b16 %v140
  %v302 = vunpack.c.l.b16 %v141
  %v303 = vunpack.c.l.b16 %v142
  %v304 = vunpack.c.l.b16 %v143
  %v305 = vunpack.c.l.b16 %v144
  %v306 = vunpack.c.l.b16 %v145
  %v307 = vunpack.c.l.b16 %v146
  %v308 = vunpack.c.l.b16 %v147
  %v309 = vunpack.c.l.b16 %v148
  %v310 = vunpack.c.l.b16 %v149
  %v311 = vunpack.c.l.b16 %v150
  %v312 = vunpack.c.l.b16 %v151
  %v313 = vunpack.c.l.b16 %v152
  %v314 = vunpack.c.l.b16 %v153
  %v315 = vunpack.c.l.b16 %v154
  %v316 = vunpack.c.l.b16 %v155
  %v317 = vunpack.c.l.b16 %v156
  %v318 = vunpack.c.l.b16 %v157
  %v319 = vunpack.c.l.b16 %v158
  %v320 = vunpack.c.l.b16 %v159
  %v321 = vunpack.c.l.b16 %v160
  %v322 = vpack.c.b16 %v250, %v249
  %v323 = vpack.c.b16 %v252, %v251
  %v324 = vpack.c.b16 %v254, %v253
  %v325 = vpack.c.b16 %v256, %v255
  %v326 = vpack.c.b16 %v258, %v257
  %v327 = vpack.c.b16 %v260, %v259
  %v328 = vpack.c.b16 %v262, %v261
  %v329 = vpack.c.b16 %v264, %v263
  %v330 = vpack.c.b16 %v266, %v265
  %v331 = vpack.c.b16 %v268, %v267
  %v332 = vpack.c.b16 %v270, %v269
  %v333 = vpack.c.b16 %v272, %v271
  %v334 = vpack.c.b16 %v274, %v273
  %v335 = vpack.c.b16 %v276, %v275
  %v336 = vpack.c.b16 %v278, %v277
  %v337 = vpack.c.b16 %v280, %v279
  %v338 = vpack.c.b16 %v282, %v281
  %v339 = vpack.c.b16 %v284, %v283
  %v340 = vpack.c.b16 %v286, %v285
  %v341 = vpack.c.b16 %v288, %v287
  %v342 = vpack.c.b16 %v290, %v289
  %v343 = vpack.c.b16 %v292, %v291
  %v344 = vpack.c.b16 %v294, %v293
  %v345 = vpack.c.b16 %v296, %v295
  %v346 = vpack.c.b16 %v298, %v297
  %v347 = vpack.c.b16 %v300, %v299
  %v348 = vpack.c.b16 %v302, %v301
  %v349 = vpack.c.b16 %v304, %v303
  %v350 = vpack.c.b16 %v306, %v305
  %v351 = vpack.c.b16 %v308, %v307
  %v352 = vpack.c.b16 %v310, %v309
  %v353 = vpack.c.b16 %v312, %v311
  %v354 = vpack.c.b16 %v314, %v313
  %v355 = vpack.c.b16 %v316, %v315
  %v356 = vpack.c.b16 %v318, %v317
  %v357 = vpack.c.b16 %v320, %v319
  %v358 = vpack.c.b16 %v321, %v321
  %v367 = vunpack.c.l.b16 %v161
  %v368 = vunpack.c.l.b16 %v162
  %v369 = vunpack.c.l.b16 %v163
  %v370 = vunpack.c.l.b16 %v164
  %v371 = vunpack.c.l.b16 %v165
  %v372 = vunpack.c.l.b16 %v166
  %v373 = vunpack.c.l.b16 %v167
  %v374 = vunpack.c.l.b16 %v168
  %v375 = vpack.c.b16 %v368, %v367
  %v376 = vpack.c.b16 %v370, %v369
  %v377 = vpack.c.b16 %v372, %v371
  %v378 = vpack.c.b16 %v374, %v373
  %vm383 = vcmask 523264
  %v385 = vsel %vm383, %v322, 0
  %v388 = vsel %vm383, %v323, 0
  %v391 = vsel %vm383, %v324, 0
  %v394 = vsel %vm383, %v325, 0
  %v397 = vsel %vm383, %v326, 0
  %v400 = vsel %vm383, %v327, 0
  %v403 = vsel %vm383, %v328, 0
  %v406 = vsel %vm383, %v329, 0
  %v409 = vsel %vm383, %v330, 0
  %v412 = vsel %vm383, %v331, 0
  %v415 = vsel %vm383, %v332, 0
  %v418 = vsel %vm383, %v333, 0
  %v421 = vsel %vm383, %v334, 0
  %v424 = vsel %vm383, %v335, 0
  %v427 = vsel %vm383, %v336, 0
  %v430 = vsel %vm383, %v337, 0
  %v433 = vsel %vm383, %v338, 0
  %v436 = vsel %vm383, %v339, 0
  %v439 = vsel %vm383, %v340, 0
  %v442 = vsel %vm383, %v341, 0
  %v445 = vsel %vm383, %v342, 0
  %v448 = vsel %vm383, %v343, 0
  %v451 = vsel %vm383, %v344, 0
  %v454 = vsel %vm383, %v345, 0
  %v457 = vsel %vm383, %v346, 0
  %v460 = vsel %vm383, %v347, 0
  %v463 = vsel %vm383, %v348, 0
  %v466 = vsel %vm383, %v349, 0
  %v469 = vsel %vm383, %v350, 0
  %v472 = vsel %vm383, %v351, 0
  %v475 = vsel %vm383, %v352, 0
  %v478 = vsel %vm383, %v353, 0
  %v481 = vsel %vm383, %v354, 0
  %v484 = vsel %vm383, %v355, 0
  %v487 = vsel %vm383, %v356, 0
  %v490 = vsel %vm383, %v357, 0
  %v493 = vsel %vm383, %v358, 0
  %495 = vmatprep.subr.bf16.mxu0 0
  %496 = vmatpush1.bf16.msra.mxu0 %v375
  %497 = vmatprep.subr.bf16.mxu0 0
  %498 = vmatpush1.bf16.msra.mxu0 %v376
  %499 = vmatprep.subr.bf16.mxu0 0
  %500 = vmatpush1.bf16.msra.mxu0 %v377
  %501 = vmatprep.subr.bf16.mxu0 0
  %502 = vmatpush1.bf16.msra.mxu0 %v378
  %503 = vmatprep.subr.bf16.mxu0 0
  %504 = vmatpush1.bf16.msra.mxu0 0
  %505 = vmatprep.subr.bf16.mxu0 0
  %506 = vmatpush1.bf16.msra.mxu0 0
  %507 = vmatprep.subr.bf16.mxu0 0
  %508 = vmatpush1.bf16.msra.mxu0 0
  %509 = vmatprep.subr.bf16.mxu0 0
  %510 = vmatpush1.bf16.msra.mxu0 0
  %511 = vmatprep.subr.bf16.mxu0 0
  %512 = vmatpush1.bf16.msra.mxu0 0
  %513 = vmatprep.subr.bf16.mxu0 0
  %514 = vmatpush1.bf16.msra.mxu0 0
  %515 = vmatprep.subr.bf16.mxu0 0
  %516 = vmatpush1.bf16.msra.mxu0 0
  %517 = vmatprep.subr.bf16.mxu0 0
  %518 = vmatpush1.bf16.msra.mxu0 0
  %519 = vmatprep.subr.bf16.mxu0 0
  %520 = vmatpush1.bf16.msra.mxu0 0
  %521 = vmatprep.subr.bf16.mxu0 0
  %522 = vmatpush1.bf16.msra.mxu0 0
  %523 = vmatprep.subr.bf16.mxu0 0
  %524 = vmatpush1.bf16.msra.mxu0 0
  %525 = vmatprep.subr.bf16.mxu0 0
  %526 = vmatpush1.bf16.msra.mxu0 0
  %527 = vmatprep.mubr.bf16.mxu0 0
  %528 = vmatmul.mubr.bf16.gmra.mrb[0].mxu0 %v385
  %v529 = vpop.f32.mrb[0].mxu0
  %v530 = vadd.f32 %v174, %v529
  %v531 = vpop.f32.mrb[0].mxu0
  %v532 = vpop.f32.mrb[0].mxu0
  %v533 = vadd.f32 %v174, %v532
  %v534 = vpop.f32.mrb[0].mxu0
  %535 = vmatprep.mubr.bf16.mxu0 0
  %536 = vmatmul.mubr.bf16.gmra.mrb[0].mxu0 %v388
  %v537 = vpop.f32.mrb[0].mxu0
  %v538 = vadd.f32 %v174, %v537
  %v539 = vpop.f32.mrb[0].mxu0
  %v540 = vpop.f32.mrb[0].mxu0
  %v541 = vadd.f32 %v174, %v540
  %v542 = vpop.f32.mrb[0].mxu0
  %543 = vmatprep.mubr.bf16.mxu0 0
  %544 = vmatmul.mubr.bf16.gmra.mrb[0].mxu0 %v391
  %v545 = vpop.f32.mrb[0].mxu0
  %v546 = vadd.f32 %v174, %v545
  %v547 = vpop.f32.mrb[0].mxu0
  %v548 = vpop.f32.mrb[0].mxu0
  %v549 = vadd.f32 %v174, %v548
  %v550 = vpop.f32.mrb[0].mxu0
  %551 = vmatprep.mubr.bf16.mxu0 0
  %552 = vmatmul.mubr.bf16.gmra.mrb[0].mxu0 %v394
  %v553 = vpop.f32.mrb[0].mxu0
  %v554 = vadd.f32 %v174, %v553
  %v555 = vpop.f32.mrb[0].mxu0
  %v556 = vpop.f32.mrb[0].mxu0
  %v557 = vadd.f32 %v174, %v556
  %v558 = vpop.f32.mrb[0].mxu0
  %559 = vmatprep.mubr.bf16.mxu0 0
  %560 = vmatmul.mubr.bf16.gmra.mrb[0].mxu0 %v397
  %v561 = vpop.f32.mrb[0].mxu0
  %v562 = vadd.f32 %v174, %v561
  %v563 = vpop.f32.mrb[0].mxu0
  %v564 = vpop.f32.mrb[0].mxu0
  %v565 = vadd.f32 %v174, %v564
  %v566 = vpop.f32.mrb[0].mxu0
  %567 = vmatprep.mubr.bf16.mxu0 0
  %568 = vmatmul.mubr.bf16.gmra.mrb[0].mxu0 %v400
  %v569 = vpop.f32.mrb[0].mxu0
  %v570 = vadd.f32 %v174, %v569
  %v571 = vpop.f32.mrb[0].mxu0
  %v572 = vpop.f32.mrb[0].mxu0
  %v573 = vadd.f32 %v174, %v572
  %v574 = vpop.f32.mrb[0].mxu0
  %575 = vmatprep.mubr.bf16.mxu0 0
  %576 = vmatmul.mubr.bf16.gmra.mrb[0].mxu0 %v403
  %v577 = vpop.f32.mrb[0].mxu0
  %v578 = vadd.f32 %v174, %v577
  %v579 = vpop.f32.mrb[0].mxu0
  %v580 = vpop.f32.mrb[0].mxu0
  %v581 = vadd.f32 %v174, %v580
  %v582 = vpop.f32.mrb[0].mxu0
  %583 = vmatprep.mubr.bf16.mxu0 0
  %584 = vmatmul.mubr.bf16.gmra.mrb[0].mxu0 %v406
  %v585 = vpop.f32.mrb[0].mxu0
  %v586 = vadd.f32 %v174, %v585
  %v587 = vpop.f32.mrb[0].mxu0
  %v588 = vpop.f32.mrb[0].mxu0
  %v589 = vadd.f32 %v174, %v588
  %v590 = vpop.f32.mrb[0].mxu0
  %591 = vmatprep.mubr.bf16.mxu0 0
  %592 = vmatmul.mubr.bf16.gmra.mrb[0].mxu0 %v409
  %v593 = vpop.f32.mrb[0].mxu0
  %v594 = vadd.f32 %v174, %v593
  %v595 = vpop.f32.mrb[0].mxu0
  %v596 = vpop.f32.mrb[0].mxu0
  %v597 = vadd.f32 %v174, %v596
  %v598 = vpop.f32.mrb[0].mxu0
  %599 = vmatprep.mubr.bf16.mxu0 0
  %600 = vmatmul.mubr.bf16.gmra.mrb[0].mxu0 %v412
  %v601 = vpop.f32.mrb[0].mxu0
  %v602 = vadd.f32 %v174, %v601
  %v603 = vpop.f32.mrb[0].mxu0
  %v604 = vpop.f32.mrb[0].mxu0
  %v605 = vadd.f32 %v174, %v604
  %v606 = vpop.f32.mrb[0].mxu0
  %607 = vmatprep.mubr.bf16.mxu0 0
  %608 = vmatmul.mubr.bf16.gmra.mrb[0].mxu0 %v415
  %v609 = vpop.f32.mrb[0].mxu0
  %v610 = vadd.f32 %v174, %v609
  %v611 = vpop.f32.mrb[0].mxu0
  %v612 = vpop.f32.mrb[0].mxu0
  %v613 = vadd.f32 %v174, %v612
  %v614 = vpop.f32.mrb[0].mxu0
  %615 = vmatprep.mubr.bf16.mxu0 0
  %616 = vmatmul.mubr.bf16.gmra.mrb[0].mxu0 %v418
  %v617 = vpop.f32.mrb[0].mxu0
  %v618 = vadd.f32 %v174, %v617
  %v619 = vpop.f32.mrb[0].mxu0
  %v620 = vpop.f32.mrb[0].mxu0
  %v621 = vadd.f32 %v174, %v620
  %v622 = vpop.f32.mrb[0].mxu0
  %623 = vmatprep.mubr.bf16.mxu0 0
  %624 = vmatmul.mubr.bf16.gmra.mrb[0].mxu0 %v421
  %v625 = vpop.f32.mrb[0].mxu0
  %v626 = vadd.f32 %v174, %v625
  %v627 = vpop.f32.mrb[0].mxu0
  %v628 = vpop.f32.mrb[0].mxu0
  %v629 = vadd.f32 %v174, %v628
  %v630 = vpop.f32.mrb[0].mxu0
  %631 = vmatprep.mubr.bf16.mxu0 0
  %632 = vmatmul.mubr.bf16.gmra.mrb[0].mxu0 %v424
  %v633 = vpop.f32.mrb[0].mxu0
  %v634 = vadd.f32 %v174, %v633
  %v635 = vpop.f32.mrb[0].mxu0
  %v636 = vpop.f32.mrb[0].mxu0
  %v637 = vadd.f32 %v174, %v636
  %v638 = vpop.f32.mrb[0].mxu0
  %639 = vmatprep.mubr.bf16.mxu0 0
  %640 = vmatmul.mubr.bf16.gmra.mrb[0].mxu0 %v427
  %v641 = vpop.f32.mrb[0].mxu0
  %v642 = vadd.f32 %v174, %v641
  %v643 = vpop.f32.mrb[0].mxu0
  %v644 = vpop.f32.mrb[0].mxu0
  %v645 = vadd.f32 %v174, %v644
  %v646 = vpop.f32.mrb[0].mxu0
  %647 = vmatprep.mubr.bf16.mxu0 0
  %648 = vmatmul.mubr.bf16.gmra.mrb[0].mxu0 %v430
  %v649 = vpop.f32.mrb[0].mxu0
  %v650 = vadd.f32 %v174, %v649
  %v651 = vpop.f32.mrb[0].mxu0
  %v652 = vpop.f32.mrb[0].mxu0
  %v653 = vadd.f32 %v174, %v652
  %v654 = vpop.f32.mrb[0].mxu0
  %655 = vmatprep.mubr.bf16.mxu0 0
  %656 = vmatmul.mubr.bf16.gmra.mrb[0].mxu0 %v433
  %v657 = vpop.f32.mrb[0].mxu0
  %v658 = vadd.f32 %v174, %v657
  %v659 = vpop.f32.mrb[0].mxu0
  %v660 = vpop.f32.mrb[0].mxu0
  %v661 = vadd.f32 %v174, %v660
  %v662 = vpop.f32.mrb[0].mxu0
  %663 = vmatprep.mubr.bf16.mxu0 0
  %664 = vmatmul.mubr.bf16.gmra.mrb[0].mxu0 %v436
  %v665 = vpop.f32.mrb[0].mxu0
  %v666 = vadd.f32 %v174, %v665
  %v667 = vpop.f32.mrb[0].mxu0
  %v668 = vpop.f32.mrb[0].mxu0
  %v669 = vadd.f32 %v174, %v668
  %v670 = vpop.f32.mrb[0].mxu0
  %671 = vmatprep.mubr.bf16.mxu0 0
  %672 = vmatmul.mubr.bf16.gmra.mrb[0].mxu0 %v439
  %v673 = vpop.f32.mrb[0].mxu0
  %v674 = vadd.f32 %v174, %v673
  %v675 = vpop.f32.mrb[0].mxu0
  %v676 = vpop.f32.mrb[0].mxu0
  %v677 = vadd.f32 %v174, %v676
  %v678 = vpop.f32.mrb[0].mxu0
  %679 = vmatprep.mubr.bf16.mxu0 0
  %680 = vmatmul.mubr.bf16.gmra.mrb[0].mxu0 %v442
  %v681 = vpop.f32.mrb[0].mxu0
  %v682 = vadd.f32 %v174, %v681
  %v683 = vpop.f32.mrb[0].mxu0
  %v684 = vpop.f32.mrb[0].mxu0
  %v685 = vadd.f32 %v174, %v684
  %v686 = vpop.f32.mrb[0].mxu0
  %687 = vmatprep.mubr.bf16.mxu0 0
  %688 = vmatmul.mubr.bf16.gmra.mrb[0].mxu0 %v445
  %v689 = vpop.f32.mrb[0].mxu0
  %v690 = vadd.f32 %v174, %v689
  %v691 = vpop.f32.mrb[0].mxu0
  %v692 = vpop.f32.mrb[0].mxu0
  %v693 = vadd.f32 %v174, %v692
  %v694 = vpop.f32.mrb[0].mxu0
  %695 = vmatprep.mubr.bf16.mxu0 0
  %696 = vmatmul.mubr.bf16.gmra.mrb[0].mxu0 %v448
  %v697 = vpop.f32.mrb[0].mxu0
  %v698 = vadd.f32 %v174, %v697
  %v699 = vpop.f32.mrb[0].mxu0
  %v700 = vpop.f32.mrb[0].mxu0
  %v701 = vadd.f32 %v174, %v700
  %v702 = vpop.f32.mrb[0].mxu0
  %703 = vmatprep.mubr.bf16.mxu0 0
  %704 = vmatmul.mubr.bf16.gmra.mrb[0].mxu0 %v451
  %v705 = vpop.f32.mrb[0].mxu0
  %v706 = vadd.f32 %v174, %v705
  %v707 = vpop.f32.mrb[0].mxu0
  %v708 = vpop.f32.mrb[0].mxu0
  %v709 = vadd.f32 %v174, %v708
  %v710 = vpop.f32.mrb[0].mxu0
  %711 = vmatprep.mubr.bf16.mxu0 0
  %712 = vmatmul.mubr.bf16.gmra.mrb[0].mxu0 %v454
  %v713 = vpop.f32.mrb[0].mxu0
  %v714 = vadd.f32 %v174, %v713
  %v715 = vpop.f32.mrb[0].mxu0
  %v716 = vpop.f32.mrb[0].mxu0
  %v717 = vadd.f32 %v174, %v716
  %v718 = vpop.f32.mrb[0].mxu0
  %719 = vmatprep.mubr.bf16.mxu0 0
  %720 = vmatmul.mubr.bf16.gmra.mrb[0].mxu0 %v457
  %v721 = vpop.f32.mrb[0].mxu0
  %v722 = vadd.f32 %v174, %v721
  %v723 = vpop.f32.mrb[0].mxu0
  %v724 = vpop.f32.mrb[0].mxu0
  %v725 = vadd.f32 %v174, %v724
  %v726 = vpop.f32.mrb[0].mxu0
  %727 = vmatprep.mubr.bf16.mxu0 0
  %728 = vmatmul.mubr.bf16.gmra.mrb[0].mxu0 %v460
  %v729 = vpop.f32.mrb[0].mxu0
  %v730 = vadd.f32 %v174, %v729
  %v731 = vpop.f32.mrb[0].mxu0
  %v732 = vpop.f32.mrb[0].mxu0
  %v733 = vadd.f32 %v174, %v732
  %v734 = vpop.f32.mrb[0].mxu0
  %735 = vmatprep.mubr.bf16.mxu0 0
  %736 = vmatmul.mubr.bf16.gmra.mrb[0].mxu0 %v463
  %v737 = vpop.f32.mrb[0].mxu0
  %v738 = vadd.f32 %v174, %v737
  %v739 = vpop.f32.mrb[0].mxu0
  %v740 = vpop.f32.mrb[0].mxu0
  %v741 = vadd.f32 %v174, %v740
  %v742 = vpop.f32.mrb[0].mxu0
  %743 = vmatprep.mubr.bf16.mxu0 0
  %744 = vmatmul.mubr.bf16.gmra.mrb[0].mxu0 %v466
  %v745 = vpop.f32.mrb[0].mxu0
  %v746 = vadd.f32 %v174, %v745
  %v747 = vpop.f32.mrb[0].mxu0
  %v748 = vpop.f32.mrb[0].mxu0
  %v749 = vadd.f32 %v174, %v748
  %v750 = vpop.f32.mrb[0].mxu0
  %751 = vmatprep.mubr.bf16.mxu0 0
  %752 = vmatmul.mubr.bf16.gmra.mrb[0].mxu0 %v469
  %v753 = vpop.f32.mrb[0].mxu0
  %v754 = vadd.f32 %v174, %v753
  %v755 = vpop.f32.mrb[0].mxu0
  %v756 = vpop.f32.mrb[0].mxu0
  %v757 = vadd.f32 %v174, %v756
  %v758 = vpop.f32.mrb[0].mxu0
  %759 = vmatprep.mubr.bf16.mxu0 0
  %760 = vmatmul.mubr.bf16.gmra.mrb[0].mxu0 %v472
  %v761 = vpop.f32.mrb[0].mxu0
  %v762 = vadd.f32 %v174, %v761
  %v763 = vpop.f32.mrb[0].mxu0
  %v764 = vpop.f32.mrb[0].mxu0
  %v765 = vadd.f32 %v174, %v764
  %v766 = vpop.f32.mrb[0].mxu0
  %767 = vmatprep.mubr.bf16.mxu0 0
  %768 = vmatmul.mubr.bf16.gmra.mrb[0].mxu0 %v475
  %v769 = vpop.f32.mrb[0].mxu0
  %v770 = vadd.f32 %v174, %v769
  %v771 = vpop.f32.mrb[0].mxu0
  %v772 = vpop.f32.mrb[0].mxu0
  %v773 = vadd.f32 %v174, %v772
  %v774 = vpop.f32.mrb[0].mxu0
  %775 = vmatprep.mubr.bf16.mxu0 0
  %776 = vmatmul.mubr.bf16.gmra.mrb[0].mxu0 %v478
  %v777 = vpop.f32.mrb[0].mxu0
  %v778 = vadd.f32 %v174, %v777
  %v779 = vpop.f32.mrb[0].mxu0
  %v780 = vpop.f32.mrb[0].mxu0
  %v781 = vadd.f32 %v174, %v780
  %v782 = vpop.f32.mrb[0].mxu0
  %783 = vmatprep.mubr.bf16.mxu0 0
  %784 = vmatmul.mubr.bf16.gmra.mrb[0].mxu0 %v481
  %v785 = vpop.f32.mrb[0].mxu0
  %v786 = vadd.f32 %v174, %v785
  %v787 = vpop.f32.mrb[0].mxu0
  %v788 = vpop.f32.mrb[0].mxu0
  %v789 = vadd.f32 %v174, %v788
  %v790 = vpop.f32.mrb[0].mxu0
  %791 = vmatprep.mubr.bf16.mxu0 0
  %792 = vmatmul.mubr.bf16.gmra.mrb[0].mxu0 %v484
  %v793 = vpop.f32.mrb[0].mxu0
  %v794 = vadd.f32 %v174, %v793
  %v795 = vpop.f32.mrb[0].mxu0
  %v796 = vpop.f32.mrb[0].mxu0
  %v797 = vadd.f32 %v174, %v796
  %v798 = vpop.f32.mrb[0].mxu0
  %799 = vmatprep.mubr.bf16.mxu0 0
  %800 = vmatmul.mubr.bf16.gmra.mrb[0].mxu0 %v487
  %v801 = vpop.f32.mrb[0].mxu0
  %v802 = vadd.f32 %v174, %v801
  %v803 = vpop.f32.mrb[0].mxu0
  %v804 = vpop.f32.mrb[0].mxu0
  %v805 = vadd.f32 %v174, %v804
  %v806 = vpop.f32.mrb[0].mxu0
  %807 = vmatprep.mubr.bf16.mxu0 0
  %808 = vmatmul.mubr.bf16.gmra.mrb[0].mxu0 %v490
  %v809 = vpop.f32.mrb[0].mxu0
  %v810 = vadd.f32 %v174, %v809
  %v811 = vpop.f32.mrb[0].mxu0
  %v812 = vpop.f32.mrb[0].mxu0
  %v813 = vadd.f32 %v174, %v812
  %v814 = vpop.f32.mrb[0].mxu0
  %815 = vmatprep.mubr.bf16.mxu0 0
  %816 = vmatmul.mubr.bf16.gmra.mrb[0].mxu0 %v493
  %v817 = vpop.f32.mrb[0].mxu0
  %v818 = vadd.f32 %v174, %v817
  %v819 = vpop.f32.mrb[0].mxu0
  %v820 = vpop.f32.mrb[0].mxu0
  %v821 = vpop.f32.mrb[0].mxu0
  %822 = vdwg.mxu0
  %v823 = vtanh.pop %v530
  %v824 = vtanh.pop %v533
  %v825 = vtanh.pop %v538
  %v826 = vtanh.pop %v541
  %v827 = vtanh.pop %v546
  %v828 = vtanh.pop %v549
  %v829 = vtanh.pop %v554
  %v830 = vtanh.pop %v557
  %v831 = vtanh.pop %v562
  %v832 = vtanh.pop %v565
  %v833 = vtanh.pop %v570
  %v834 = vtanh.pop %v573
  %v835 = vtanh.pop %v578
  %v836 = vtanh.pop %v581
  %v837 = vtanh.pop %v586
  %v838 = vtanh.pop %v589
  %v839 = vtanh.pop %v594
  %v840 = vtanh.pop %v597
  %v841 = vtanh.pop %v602
  %v842 = vtanh.pop %v605
  %v843 = vtanh.pop %v610
  %v844 = vtanh.pop %v613
  %v845 = vtanh.pop %v618
  %v846 = vtanh.pop %v621
  %v847 = vtanh.pop %v626
  %v848 = vtanh.pop %v629
  %v849 = vtanh.pop %v634
  %v850 = vtanh.pop %v637
  %v851 = vtanh.pop %v642
  %v852 = vtanh.pop %v645
  %v853 = vtanh.pop %v650
  %v854 = vtanh.pop %v653
  %v855 = vtanh.pop %v658
  %v856 = vtanh.pop %v661
  %v857 = vtanh.pop %v666
  %v858 = vtanh.pop %v669
  %v859 = vtanh.pop %v674
  %v860 = vtanh.pop %v677
  %v861 = vtanh.pop %v682
  %v862 = vtanh.pop %v685
  %v863 = vtanh.pop %v690
  %v864 = vtanh.pop %v693
  %v865 = vtanh.pop %v698
  %v866 = vtanh.pop %v701
  %v867 = vtanh.pop %v706
  %v868 = vtanh.pop %v709
  %v869 = vtanh.pop %v714
  %v870 = vtanh.pop %v717
  %v871 = vtanh.pop %v722
  %v872 = vtanh.pop %v725
  %v873 = vtanh.pop %v730
  %v874 = vtanh.pop %v733
  %v875 = vtanh.pop %v738
  %v876 = vtanh.pop %v741
  %v877 = vtanh.pop %v746
  %v878 = vtanh.pop %v749
  %v879 = vtanh.pop %v754
  %v880 = vtanh.pop %v757
  %v881 = vtanh.pop %v762
  %v882 = vtanh.pop %v765
  %v883 = vtanh.pop %v770
  %v884 = vtanh.pop %v773
  %v885 = vtanh.pop %v778
  %v886 = vtanh.pop %v781
  %v887 = vtanh.pop %v786
  %v888 = vtanh.pop %v789
  %v889 = vtanh.pop %v794
  %v890 = vtanh.pop %v797
  %v891 = vtanh.pop %v802
  %v892 = vtanh.pop %v805
  %v893 = vtanh.pop %v810
  %v894 = vtanh.pop %v813
  %v895 = vtanh.pop %v818
  %896 = vst [vmem:[%s3] sm:$0xff] %v823
  %897 = vst [vmem:[%s3 + $0x8] sm:$0xff] %v824
  %898 = vst [vmem:[%s3 + $0x10] sm:$0xff] %v825
  %899 = vst [vmem:[%s3 + $0x18] sm:$0xff] %v826
  %900 = vst [vmem:[%s3 + $0x20] sm:$0xff] %v827
  %901 = vst [vmem:[%s3 + $0x28] sm:$0xff] %v828
  %902 = vst [vmem:[%s3 + $0x30] sm:$0xff] %v829
  %903 = vst [vmem:[%s3 + $0x38] sm:$0xff] %v830
  %904 = vst [vmem:[%s3 + $0x40] sm:$0xff] %v831
  %905 = vst [vmem:[%s3 + $0x48] sm:$0xff] %v832
  %906 = vst [vmem:[%s3 + $0x50] sm:$0xff] %v833
  %907 = vst [vmem:[%s3 + $0x58] sm:$0xff] %v834
  %908 = vst [vmem:[%s3 + $0x60] sm:$0xff] %v835
  %909 = vst [vmem:[%s3 + $0x68] sm:$0xff] %v836
  %910 = vst [vmem:[%s3 + $0x70] sm:$0xff] %v837
  %911 = vst [vmem:[%s3 + $0x78] sm:$0xff] %v838
  %912 = vst [vmem:[%s3 + $0x80] sm:$0xff] %v839
  %913 = vst [vmem:[%s3 + $0x88] sm:$0xff] %v840
  %914 = vst [vmem:[%s3 + $0x90] sm:$0xff] %v841
  %915 = vst [vmem:[%s3 + $0x98] sm:$0xff] %v842
  %916 = vst [vmem:[%s3 + $0xa0] sm:$0xff] %v843
  %917 = vst [vmem:[%s3 + $0xa8] sm:$0xff] %v844
  %918 = vst [vmem:[%s3 + $0xb0] sm:$0xff] %v845
  %919 = vst [vmem:[%s3 + $0xb8] sm:$0xff] %v846
  %920 = vst [vmem:[%s3 + $0xc0] sm:$0xff] %v847
  %921 = vst [vmem:[%s3 + $0xc8] sm:$0xff] %v848
  %922 = vst [vmem:[%s3 + $0xd0] sm:$0xff] %v849
  %923 = vst [vmem:[%s3 + $0xd8] sm:$0xff] %v850
  %924 = vst [vmem:[%s3 + $0xe0] sm:$0xff] %v851
  %925 = vst [vmem:[%s3 + $0xe8] sm:$0xff] %v852
  %926 = vst [vmem:[%s3 + $0xf0] sm:$0xff] %v853
  %927 = vst [vmem:[%s3 + $0xf8] sm:$0xff] %v854
  %928 = vst [vmem:[%s3 + $0x100] sm:$0xff] %v855
  %929 = vst [vmem:[%s3 + $0x108] sm:$0xff] %v856
  %930 = vst [vmem:[%s3 + $0x110] sm:$0xff] %v857
  %931 = vst [vmem:[%s3 + $0x118] sm:$0xff] %v858
  %932 = vst [vmem:[%s3 + $0x120] sm:$0xff] %v859
  %933 = vst [vmem:[%s3 + $0x128] sm:$0xff] %v860
  %934 = vst [vmem:[%s3 + $0x130] sm:$0xff] %v861
  %935 = vst [vmem:[%s3 + $0x138] sm:$0xff] %v862
  %936 = vst [vmem:[%s3 + $0x140] sm:$0xff] %v863
  %937 = vst [vmem:[%s3 + $0x148] sm:$0xff] %v864
  %938 = vst [vmem:[%s3 + $0x150] sm:$0xff] %v865
  %939 = vst [vmem:[%s3 + $0x158] sm:$0xff] %v866
  %940 = vst [vmem:[%s3 + $0x160] sm:$0xff] %v867
  %941 = vst [vmem:[%s3 + $0x168] sm:$0xff] %v868
  %942 = vst [vmem:[%s3 + $0x170] sm:$0xff] %v869
  %943 = vst [vmem:[%s3 + $0x178] sm:$0xff] %v870
  %944 = vst [vmem:[%s3 + $0x180] sm:$0xff] %v871
  %945 = vst [vmem:[%s3 + $0x188] sm:$0xff] %v872
  %946 = vst [vmem:[%s3 + $0x190] sm:$0xff] %v873
  %947 = vst [vmem:[%s3 + $0x198] sm:$0xff] %v874
  %948 = vst [vmem:[%s3 + $0x1a0] sm:$0xff] %v875
  %949 = vst [vmem:[%s3 + $0x1a8] sm:$0xff] %v876
  %950 = vst [vmem:[%s3 + $0x1b0] sm:$0xff] %v877
  %951 = vst [vmem:[%s3 + $0x1b8] sm:$0xff] %v878
  %952 = vst [vmem:[%s3 + $0x1c0] sm:$0xff] %v879
  %953 = vst [vmem:[%s3 + $0x1c8] sm:$0xff] %v880
  %954 = vst [vmem:[%s3 + $0x1d0] sm:$0xff] %v881
  %955 = vst [vmem:[%s3 + $0x1d8] sm:$0xff] %v882
  %956 = vst [vmem:[%s3 + $0x1e0] sm:$0xff] %v883
  %957 = vst [vmem:[%s3 + $0x1e8] sm:$0xff] %v884
  %958 = vst [vmem:[%s3 + $0x1f0] sm:$0xff] %v885
  %959 = vst [vmem:[%s3 + $0x1f8] sm:$0xff] %v886
  %960 = vst [vmem:[%s3 + $0x200] sm:$0xff] %v887
  %961 = vst [vmem:[%s3 + $0x208] sm:$0xff] %v888
  %962 = vst [vmem:[%s3 + $0x210] sm:$0xff] %v889
  %963 = vst [vmem:[%s3 + $0x218] sm:$0xff] %v890
  %964 = vst [vmem:[%s3 + $0x220] sm:$0xff] %v891
  %965 = vst [vmem:[%s3 + $0x228] sm:$0xff] %v892
  %966 = vst [vmem:[%s3 + $0x230] sm:$0xff] %v893
  %967 = vst [vmem:[%s3 + $0x238] sm:$0xff] %v894
  %968 = vst [vmem:[%s3 + $0x240] sm:$0x3] %v895
  // Predicated region
  $region14: #{model_forward.25} parent=0 // pred_check
    _
  $region15: #{model_forward.25} parent=0 // pred_check_branch
    %970 = sbr.rel (0) target = $region17
  $region16: #{model_forward.25} parent=0 // pred_region
    _
  $region17: #{model_forward.25} parent=0 // pred_fallthru
    _
  // Predicated region
  $region18: #{model_forward.25} parent=0 // pred_check
    _
  $region19: #{model_forward.25} parent=0 // pred_check_branch
    %972 = sbr.rel (0) target = $region21
  $region20: #{model_forward.25} parent=0 // pred_region
    _
  $region21: #{model_forward.25} parent=0 // pred_fallthru
    _

</llo_original>
